<compile_context>
chip_gen: v7x
topology: tpu7x:2x2x1
jax: 0.10.0
libtpu: 0.0.40
codegen_flags: <defaults>
</compile_context>

<pallas_src>
import math
from functools import partial

import jax
import jax.numpy as jnp
import numpy as np
from jax.experimental import pallas as pl
from jax.experimental.pallas import tpu as pltpu


# ----------------------------------------------------------------------------- kernel
def _cross_attn_kernel(x_ref, xpe_ref, mem_ref, mempe_ref, vec_ref, w_ref, out_ref,
                       *, nhead: int, eps: float):
    TB, Lq, D = x_ref.shape
    _, Lk, _ = mem_ref.shape
    hd = D // nhead
    Mq = TB * Lq
    Mk = TB * Lk

    gamma = vec_ref[0:1, :]          # (1, D) f32
    beta = vec_ref[1:2, :]
    bq = vec_ref[2:3, :]             # already scaled by 1/sqrt(hd)
    bo = vec_ref[3:4, :]             # bo + bv @ Wo^T folded on host

    # ---- LayerNorm (f32) on flattened (TB*Lq, D) rows (leading-dim merge, layout-preserving).
    x = x_ref[...].astype(jnp.float32).reshape(Mq, D)
    mean = jnp.mean(x, axis=-1, keepdims=True)
    var = jnp.mean(jnp.square(x - mean), axis=-1, keepdims=True)
    xn = (x - mean) * jax.lax.rsqrt(var + eps) * gamma + beta           # (Mq, D) f32

    xpe = xpe_ref[...].astype(jnp.float32).reshape(Mq, D)
    memv = mem_ref[...].astype(jnp.float32).reshape(Mk, D)
    mempe = mempe_ref[...].astype(jnp.float32).reshape(Mk, D)

    # PE adds (add_pe_to_qkv = [True, True, False]); bf16 at the MXU boundary.
    q_in = (xn + xpe).astype(jnp.bfloat16)       # (Mq, D)
    k_in = (memv + mempe).astype(jnp.bfloat16)   # (Mk, D)
    v_in = memv.astype(jnp.bfloat16)             # (Mk, D)

    wq = w_ref[0]                                # (D, D) bf16, (in, out), scale folded
    wk = w_ref[1]
    wv = w_ref[2]
    wo = w_ref[3]

    # ---- Full-width projections (3 matmuls instead of 3*nhead panel dots).
    Q = jnp.dot(q_in, wq, preferred_element_type=jnp.float32) + bq      # (Mq, D) f32
    K = jnp.dot(k_in, wk, preferred_element_type=jnp.float32)           # bk dropped (softmax-invariant)
    V = jnp.dot(v_in, wv, preferred_element_type=jnp.float32)           # bv folded into bo
    Qb = Q.astype(jnp.bfloat16)
    Kb = K.astype(jnp.bfloat16)
    Vb = V.astype(jnp.bfloat16)

    # ---- Block-diagonal batch mask for the flattened (Mq, Mk) score matmul (hoisted, finite -1e30).
    row_b = jnp.floor(
        (jax.lax.broadcasted_iota(jnp.int32, (Mq, 1), 0).astype(jnp.float32) + 0.5) * (1.0 / Lq))
    col_b = jnp.floor(
        (jax.lax.broadcasted_iota(jnp.int32, (1, Mk), 1).astype(jnp.float32) + 0.5) * (1.0 / Lk))
    neg_mask = jnp.where(row_b == col_b, 0.0, -1e30)                    # (Mq, Mk) f32

    # ---- Per-head attention on lane slices; one dense score matmul + one PV matmul per head.
    heads = []
    for h in range(nhead):                       # static unroll
        qh = Qb[:, h * hd:(h + 1) * hd]          # (Mq, hd)
        kh = Kb[:, h * hd:(h + 1) * hd]          # (Mk, hd)
        vh = Vb[:, h * hd:(h + 1) * hd]          # (Mk, hd)
        s = jax.lax.dot_general(qh, kh, (((1,), (1,)), ((), ())),
                                preferred_element_type=jnp.float32)     # (Mq, Mk) f32
        s = s + neg_mask
        s = s - jnp.max(s, axis=-1, keepdims=True)
        p = jnp.exp(s)
        p = p * pl.reciprocal(jnp.sum(p, axis=-1, keepdims=True), approx=True)
        heads.append(jnp.dot(p.astype(jnp.bfloat16), vh,
                             preferred_element_type=jnp.float32))       # (Mq, hd) f32

    # ---- Single output projection over the lane-concatenated heads (stays inside one 128-lane tile).
    a = jnp.concatenate(heads, axis=-1).astype(jnp.bfloat16)            # (Mq, D)
    o = jnp.dot(a, wo, preferred_element_type=jnp.float32) + bo

    # Residual uses the *normed* x (r = x after norm in the PyTorch module); dropout=0.0 -> identity.
    out_ref[...] = (xn + o).reshape(TB, Lq, D).astype(out_ref.dtype)


# ----------------------------------------------------------------------------- one-time param prep
def prepare_cross_attention_params(params, *, nhead):
    """One-time host-side prep: transpose to (in,out), fold scale/bk/bv, pack, cast to bf16."""
    D = params["wq"].shape[0]
    hd = D // nhead
    scale = 1.0 / math.sqrt(hd)
    f32 = lambda a: jnp.asarray(a, jnp.float32)

    wq, wk, wv, wo = f32(params["wq"]), f32(params["wk"]), f32(params["wv"]), f32(params["wo"])
    bq = f32(params["bq"]).reshape(D)
    bv = f32(params["bv"]).reshape(D)
    bo = f32(params["bo"]).reshape(D)
    gamma = f32(params["gamma"]).reshape(D)
    beta = f32(params["beta"]).reshape(D)

    # PyTorch convention W:(out,in), y = x @ W.T + b  ->  store (in,out); fold 1/sqrt(hd) into Wq/bq.
    w_packed = jnp.stack([wq.T * scale, wk.T, wv.T, wo.T]).astype(jnp.bfloat16)   # (4, D, D)
    # bk dropped (per-query constant cancels in softmax); bv folded through Wo (softmax rows sum to 1).
    bo_prime = bo + bv @ wo.T
    vec_packed = jnp.stack([gamma, beta, bq * scale, bo_prime])                   # (4, D) f32
    return {"w": w_packed, "vec": vec_packed, "nhead": nhead, "dim": D}


# ----------------------------------------------------------------------------- wrapper
def _pick_tb(B, Lq, Lk):
    """Batch tile: whole batch on single-TC chips; even 'parallel' grid on dual-TC v7x."""
    try:
        kind = jax.devices()[0].device_kind.lower()
    except Exception:
        kind = ""
    dual_tc = ("v7" in kind) or ("7x" in kind)

    # Cap TB so the flattened (TB*Lq) x (TB*Lk) f32 score tile stays small (<= 1 MiB per head).
    max_rows = 512
    tb = 1
    for d in range(1, B + 1):
        if B % d == 0 and d * max(Lq, Lk) <= max_rows:
            tb = d
    if dual_tc and B % 2 == 0 and tb == B:
        tb = B // 2   # grid=2 'parallel' -> one step per TensorCore
    return tb


def cross_attention_pallas(x, mem, x_pe, mem_pe, prep, *, eps=1e-5):
    B, Lq, D = x.shape
    _, Lk, _ = mem.shape
    nhead = prep["nhead"]
    assert D == prep["dim"] and D % nhead == 0
    # (TB,Lq,D)->(TB*Lq,D) in-kernel reshapes are only layout-preserving for 8-multiples.
    assert Lq % 8 == 0 and Lk % 8 == 0, "Lq/Lk must be multiples of 8 (pad upstream otherwise)"

    TB = _pick_tb(B, Lq, Lk)
    grid = (B // TB,)

    data = lambda L: pl.BlockSpec((TB, L, D), lambda b: (b, 0, 0))
    kernel = partial(_cross_attn_kernel, nhead=nhead, eps=eps)

    # VMEM footprint at these shapes is tiny (< a few MiB, fits the default scoped limit on
    # v5e/v6e/v7x); for large Lk tile Lk with an online-softmax inner loop (keep M, tile K) and
    # set pltpu.CompilerParams(vmem_limit_bytes=...) instead of shrinking TB.
    return pl.pallas_call(
        kernel,
        out_shape=jax.ShapeDtypeStruct((B, Lq, D), x.dtype),
        grid_spec=pltpu.PrefetchScalarGridSpec(
            num_scalar_prefetch=0,
            grid=grid,
            in_specs=[
                data(Lq), data(Lq), data(Lk), data(Lk),                   # x, x_pe, mem, mem_pe
                pl.BlockSpec((4, D), lambda b: (0, 0)),                   # packed f32 vectors
                pl.BlockSpec((4, D, D), lambda b: (0, 0, 0)),             # packed bf16 weights
            ],
            out_specs=pl.BlockSpec((TB, Lq, D), lambda b: (b, 0, 0)),
        ),
        compiler_params=pltpu.CompilerParams(dimension_semantics=("parallel",)),
    )(x, x_pe, mem, mem_pe, prep["vec"], prep["w"])


# ----------------------------------------------------------------------------- pure-JAX reference
def cross_attention_ref(x, mem, x_pe, mem_pe, params, *, nhead, eps=1e-5):
    mean = jnp.mean(x, axis=-1, keepdims=True)
    var = jnp.mean(jnp.square(x - mean), axis=-1, keepdims=True)
    xn = (x - mean) / jnp.sqrt(var + eps) * params["gamma"][0] + params["beta"][0]
    q_in, k_in, v_in = xn + x_pe, mem + mem_pe, mem
    dot = lambda a, w, b: jnp.einsum("bld,ed->ble", a, w,
                                     precision=jax.lax.Precision.HIGHEST) + b[0]
    Q = dot(q_in, params["wq"], params["bq"])
    K = dot(k_in, params["wk"], params["bk"])
    V = dot(v_in, params["wv"], params["bv"])
    B, Lq, D = Q.shape
    hd = D // nhead
    Qh = Q.reshape(B, Lq, nhead, hd).transpose(0, 2, 1, 3)
    Kh = K.reshape(B, -1, nhead, hd).transpose(0, 2, 1, 3)
    Vh = V.reshape(B, -1, nhead, hd).transpose(0, 2, 1, 3)
    s = jnp.einsum("bhqd,bhkd->bhqk", Qh / math.sqrt(hd), Kh,
                   precision=jax.lax.Precision.HIGHEST)
    p = jax.nn.softmax(s, axis=-1)
    a = jnp.einsum("bhqk,bhkd->bhqd", p, Vh, precision=jax.lax.Precision.HIGHEST)
    a = a.transpose(0, 2, 1, 3).reshape(B, Lq, D)
    o = dot(a, params["wo"], params["bo"])
    return xn + o


# ----------------------------------------------------------------------------- demo / test
if __name__ == "__main__":
    B, Lq, Lk, D, nhead = 32, 8, 8, 32, 4

    key = jax.random.PRNGKey(0)
    ks = jax.random.split(key, 12)

    x = jax.random.normal(ks[0], (B, Lq, D), jnp.float32)
    mem = jax.random.normal(ks[1], (B, Lk, D), jnp.float32)
    x_pe = jax.random.normal(ks[2], (B, Lq, D), jnp.float32)
    mem_pe = jax.random.normal(ks[3], (B, Lk, D), jnp.float32)

    winit = lambda k, shp: (jax.random.normal(k, shp, jnp.float32) * 0.05)
    params = {
        "gamma": jnp.ones((1, D), jnp.float32),
        "beta": jnp.zeros((1, D), jnp.float32),
        # in_proj_weight (3D, D) split into Wq/Wk/Wv, each (D, D) out-by-in (PyTorch convention).
        "wq": winit(ks[4], (D, D)),
        "wk": winit(ks[5], (D, D)),
        "wv": winit(ks[6], (D, D)),
        "wo": winit(ks[7], (D, D)),
        "bq": winit(ks[8], (1, D)),
        "bk": winit(ks[9], (1, D)),
        "bv": winit(ks[10], (1, D)),
        "bo": winit(ks[11], (1, D)),
    }

    prep = prepare_cross_attention_params(params, nhead=nhead)   # one-time, hoisted out of forward

    out = cross_attention_pallas(x, mem, x_pe, mem_pe, prep)
    out = jax.block_until_ready(out)

    ref = cross_attention_ref(x, mem, x_pe, mem_pe, params, nhead=nhead)
    np.testing.assert_allclose(np.asarray(out), np.asarray(ref), rtol=2e-2, atol=2e-2)

    # need_weights=False => attention weights are None (not materialized).
    weights = None  # TODO(synk): expose per-head attention weights if need_weights=True is required.

    print("KERNEL_OK")
</pallas_src>

<mosaic_0001>
module attributes {stable_mosaic.version = 11 : i64} {
  func.func @_cross_attn_kernel(%arg0: i32, %arg1: memref<32x8x32xf32, #tpu.memory_space<vmem>>, %arg2: memref<32x8x32xf32, #tpu.memory_space<vmem>>, %arg3: memref<32x8x32xf32, #tpu.memory_space<vmem>>, %arg4: memref<32x8x32xf32, #tpu.memory_space<vmem>>, %arg5: memref<4x32xf32, #tpu.memory_space<vmem>>, %arg6: memref<4x32x32xbf16, #tpu.memory_space<vmem>>, %arg7: memref<32x8x32xf32, #tpu.memory_space<vmem>>) attributes {dimension_semantics = [#tpu.dimension_semantics<parallel>], iteration_bounds = array<i64: 1>, scalar_prefetch = 0 : i64, scratch_operands = 0 : i64, tpu.core_type = #tpu.core_type<tc>, window_params = [{transform_indices = @transform_0, window_bounds = array<i64: 32, 8, 32>}, {transform_indices = @transform_1, window_bounds = array<i64: 32, 8, 32>}, {transform_indices = @transform_2, window_bounds = array<i64: 32, 8, 32>}, {transform_indices = @transform_3, window_bounds = array<i64: 32, 8, 32>}, {pipeline_mode = #tpu.pipeline_mode<synchronous>, transform_indices = @transform_4, window_bounds = array<i64: 4, 32>}, {pipeline_mode = #tpu.pipeline_mode<synchronous>, transform_indices = @transform_5, window_bounds = array<i64: 4, 32, 32>}, {transform_indices = @transform_6, window_bounds = array<i64: 32, 8, 32>}]} {
    %c0 = arith.constant 0 : index
    %c0_0 = arith.constant 0 : index
    %0 = vector.load %arg5[%c0, %c0_0] : memref<4x32xf32, #tpu.memory_space<vmem>>, vector<1x32xf32>
    %c1 = arith.constant 1 : index
    %c0_1 = arith.constant 0 : index
    %1 = vector.load %arg5[%c1, %c0_1] : memref<4x32xf32, #tpu.memory_space<vmem>>, vector<1x32xf32>
    %c2 = arith.constant 2 : index
    %c0_2 = arith.constant 0 : index
    %2 = vector.load %arg5[%c2, %c0_2] : memref<4x32xf32, #tpu.memory_space<vmem>>, vector<1x32xf32>
    %c3 = arith.constant 3 : index
    %c0_3 = arith.constant 0 : index
    %3 = vector.load %arg5[%c3, %c0_3] : memref<4x32xf32, #tpu.memory_space<vmem>>, vector<1x32xf32>
    %c0_4 = arith.constant 0 : index
    %c0_5 = arith.constant 0 : index
    %c0_6 = arith.constant 0 : index
    %4 = vector.load %arg1[%c0_4, %c0_5, %c0_6] : memref<32x8x32xf32, #tpu.memory_space<vmem>>, vector<32x8x32xf32>
    %5 = vector.shape_cast %4 : vector<32x8x32xf32> to vector<256x32xf32>
    %cst = arith.constant dense<0.000000e+00> : vector<256xf32>
    %6 = vector.multi_reduction <add>, %5, %cst [1] : vector<256x32xf32> to vector<256xf32>
    %7 = vector.shape_cast %6 : vector<256xf32> to vector<256x1xf32>
    %cst_7 = arith.constant 3.200000e+01 : f32
    %8 = vector.broadcast %cst_7 : f32 to vector<256x1xf32>
    %9 = arith.divf %7, %8 : vector<256x1xf32>
    %10 = vector.broadcast %9 : vector<256x1xf32> to vector<256x32xf32>
    %11 = arith.subf %5, %10 : vector<256x32xf32>
    %12 = arith.mulf %11, %11 : vector<256x32xf32>
    %cst_8 = arith.constant dense<0.000000e+00> : vector<256xf32>
    %13 = vector.multi_reduction <add>, %12, %cst_8 [1] : vector<256x32xf32> to vector<256xf32>
    %14 = vector.shape_cast %13 : vector<256xf32> to vector<256x1xf32>
    %cst_9 = arith.constant 3.200000e+01 : f32
    %15 = vector.broadcast %cst_9 : f32 to vector<256x1xf32>
    %16 = arith.divf %14, %15 : vector<256x1xf32>
    %17 = vector.broadcast %9 : vector<256x1xf32> to vector<256x32xf32>
    %18 = arith.subf %5, %17 : vector<256x32xf32>
    %cst_10 = arith.constant 9.99999974E-6 : f32
    %19 = vector.broadcast %cst_10 : f32 to vector<256x1xf32>
    %20 = arith.addf %16, %19 : vector<256x1xf32>
    %21 = math.rsqrt %20 : vector<256x1xf32>
    %22 = vector.broadcast %21 : vector<256x1xf32> to vector<256x32xf32>
    %23 = arith.mulf %18, %22 : vector<256x32xf32>
    %24 = vector.broadcast %0 : vector<1x32xf32> to vector<256x32xf32>
    %25 = arith.mulf %23, %24 : vector<256x32xf32>
    %26 = vector.broadcast %1 : vector<1x32xf32> to vector<256x32xf32>
    %27 = arith.addf %25, %26 : vector<256x32xf32>
    %c0_11 = arith.constant 0 : index
    %c0_12 = arith.constant 0 : index
    %c0_13 = arith.constant 0 : index
    %28 = vector.load %arg2[%c0_11, %c0_12, %c0_13] : memref<32x8x32xf32, #tpu.memory_space<vmem>>, vector<32x8x32xf32>
    %29 = vector.shape_cast %28 : vector<32x8x32xf32> to vector<256x32xf32>
    %c0_14 = arith.constant 0 : index
    %c0_15 = arith.constant 0 : index
    %c0_16 = arith.constant 0 : index
    %30 = vector.load %arg3[%c0_14, %c0_15, %c0_16] : memref<32x8x32xf32, #tpu.memory_space<vmem>>, vector<32x8x32xf32>
    %31 = vector.shape_cast %30 : vector<32x8x32xf32> to vector<256x32xf32>
    %c0_17 = arith.constant 0 : index
    %c0_18 = arith.constant 0 : index
    %c0_19 = arith.constant 0 : index
    %32 = vector.load %arg4[%c0_17, %c0_18, %c0_19] : memref<32x8x32xf32, #tpu.memory_space<vmem>>, vector<32x8x32xf32>
    %33 = vector.shape_cast %32 : vector<32x8x32xf32> to vector<256x32xf32>
    %34 = arith.addf %27, %29 : vector<256x32xf32>
    %35 = arith.truncf %34 : vector<256x32xf32> to vector<256x32xbf16>
    %36 = arith.addf %31, %33 : vector<256x32xf32>
    %37 = arith.truncf %36 : vector<256x32xf32> to vector<256x32xbf16>
    %38 = arith.truncf %31 : vector<256x32xf32> to vector<256x32xbf16>
    %c0_20 = arith.constant 0 : index
    %c0_21 = arith.constant 0 : index
    %c0_22 = arith.constant 0 : index
    %39 = vector.load %arg6[%c0_20, %c0_21, %c0_22] : memref<4x32x32xbf16, #tpu.memory_space<vmem>>, vector<1x32x32xbf16>
    %40 = vector.shape_cast %39 : vector<1x32x32xbf16> to vector<32x32xbf16>
    %c1_23 = arith.constant 1 : index
    %c0_24 = arith.constant 0 : index
    %c0_25 = arith.constant 0 : index
    %41 = vector.load %arg6[%c1_23, %c0_24, %c0_25] : memref<4x32x32xbf16, #tpu.memory_space<vmem>>, vector<1x32x32xbf16>
    %42 = vector.shape_cast %41 : vector<1x32x32xbf16> to vector<32x32xbf16>
    %c2_26 = arith.constant 2 : index
    %c0_27 = arith.constant 0 : index
    %c0_28 = arith.constant 0 : index
    %43 = vector.load %arg6[%c2_26, %c0_27, %c0_28] : memref<4x32x32xbf16, #tpu.memory_space<vmem>>, vector<1x32x32xbf16>
    %44 = vector.shape_cast %43 : vector<1x32x32xbf16> to vector<32x32xbf16>
    %c3_29 = arith.constant 3 : index
    %c0_30 = arith.constant 0 : index
    %c0_31 = arith.constant 0 : index
    %45 = vector.load %arg6[%c3_29, %c0_30, %c0_31] : memref<4x32x32xbf16, #tpu.memory_space<vmem>>, vector<1x32x32xbf16>
    %46 = vector.shape_cast %45 : vector<1x32x32xbf16> to vector<32x32xbf16>
    %cst_32 = arith.constant dense<0.000000e+00> : vector<256x32xf32>
    %47 = tpu.matmul %35, %40, %cst_32 {dimension_numbers = #tpu.dot_dimension_numbers<[1], [0], [0], [1], [0, 0, 1, 1], [], []>} : vector<256x32xbf16>, vector<32x32xbf16>, vector<256x32xf32> -> vector<256x32xf32>
    %48 = vector.broadcast %2 : vector<1x32xf32> to vector<256x32xf32>
    %49 = arith.addf %47, %48 : vector<256x32xf32>
    %cst_33 = arith.constant dense<0.000000e+00> : vector<256x32xf32>
    %50 = tpu.matmul %37, %42, %cst_33 {dimension_numbers = #tpu.dot_dimension_numbers<[1], [0], [0], [1], [0, 0, 1, 1], [], []>} : vector<256x32xbf16>, vector<32x32xbf16>, vector<256x32xf32> -> vector<256x32xf32>
    %cst_34 = arith.constant dense<0.000000e+00> : vector<256x32xf32>
    %51 = tpu.matmul %38, %44, %cst_34 {dimension_numbers = #tpu.dot_dimension_numbers<[1], [0], [0], [1], [0, 0, 1, 1], [], []>} : vector<256x32xbf16>, vector<32x32xbf16>, vector<256x32xf32> -> vector<256x32xf32>
    %52 = arith.truncf %49 : vector<256x32xf32> to vector<256x32xbf16>
    %53 = arith.truncf %50 : vector<256x32xf32> to vector<256x32xbf16>
    %54 = arith.truncf %51 : vector<256x32xf32> to vector<256x32xbf16>
    %55 = tpu.iota {dimensions = array<i32: 0>} : vector<256x1xi32>
    %56 = arith.sitofp %55 : vector<256x1xi32> to vector<256x1xf32>
    %cst_35 = arith.constant 5.000000e-01 : f32
    %57 = vector.broadcast %cst_35 : f32 to vector<256x1xf32>
    %58 = arith.addf %56, %57 : vector<256x1xf32>
    %cst_36 = arith.constant 1.250000e-01 : f32
    %59 = vector.broadcast %cst_36 : f32 to vector<256x1xf32>
    %60 = arith.mulf %58, %59 : vector<256x1xf32>
    %61 = math.floor %60 : vector<256x1xf32>
    %62 = tpu.iota {dimensions = array<i32: 1>} : vector<1x256xi32>
    %63 = arith.sitofp %62 : vector<1x256xi32> to vector<1x256xf32>
    %cst_37 = arith.constant 5.000000e-01 : f32
    %64 = vector.broadcast %cst_37 : f32 to vector<1x256xf32>
    %65 = arith.addf %63, %64 : vector<1x256xf32>
    %cst_38 = arith.constant 1.250000e-01 : f32
    %66 = vector.broadcast %cst_38 : f32 to vector<1x256xf32>
    %67 = arith.mulf %65, %66 : vector<1x256xf32>
    %68 = math.floor %67 : vector<1x256xf32>
    %69 = vector.broadcast %61 : vector<256x1xf32> to vector<256x256xf32>
    %70 = vector.broadcast %68 : vector<1x256xf32> to vector<256x256xf32>
    %71 = arith.cmpf oeq, %69, %70 : vector<256x256xf32>
    %cst_39 = arith.constant 0.000000e+00 : f32
    %cst_40 = arith.constant -1.000000e+30 : f32
    %72 = vector.broadcast %cst_39 : f32 to vector<256x256xf32>
    %73 = vector.broadcast %cst_40 : f32 to vector<256x256xf32>
    %74 = arith.select %71, %72, %73 : vector<256x256xi1>, vector<256x256xf32>
    %75 = vector.extract_strided_slice %52 {offsets = [0, 0], sizes = [256, 8], strides = [1, 1]} : vector<256x32xbf16> to vector<256x8xbf16>
    %76 = vector.extract_strided_slice %53 {offsets = [0, 0], sizes = [256, 8], strides = [1, 1]} : vector<256x32xbf16> to vector<256x8xbf16>
    %77 = vector.extract_strided_slice %54 {offsets = [0, 0], sizes = [256, 8], strides = [1, 1]} : vector<256x32xbf16> to vector<256x8xbf16>
    %cst_41 = arith.constant dense<0.000000e+00> : vector<256x256xf32>
    %78 = tpu.matmul %75, %76, %cst_41 {dimension_numbers = #tpu.dot_dimension_numbers<[1], [1], [0], [0], [0, 0, 1, 0], [], []>} : vector<256x8xbf16>, vector<256x8xbf16>, vector<256x256xf32> -> vector<256x256xf32>
    %79 = arith.addf %78, %74 : vector<256x256xf32>
    %cst_42 = arith.constant dense<0xFF800000> : vector<256xf32>
    %80 = vector.multi_reduction <maximumf>, %79, %cst_42 [1] : vector<256x256xf32> to vector<256xf32>
    %81 = vector.shape_cast %80 : vector<256xf32> to vector<256x1xf32>
    %82 = vector.broadcast %81 : vector<256x1xf32> to vector<256x256xf32>
    %83 = arith.subf %79, %82 : vector<256x256xf32>
    %84 = math.exp %83 : vector<256x256xf32>
    %cst_43 = arith.constant dense<0.000000e+00> : vector<256xf32>
    %85 = vector.multi_reduction <add>, %84, %cst_43 [1] : vector<256x256xf32> to vector<256xf32>
    %86 = vector.shape_cast %85 : vector<256xf32> to vector<256x1xf32>
    %87 = tpu.reciprocal %86 {approx = true} : vector<256x1xf32> -> vector<256x1xf32>
    %88 = vector.broadcast %87 : vector<256x1xf32> to vector<256x256xf32>
    %89 = arith.mulf %84, %88 : vector<256x256xf32>
    %90 = arith.truncf %89 : vector<256x256xf32> to vector<256x256xbf16>
    %cst_44 = arith.constant dense<0.000000e+00> : vector<256x8xf32>
    %91 = tpu.matmul %90, %77, %cst_44 {dimension_numbers = #tpu.dot_dimension_numbers<[1], [0], [0], [1], [0, 0, 1, 1], [], []>} : vector<256x256xbf16>, vector<256x8xbf16>, vector<256x8xf32> -> vector<256x8xf32>
    %92 = vector.extract_strided_slice %52 {offsets = [0, 8], sizes = [256, 8], strides = [1, 1]} : vector<256x32xbf16> to vector<256x8xbf16>
    %93 = vector.extract_strided_slice %53 {offsets = [0, 8], sizes = [256, 8], strides = [1, 1]} : vector<256x32xbf16> to vector<256x8xbf16>
    %94 = vector.extract_strided_slice %54 {offsets = [0, 8], sizes = [256, 8], strides = [1, 1]} : vector<256x32xbf16> to vector<256x8xbf16>
    %cst_45 = arith.constant dense<0.000000e+00> : vector<256x256xf32>
    %95 = tpu.matmul %92, %93, %cst_45 {dimension_numbers = #tpu.dot_dimension_numbers<[1], [1], [0], [0], [0, 0, 1, 0], [], []>} : vector<256x8xbf16>, vector<256x8xbf16>, vector<256x256xf32> -> vector<256x256xf32>
    %96 = arith.addf %95, %74 : vector<256x256xf32>
    %cst_46 = arith.constant dense<0xFF800000> : vector<256xf32>
    %97 = vector.multi_reduction <maximumf>, %96, %cst_46 [1] : vector<256x256xf32> to vector<256xf32>
    %98 = vector.shape_cast %97 : vector<256xf32> to vector<256x1xf32>
    %99 = vector.broadcast %98 : vector<256x1xf32> to vector<256x256xf32>
    %100 = arith.subf %96, %99 : vector<256x256xf32>
    %101 = math.exp %100 : vector<256x256xf32>
    %cst_47 = arith.constant dense<0.000000e+00> : vector<256xf32>
    %102 = vector.multi_reduction <add>, %101, %cst_47 [1] : vector<256x256xf32> to vector<256xf32>
    %103 = vector.shape_cast %102 : vector<256xf32> to vector<256x1xf32>
    %104 = tpu.reciprocal %103 {approx = true} : vector<256x1xf32> -> vector<256x1xf32>
    %105 = vector.broadcast %104 : vector<256x1xf32> to vector<256x256xf32>
    %106 = arith.mulf %101, %105 : vector<256x256xf32>
    %107 = arith.truncf %106 : vector<256x256xf32> to vector<256x256xbf16>
    %cst_48 = arith.constant dense<0.000000e+00> : vector<256x8xf32>
    %108 = tpu.matmul %107, %94, %cst_48 {dimension_numbers = #tpu.dot_dimension_numbers<[1], [0], [0], [1], [0, 0, 1, 1], [], []>} : vector<256x256xbf16>, vector<256x8xbf16>, vector<256x8xf32> -> vector<256x8xf32>
    %109 = vector.extract_strided_slice %52 {offsets = [0, 16], sizes = [256, 8], strides = [1, 1]} : vector<256x32xbf16> to vector<256x8xbf16>
    %110 = vector.extract_strided_slice %53 {offsets = [0, 16], sizes = [256, 8], strides = [1, 1]} : vector<256x32xbf16> to vector<256x8xbf16>
    %111 = vector.extract_strided_slice %54 {offsets = [0, 16], sizes = [256, 8], strides = [1, 1]} : vector<256x32xbf16> to vector<256x8xbf16>
    %cst_49 = arith.constant dense<0.000000e+00> : vector<256x256xf32>
    %112 = tpu.matmul %109, %110, %cst_49 {dimension_numbers = #tpu.dot_dimension_numbers<[1], [1], [0], [0], [0, 0, 1, 0], [], []>} : vector<256x8xbf16>, vector<256x8xbf16>, vector<256x256xf32> -> vector<256x256xf32>
    %113 = arith.addf %112, %74 : vector<256x256xf32>
    %cst_50 = arith.constant dense<0xFF800000> : vector<256xf32>
    %114 = vector.multi_reduction <maximumf>, %113, %cst_50 [1] : vector<256x256xf32> to vector<256xf32>
    %115 = vector.shape_cast %114 : vector<256xf32> to vector<256x1xf32>
    %116 = vector.broadcast %115 : vector<256x1xf32> to vector<256x256xf32>
    %117 = arith.subf %113, %116 : vector<256x256xf32>
    %118 = math.exp %117 : vector<256x256xf32>
    %cst_51 = arith.constant dense<0.000000e+00> : vector<256xf32>
    %119 = vector.multi_reduction <add>, %118, %cst_51 [1] : vector<256x256xf32> to vector<256xf32>
    %120 = vector.shape_cast %119 : vector<256xf32> to vector<256x1xf32>
    %121 = tpu.reciprocal %120 {approx = true} : vector<256x1xf32> -> vector<256x1xf32>
    %122 = vector.broadcast %121 : vector<256x1xf32> to vector<256x256xf32>
    %123 = arith.mulf %118, %122 : vector<256x256xf32>
    %124 = arith.truncf %123 : vector<256x256xf32> to vector<256x256xbf16>
    %cst_52 = arith.constant dense<0.000000e+00> : vector<256x8xf32>
    %125 = tpu.matmul %124, %111, %cst_52 {dimension_numbers = #tpu.dot_dimension_numbers<[1], [0], [0], [1], [0, 0, 1, 1], [], []>} : vector<256x256xbf16>, vector<256x8xbf16>, vector<256x8xf32> -> vector<256x8xf32>
    %126 = vector.extract_strided_slice %52 {offsets = [0, 24], sizes = [256, 8], strides = [1, 1]} : vector<256x32xbf16> to vector<256x8xbf16>
    %127 = vector.extract_strided_slice %53 {offsets = [0, 24], sizes = [256, 8], strides = [1, 1]} : vector<256x32xbf16> to vector<256x8xbf16>
    %128 = vector.extract_strided_slice %54 {offsets = [0, 24], sizes = [256, 8], strides = [1, 1]} : vector<256x32xbf16> to vector<256x8xbf16>
    %cst_53 = arith.constant dense<0.000000e+00> : vector<256x256xf32>
    %129 = tpu.matmul %126, %127, %cst_53 {dimension_numbers = #tpu.dot_dimension_numbers<[1], [1], [0], [0], [0, 0, 1, 0], [], []>} : vector<256x8xbf16>, vector<256x8xbf16>, vector<256x256xf32> -> vector<256x256xf32>
    %130 = arith.addf %129, %74 : vector<256x256xf32>
    %cst_54 = arith.constant dense<0xFF800000> : vector<256xf32>
    %131 = vector.multi_reduction <maximumf>, %130, %cst_54 [1] : vector<256x256xf32> to vector<256xf32>
    %132 = vector.shape_cast %131 : vector<256xf32> to vector<256x1xf32>
    %133 = vector.broadcast %132 : vector<256x1xf32> to vector<256x256xf32>
    %134 = arith.subf %130, %133 : vector<256x256xf32>
    %135 = math.exp %134 : vector<256x256xf32>
    %cst_55 = arith.constant dense<0.000000e+00> : vector<256xf32>
    %136 = vector.multi_reduction <add>, %135, %cst_55 [1] : vector<256x256xf32> to vector<256xf32>
    %137 = vector.shape_cast %136 : vector<256xf32> to vector<256x1xf32>
    %138 = tpu.reciprocal %137 {approx = true} : vector<256x1xf32> -> vector<256x1xf32>
    %139 = vector.broadcast %138 : vector<256x1xf32> to vector<256x256xf32>
    %140 = arith.mulf %135, %139 : vector<256x256xf32>
    %141 = arith.truncf %140 : vector<256x256xf32> to vector<256x256xbf16>
    %cst_56 = arith.constant dense<0.000000e+00> : vector<256x8xf32>
    %142 = tpu.matmul %141, %128, %cst_56 {dimension_numbers = #tpu.dot_dimension_numbers<[1], [0], [0], [1], [0, 0, 1, 1], [], []>} : vector<256x256xbf16>, vector<256x8xbf16>, vector<256x8xf32> -> vector<256x8xf32>
    %143 = tpu.concatenate %91, %108, %125, %142 in 1 : vector<256x8xf32>, vector<256x8xf32>, vector<256x8xf32>, vector<256x8xf32> -> vector<256x32xf32>
    %144 = arith.truncf %143 : vector<256x32xf32> to vector<256x32xbf16>
    %cst_57 = arith.constant dense<0.000000e+00> : vector<256x32xf32>
    %145 = tpu.matmul %144, %46, %cst_57 {dimension_numbers = #tpu.dot_dimension_numbers<[1], [0], [0], [1], [0, 0, 1, 1], [], []>} : vector<256x32xbf16>, vector<32x32xbf16>, vector<256x32xf32> -> vector<256x32xf32>
    %146 = vector.broadcast %3 : vector<1x32xf32> to vector<256x32xf32>
    %147 = arith.addf %145, %146 : vector<256x32xf32>
    %148 = arith.addf %27, %147 : vector<256x32xf32>
    %149 = vector.shape_cast %148 : vector<256x32xf32> to vector<32x8x32xf32>
    %c0_58 = arith.constant 0 : index
    %c0_59 = arith.constant 0 : index
    %c0_60 = arith.constant 0 : index
    %150 = vector.load %arg7[%c0_58, %c0_59, %c0_60] : memref<32x8x32xf32, #tpu.memory_space<vmem>>, vector<32x8x32xf32>
    tpu.vector_store %arg7[%c0_58, %c0_59, %c0_60], %149 {strides = array<i32>} : memref<32x8x32xf32, #tpu.memory_space<vmem>>, vector<32x8x32xf32>,
    return
  }
  func.func @transform_0(%arg0: i32) -> (i32, i32, i32) {
    %c0_i32 = arith.constant 0 : i32
    %c0_i32_0 = arith.constant 0 : i32
    %c0_i32_1 = arith.constant 0 : i32
    return %arg0, %c0_i32, %c0_i32_0 : i32, i32, i32
  }
  func.func @transform_1(%arg0: i32) -> (i32, i32, i32) {
    %c0_i32 = arith.constant 0 : i32
    %c0_i32_0 = arith.constant 0 : i32
    %c0_i32_1 = arith.constant 0 : i32
    return %arg0, %c0_i32, %c0_i32_0 : i32, i32, i32
  }
  func.func @transform_2(%arg0: i32) -> (i32, i32, i32) {
    %c0_i32 = arith.constant 0 : i32
    %c0_i32_0 = arith.constant 0 : i32
    %c0_i32_1 = arith.constant 0 : i32
    return %arg0, %c0_i32, %c0_i32_0 : i32, i32, i32
  }
  func.func @transform_3(%arg0: i32) -> (i32, i32, i32) {
    %c0_i32 = arith.constant 0 : i32
    %c0_i32_0 = arith.constant 0 : i32
    %c0_i32_1 = arith.constant 0 : i32
    return %arg0, %c0_i32, %c0_i32_0 : i32, i32, i32
  }
  func.func @transform_4(%arg0: i32) -> (i32, i32) {
    %c0_i32 = arith.constant 0 : i32
    %c0_i32_0 = arith.constant 0 : i32
    %c0_i32_1 = arith.constant 0 : i32
    return %c0_i32, %c0_i32_0 : i32, i32
  }
  func.func @transform_5(%arg0: i32) -> (i32, i32, i32) {
    %c0_i32 = arith.constant 0 : i32
    %c0_i32_0 = arith.constant 0 : i32
    %c0_i32_1 = arith.constant 0 : i32
    %c0_i32_2 = arith.constant 0 : i32
    return %c0_i32, %c0_i32_0, %c0_i32_1 : i32, i32, i32
  }
  func.func @transform_6(%arg0: i32) -> (i32, i32, i32) {
    %c0_i32 = arith.constant 0 : i32
    %c0_i32_0 = arith.constant 0 : i32
    %c0_i32_1 = arith.constant 0 : i32
    return %arg0, %c0_i32, %c0_i32_0 : i32, i32, i32
  }
}

</mosaic_0001>

<llo_original>
// kernel: tpu_custom_call.1
$region0: #{tpu_custom_call.1}
  #allocation0 [shape = 'u32[]', space=smem, size = 0x4, offset = 0x4, fixed_abs, tag = 'smem constant byte address 0x4 - core index']
  #allocation1 [shape = 'u32[144,128]{1,0:T(1,128)}', space=vmem, size = 0x12000, scoped, tag = 'internal scratch']
  %s0 = inlined_call_operand.hbm [shape: f32[32,8,32], index: 0, kind: input, shape index: {}]
  %s1 = inlined_call_operand.hbm [shape: f32[32,8,32], index: 1, kind: input, shape index: {}]
  %s2 = inlined_call_operand.hbm [shape: f32[32,8,32], index: 2, kind: input, shape index: {}]
  %s3 = inlined_call_operand.hbm [shape: f32[32,8,32], index: 3, kind: input, shape index: {}]
  %s4 = inlined_call_operand.vmem [shape: f32[4,32], index: 4, kind: input, shape index: {}]
  %s5 = inlined_call_operand.hbm [shape: bf16[4,32,32], index: 5, kind: input, shape index: {}]
  %s6 = inlined_call_operand.hbm [shape: f32[32,8,32], index: 6, kind: output, shape index: {}]
  %s7 = sld [smem:[#allocation0]]
  $region54: #{tpu_custom_call.1} parent=0
    _
  %s9 = ssub.s32 1, %s7
  %s10 = scalar_select 0, %s9, %s7
  $region1: #{tpu_custom_call.1} parent=0
    #allocation2 [shape = 'u8[131072]{0}', space=vmem, size = 0x20000, scoped, tag = 'input window, operand 0, single buffered']
    #allocation3 [shape = 's32[1]{0}', space=sflag, size = 0x4, scoped, tag = 'scoped memory for tpu_custom_call.1']
    #allocation4 [shape = 's32[1]{0}', space=sflag, size = 0x4, scoped, tag = 'scoped memory for tpu_custom_call.1']
    #allocation5 [shape = 'u8[131072]{0}', space=vmem, size = 0x20000, scoped, tag = 'input window, operand 1, single buffered']
    #allocation6 [shape = 's32[1]{0}', space=sflag, size = 0x4, scoped, tag = 'scoped memory for tpu_custom_call.1']
    #allocation7 [shape = 'u8[131072]{0}', space=vmem, size = 0x20000, scoped, tag = 'input window, operand 2, single buffered']
    #allocation8 [shape = 'u8[131072]{0}', space=vmem, size = 0x20000, scoped, tag = 'input window, operand 3, single buffered']
    #allocation9 [shape = 's32[1]{0}', space=sflag, size = 0x4, scoped, tag = 'scoped memory for tpu_custom_call.1']
    #allocation10 [shape = 'u8[32768]{0}', space=vmem, size = 0x8000, scoped, tag = 'input window, operand 5, single buffered']
    #allocation11 [shape = 'u8[131072]{0}', space=vmem, size = 0x20000, scoped, tag = 'output window, operand 0, single buffered']
    %11 = vsyncpa [#allocation3], 0
    %12 = vsyncpa [#allocation6], 0
    %13 = vsyncpa [#allocation9], 0
    %14 = vsyncpa [#allocation4], 0
    // Predicated region
    $region2: #{tpu_custom_call.1} parent=1 // pred_check
      _
    $region3: #{tpu_custom_call.1} parent=1 // pred_check_branch
      %16 = sbr.rel (0) target = $region5
    $region4: #{tpu_custom_call.1} parent=1 // pred_region
      %s18 = ssub.s32 4096, 4096
      %19 = vsyncadd [#allocation3], %s18
      %s20 = sshll.u32 [#allocation2], 4
      %s21 = int_to_ptr.vmem [resolvable:$true] %s20
      %26 = dma.hbm_to_vmem [thread:$0]  %s0, 4096, %s21, [#allocation3], 128, 128, 8
    $region5: #{tpu_custom_call.1} parent=1 // pred_fallthru
      _
    // Predicated region
    $region6: #{tpu_custom_call.1} parent=1 // pred_check
      _
    $region7: #{tpu_custom_call.1} parent=1 // pred_check_branch
      %28 = sbr.rel (0) target = $region9
    $region8: #{tpu_custom_call.1} parent=1 // pred_region
      %s30 = ssub.s32 4096, 4096
      %31 = vsyncadd [#allocation6], %s30
      %s32 = sshll.u32 [#allocation5], 4
      %s33 = int_to_ptr.vmem [resolvable:$true] %s32
      %38 = dma.hbm_to_vmem [thread:$0]  %s1, 4096, %s33, [#allocation6], 128, 128, 8
    $region9: #{tpu_custom_call.1} parent=1 // pred_fallthru
      _
    // Predicated region
    $region10: #{tpu_custom_call.1} parent=1 // pred_check
      _
    $region11: #{tpu_custom_call.1} parent=1 // pred_check_branch
      %40 = sbr.rel (0) target = $region13
    $region12: #{tpu_custom_call.1} parent=1 // pred_region
      %s42 = ssub.s32 4096, 4096
      %43 = vsyncadd [#allocation6], %s42
      %s44 = sshll.u32 [#allocation7], 4
      %s45 = int_to_ptr.vmem [resolvable:$true] %s44
      %50 = dma.hbm_to_vmem [thread:$0]  %s2, 4096, %s45, [#allocation6], 128, 128, 8
    $region13: #{tpu_custom_call.1} parent=1 // pred_fallthru
      _
    // Predicated region
    $region14: #{tpu_custom_call.1} parent=1 // pred_check
      _
    $region15: #{tpu_custom_call.1} parent=1 // pred_check_branch
      %52 = sbr.rel (0) target = $region17
    $region16: #{tpu_custom_call.1} parent=1 // pred_region
      %s54 = ssub.s32 4096, 4096
      %55 = vsyncadd [#allocation9], %s54
      %s56 = sshll.u32 [#allocation8], 4
      %s57 = int_to_ptr.vmem [resolvable:$true] %s56
      %62 = dma.hbm_to_vmem [thread:$0]  %s3, 4096, %s57, [#allocation9], 128, 128, 8
    $region17: #{tpu_custom_call.1} parent=1 // pred_fallthru
      _
    // Predicated region
    $region18: #{tpu_custom_call.1} parent=1 // pred_check
      _
    $region19: #{tpu_custom_call.1} parent=1 // pred_check_branch
      %64 = sbr.rel (0) target = $region21
    $region20: #{tpu_custom_call.1} parent=1 // pred_region
      _
    $region21: #{tpu_custom_call.1} parent=1 // pred_fallthru
      _
    // Predicated region
    $region22: #{tpu_custom_call.1} parent=1 // pred_check
      _
    $region23: #{tpu_custom_call.1} parent=1 // pred_check_branch
      %66 = sbr.rel (0) target = $region25
    $region24: #{tpu_custom_call.1} parent=1 // pred_region
      %s68 = ssub.s32 1024, 1024
      %69 = vsyncadd [#allocation9], %s68
      %s70 = sshll.u32 [#allocation10], 4
      %s71 = int_to_ptr.vmem [resolvable:$true] %s70
      %76 = dma.hbm_to_vmem [thread:$0]  %s5, 1024, %s71, [#allocation9], 64, 64, 4
    $region25: #{tpu_custom_call.1} parent=1 // pred_fallthru
      _
    // Predicated region
    $region26: #{tpu_custom_call.1} parent=1 // pred_check
      _
    $region27: #{tpu_custom_call.1} parent=1 // pred_check_branch
      %78 = sbr.rel (0) target = $region29
    $region28: #{tpu_custom_call.1} parent=1 // pred_region
      %79 = dma.done [#allocation3], 4096
    $region29: #{tpu_custom_call.1} parent=1 // pred_fallthru
      _
    // Predicated region
    $region30: #{tpu_custom_call.1} parent=1 // pred_check
      _
    $region31: #{tpu_custom_call.1} parent=1 // pred_check_branch
      %81 = sbr.rel (0) target = $region33
    $region32: #{tpu_custom_call.1} parent=1 // pred_region
      %82 = dma.done [#allocation6], 4096
    $region33: #{tpu_custom_call.1} parent=1 // pred_fallthru
      _
    // Predicated region
    $region34: #{tpu_custom_call.1} parent=1 // pred_check
      _
    $region35: #{tpu_custom_call.1} parent=1 // pred_check_branch
      %84 = sbr.rel (0) target = $region37
    $region36: #{tpu_custom_call.1} parent=1 // pred_region
      %85 = dma.done [#allocation6], 4096
    $region37: #{tpu_custom_call.1} parent=1 // pred_fallthru
      _
    // Predicated region
    $region38: #{tpu_custom_call.1} parent=1 // pred_check
      _
    $region39: #{tpu_custom_call.1} parent=1 // pred_check_branch
      %87 = sbr.rel (0) target = $region41
    $region40: #{tpu_custom_call.1} parent=1 // pred_region
      %88 = dma.done [#allocation9], 4096
    $region41: #{tpu_custom_call.1} parent=1 // pred_fallthru
      _
    // Predicated region
    $region42: #{tpu_custom_call.1} parent=1 // pred_check
      _
    $region43: #{tpu_custom_call.1} parent=1 // pred_check_branch
      %90 = sbr.rel (0) target = $region45
    $region44: #{tpu_custom_call.1} parent=1 // pred_region
      %91 = dma.done [#allocation9], 1024
    $region45: #{tpu_custom_call.1} parent=1 // pred_fallthru
      _
    %v93 = vld [vmem:[%s4] sm:$0x1]
    %v94 = vld [vmem:[%s4 + $0x1] sm:$0x1]
    %v95 = vld [vmem:[%s4 + $0x2] sm:$0x1]
    %v96 = vld [vmem:[%s4 + $0x3] sm:$0x1]
    %v97 = vld [vmem:[#allocation2] sm:$0xff]
    %v98 = vld [vmem:[#allocation2 + $0x8] sm:$0xff]
    %v99 = vld [vmem:[#allocation2 + $0x10] sm:$0xff]
    %v100 = vld [vmem:[#allocation2 + $0x18] sm:$0xff]
    %v101 = vld [vmem:[#allocation2 + $0x20] sm:$0xff]
    %v102 = vld [vmem:[#allocation2 + $0x28] sm:$0xff]
    %v103 = vld [vmem:[#allocation2 + $0x30] sm:$0xff]
    %v104 = vld [vmem:[#allocation2 + $0x38] sm:$0xff]
    %v105 = vld [vmem:[#allocation2 + $0x40] sm:$0xff]
    %v106 = vld [vmem:[#allocation2 + $0x48] sm:$0xff]
    %v107 = vld [vmem:[#allocation2 + $0x50] sm:$0xff]
    %v108 = vld [vmem:[#allocation2 + $0x58] sm:$0xff]
    %v109 = vld [vmem:[#allocation2 + $0x60] sm:$0xff]
    %v110 = vld [vmem:[#allocation2 + $0x68] sm:$0xff]
    %v111 = vld [vmem:[#allocation2 + $0x70] sm:$0xff]
    %v112 = vld [vmem:[#allocation2 + $0x78] sm:$0xff]
    %v113 = vld [vmem:[#allocation2 + $0x80] sm:$0xff]
    %v114 = vld [vmem:[#allocation2 + $0x88] sm:$0xff]
    %v115 = vld [vmem:[#allocation2 + $0x90] sm:$0xff]
    %v116 = vld [vmem:[#allocation2 + $0x98] sm:$0xff]
    %v117 = vld [vmem:[#allocation2 + $0xa0] sm:$0xff]
    %v118 = vld [vmem:[#allocation2 + $0xa8] sm:$0xff]
    %v119 = vld [vmem:[#allocation2 + $0xb0] sm:$0xff]
    %v120 = vld [vmem:[#allocation2 + $0xb8] sm:$0xff]
    %v121 = vld [vmem:[#allocation2 + $0xc0] sm:$0xff]
    %v122 = vld [vmem:[#allocation2 + $0xc8] sm:$0xff]
    %v123 = vld [vmem:[#allocation2 + $0xd0] sm:$0xff]
    %v124 = vld [vmem:[#allocation2 + $0xd8] sm:$0xff]
    %v125 = vld [vmem:[#allocation2 + $0xe0] sm:$0xff]
    %v126 = vld [vmem:[#allocation2 + $0xe8] sm:$0xff]
    %v127 = vld [vmem:[#allocation2 + $0xf0] sm:$0xff]
    %v128 = vld [vmem:[#allocation2 + $0xf8] sm:$0xff]
    %vm129 = vcmask 261120
    %v130 = vsel %vm129, %v97, 0.0
    %131 = vadd.xlane.f32.xlu0 %v130
    %v132 = vpop.xlane.xlu0 %131
    %v133 = vsel %vm129, %v98, 0.0
    %134 = vadd.xlane.f32.xlu0 %v133
    %v135 = vpop.xlane.xlu0 %134
    %v136 = vsel %vm129, %v99, 0.0
    %137 = vadd.xlane.f32.xlu0 %v136
    %v138 = vpop.xlane.xlu0 %137
    %v139 = vsel %vm129, %v100, 0.0
    %140 = vadd.xlane.f32.xlu0 %v139
    %v141 = vpop.xlane.xlu0 %140
    %v142 = vsel %vm129, %v101, 0.0
    %143 = vadd.xlane.f32.xlu0 %v142
    %v144 = vpop.xlane.xlu0 %143
    %v145 = vsel %vm129, %v102, 0.0
    %146 = vadd.xlane.f32.xlu0 %v145
    %v147 = vpop.xlane.xlu0 %146
    %v148 = vsel %vm129, %v103, 0.0
    %149 = vadd.xlane.f32.xlu0 %v148
    %v150 = vpop.xlane.xlu0 %149
    %v151 = vsel %vm129, %v104, 0.0
    %152 = vadd.xlane.f32.xlu0 %v151
    %v153 = vpop.xlane.xlu0 %152
    %v154 = vsel %vm129, %v105, 0.0
    %155 = vadd.xlane.f32.xlu0 %v154
    %v156 = vpop.xlane.xlu0 %155
    %v157 = vsel %vm129, %v106, 0.0
    %158 = vadd.xlane.f32.xlu0 %v157
    %v159 = vpop.xlane.xlu0 %158
    %v160 = vsel %vm129, %v107, 0.0
    %161 = vadd.xlane.f32.xlu0 %v160
    %v162 = vpop.xlane.xlu0 %161
    %v163 = vsel %vm129, %v108, 0.0
    %164 = vadd.xlane.f32.xlu0 %v163
    %v165 = vpop.xlane.xlu0 %164
    %v166 = vsel %vm129, %v109, 0.0
    %167 = vadd.xlane.f32.xlu0 %v166
    %v168 = vpop.xlane.xlu0 %167
    %v169 = vsel %vm129, %v110, 0.0
    %170 = vadd.xlane.f32.xlu0 %v169
    %v171 = vpop.xlane.xlu0 %170
    %v172 = vsel %vm129, %v111, 0.0
    %173 = vadd.xlane.f32.xlu0 %v172
    %v174 = vpop.xlane.xlu0 %173
    %v175 = vsel %vm129, %v112, 0.0
    %176 = vadd.xlane.f32.xlu0 %v175
    %v177 = vpop.xlane.xlu0 %176
    %v178 = vsel %vm129, %v113, 0.0
    %179 = vadd.xlane.f32.xlu0 %v178
    %v180 = vpop.xlane.xlu0 %179
    %v181 = vsel %vm129, %v114, 0.0
    %182 = vadd.xlane.f32.xlu0 %v181
    %v183 = vpop.xlane.xlu0 %182
    %v184 = vsel %vm129, %v115, 0.0
    %185 = vadd.xlane.f32.xlu0 %v184
    %v186 = vpop.xlane.xlu0 %185
    %v187 = vsel %vm129, %v116, 0.0
    %188 = vadd.xlane.f32.xlu0 %v187
    %v189 = vpop.xlane.xlu0 %188
    %v190 = vsel %vm129, %v117, 0.0
    %191 = vadd.xlane.f32.xlu0 %v190
    %v192 = vpop.xlane.xlu0 %191
    %v193 = vsel %vm129, %v118, 0.0
    %194 = vadd.xlane.f32.xlu0 %v193
    %v195 = vpop.xlane.xlu0 %194
    %v196 = vsel %vm129, %v119, 0.0
    %197 = vadd.xlane.f32.xlu0 %v196
    %v198 = vpop.xlane.xlu0 %197
    %v199 = vsel %vm129, %v120, 0.0
    %200 = vadd.xlane.f32.xlu0 %v199
    %v201 = vpop.xlane.xlu0 %200
    %v202 = vsel %vm129, %v121, 0.0
    %203 = vadd.xlane.f32.xlu0 %v202
    %v204 = vpop.xlane.xlu0 %203
    %v205 = vsel %vm129, %v122, 0.0
    %206 = vadd.xlane.f32.xlu0 %v205
    %v207 = vpop.xlane.xlu0 %206
    %v208 = vsel %vm129, %v123, 0.0
    %209 = vadd.xlane.f32.xlu0 %v208
    %v210 = vpop.xlane.xlu0 %209
    %v211 = vsel %vm129, %v124, 0.0
    %212 = vadd.xlane.f32.xlu0 %v211
    %v213 = vpop.xlane.xlu0 %212
    %v214 = vsel %vm129, %v125, 0.0
    %215 = vadd.xlane.f32.xlu0 %v214
    %v216 = vpop.xlane.xlu0 %215
    %v217 = vsel %vm129, %v126, 0.0
    %218 = vadd.xlane.f32.xlu0 %v217
    %v219 = vpop.xlane.xlu0 %218
    %v220 = vsel %vm129, %v127, 0.0
    %221 = vadd.xlane.f32.xlu0 %v220
    %v222 = vpop.xlane.xlu0 %221
    %v223 = vsel %vm129, %v128, 0.0
    %224 = vadd.xlane.f32.xlu0 %v223
    %v225 = vpop.xlane.xlu0 %224
    %v226 = vrcp.pop 32.0
    %v227 = vmul.f32 %v132, %v226
    %v228 = vmul.f32 %v135, %v226
    %v229 = vmul.f32 %v138, %v226
    %v230 = vmul.f32 %v141, %v226
    %v231 = vmul.f32 %v144, %v226
    %v232 = vmul.f32 %v147, %v226
    %v233 = vmul.f32 %v150, %v226
    %v234 = vmul.f32 %v153, %v226
    %v235 = vmul.f32 %v156, %v226
    %v236 = vmul.f32 %v159, %v226
    %v237 = vmul.f32 %v162, %v226
    %v238 = vmul.f32 %v165, %v226
    %v239 = vmul.f32 %v168, %v226
    %v240 = vmul.f32 %v171, %v226
    %v241 = vmul.f32 %v174, %v226
    %v242 = vmul.f32 %v177, %v226
    %v243 = vmul.f32 %v180, %v226
    %v244 = vmul.f32 %v183, %v226
    %v245 = vmul.f32 %v186, %v226
    %v246 = vmul.f32 %v189, %v226
    %v247 = vmul.f32 %v192, %v226
    %v248 = vmul.f32 %v195, %v226
    %v249 = vmul.f32 %v198, %v226
    %v250 = vmul.f32 %v201, %v226
    %v251 = vmul.f32 %v204, %v226
    %v252 = vmul.f32 %v207, %v226
    %v253 = vmul.f32 %v210, %v226
    %v254 = vmul.f32 %v213, %v226
    %v255 = vmul.f32 %v216, %v226
    %v256 = vmul.f32 %v219, %v226
    %v257 = vmul.f32 %v222, %v226
    %v258 = vmul.f32 %v225, %v226
    %v259 = vsub.f32 %v97, %v227
    %v260 = vsub.f32 %v98, %v228
    %v261 = vsub.f32 %v99, %v229
    %v262 = vsub.f32 %v100, %v230
    %v263 = vsub.f32 %v101, %v231
    %v264 = vsub.f32 %v102, %v232
    %v265 = vsub.f32 %v103, %v233
    %v266 = vsub.f32 %v104, %v234
    %v267 = vsub.f32 %v105, %v235
    %v268 = vsub.f32 %v106, %v236
    %v269 = vsub.f32 %v107, %v237
    %v270 = vsub.f32 %v108, %v238
    %v271 = vsub.f32 %v109, %v239
    %v272 = vsub.f32 %v110, %v240
    %v273 = vsub.f32 %v111, %v241
    %v274 = vsub.f32 %v112, %v242
    %v275 = vsub.f32 %v113, %v243
    %v276 = vsub.f32 %v114, %v244
    %v277 = vsub.f32 %v115, %v245
    %v278 = vsub.f32 %v116, %v246
    %v279 = vsub.f32 %v117, %v247
    %v280 = vsub.f32 %v118, %v248
    %v281 = vsub.f32 %v119, %v249
    %v282 = vsub.f32 %v120, %v250
    %v283 = vsub.f32 %v121, %v251
    %v284 = vsub.f32 %v122, %v252
    %v285 = vsub.f32 %v123, %v253
    %v286 = vsub.f32 %v124, %v254
    %v287 = vsub.f32 %v125, %v255
    %v288 = vsub.f32 %v126, %v256
    %v289 = vsub.f32 %v127, %v257
    %v290 = vsub.f32 %v128, %v258
    %v291 = vmul.f32 %v259, %v259
    %v292 = vmul.f32 %v260, %v260
    %v293 = vmul.f32 %v261, %v261
    %v294 = vmul.f32 %v262, %v262
    %v295 = vmul.f32 %v263, %v263
    %v296 = vmul.f32 %v264, %v264
    %v297 = vmul.f32 %v265, %v265
    %v298 = vmul.f32 %v266, %v266
    %v299 = vmul.f32 %v267, %v267
    %v300 = vmul.f32 %v268, %v268
    %v301 = vmul.f32 %v269, %v269
    %v302 = vmul.f32 %v270, %v270
    %v303 = vmul.f32 %v271, %v271
    %v304 = vmul.f32 %v272, %v272
    %v305 = vmul.f32 %v273, %v273
    %v306 = vmul.f32 %v274, %v274
    %v307 = vmul.f32 %v275, %v275
    %v308 = vmul.f32 %v276, %v276
    %v309 = vmul.f32 %v277, %v277
    %v310 = vmul.f32 %v278, %v278
    %v311 = vmul.f32 %v279, %v279
    %v312 = vmul.f32 %v280, %v280
    %v313 = vmul.f32 %v281, %v281
    %v314 = vmul.f32 %v282, %v282
    %v315 = vmul.f32 %v283, %v283
    %v316 = vmul.f32 %v284, %v284
    %v317 = vmul.f32 %v285, %v285
    %v318 = vmul.f32 %v286, %v286
    %v319 = vmul.f32 %v287, %v287
    %v320 = vmul.f32 %v288, %v288
    %v321 = vmul.f32 %v289, %v289
    %v322 = vmul.f32 %v290, %v290
    %v323 = vsel %vm129, %v291, 0.0
    %324 = vadd.xlane.f32.xlu0 %v323
    %v325 = vpop.xlane.xlu0 %324
    %v326 = vsel %vm129, %v292, 0.0
    %327 = vadd.xlane.f32.xlu0 %v326
    %v328 = vpop.xlane.xlu0 %327
    %v329 = vsel %vm129, %v293, 0.0
    %330 = vadd.xlane.f32.xlu0 %v329
    %v331 = vpop.xlane.xlu0 %330
    %v332 = vsel %vm129, %v294, 0.0
    %333 = vadd.xlane.f32.xlu0 %v332
    %v334 = vpop.xlane.xlu0 %333
    %v335 = vsel %vm129, %v295, 0.0
    %336 = vadd.xlane.f32.xlu0 %v335
    %v337 = vpop.xlane.xlu0 %336
    %v338 = vsel %vm129, %v296, 0.0
    %339 = vadd.xlane.f32.xlu0 %v338
    %v340 = vpop.xlane.xlu0 %339
    %v341 = vsel %vm129, %v297, 0.0
    %342 = vadd.xlane.f32.xlu0 %v341
    %v343 = vpop.xlane.xlu0 %342
    %v344 = vsel %vm129, %v298, 0.0
    %345 = vadd.xlane.f32.xlu0 %v344
    %v346 = vpop.xlane.xlu0 %345
    %v347 = vsel %vm129, %v299, 0.0
    %348 = vadd.xlane.f32.xlu0 %v347
    %v349 = vpop.xlane.xlu0 %348
    %v350 = vsel %vm129, %v300, 0.0
    %351 = vadd.xlane.f32.xlu0 %v350
    %v352 = vpop.xlane.xlu0 %351
    %v353 = vsel %vm129, %v301, 0.0
    %354 = vadd.xlane.f32.xlu0 %v353
    %v355 = vpop.xlane.xlu0 %354
    %v356 = vsel %vm129, %v302, 0.0
    %357 = vadd.xlane.f32.xlu0 %v356
    %v358 = vpop.xlane.xlu0 %357
    %v359 = vsel %vm129, %v303, 0.0
    %360 = vadd.xlane.f32.xlu0 %v359
    %v361 = vpop.xlane.xlu0 %360
    %v362 = vsel %vm129, %v304, 0.0
    %363 = vadd.xlane.f32.xlu0 %v362
    %v364 = vpop.xlane.xlu0 %363
    %v365 = vsel %vm129, %v305, 0.0
    %366 = vadd.xlane.f32.xlu0 %v365
    %v367 = vpop.xlane.xlu0 %366
    %v368 = vsel %vm129, %v306, 0.0
    %369 = vadd.xlane.f32.xlu0 %v368
    %v370 = vpop.xlane.xlu0 %369
    %v371 = vsel %vm129, %v307, 0.0
    %372 = vadd.xlane.f32.xlu0 %v371
    %v373 = vpop.xlane.xlu0 %372
    %v374 = vsel %vm129, %v308, 0.0
    %375 = vadd.xlane.f32.xlu0 %v374
    %v376 = vpop.xlane.xlu0 %375
    %v377 = vsel %vm129, %v309, 0.0
    %378 = vadd.xlane.f32.xlu0 %v377
    %v379 = vpop.xlane.xlu0 %378
    %v380 = vsel %vm129, %v310, 0.0
    %381 = vadd.xlane.f32.xlu0 %v380
    %v382 = vpop.xlane.xlu0 %381
    %v383 = vsel %vm129, %v311, 0.0
    %384 = vadd.xlane.f32.xlu0 %v383
    %v385 = vpop.xlane.xlu0 %384
    %v386 = vsel %vm129, %v312, 0.0
    %387 = vadd.xlane.f32.xlu0 %v386
    %v388 = vpop.xlane.xlu0 %387
    %v389 = vsel %vm129, %v313, 0.0
    %390 = vadd.xlane.f32.xlu0 %v389
    %v391 = vpop.xlane.xlu0 %390
    %v392 = vsel %vm129, %v314, 0.0
    %393 = vadd.xlane.f32.xlu0 %v392
    %v394 = vpop.xlane.xlu0 %393
    %v395 = vsel %vm129, %v315, 0.0
    %396 = vadd.xlane.f32.xlu0 %v395
    %v397 = vpop.xlane.xlu0 %396
    %v398 = vsel %vm129, %v316, 0.0
    %399 = vadd.xlane.f32.xlu0 %v398
    %v400 = vpop.xlane.xlu0 %399
    %v401 = vsel %vm129, %v317, 0.0
    %402 = vadd.xlane.f32.xlu0 %v401
    %v403 = vpop.xlane.xlu0 %402
    %v404 = vsel %vm129, %v318, 0.0
    %405 = vadd.xlane.f32.xlu0 %v404
    %v406 = vpop.xlane.xlu0 %405
    %v407 = vsel %vm129, %v319, 0.0
    %408 = vadd.xlane.f32.xlu0 %v407
    %v409 = vpop.xlane.xlu0 %408
    %v410 = vsel %vm129, %v320, 0.0
    %411 = vadd.xlane.f32.xlu0 %v410
    %v412 = vpop.xlane.xlu0 %411
    %v413 = vsel %vm129, %v321, 0.0
    %414 = vadd.xlane.f32.xlu0 %v413
    %v415 = vpop.xlane.xlu0 %414
    %v416 = vsel %vm129, %v322, 0.0
    %417 = vadd.xlane.f32.xlu0 %v416
    %v418 = vpop.xlane.xlu0 %417
    %v419 = vmul.f32 %v325, %v226
    %v420 = vmul.f32 %v328, %v226
    %v421 = vmul.f32 %v331, %v226
    %v422 = vmul.f32 %v334, %v226
    %v423 = vmul.f32 %v337, %v226
    %v424 = vmul.f32 %v340, %v226
    %v425 = vmul.f32 %v343, %v226
    %v426 = vmul.f32 %v346, %v226
    %v427 = vmul.f32 %v349, %v226
    %v428 = vmul.f32 %v352, %v226
    %v429 = vmul.f32 %v355, %v226
    %v430 = vmul.f32 %v358, %v226
    %v431 = vmul.f32 %v361, %v226
    %v432 = vmul.f32 %v364, %v226
    %v433 = vmul.f32 %v367, %v226
    %v434 = vmul.f32 %v370, %v226
    %v435 = vmul.f32 %v373, %v226
    %v436 = vmul.f32 %v376, %v226
    %v437 = vmul.f32 %v379, %v226
    %v438 = vmul.f32 %v382, %v226
    %v439 = vmul.f32 %v385, %v226
    %v440 = vmul.f32 %v388, %v226
    %v441 = vmul.f32 %v391, %v226
    %v442 = vmul.f32 %v394, %v226
    %v443 = vmul.f32 %v397, %v226
    %v444 = vmul.f32 %v400, %v226
    %v445 = vmul.f32 %v403, %v226
    %v446 = vmul.f32 %v406, %v226
    %v447 = vmul.f32 %v409, %v226
    %v448 = vmul.f32 %v412, %v226
    %v449 = vmul.f32 %v415, %v226
    %v450 = vmul.f32 %v418, %v226
    %v451 = vadd.f32 %v419, 1e-05
    %v452 = vadd.f32 %v420, 1e-05
    %v453 = vadd.f32 %v421, 1e-05
    %v454 = vadd.f32 %v422, 1e-05
    %v455 = vadd.f32 %v423, 1e-05
    %v456 = vadd.f32 %v424, 1e-05
    %v457 = vadd.f32 %v425, 1e-05
    %v458 = vadd.f32 %v426, 1e-05
    %v459 = vadd.f32 %v427, 1e-05
    %v460 = vadd.f32 %v428, 1e-05
    %v461 = vadd.f32 %v429, 1e-05
    %v462 = vadd.f32 %v430, 1e-05
    %v463 = vadd.f32 %v431, 1e-05
    %v464 = vadd.f32 %v432, 1e-05
    %v465 = vadd.f32 %v433, 1e-05
    %v466 = vadd.f32 %v434, 1e-05
    %v467 = vadd.f32 %v435, 1e-05
    %v468 = vadd.f32 %v436, 1e-05
    %v469 = vadd.f32 %v437, 1e-05
    %v470 = vadd.f32 %v438, 1e-05
    %v471 = vadd.f32 %v439, 1e-05
    %v472 = vadd.f32 %v440, 1e-05
    %v473 = vadd.f32 %v441, 1e-05
    %v474 = vadd.f32 %v442, 1e-05
    %v475 = vadd.f32 %v443, 1e-05
    %v476 = vadd.f32 %v444, 1e-05
    %v477 = vadd.f32 %v445, 1e-05
    %v478 = vadd.f32 %v446, 1e-05
    %v479 = vadd.f32 %v447, 1e-05
    %v480 = vadd.f32 %v448, 1e-05
    %v481 = vadd.f32 %v449, 1e-05
    %v482 = vadd.f32 %v450, 1e-05
    %v483 = vrsqrt.pop %v451
    %v484 = vrsqrt.pop %v452
    %v485 = vrsqrt.pop %v453
    %v486 = vrsqrt.pop %v454
    %v487 = vrsqrt.pop %v455
    %v488 = vrsqrt.pop %v456
    %v489 = vrsqrt.pop %v457
    %v490 = vrsqrt.pop %v458
    %v491 = vrsqrt.pop %v459
    %v492 = vrsqrt.pop %v460
    %v493 = vrsqrt.pop %v461
    %v494 = vrsqrt.pop %v462
    %v495 = vrsqrt.pop %v463
    %v496 = vrsqrt.pop %v464
    %v497 = vrsqrt.pop %v465
    %v498 = vrsqrt.pop %v466
    %v499 = vrsqrt.pop %v467
    %v500 = vrsqrt.pop %v468
    %v501 = vrsqrt.pop %v469
    %v502 = vrsqrt.pop %v470
    %v503 = vrsqrt.pop %v471
    %v504 = vrsqrt.pop %v472
    %v505 = vrsqrt.pop %v473
    %v506 = vrsqrt.pop %v474
    %v507 = vrsqrt.pop %v475
    %v508 = vrsqrt.pop %v476
    %v509 = vrsqrt.pop %v477
    %v510 = vrsqrt.pop %v478
    %v511 = vrsqrt.pop %v479
    %v512 = vrsqrt.pop %v480
    %v513 = vrsqrt.pop %v481
    %v514 = vrsqrt.pop %v482
    %v515 = vmul.f32 %v259, %v483
    %v516 = vmul.f32 %v260, %v484
    %v517 = vmul.f32 %v261, %v485
    %v518 = vmul.f32 %v262, %v486
    %v519 = vmul.f32 %v263, %v487
    %v520 = vmul.f32 %v264, %v488
    %v521 = vmul.f32 %v265, %v489
    %v522 = vmul.f32 %v266, %v490
    %v523 = vmul.f32 %v267, %v491
    %v524 = vmul.f32 %v268, %v492
    %v525 = vmul.f32 %v269, %v493
    %v526 = vmul.f32 %v270, %v494
    %v527 = vmul.f32 %v271, %v495
    %v528 = vmul.f32 %v272, %v496
    %v529 = vmul.f32 %v273, %v497
    %v530 = vmul.f32 %v274, %v498
    %v531 = vmul.f32 %v275, %v499
    %v532 = vmul.f32 %v276, %v500
    %v533 = vmul.f32 %v277, %v501
    %v534 = vmul.f32 %v278, %v502
    %v535 = vmul.f32 %v279, %v503
    %v536 = vmul.f32 %v280, %v504
    %v537 = vmul.f32 %v281, %v505
    %v538 = vmul.f32 %v282, %v506
    %v539 = vmul.f32 %v283, %v507
    %v540 = vmul.f32 %v284, %v508
    %v541 = vmul.f32 %v285, %v509
    %v542 = vmul.f32 %v286, %v510
    %v543 = vmul.f32 %v287, %v511
    %v544 = vmul.f32 %v288, %v512
    %v545 = vmul.f32 %v289, %v513
    %v546 = vmul.f32 %v290, %v514
    %v547 = vlaneseq
    %v548 = vshrl.u32 %v547, 7
    %v549 = vsub.s32 0, %v548
    %v550 = vrot.slane %v93, %v549
    %v551 = vmul.f32 %v515, %v550
    %v552 = vmul.f32 %v516, %v550
    %v553 = vmul.f32 %v517, %v550
    %v554 = vmul.f32 %v518, %v550
    %v555 = vmul.f32 %v519, %v550
    %v556 = vmul.f32 %v520, %v550
    %v557 = vmul.f32 %v521, %v550
    %v558 = vmul.f32 %v522, %v550
    %v559 = vmul.f32 %v523, %v550
    %v560 = vmul.f32 %v524, %v550
    %v561 = vmul.f32 %v525, %v550
    %v562 = vmul.f32 %v526, %v550
    %v563 = vmul.f32 %v527, %v550
    %v564 = vmul.f32 %v528, %v550
    %v565 = vmul.f32 %v529, %v550
    %v566 = vmul.f32 %v530, %v550
    %v567 = vmul.f32 %v531, %v550
    %v568 = vmul.f32 %v532, %v550
    %v569 = vmul.f32 %v533, %v550
    %v570 = vmul.f32 %v534, %v550
    %v571 = vmul.f32 %v535, %v550
    %v572 = vmul.f32 %v536, %v550
    %v573 = vmul.f32 %v537, %v550
    %v574 = vmul.f32 %v538, %v550
    %v575 = vmul.f32 %v539, %v550
    %v576 = vmul.f32 %v540, %v550
    %v577 = vmul.f32 %v541, %v550
    %v578 = vmul.f32 %v542, %v550
    %v579 = vmul.f32 %v543, %v550
    %v580 = vmul.f32 %v544, %v550
    %v581 = vmul.f32 %v545, %v550
    %v582 = vmul.f32 %v546, %v550
    %v583 = vlaneseq
    %v584 = vshrl.u32 %v583, 7
    %v585 = vsub.s32 0, %v584
    %v586 = vrot.slane %v94, %v585
    %v587 = vadd.f32 %v551, %v586
    %v588 = vadd.f32 %v552, %v586
    %v589 = vadd.f32 %v553, %v586
    %v590 = vadd.f32 %v554, %v586
    %v591 = vadd.f32 %v555, %v586
    %v592 = vadd.f32 %v556, %v586
    %v593 = vadd.f32 %v557, %v586
    %v594 = vadd.f32 %v558, %v586
    %v595 = vadd.f32 %v559, %v586
    %v596 = vadd.f32 %v560, %v586
    %v597 = vadd.f32 %v561, %v586
    %v598 = vadd.f32 %v562, %v586
    %v599 = vadd.f32 %v563, %v586
    %v600 = vadd.f32 %v564, %v586
    %v601 = vadd.f32 %v565, %v586
    %v602 = vadd.f32 %v566, %v586
    %v603 = vadd.f32 %v567, %v586
    %v604 = vadd.f32 %v568, %v586
    %v605 = vadd.f32 %v569, %v586
    %v606 = vadd.f32 %v570, %v586
    %v607 = vadd.f32 %v571, %v586
    %v608 = vadd.f32 %v572, %v586
    %v609 = vadd.f32 %v573, %v586
    %v610 = vadd.f32 %v574, %v586
    %v611 = vadd.f32 %v575, %v586
    %v612 = vadd.f32 %v576, %v586
    %v613 = vadd.f32 %v577, %v586
    %v614 = vadd.f32 %v578, %v586
    %v615 = vadd.f32 %v579, %v586
    %v616 = vadd.f32 %v580, %v586
    %v617 = vadd.f32 %v581, %v586
    %v618 = vadd.f32 %v582, %v586
    %v619 = vld [vmem:[#allocation5] sm:$0xff]
    %v620 = vld [vmem:[#allocation5 + $0x8] sm:$0xff]
    %v621 = vld [vmem:[#allocation5 + $0x10] sm:$0xff]
    %v622 = vld [vmem:[#allocation5 + $0x18] sm:$0xff]
    %v623 = vld [vmem:[#allocation5 + $0x20] sm:$0xff]
    %v624 = vld [vmem:[#allocation5 + $0x28] sm:$0xff]
    %v625 = vld [vmem:[#allocation5 + $0x30] sm:$0xff]
    %v626 = vld [vmem:[#allocation5 + $0x38] sm:$0xff]
    %v627 = vld [vmem:[#allocation5 + $0x40] sm:$0xff]
    %v628 = vld [vmem:[#allocation5 + $0x48] sm:$0xff]
    %v629 = vld [vmem:[#allocation5 + $0x50] sm:$0xff]
    %v630 = vld [vmem:[#allocation5 + $0x58] sm:$0xff]
    %v631 = vld [vmem:[#allocation5 + $0x60] sm:$0xff]
    %v632 = vld [vmem:[#allocation5 + $0x68] sm:$0xff]
    %v633 = vld [vmem:[#allocation5 + $0x70] sm:$0xff]
    %v634 = vld [vmem:[#allocation5 + $0x78] sm:$0xff]
    %v635 = vld [vmem:[#allocation5 + $0x80] sm:$0xff]
    %v636 = vld [vmem:[#allocation5 + $0x88] sm:$0xff]
    %v637 = vld [vmem:[#allocation5 + $0x90] sm:$0xff]
    %v638 = vld [vmem:[#allocation5 + $0x98] sm:$0xff]
    %v639 = vld [vmem:[#allocation5 + $0xa0] sm:$0xff]
    %v640 = vld [vmem:[#allocation5 + $0xa8] sm:$0xff]
    %v641 = vld [vmem:[#allocation5 + $0xb0] sm:$0xff]
    %v642 = vld [vmem:[#allocation5 + $0xb8] sm:$0xff]
    %v643 = vld [vmem:[#allocation5 + $0xc0] sm:$0xff]
    %v644 = vld [vmem:[#allocation5 + $0xc8] sm:$0xff]
    %v645 = vld [vmem:[#allocation5 + $0xd0] sm:$0xff]
    %v646 = vld [vmem:[#allocation5 + $0xd8] sm:$0xff]
    %v647 = vld [vmem:[#allocation5 + $0xe0] sm:$0xff]
    %v648 = vld [vmem:[#allocation5 + $0xe8] sm:$0xff]
    %v649 = vld [vmem:[#allocation5 + $0xf0] sm:$0xff]
    %v650 = vld [vmem:[#allocation5 + $0xf8] sm:$0xff]
    %v651 = vld [vmem:[#allocation7] sm:$0xff]
    %v652 = vld [vmem:[#allocation7 + $0x8] sm:$0xff]
    %v653 = vld [vmem:[#allocation7 + $0x10] sm:$0xff]
    %v654 = vld [vmem:[#allocation7 + $0x18] sm:$0xff]
    %v655 = vld [vmem:[#allocation7 + $0x20] sm:$0xff]
    %v656 = vld [vmem:[#allocation7 + $0x28] sm:$0xff]
    %v657 = vld [vmem:[#allocation7 + $0x30] sm:$0xff]
    %v658 = vld [vmem:[#allocation7 + $0x38] sm:$0xff]
    %v659 = vld [vmem:[#allocation7 + $0x40] sm:$0xff]
    %v660 = vld [vmem:[#allocation7 + $0x48] sm:$0xff]
    %v661 = vld [vmem:[#allocation7 + $0x50] sm:$0xff]
    %v662 = vld [vmem:[#allocation7 + $0x58] sm:$0xff]
    %v663 = vld [vmem:[#allocation7 + $0x60] sm:$0xff]
    %v664 = vld [vmem:[#allocation7 + $0x68] sm:$0xff]
    %v665 = vld [vmem:[#allocation7 + $0x70] sm:$0xff]
    %v666 = vld [vmem:[#allocation7 + $0x78] sm:$0xff]
    %v667 = vld [vmem:[#allocation7 + $0x80] sm:$0xff]
    %v668 = vld [vmem:[#allocation7 + $0x88] sm:$0xff]
    %v669 = vld [vmem:[#allocation7 + $0x90] sm:$0xff]
    %v670 = vld [vmem:[#allocation7 + $0x98] sm:$0xff]
    %v671 = vld [vmem:[#allocation7 + $0xa0] sm:$0xff]
    %v672 = vld [vmem:[#allocation7 + $0xa8] sm:$0xff]
    %v673 = vld [vmem:[#allocation7 + $0xb0] sm:$0xff]
    %v674 = vld [vmem:[#allocation7 + $0xb8] sm:$0xff]
    %v675 = vld [vmem:[#allocation7 + $0xc0] sm:$0xff]
    %v676 = vld [vmem:[#allocation7 + $0xc8] sm:$0xff]
    %v677 = vld [vmem:[#allocation7 + $0xd0] sm:$0xff]
    %v678 = vld [vmem:[#allocation7 + $0xd8] sm:$0xff]
    %v679 = vld [vmem:[#allocation7 + $0xe0] sm:$0xff]
    %v680 = vld [vmem:[#allocation7 + $0xe8] sm:$0xff]
    %v681 = vld [vmem:[#allocation7 + $0xf0] sm:$0xff]
    %v682 = vld [vmem:[#allocation7 + $0xf8] sm:$0xff]
    %v683 = vld [vmem:[#allocation8] sm:$0xff]
    %v684 = vld [vmem:[#allocation8 + $0x8] sm:$0xff]
    %v685 = vld [vmem:[#allocation8 + $0x10] sm:$0xff]
    %v686 = vld [vmem:[#allocation8 + $0x18] sm:$0xff]
    %v687 = vld [vmem:[#allocation8 + $0x20] sm:$0xff]
    %v688 = vld [vmem:[#allocation8 + $0x28] sm:$0xff]
    %v689 = vld [vmem:[#allocation8 + $0x30] sm:$0xff]
    %v690 = vld [vmem:[#allocation8 + $0x38] sm:$0xff]
    %v691 = vld [vmem:[#allocation8 + $0x40] sm:$0xff]
    %v692 = vld [vmem:[#allocation8 + $0x48] sm:$0xff]
    %v693 = vld [vmem:[#allocation8 + $0x50] sm:$0xff]
    %v694 = vld [vmem:[#allocation8 + $0x58] sm:$0xff]
    %v695 = vld [vmem:[#allocation8 + $0x60] sm:$0xff]
    %v696 = vld [vmem:[#allocation8 + $0x68] sm:$0xff]
    %v697 = vld [vmem:[#allocation8 + $0x70] sm:$0xff]
    %v698 = vld [vmem:[#allocation8 + $0x78] sm:$0xff]
    %v699 = vld [vmem:[#allocation8 + $0x80] sm:$0xff]
    %v700 = vld [vmem:[#allocation8 + $0x88] sm:$0xff]
    %v701 = vld [vmem:[#allocation8 + $0x90] sm:$0xff]
    %v702 = vld [vmem:[#allocation8 + $0x98] sm:$0xff]
    %v703 = vld [vmem:[#allocation8 + $0xa0] sm:$0xff]
    %v704 = vld [vmem:[#allocation8 + $0xa8] sm:$0xff]
    %v705 = vld [vmem:[#allocation8 + $0xb0] sm:$0xff]
    %v706 = vld [vmem:[#allocation8 + $0xb8] sm:$0xff]
    %v707 = vld [vmem:[#allocation8 + $0xc0] sm:$0xff]
    %v708 = vld [vmem:[#allocation8 + $0xc8] sm:$0xff]
    %v709 = vld [vmem:[#allocation8 + $0xd0] sm:$0xff]
    %v710 = vld [vmem:[#allocation8 + $0xd8] sm:$0xff]
    %v711 = vld [vmem:[#allocation8 + $0xe0] sm:$0xff]
    %v712 = vld [vmem:[#allocation8 + $0xe8] sm:$0xff]
    %v713 = vld [vmem:[#allocation8 + $0xf0] sm:$0xff]
    %v714 = vld [vmem:[#allocation8 + $0xf8] sm:$0xff]
    %v715 = vadd.f32 %v587, %v619
    %v716 = vadd.f32 %v588, %v620
    %v717 = vadd.f32 %v589, %v621
    %v718 = vadd.f32 %v590, %v622
    %v719 = vadd.f32 %v591, %v623
    %v720 = vadd.f32 %v592, %v624
    %v721 = vadd.f32 %v593, %v625
    %v722 = vadd.f32 %v594, %v626
    %v723 = vadd.f32 %v595, %v627
    %v724 = vadd.f32 %v596, %v628
    %v725 = vadd.f32 %v597, %v629
    %v726 = vadd.f32 %v598, %v630
    %v727 = vadd.f32 %v599, %v631
    %v728 = vadd.f32 %v600, %v632
    %v729 = vadd.f32 %v601, %v633
    %v730 = vadd.f32 %v602, %v634
    %v731 = vadd.f32 %v603, %v635
    %v732 = vadd.f32 %v604, %v636
    %v733 = vadd.f32 %v605, %v637
    %v734 = vadd.f32 %v606, %v638
    %v735 = vadd.f32 %v607, %v639
    %v736 = vadd.f32 %v608, %v640
    %v737 = vadd.f32 %v609, %v641
    %v738 = vadd.f32 %v610, %v642
    %v739 = vadd.f32 %v611, %v643
    %v740 = vadd.f32 %v612, %v644
    %v741 = vadd.f32 %v613, %v645
    %v742 = vadd.f32 %v614, %v646
    %v743 = vadd.f32 %v615, %v647
    %v744 = vadd.f32 %v616, %v648
    %v745 = vadd.f32 %v617, %v649
    %v746 = vadd.f32 %v618, %v650
    %v747 = vpack.c.bf16 %v716, %v715
    %v748 = vpack.c.bf16 %v718, %v717
    %v749 = vpack.c.bf16 %v720, %v719
    %v750 = vpack.c.bf16 %v722, %v721
    %v751 = vpack.c.bf16 %v724, %v723
    %v752 = vpack.c.bf16 %v726, %v725
    %v753 = vpack.c.bf16 %v728, %v727
    %v754 = vpack.c.bf16 %v730, %v729
    %v755 = vpack.c.bf16 %v732, %v731
    %v756 = vpack.c.bf16 %v734, %v733
    %v757 = vpack.c.bf16 %v736, %v735
    %v758 = vpack.c.bf16 %v738, %v737
    %v759 = vpack.c.bf16 %v740, %v739
    %v760 = vpack.c.bf16 %v742, %v741
    %v761 = vpack.c.bf16 %v744, %v743
    %v762 = vpack.c.bf16 %v746, %v745
    %v763 = vadd.f32 %v651, %v683
    %v764 = vadd.f32 %v652, %v684
    %v765 = vadd.f32 %v653, %v685
    %v766 = vadd.f32 %v654, %v686
    %v767 = vadd.f32 %v655, %v687
    %v768 = vadd.f32 %v656, %v688
    %v769 = vadd.f32 %v657, %v689
    %v770 = vadd.f32 %v658, %v690
    %v771 = vadd.f32 %v659, %v691
    %v772 = vadd.f32 %v660, %v692
    %v773 = vadd.f32 %v661, %v693
    %v774 = vadd.f32 %v662, %v694
    %v775 = vadd.f32 %v663, %v695
    %v776 = vadd.f32 %v664, %v696
    %v777 = vadd.f32 %v665, %v697
    %v778 = vadd.f32 %v666, %v698
    %v779 = vadd.f32 %v667, %v699
    %v780 = vadd.f32 %v668, %v700
    %v781 = vadd.f32 %v669, %v701
    %v782 = vadd.f32 %v670, %v702
    %v783 = vadd.f32 %v671, %v703
    %v784 = vadd.f32 %v672, %v704
    %v785 = vadd.f32 %v673, %v705
    %v786 = vadd.f32 %v674, %v706
    %v787 = vadd.f32 %v675, %v707
    %v788 = vadd.f32 %v676, %v708
    %v789 = vadd.f32 %v677, %v709
    %v790 = vadd.f32 %v678, %v710
    %v791 = vadd.f32 %v679, %v711
    %v792 = vadd.f32 %v680, %v712
    %v793 = vadd.f32 %v681, %v713
    %v794 = vadd.f32 %v682, %v714
    %v795 = vpack.c.bf16 %v764, %v763
    %v796 = vpack.c.bf16 %v766, %v765
    %v797 = vpack.c.bf16 %v768, %v767
    %v798 = vpack.c.bf16 %v770, %v769
    %v799 = vpack.c.bf16 %v772, %v771
    %v800 = vpack.c.bf16 %v774, %v773
    %v801 = vpack.c.bf16 %v776, %v775
    %v802 = vpack.c.bf16 %v778, %v777
    %v803 = vpack.c.bf16 %v780, %v779
    %v804 = vpack.c.bf16 %v782, %v781
    %v805 = vpack.c.bf16 %v784, %v783
    %v806 = vpack.c.bf16 %v786, %v785
    %v807 = vpack.c.bf16 %v788, %v787
    %v808 = vpack.c.bf16 %v790, %v789
    %v809 = vpack.c.bf16 %v792, %v791
    %v810 = vpack.c.bf16 %v794, %v793
    %v811 = vpack.c.bf16 %v652, %v651
    %v812 = vpack.c.bf16 %v654, %v653
    %v813 = vpack.c.bf16 %v656, %v655
    %v814 = vpack.c.bf16 %v658, %v657
    %v815 = vpack.c.bf16 %v660, %v659
    %v816 = vpack.c.bf16 %v662, %v661
    %v817 = vpack.c.bf16 %v664, %v663
    %v818 = vpack.c.bf16 %v666, %v665
    %v819 = vpack.c.bf16 %v668, %v667
    %v820 = vpack.c.bf16 %v670, %v669
    %v821 = vpack.c.bf16 %v672, %v671
    %v822 = vpack.c.bf16 %v674, %v673
    %v823 = vpack.c.bf16 %v676, %v675
    %v824 = vpack.c.bf16 %v678, %v677
    %v825 = vpack.c.bf16 %v680, %v679
    %v826 = vpack.c.bf16 %v682, %v681
    %v827 = vld [vmem:[#allocation10] sm:$0xf]
    %v828 = vld [vmem:[#allocation10 + $0x4] sm:$0xf]
    %v829 = vld [vmem:[#allocation10 + $0x8] sm:$0xf]
    %v830 = vld [vmem:[#allocation10 + $0xc] sm:$0xf]
    %s831 = scalar_lea.vmem [#allocation10], 16
    %v832 = vld [vmem:[%s831] sm:$0xf]
    %v833 = vld [vmem:[%s831 + $0x4] sm:$0xf]
    %v834 = vld [vmem:[%s831 + $0x8] sm:$0xf]
    %v835 = vld [vmem:[%s831 + $0xc] sm:$0xf]
    %s836 = scalar_lea.vmem [#allocation10], 32
    %v837 = vld [vmem:[%s836] sm:$0xf]
    %v838 = vld [vmem:[%s836 + $0x4] sm:$0xf]
    %v839 = vld [vmem:[%s836 + $0x8] sm:$0xf]
    %v840 = vld [vmem:[%s836 + $0xc] sm:$0xf]
    %s841 = scalar_lea.vmem [#allocation10], 48
    %v842 = vld [vmem:[%s841] sm:$0xf]
    %v843 = vld [vmem:[%s841 + $0x4] sm:$0xf]
    %v844 = vld [vmem:[%s841 + $0x8] sm:$0xf]
    %v845 = vld [vmem:[%s841 + $0xc] sm:$0xf]
    %v846 = vlaneseq
    %v847 = vshrl.u32 %v846, 7
    %v848 = vsub.s32 0, %v847
    %v849 = vrot.slane %v95, %v848
    %v854 = vunpack.c.l.b16 %v827
    %v855 = vunpack.c.l.b16 %v828
    %v856 = vunpack.c.l.b16 %v829
    %v857 = vunpack.c.l.b16 %v830
    %v858 = vpack.c.b16 %v855, %v854
    %v859 = vpack.c.b16 %v857, %v856
    %v863 = vsel %vm129, %v747, 0
    %v866 = vsel %vm129, %v748, 0
    %v869 = vsel %vm129, %v749, 0
    %v872 = vsel %vm129, %v750, 0
    %v875 = vsel %vm129, %v751, 0
    %v878 = vsel %vm129, %v752, 0
    %v881 = vsel %vm129, %v753, 0
    %v884 = vsel %vm129, %v754, 0
    %v887 = vsel %vm129, %v755, 0
    %v890 = vsel %vm129, %v756, 0
    %v893 = vsel %vm129, %v757, 0
    %v896 = vsel %vm129, %v758, 0
    %v899 = vsel %vm129, %v759, 0
    %v902 = vsel %vm129, %v760, 0
    %v905 = vsel %vm129, %v761, 0
    %v908 = vsel %vm129, %v762, 0
    %910 = vmatprep.subr.bf16.mxu0 0
    %911 = vmatpush1.bf16.msra.mxu0 %v858
    %912 = vmatprep.subr.bf16.mxu0 0
    %913 = vmatpush1.bf16.msra.mxu0 %v859
    %914 = vmatprep.subr.bf16.mxu0 0
    %915 = vmatpush1.bf16.msra.mxu0 0
    %916 = vmatprep.subr.bf16.mxu0 0
    %917 = vmatpush1.bf16.msra.mxu0 0
    %918 = vmatprep.subr.bf16.mxu0 0
    %919 = vmatpush1.bf16.msra.mxu0 0
    %920 = vmatprep.subr.bf16.mxu0 0
    %921 = vmatpush1.bf16.msra.mxu0 0
    %922 = vmatprep.subr.bf16.mxu0 0
    %923 = vmatpush1.bf16.msra.mxu0 0
    %924 = vmatprep.subr.bf16.mxu0 0
    %925 = vmatpush1.bf16.msra.mxu0 0
    %926 = vmatprep.subr.bf16.mxu0 0
    %927 = vmatpush1.bf16.msra.mxu0 0
    %928 = vmatprep.subr.bf16.mxu0 0
    %929 = vmatpush1.bf16.msra.mxu0 0
    %930 = vmatprep.subr.bf16.mxu0 0
    %931 = vmatpush1.bf16.msra.mxu0 0
    %932 = vmatprep.subr.bf16.mxu0 0
    %933 = vmatpush1.bf16.msra.mxu0 0
    %934 = vmatprep.subr.bf16.mxu0 0
    %935 = vmatpush1.bf16.msra.mxu0 0
    %936 = vmatprep.subr.bf16.mxu0 0
    %937 = vmatpush1.bf16.msra.mxu0 0
    %938 = vmatprep.subr.bf16.mxu0 0
    %939 = vmatpush1.bf16.msra.mxu0 0
    %940 = vmatprep.subr.bf16.mxu0 0
    %941 = vmatpush1.bf16.msra.mxu0 0
    %942 = vmatprep.mubr.bf16.mxu0 0
    %943 = vmatmul.mubr.bf16.gmra.mrb[0].mxu0 %v863
    %v944 = vpop.f32.mrb[0].mxu0
    %v945 = vadd.f32 %v849, %v944
    %v946 = vpop.f32.mrb[0].mxu0
    %v947 = vpop.f32.mrb[0].mxu0
    %v948 = vadd.f32 %v849, %v947
    %v949 = vpop.f32.mrb[0].mxu0
    %950 = vmatprep.mubr.bf16.mxu0 0
    %951 = vmatmul.mubr.bf16.gmra.mrb[0].mxu0 %v866
    %v952 = vpop.f32.mrb[0].mxu0
    %v953 = vadd.f32 %v849, %v952
    %v954 = vpop.f32.mrb[0].mxu0
    %v955 = vpop.f32.mrb[0].mxu0
    %v956 = vadd.f32 %v849, %v955
    %v957 = vpop.f32.mrb[0].mxu0
    %958 = vmatprep.mubr.bf16.mxu0 0
    %959 = vmatmul.mubr.bf16.gmra.mrb[0].mxu0 %v869
    %v960 = vpop.f32.mrb[0].mxu0
    %v961 = vadd.f32 %v849, %v960
    %v962 = vpop.f32.mrb[0].mxu0
    %v963 = vpop.f32.mrb[0].mxu0
    %v964 = vadd.f32 %v849, %v963
    %v965 = vpop.f32.mrb[0].mxu0
    %966 = vmatprep.mubr.bf16.mxu0 0
    %967 = vmatmul.mubr.bf16.gmra.mrb[0].mxu0 %v872
    %v968 = vpop.f32.mrb[0].mxu0
    %v969 = vadd.f32 %v849, %v968
    %v970 = vpop.f32.mrb[0].mxu0
    %v971 = vpop.f32.mrb[0].mxu0
    %v972 = vadd.f32 %v849, %v971
    %v973 = vpop.f32.mrb[0].mxu0
    %974 = vmatprep.mubr.bf16.mxu0 0
    %975 = vmatmul.mubr.bf16.gmra.mrb[0].mxu0 %v875
    %v976 = vpop.f32.mrb[0].mxu0
    %v977 = vadd.f32 %v849, %v976
    %v978 = vpop.f32.mrb[0].mxu0
    %v979 = vpop.f32.mrb[0].mxu0
    %v980 = vadd.f32 %v849, %v979
    %v981 = vpop.f32.mrb[0].mxu0
    %982 = vmatprep.mubr.bf16.mxu0 0
    %983 = vmatmul.mubr.bf16.gmra.mrb[0].mxu0 %v878
    %v984 = vpop.f32.mrb[0].mxu0
    %v985 = vadd.f32 %v849, %v984
    %v986 = vpop.f32.mrb[0].mxu0
    %v987 = vpop.f32.mrb[0].mxu0
    %v988 = vadd.f32 %v849, %v987
    %v989 = vpop.f32.mrb[0].mxu0
    %990 = vmatprep.mubr.bf16.mxu0 0
    %991 = vmatmul.mubr.bf16.gmra.mrb[0].mxu0 %v881
    %v992 = vpop.f32.mrb[0].mxu0
    %v993 = vadd.f32 %v849, %v992
    %v994 = vpop.f32.mrb[0].mxu0
    %v995 = vpop.f32.mrb[0].mxu0
    %v996 = vadd.f32 %v849, %v995
    %v997 = vpop.f32.mrb[0].mxu0
    %998 = vmatprep.mubr.bf16.mxu0 0
    %999 = vmatmul.mubr.bf16.gmra.mrb[0].mxu0 %v884
    %v1000 = vpop.f32.mrb[0].mxu0
    %v1001 = vadd.f32 %v849, %v1000
    %v1002 = vpop.f32.mrb[0].mxu0
    %v1003 = vpop.f32.mrb[0].mxu0
    %v1004 = vadd.f32 %v849, %v1003
    %v1005 = vpop.f32.mrb[0].mxu0
    %1006 = vmatprep.mubr.bf16.mxu0 0
    %1007 = vmatmul.mubr.bf16.gmra.mrb[0].mxu0 %v887
    %v1008 = vpop.f32.mrb[0].mxu0
    %v1009 = vadd.f32 %v849, %v1008
    %v1010 = vpop.f32.mrb[0].mxu0
    %v1011 = vpop.f32.mrb[0].mxu0
    %v1012 = vadd.f32 %v849, %v1011
    %v1013 = vpop.f32.mrb[0].mxu0
    %1014 = vmatprep.mubr.bf16.mxu0 0
    %1015 = vmatmul.mubr.bf16.gmra.mrb[0].mxu0 %v890
    %v1016 = vpop.f32.mrb[0].mxu0
    %v1017 = vadd.f32 %v849, %v1016
    %v1018 = vpop.f32.mrb[0].mxu0
    %v1019 = vpop.f32.mrb[0].mxu0
    %v1020 = vadd.f32 %v849, %v1019
    %v1021 = vpop.f32.mrb[0].mxu0
    %1022 = vmatprep.mubr.bf16.mxu0 0
    %1023 = vmatmul.mubr.bf16.gmra.mrb[0].mxu0 %v893
    %v1024 = vpop.f32.mrb[0].mxu0
    %v1025 = vadd.f32 %v849, %v1024
    %v1026 = vpop.f32.mrb[0].mxu0
    %v1027 = vpop.f32.mrb[0].mxu0
    %v1028 = vadd.f32 %v849, %v1027
    %v1029 = vpop.f32.mrb[0].mxu0
    %1030 = vmatprep.mubr.bf16.mxu0 0
    %1031 = vmatmul.mubr.bf16.gmra.mrb[0].mxu0 %v896
    %v1032 = vpop.f32.mrb[0].mxu0
    %v1033 = vadd.f32 %v849, %v1032
    %v1034 = vpop.f32.mrb[0].mxu0
    %v1035 = vpop.f32.mrb[0].mxu0
    %v1036 = vadd.f32 %v849, %v1035
    %v1037 = vpop.f32.mrb[0].mxu0
    %1038 = vmatprep.mubr.bf16.mxu0 0
    %1039 = vmatmul.mubr.bf16.gmra.mrb[0].mxu0 %v899
    %v1040 = vpop.f32.mrb[0].mxu0
    %v1041 = vadd.f32 %v849, %v1040
    %v1042 = vpop.f32.mrb[0].mxu0
    %v1043 = vpop.f32.mrb[0].mxu0
    %v1044 = vadd.f32 %v849, %v1043
    %v1045 = vpop.f32.mrb[0].mxu0
    %1046 = vmatprep.mubr.bf16.mxu0 0
    %1047 = vmatmul.mubr.bf16.gmra.mrb[0].mxu0 %v902
    %v1048 = vpop.f32.mrb[0].mxu0
    %v1049 = vadd.f32 %v849, %v1048
    %v1050 = vpop.f32.mrb[0].mxu0
    %v1051 = vpop.f32.mrb[0].mxu0
    %v1052 = vadd.f32 %v849, %v1051
    %v1053 = vpop.f32.mrb[0].mxu0
    %1054 = vmatprep.mubr.bf16.mxu0 0
    %1055 = vmatmul.mubr.bf16.gmra.mrb[0].mxu0 %v905
    %v1056 = vpop.f32.mrb[0].mxu0
    %v1057 = vadd.f32 %v849, %v1056
    %v1058 = vpop.f32.mrb[0].mxu0
    %v1059 = vpop.f32.mrb[0].mxu0
    %v1060 = vadd.f32 %v849, %v1059
    %v1061 = vpop.f32.mrb[0].mxu0
    %1062 = vmatprep.mubr.bf16.mxu0 0
    %1063 = vmatmul.mubr.bf16.gmra.mrb[0].mxu0 %v908
    %v1064 = vpop.f32.mrb[0].mxu0
    %v1065 = vadd.f32 %v849, %v1064
    %v1066 = vpop.f32.mrb[0].mxu0
    %v1067 = vpop.f32.mrb[0].mxu0
    %v1068 = vadd.f32 %v849, %v1067
    %v1069 = vpop.f32.mrb[0].mxu0
    %1070 = vdwg.mxu0
    %v1075 = vunpack.c.l.b16 %v832
    %v1076 = vunpack.c.l.b16 %v833
    %v1077 = vunpack.c.l.b16 %v834
    %v1078 = vunpack.c.l.b16 %v835
    %v1079 = vpack.c.b16 %v1076, %v1075
    %v1080 = vpack.c.b16 %v1078, %v1077
    %v1084 = vsel %vm129, %v795, 0
    %v1087 = vsel %vm129, %v796, 0
    %v1090 = vsel %vm129, %v797, 0
    %v1093 = vsel %vm129, %v798, 0
    %v1096 = vsel %vm129, %v799, 0
    %v1099 = vsel %vm129, %v800, 0
    %v1102 = vsel %vm129, %v801, 0
    %v1105 = vsel %vm129, %v802, 0
    %v1108 = vsel %vm129, %v803, 0
    %v1111 = vsel %vm129, %v804, 0
    %v1114 = vsel %vm129, %v805, 0
    %v1117 = vsel %vm129, %v806, 0
    %v1120 = vsel %vm129, %v807, 0
    %v1123 = vsel %vm129, %v808, 0
    %v1126 = vsel %vm129, %v809, 0
    %v1129 = vsel %vm129, %v810, 0
    %1131 = vmatprep.subr.bf16.mxu0 0
    %1132 = vmatpush1.bf16.msra.mxu0 %v1079
    %1133 = vmatprep.subr.bf16.mxu0 0
    %1134 = vmatpush1.bf16.msra.mxu0 %v1080
    %1135 = vmatprep.subr.bf16.mxu0 0
    %1136 = vmatpush1.bf16.msra.mxu0 0
    %1137 = vmatprep.subr.bf16.mxu0 0
    %1138 = vmatpush1.bf16.msra.mxu0 0
    %1139 = vmatprep.subr.bf16.mxu0 0
    %1140 = vmatpush1.bf16.msra.mxu0 0
    %1141 = vmatprep.subr.bf16.mxu0 0
    %1142 = vmatpush1.bf16.msra.mxu0 0
    %1143 = vmatprep.subr.bf16.mxu0 0
    %1144 = vmatpush1.bf16.msra.mxu0 0
    %1145 = vmatprep.subr.bf16.mxu0 0
    %1146 = vmatpush1.bf16.msra.mxu0 0
    %1147 = vmatprep.subr.bf16.mxu0 0
    %1148 = vmatpush1.bf16.msra.mxu0 0
    %1149 = vmatprep.subr.bf16.mxu0 0
    %1150 = vmatpush1.bf16.msra.mxu0 0
    %1151 = vmatprep.subr.bf16.mxu0 0
    %1152 = vmatpush1.bf16.msra.mxu0 0
    %1153 = vmatprep.subr.bf16.mxu0 0
    %1154 = vmatpush1.bf16.msra.mxu0 0
    %1155 = vmatprep.subr.bf16.mxu0 0
    %1156 = vmatpush1.bf16.msra.mxu0 0
    %1157 = vmatprep.subr.bf16.mxu0 0
    %1158 = vmatpush1.bf16.msra.mxu0 0
    %1159 = vmatprep.subr.bf16.mxu0 0
    %1160 = vmatpush1.bf16.msra.mxu0 0
    %1161 = vmatprep.subr.bf16.mxu0 0
    %1162 = vmatpush1.bf16.msra.mxu0 0
    %1163 = vmatprep.mubr.bf16.mxu0 0
    %1164 = vmatmul.mubr.bf16.gmra.mrb[0].mxu0 %v1084
    %v1165 = vpop.f32.mrb[0].mxu0
    %v1166 = vadd.f32 0.0, %v1165
    %v1167 = vpop.f32.mrb[0].mxu0
    %v1168 = vpop.f32.mrb[0].mxu0
    %v1169 = vadd.f32 0.0, %v1168
    %v1170 = vpop.f32.mrb[0].mxu0
    %1171 = vmatprep.mubr.bf16.mxu0 0
    %1172 = vmatmul.mubr.bf16.gmra.mrb[0].mxu0 %v1087
    %v1173 = vpop.f32.mrb[0].mxu0
    %v1174 = vadd.f32 0.0, %v1173
    %v1175 = vpop.f32.mrb[0].mxu0
    %v1176 = vpop.f32.mrb[0].mxu0
    %v1177 = vadd.f32 0.0, %v1176
    %v1178 = vpop.f32.mrb[0].mxu0
    %1179 = vmatprep.mubr.bf16.mxu0 0
    %1180 = vmatmul.mubr.bf16.gmra.mrb[0].mxu0 %v1090
    %v1181 = vpop.f32.mrb[0].mxu0
    %v1182 = vadd.f32 0.0, %v1181
    %v1183 = vpop.f32.mrb[0].mxu0
    %v1184 = vpop.f32.mrb[0].mxu0
    %v1185 = vadd.f32 0.0, %v1184
    %v1186 = vpop.f32.mrb[0].mxu0
    %1187 = vmatprep.mubr.bf16.mxu0 0
    %1188 = vmatmul.mubr.bf16.gmra.mrb[0].mxu0 %v1093
    %v1189 = vpop.f32.mrb[0].mxu0
    %v1190 = vadd.f32 0.0, %v1189
    %v1191 = vpop.f32.mrb[0].mxu0
    %v1192 = vpop.f32.mrb[0].mxu0
    %v1193 = vadd.f32 0.0, %v1192
    %v1194 = vpop.f32.mrb[0].mxu0
    %1195 = vmatprep.mubr.bf16.mxu0 0
    %1196 = vmatmul.mubr.bf16.gmra.mrb[0].mxu0 %v1096
    %v1197 = vpop.f32.mrb[0].mxu0
    %v1198 = vadd.f32 0.0, %v1197
    %v1199 = vpop.f32.mrb[0].mxu0
    %v1200 = vpop.f32.mrb[0].mxu0
    %v1201 = vadd.f32 0.0, %v1200
    %v1202 = vpop.f32.mrb[0].mxu0
    %1203 = vmatprep.mubr.bf16.mxu0 0
    %1204 = vmatmul.mubr.bf16.gmra.mrb[0].mxu0 %v1099
    %v1205 = vpop.f32.mrb[0].mxu0
    %v1206 = vadd.f32 0.0, %v1205
    %v1207 = vpop.f32.mrb[0].mxu0
    %v1208 = vpop.f32.mrb[0].mxu0
    %v1209 = vadd.f32 0.0, %v1208
    %v1210 = vpop.f32.mrb[0].mxu0
    %1211 = vmatprep.mubr.bf16.mxu0 0
    %1212 = vmatmul.mubr.bf16.gmra.mrb[0].mxu0 %v1102
    %v1213 = vpop.f32.mrb[0].mxu0
    %v1214 = vadd.f32 0.0, %v1213
    %v1215 = vpop.f32.mrb[0].mxu0
    %v1216 = vpop.f32.mrb[0].mxu0
    %v1217 = vadd.f32 0.0, %v1216
    %v1218 = vpop.f32.mrb[0].mxu0
    %1219 = vmatprep.mubr.bf16.mxu0 0
    %1220 = vmatmul.mubr.bf16.gmra.mrb[0].mxu0 %v1105
    %v1221 = vpop.f32.mrb[0].mxu0
    %v1222 = vadd.f32 0.0, %v1221
    %v1223 = vpop.f32.mrb[0].mxu0
    %v1224 = vpop.f32.mrb[0].mxu0
    %v1225 = vadd.f32 0.0, %v1224
    %v1226 = vpop.f32.mrb[0].mxu0
    %1227 = vmatprep.mubr.bf16.mxu0 0
    %1228 = vmatmul.mubr.bf16.gmra.mrb[0].mxu0 %v1108
    %v1229 = vpop.f32.mrb[0].mxu0
    %v1230 = vadd.f32 0.0, %v1229
    %v1231 = vpop.f32.mrb[0].mxu0
    %v1232 = vpop.f32.mrb[0].mxu0
    %v1233 = vadd.f32 0.0, %v1232
    %v1234 = vpop.f32.mrb[0].mxu0
    %1235 = vmatprep.mubr.bf16.mxu0 0
    %1236 = vmatmul.mubr.bf16.gmra.mrb[0].mxu0 %v1111
    %v1237 = vpop.f32.mrb[0].mxu0
    %v1238 = vadd.f32 0.0, %v1237
    %v1239 = vpop.f32.mrb[0].mxu0
    %v1240 = vpop.f32.mrb[0].mxu0
    %v1241 = vadd.f32 0.0, %v1240
    %v1242 = vpop.f32.mrb[0].mxu0
    %1243 = vmatprep.mubr.bf16.mxu0 0
    %1244 = vmatmul.mubr.bf16.gmra.mrb[0].mxu0 %v1114
    %v1245 = vpop.f32.mrb[0].mxu0
    %v1246 = vadd.f32 0.0, %v1245
    %v1247 = vpop.f32.mrb[0].mxu0
    %v1248 = vpop.f32.mrb[0].mxu0
    %v1249 = vadd.f32 0.0, %v1248
    %v1250 = vpop.f32.mrb[0].mxu0
    %1251 = vmatprep.mubr.bf16.mxu0 0
    %1252 = vmatmul.mubr.bf16.gmra.mrb[0].mxu0 %v1117
    %v1253 = vpop.f32.mrb[0].mxu0
    %v1254 = vadd.f32 0.0, %v1253
    %v1255 = vpop.f32.mrb[0].mxu0
    %v1256 = vpop.f32.mrb[0].mxu0
    %v1257 = vadd.f32 0.0, %v1256
    %v1258 = vpop.f32.mrb[0].mxu0
    %1259 = vmatprep.mubr.bf16.mxu0 0
    %1260 = vmatmul.mubr.bf16.gmra.mrb[0].mxu0 %v1120
    %v1261 = vpop.f32.mrb[0].mxu0
    %v1262 = vadd.f32 0.0, %v1261
    %v1263 = vpop.f32.mrb[0].mxu0
    %v1264 = vpop.f32.mrb[0].mxu0
    %v1265 = vadd.f32 0.0, %v1264
    %v1266 = vpop.f32.mrb[0].mxu0
    %1267 = vmatprep.mubr.bf16.mxu0 0
    %1268 = vmatmul.mubr.bf16.gmra.mrb[0].mxu0 %v1123
    %v1269 = vpop.f32.mrb[0].mxu0
    %v1270 = vadd.f32 0.0, %v1269
    %v1271 = vpop.f32.mrb[0].mxu0
    %v1272 = vpop.f32.mrb[0].mxu0
    %v1273 = vadd.f32 0.0, %v1272
    %v1274 = vpop.f32.mrb[0].mxu0
    %1275 = vmatprep.mubr.bf16.mxu0 0
    %1276 = vmatmul.mubr.bf16.gmra.mrb[0].mxu0 %v1126
    %v1277 = vpop.f32.mrb[0].mxu0
    %v1278 = vadd.f32 0.0, %v1277
    %v1279 = vpop.f32.mrb[0].mxu0
    %v1280 = vpop.f32.mrb[0].mxu0
    %v1281 = vadd.f32 0.0, %v1280
    %v1282 = vpop.f32.mrb[0].mxu0
    %1283 = vmatprep.mubr.bf16.mxu0 0
    %1284 = vmatmul.mubr.bf16.gmra.mrb[0].mxu0 %v1129
    %v1285 = vpop.f32.mrb[0].mxu0
    %v1286 = vadd.f32 0.0, %v1285
    %v1287 = vpop.f32.mrb[0].mxu0
    %v1288 = vpop.f32.mrb[0].mxu0
    %v1289 = vadd.f32 0.0, %v1288
    %v1290 = vpop.f32.mrb[0].mxu0
    %1291 = vdwg.mxu0
    %v1296 = vunpack.c.l.b16 %v837
    %v1297 = vunpack.c.l.b16 %v838
    %v1298 = vunpack.c.l.b16 %v839
    %v1299 = vunpack.c.l.b16 %v840
    %v1300 = vpack.c.b16 %v1297, %v1296
    %v1301 = vpack.c.b16 %v1299, %v1298
    %v1305 = vsel %vm129, %v811, 0
    %v1308 = vsel %vm129, %v812, 0
    %v1311 = vsel %vm129, %v813, 0
    %v1314 = vsel %vm129, %v814, 0
    %v1317 = vsel %vm129, %v815, 0
    %v1320 = vsel %vm129, %v816, 0
    %v1323 = vsel %vm129, %v817, 0
    %v1326 = vsel %vm129, %v818, 0
    %v1329 = vsel %vm129, %v819, 0
    %v1332 = vsel %vm129, %v820, 0
    %v1335 = vsel %vm129, %v821, 0
    %v1338 = vsel %vm129, %v822, 0
    %v1341 = vsel %vm129, %v823, 0
    %v1344 = vsel %vm129, %v824, 0
    %v1347 = vsel %vm129, %v825, 0
    %v1350 = vsel %vm129, %v826, 0
    %1352 = vmatprep.subr.bf16.mxu0 0
    %1353 = vmatpush1.bf16.msra.mxu0 %v1300
    %1354 = vmatprep.subr.bf16.mxu0 0
    %1355 = vmatpush1.bf16.msra.mxu0 %v1301
    %1356 = vmatprep.subr.bf16.mxu0 0
    %1357 = vmatpush1.bf16.msra.mxu0 0
    %1358 = vmatprep.subr.bf16.mxu0 0
    %1359 = vmatpush1.bf16.msra.mxu0 0
    %1360 = vmatprep.subr.bf16.mxu0 0
    %1361 = vmatpush1.bf16.msra.mxu0 0
    %1362 = vmatprep.subr.bf16.mxu0 0
    %1363 = vmatpush1.bf16.msra.mxu0 0
    %1364 = vmatprep.subr.bf16.mxu0 0
    %1365 = vmatpush1.bf16.msra.mxu0 0
    %1366 = vmatprep.subr.bf16.mxu0 0
    %1367 = vmatpush1.bf16.msra.mxu0 0
    %1368 = vmatprep.subr.bf16.mxu0 0
    %1369 = vmatpush1.bf16.msra.mxu0 0
    %1370 = vmatprep.subr.bf16.mxu0 0
    %1371 = vmatpush1.bf16.msra.mxu0 0
    %1372 = vmatprep.subr.bf16.mxu0 0
    %1373 = vmatpush1.bf16.msra.mxu0 0
    %1374 = vmatprep.subr.bf16.mxu0 0
    %1375 = vmatpush1.bf16.msra.mxu0 0
    %1376 = vmatprep.subr.bf16.mxu0 0
    %1377 = vmatpush1.bf16.msra.mxu0 0
    %1378 = vmatprep.subr.bf16.mxu0 0
    %1379 = vmatpush1.bf16.msra.mxu0 0
    %1380 = vmatprep.subr.bf16.mxu0 0
    %1381 = vmatpush1.bf16.msra.mxu0 0
    %1382 = vmatprep.subr.bf16.mxu0 0
    %1383 = vmatpush1.bf16.msra.mxu0 0
    %1384 = vmatprep.mubr.bf16.mxu0 0
    %1385 = vmatmul.mubr.bf16.gmra.mrb[0].mxu0 %v1305
    %v1386 = vpop.f32.mrb[0].mxu0
    %v1387 = vadd.f32 0.0, %v1386
    %v1388 = vpop.f32.mrb[0].mxu0
    %v1389 = vpop.f32.mrb[0].mxu0
    %v1390 = vadd.f32 0.0, %v1389
    %v1391 = vpop.f32.mrb[0].mxu0
    %1392 = vmatprep.mubr.bf16.mxu0 0
    %1393 = vmatmul.mubr.bf16.gmra.mrb[0].mxu0 %v1308
    %v1394 = vpop.f32.mrb[0].mxu0
    %v1395 = vadd.f32 0.0, %v1394
    %v1396 = vpop.f32.mrb[0].mxu0
    %v1397 = vpop.f32.mrb[0].mxu0
    %v1398 = vadd.f32 0.0, %v1397
    %v1399 = vpop.f32.mrb[0].mxu0
    %1400 = vmatprep.mubr.bf16.mxu0 0
    %1401 = vmatmul.mubr.bf16.gmra.mrb[0].mxu0 %v1311
    %v1402 = vpop.f32.mrb[0].mxu0
    %v1403 = vadd.f32 0.0, %v1402
    %v1404 = vpop.f32.mrb[0].mxu0
    %v1405 = vpop.f32.mrb[0].mxu0
    %v1406 = vadd.f32 0.0, %v1405
    %v1407 = vpop.f32.mrb[0].mxu0
    %1408 = vmatprep.mubr.bf16.mxu0 0
    %1409 = vmatmul.mubr.bf16.gmra.mrb[0].mxu0 %v1314
    %v1410 = vpop.f32.mrb[0].mxu0
    %v1411 = vadd.f32 0.0, %v1410
    %v1412 = vpop.f32.mrb[0].mxu0
    %v1413 = vpop.f32.mrb[0].mxu0
    %v1414 = vadd.f32 0.0, %v1413
    %v1415 = vpop.f32.mrb[0].mxu0
    %1416 = vmatprep.mubr.bf16.mxu0 0
    %1417 = vmatmul.mubr.bf16.gmra.mrb[0].mxu0 %v1317
    %v1418 = vpop.f32.mrb[0].mxu0
    %v1419 = vadd.f32 0.0, %v1418
    %v1420 = vpop.f32.mrb[0].mxu0
    %v1421 = vpop.f32.mrb[0].mxu0
    %v1422 = vadd.f32 0.0, %v1421
    %v1423 = vpop.f32.mrb[0].mxu0
    %1424 = vmatprep.mubr.bf16.mxu0 0
    %1425 = vmatmul.mubr.bf16.gmra.mrb[0].mxu0 %v1320
    %v1426 = vpop.f32.mrb[0].mxu0
    %v1427 = vadd.f32 0.0, %v1426
    %v1428 = vpop.f32.mrb[0].mxu0
    %v1429 = vpop.f32.mrb[0].mxu0
    %v1430 = vadd.f32 0.0, %v1429
    %v1431 = vpop.f32.mrb[0].mxu0
    %1432 = vmatprep.mubr.bf16.mxu0 0
    %1433 = vmatmul.mubr.bf16.gmra.mrb[0].mxu0 %v1323
    %v1434 = vpop.f32.mrb[0].mxu0
    %v1435 = vadd.f32 0.0, %v1434
    %v1436 = vpop.f32.mrb[0].mxu0
    %v1437 = vpop.f32.mrb[0].mxu0
    %v1438 = vadd.f32 0.0, %v1437
    %v1439 = vpop.f32.mrb[0].mxu0
    %1440 = vmatprep.mubr.bf16.mxu0 0
    %1441 = vmatmul.mubr.bf16.gmra.mrb[0].mxu0 %v1326
    %v1442 = vpop.f32.mrb[0].mxu0
    %v1443 = vadd.f32 0.0, %v1442
    %v1444 = vpop.f32.mrb[0].mxu0
    %v1445 = vpop.f32.mrb[0].mxu0
    %v1446 = vadd.f32 0.0, %v1445
    %v1447 = vpop.f32.mrb[0].mxu0
    %1448 = vmatprep.mubr.bf16.mxu0 0
    %1449 = vmatmul.mubr.bf16.gmra.mrb[0].mxu0 %v1329
    %v1450 = vpop.f32.mrb[0].mxu0
    %v1451 = vadd.f32 0.0, %v1450
    %v1452 = vpop.f32.mrb[0].mxu0
    %v1453 = vpop.f32.mrb[0].mxu0
    %v1454 = vadd.f32 0.0, %v1453
    %v1455 = vpop.f32.mrb[0].mxu0
    %1456 = vmatprep.mubr.bf16.mxu0 0
    %1457 = vmatmul.mubr.bf16.gmra.mrb[0].mxu0 %v1332
    %v1458 = vpop.f32.mrb[0].mxu0
    %v1459 = vadd.f32 0.0, %v1458
    %v1460 = vpop.f32.mrb[0].mxu0
    %v1461 = vpop.f32.mrb[0].mxu0
    %v1462 = vadd.f32 0.0, %v1461
    %v1463 = vpop.f32.mrb[0].mxu0
    %1464 = vmatprep.mubr.bf16.mxu0 0
    %1465 = vmatmul.mubr.bf16.gmra.mrb[0].mxu0 %v1335
    %v1466 = vpop.f32.mrb[0].mxu0
    %v1467 = vadd.f32 0.0, %v1466
    %v1468 = vpop.f32.mrb[0].mxu0
    %v1469 = vpop.f32.mrb[0].mxu0
    %v1470 = vadd.f32 0.0, %v1469
    %v1471 = vpop.f32.mrb[0].mxu0
    %1472 = vmatprep.mubr.bf16.mxu0 0
    %1473 = vmatmul.mubr.bf16.gmra.mrb[0].mxu0 %v1338
    %v1474 = vpop.f32.mrb[0].mxu0
    %v1475 = vadd.f32 0.0, %v1474
    %v1476 = vpop.f32.mrb[0].mxu0
    %v1477 = vpop.f32.mrb[0].mxu0
    %v1478 = vadd.f32 0.0, %v1477
    %v1479 = vpop.f32.mrb[0].mxu0
    %1480 = vmatprep.mubr.bf16.mxu0 0
    %1481 = vmatmul.mubr.bf16.gmra.mrb[0].mxu0 %v1341
    %v1482 = vpop.f32.mrb[0].mxu0
    %v1483 = vadd.f32 0.0, %v1482
    %v1484 = vpop.f32.mrb[0].mxu0
    %v1485 = vpop.f32.mrb[0].mxu0
    %v1486 = vadd.f32 0.0, %v1485
    %v1487 = vpop.f32.mrb[0].mxu0
    %1488 = vmatprep.mubr.bf16.mxu0 0
    %1489 = vmatmul.mubr.bf16.gmra.mrb[0].mxu0 %v1344
    %v1490 = vpop.f32.mrb[0].mxu0
    %v1491 = vadd.f32 0.0, %v1490
    %v1492 = vpop.f32.mrb[0].mxu0
    %v1493 = vpop.f32.mrb[0].mxu0
    %v1494 = vadd.f32 0.0, %v1493
    %v1495 = vpop.f32.mrb[0].mxu0
    %1496 = vmatprep.mubr.bf16.mxu0 0
    %1497 = vmatmul.mubr.bf16.gmra.mrb[0].mxu0 %v1347
    %v1498 = vpop.f32.mrb[0].mxu0
    %v1499 = vadd.f32 0.0, %v1498
    %v1500 = vpop.f32.mrb[0].mxu0
    %v1501 = vpop.f32.mrb[0].mxu0
    %v1502 = vadd.f32 0.0, %v1501
    %v1503 = vpop.f32.mrb[0].mxu0
    %1504 = vmatprep.mubr.bf16.mxu0 0
    %1505 = vmatmul.mubr.bf16.gmra.mrb[0].mxu0 %v1350
    %v1506 = vpop.f32.mrb[0].mxu0
    %v1507 = vadd.f32 0.0, %v1506
    %v1508 = vpop.f32.mrb[0].mxu0
    %v1509 = vpop.f32.mrb[0].mxu0
    %v1510 = vadd.f32 0.0, %v1509
    %v1511 = vpop.f32.mrb[0].mxu0
    %1512 = vdwg.mxu0
    %v1513 = vpack.c.bf16 %v948, %v945
    %v1514 = vpack.c.bf16 %v956, %v953
    %v1515 = vpack.c.bf16 %v964, %v961
    %v1516 = vpack.c.bf16 %v972, %v969
    %v1517 = vpack.c.bf16 %v980, %v977
    %v1518 = vpack.c.bf16 %v988, %v985
    %v1519 = vpack.c.bf16 %v996, %v993
    %v1520 = vpack.c.bf16 %v1004, %v1001
    %v1521 = vpack.c.bf16 %v1012, %v1009
    %v1522 = vpack.c.bf16 %v1020, %v1017
    %v1523 = vpack.c.bf16 %v1028, %v1025
    %v1524 = vpack.c.bf16 %v1036, %v1033
    %v1525 = vpack.c.bf16 %v1044, %v1041
    %v1526 = vpack.c.bf16 %v1052, %v1049
    %v1527 = vpack.c.bf16 %v1060, %v1057
    %v1528 = vpack.c.bf16 %v1068, %v1065
    %v1529 = vpack.c.bf16 %v1169, %v1166
    %v1530 = vpack.c.bf16 %v1177, %v1174
    %v1531 = vpack.c.bf16 %v1185, %v1182
    %v1532 = vpack.c.bf16 %v1193, %v1190
    %v1533 = vpack.c.bf16 %v1201, %v1198
    %v1534 = vpack.c.bf16 %v1209, %v1206
    %v1535 = vpack.c.bf16 %v1217, %v1214
    %v1536 = vpack.c.bf16 %v1225, %v1222
    %v1537 = vpack.c.bf16 %v1233, %v1230
    %v1538 = vpack.c.bf16 %v1241, %v1238
    %v1539 = vpack.c.bf16 %v1249, %v1246
    %v1540 = vpack.c.bf16 %v1257, %v1254
    %v1541 = vpack.c.bf16 %v1265, %v1262
    %v1542 = vpack.c.bf16 %v1273, %v1270
    %v1543 = vpack.c.bf16 %v1281, %v1278
    %v1544 = vpack.c.bf16 %v1289, %v1286
    %v1545 = vpack.c.bf16 %v1390, %v1387
    %v1546 = vpack.c.bf16 %v1398, %v1395
    %v1547 = vpack.c.bf16 %v1406, %v1403
    %v1548 = vpack.c.bf16 %v1414, %v1411
    %v1549 = vpack.c.bf16 %v1422, %v1419
    %v1550 = vpack.c.bf16 %v1430, %v1427
    %v1551 = vpack.c.bf16 %v1438, %v1435
    %v1552 = vpack.c.bf16 %v1446, %v1443
    %v1553 = vpack.c.bf16 %v1454, %v1451
    %v1554 = vpack.c.bf16 %v1462, %v1459
    %v1555 = vpack.c.bf16 %v1470, %v1467
    %v1556 = vpack.c.bf16 %v1478, %v1475
    %v1557 = vpack.c.bf16 %v1486, %v1483
    %v1558 = vpack.c.bf16 %v1494, %v1491
    %v1559 = vpack.c.bf16 %v1502, %v1499
    %v1560 = vpack.c.bf16 %v1510, %v1507
    %v1561 = vlaneseq
    %v1562 = vshrl.u32 %v1561, 7
    %v1563 = vadd.s32 %v1562, 8
    %v1564 = vadd.s32 %v1562, 16
    %v1565 = vadd.s32 %v1562, 24
    %v1566 = vadd.s32 %v1562, 32
    %v1567 = vadd.s32 %v1562, 40
    %v1568 = vadd.s32 %v1562, 48
    %v1569 = vadd.s32 %v1562, 56
    %v1570 = vadd.s32 %v1562, 64
    %v1571 = vadd.s32 %v1562, 72
    %v1572 = vadd.s32 %v1562, 80
    %v1573 = vadd.s32 %v1562, 88
    %v1574 = vadd.s32 %v1562, 96
    %v1575 = vadd.s32 %v1562, 104
    %v1576 = vadd.s32 %v1562, 112
    %v1577 = vadd.s32 %v1562, 120
    %v1578 = vadd.s32 %v1562, 128
    %v1579 = vadd.s32 %v1562, 136
    %v1580 = vadd.s32 %v1562, 144
    %v1581 = vadd.s32 %v1562, 152
    %v1582 = vadd.s32 %v1562, 160
    %v1583 = vadd.s32 %v1562, 168
    %v1584 = vadd.s32 %v1562, 176
    %v1585 = vadd.s32 %v1562, 184
    %v1586 = vadd.s32 %v1562, 192
    %v1587 = vadd.s32 %v1562, 200
    %v1588 = vadd.s32 %v1562, 208
    %v1589 = vadd.s32 %v1562, 216
    %v1590 = vadd.s32 %v1562, 224
    %v1591 = vadd.s32 %v1562, 232
    %v1592 = vadd.s32 %v1562, 240
    %v1593 = vadd.s32 %v1562, 248
    %v1594 = vcvt.s32.f32 %v1562
    %v1595 = vcvt.s32.f32 %v1563
    %v1596 = vcvt.s32.f32 %v1564
    %v1597 = vcvt.s32.f32 %v1565
    %v1598 = vcvt.s32.f32 %v1566
    %v1599 = vcvt.s32.f32 %v1567
    %v1600 = vcvt.s32.f32 %v1568
    %v1601 = vcvt.s32.f32 %v1569
    %v1602 = vcvt.s32.f32 %v1570
    %v1603 = vcvt.s32.f32 %v1571
    %v1604 = vcvt.s32.f32 %v1572
    %v1605 = vcvt.s32.f32 %v1573
    %v1606 = vcvt.s32.f32 %v1574
    %v1607 = vcvt.s32.f32 %v1575
    %v1608 = vcvt.s32.f32 %v1576
    %v1609 = vcvt.s32.f32 %v1577
    %v1610 = vcvt.s32.f32 %v1578
    %v1611 = vcvt.s32.f32 %v1579
    %v1612 = vcvt.s32.f32 %v1580
    %v1613 = vcvt.s32.f32 %v1581
    %v1614 = vcvt.s32.f32 %v1582
    %v1615 = vcvt.s32.f32 %v1583
    %v1616 = vcvt.s32.f32 %v1584
    %v1617 = vcvt.s32.f32 %v1585
    %v1618 = vcvt.s32.f32 %v1586
    %v1619 = vcvt.s32.f32 %v1587
    %v1620 = vcvt.s32.f32 %v1588
    %v1621 = vcvt.s32.f32 %v1589
    %v1622 = vcvt.s32.f32 %v1590
    %v1623 = vcvt.s32.f32 %v1591
    %v1624 = vcvt.s32.f32 %v1592
    %v1625 = vcvt.s32.f32 %v1593
    %v1626 = vadd.f32 %v1594, 0.5
    %v1627 = vadd.f32 %v1595, 0.5
    %v1628 = vadd.f32 %v1596, 0.5
    %v1629 = vadd.f32 %v1597, 0.5
    %v1630 = vadd.f32 %v1598, 0.5
    %v1631 = vadd.f32 %v1599, 0.5
    %v1632 = vadd.f32 %v1600, 0.5
    %v1633 = vadd.f32 %v1601, 0.5
    %v1634 = vadd.f32 %v1602, 0.5
    %v1635 = vadd.f32 %v1603, 0.5
    %v1636 = vadd.f32 %v1604, 0.5
    %v1637 = vadd.f32 %v1605, 0.5
    %v1638 = vadd.f32 %v1606, 0.5
    %v1639 = vadd.f32 %v1607, 0.5
    %v1640 = vadd.f32 %v1608, 0.5
    %v1641 = vadd.f32 %v1609, 0.5
    %v1642 = vadd.f32 %v1610, 0.5
    %v1643 = vadd.f32 %v1611, 0.5
    %v1644 = vadd.f32 %v1612, 0.5
    %v1645 = vadd.f32 %v1613, 0.5
    %v1646 = vadd.f32 %v1614, 0.5
    %v1647 = vadd.f32 %v1615, 0.5
    %v1648 = vadd.f32 %v1616, 0.5
    %v1649 = vadd.f32 %v1617, 0.5
    %v1650 = vadd.f32 %v1618, 0.5
    %v1651 = vadd.f32 %v1619, 0.5
    %v1652 = vadd.f32 %v1620, 0.5
    %v1653 = vadd.f32 %v1621, 0.5
    %v1654 = vadd.f32 %v1622, 0.5
    %v1655 = vadd.f32 %v1623, 0.5
    %v1656 = vadd.f32 %v1624, 0.5
    %v1657 = vadd.f32 %v1625, 0.5
    %v1658 = vmul.f32 %v1626, 0.125
    %v1659 = vmul.f32 %v1627, 0.125
    %v1660 = vmul.f32 %v1628, 0.125
    %v1661 = vmul.f32 %v1629, 0.125
    %v1662 = vmul.f32 %v1630, 0.125
    %v1663 = vmul.f32 %v1631, 0.125
    %v1664 = vmul.f32 %v1632, 0.125
    %v1665 = vmul.f32 %v1633, 0.125
    %v1666 = vmul.f32 %v1634, 0.125
    %v1667 = vmul.f32 %v1635, 0.125
    %v1668 = vmul.f32 %v1636, 0.125
    %v1669 = vmul.f32 %v1637, 0.125
    %v1670 = vmul.f32 %v1638, 0.125
    %v1671 = vmul.f32 %v1639, 0.125
    %v1672 = vmul.f32 %v1640, 0.125
    %v1673 = vmul.f32 %v1641, 0.125
    %v1674 = vmul.f32 %v1642, 0.125
    %v1675 = vmul.f32 %v1643, 0.125
    %v1676 = vmul.f32 %v1644, 0.125
    %v1677 = vmul.f32 %v1645, 0.125
    %v1678 = vmul.f32 %v1646, 0.125
    %v1679 = vmul.f32 %v1647, 0.125
    %v1680 = vmul.f32 %v1648, 0.125
    %v1681 = vmul.f32 %v1649, 0.125
    %v1682 = vmul.f32 %v1650, 0.125
    %v1683 = vmul.f32 %v1651, 0.125
    %v1684 = vmul.f32 %v1652, 0.125
    %v1685 = vmul.f32 %v1653, 0.125
    %v1686 = vmul.f32 %v1654, 0.125
    %v1687 = vmul.f32 %v1655, 0.125
    %v1688 = vmul.f32 %v1656, 0.125
    %v1689 = vmul.f32 %v1657, 0.125
    %v1690 = vfloor.f32 %v1658
    %v1691 = vfloor.f32 %v1659
    %v1692 = vfloor.f32 %v1660
    %v1693 = vfloor.f32 %v1661
    %v1694 = vfloor.f32 %v1662
    %v1695 = vfloor.f32 %v1663
    %v1696 = vfloor.f32 %v1664
    %v1697 = vfloor.f32 %v1665
    %v1698 = vfloor.f32 %v1666
    %v1699 = vfloor.f32 %v1667
    %v1700 = vfloor.f32 %v1668
    %v1701 = vfloor.f32 %v1669
    %v1702 = vfloor.f32 %v1670
    %v1703 = vfloor.f32 %v1671
    %v1704 = vfloor.f32 %v1672
    %v1705 = vfloor.f32 %v1673
    %v1706 = vfloor.f32 %v1674
    %v1707 = vfloor.f32 %v1675
    %v1708 = vfloor.f32 %v1676
    %v1709 = vfloor.f32 %v1677
    %v1710 = vfloor.f32 %v1678
    %v1711 = vfloor.f32 %v1679
    %v1712 = vfloor.f32 %v1680
    %v1713 = vfloor.f32 %v1681
    %v1714 = vfloor.f32 %v1682
    %v1715 = vfloor.f32 %v1683
    %v1716 = vfloor.f32 %v1684
    %v1717 = vfloor.f32 %v1685
    %v1718 = vfloor.f32 %v1686
    %v1719 = vfloor.f32 %v1687
    %v1720 = vfloor.f32 %v1688
    %v1721 = vfloor.f32 %v1689
    %v1722 = vlaneseq
    %v1723 = vand.u32 %v1722, 127
    %v1724 = vadd.s32 %v1723, 128
    %v1725 = vcvt.s32.f32 %v1723
    %v1726 = vcvt.s32.f32 %v1724
    %v1727 = vadd.f32 %v1725, 0.5
    %v1728 = vadd.f32 %v1726, 0.5
    %v1729 = vmul.f32 %v1727, 0.125
    %v1730 = vmul.f32 %v1728, 0.125
    %v1731 = vfloor.f32 %v1729
    %v1732 = vfloor.f32 %v1730
    %vm1733 = vcmp.eq.f32.partialorder %v1690, %v1731
    %vm1734 = vcmp.eq.f32.partialorder %v1690, %v1732
    %vm1735 = vcmp.eq.f32.partialorder %v1691, %v1731
    %vm1736 = vcmp.eq.f32.partialorder %v1691, %v1732
    %vm1737 = vcmp.eq.f32.partialorder %v1692, %v1731
    %vm1738 = vcmp.eq.f32.partialorder %v1692, %v1732
    %vm1739 = vcmp.eq.f32.partialorder %v1693, %v1731
    %vm1740 = vcmp.eq.f32.partialorder %v1693, %v1732
    %vm1741 = vcmp.eq.f32.partialorder %v1694, %v1731
    %vm1742 = vcmp.eq.f32.partialorder %v1694, %v1732
    %vm1743 = vcmp.eq.f32.partialorder %v1695, %v1731
    %vm1744 = vcmp.eq.f32.partialorder %v1695, %v1732
    %vm1745 = vcmp.eq.f32.partialorder %v1696, %v1731
    %vm1746 = vcmp.eq.f32.partialorder %v1696, %v1732
    %vm1747 = vcmp.eq.f32.partialorder %v1697, %v1731
    %vm1748 = vcmp.eq.f32.partialorder %v1697, %v1732
    %vm1749 = vcmp.eq.f32.partialorder %v1698, %v1731
    %vm1750 = vcmp.eq.f32.partialorder %v1698, %v1732
    %vm1751 = vcmp.eq.f32.partialorder %v1699, %v1731
    %vm1752 = vcmp.eq.f32.partialorder %v1699, %v1732
    %vm1753 = vcmp.eq.f32.partialorder %v1700, %v1731
    %vm1754 = vcmp.eq.f32.partialorder %v1700, %v1732
    %vm1755 = vcmp.eq.f32.partialorder %v1701, %v1731
    %vm1756 = vcmp.eq.f32.partialorder %v1701, %v1732
    %vm1757 = vcmp.eq.f32.partialorder %v1702, %v1731
    %vm1758 = vcmp.eq.f32.partialorder %v1702, %v1732
    %vm1759 = vcmp.eq.f32.partialorder %v1703, %v1731
    %vm1760 = vcmp.eq.f32.partialorder %v1703, %v1732
    %vm1761 = vcmp.eq.f32.partialorder %v1704, %v1731
    %vm1762 = vcmp.eq.f32.partialorder %v1704, %v1732
    %vm1763 = vcmp.eq.f32.partialorder %v1705, %v1731
    %vm1764 = vcmp.eq.f32.partialorder %v1705, %v1732
    %vm1765 = vcmp.eq.f32.partialorder %v1706, %v1731
    %vm1766 = vcmp.eq.f32.partialorder %v1706, %v1732
    %vm1767 = vcmp.eq.f32.partialorder %v1707, %v1731
    %vm1768 = vcmp.eq.f32.partialorder %v1707, %v1732
    %vm1769 = vcmp.eq.f32.partialorder %v1708, %v1731
    %vm1770 = vcmp.eq.f32.partialorder %v1708, %v1732
    %vm1771 = vcmp.eq.f32.partialorder %v1709, %v1731
    %vm1772 = vcmp.eq.f32.partialorder %v1709, %v1732
    %vm1773 = vcmp.eq.f32.partialorder %v1710, %v1731
    %vm1774 = vcmp.eq.f32.partialorder %v1710, %v1732
    %vm1775 = vcmp.eq.f32.partialorder %v1711, %v1731
    %vm1776 = vcmp.eq.f32.partialorder %v1711, %v1732
    %vm1777 = vcmp.eq.f32.partialorder %v1712, %v1731
    %vm1778 = vcmp.eq.f32.partialorder %v1712, %v1732
    %vm1779 = vcmp.eq.f32.partialorder %v1713, %v1731
    %vm1780 = vcmp.eq.f32.partialorder %v1713, %v1732
    %vm1781 = vcmp.eq.f32.partialorder %v1714, %v1731
    %vm1782 = vcmp.eq.f32.partialorder %v1714, %v1732
    %vm1783 = vcmp.eq.f32.partialorder %v1715, %v1731
    %vm1784 = vcmp.eq.f32.partialorder %v1715, %v1732
    %vm1785 = vcmp.eq.f32.partialorder %v1716, %v1731
    %vm1786 = vcmp.eq.f32.partialorder %v1716, %v1732
    %vm1787 = vcmp.eq.f32.partialorder %v1717, %v1731
    %vm1788 = vcmp.eq.f32.partialorder %v1717, %v1732
    %vm1789 = vcmp.eq.f32.partialorder %v1718, %v1731
    %vm1790 = vcmp.eq.f32.partialorder %v1718, %v1732
    %vm1791 = vcmp.eq.f32.partialorder %v1719, %v1731
    %vm1792 = vcmp.eq.f32.partialorder %v1719, %v1732
    %vm1793 = vcmp.eq.f32.partialorder %v1720, %v1731
    %vm1794 = vcmp.eq.f32.partialorder %v1720, %v1732
    %vm1795 = vcmp.eq.f32.partialorder %v1721, %v1731
    %vm1796 = vcmp.eq.f32.partialorder %v1721, %v1732
    %v1797 = vsel %vm1733, 0.0, -1e+30
    %v1798 = vsel %vm1734, 0.0, -1e+30
    %v1799 = vsel %vm1735, 0.0, -1e+30
    %v1800 = vsel %vm1736, 0.0, -1e+30
    %v1801 = vsel %vm1737, 0.0, -1e+30
    %v1802 = vsel %vm1738, 0.0, -1e+30
    %v1803 = vsel %vm1739, 0.0, -1e+30
    %v1804 = vsel %vm1740, 0.0, -1e+30
    %v1805 = vsel %vm1741, 0.0, -1e+30
    %v1806 = vsel %vm1742, 0.0, -1e+30
    %v1807 = vsel %vm1743, 0.0, -1e+30
    %v1808 = vsel %vm1744, 0.0, -1e+30
    %v1809 = vsel %vm1745, 0.0, -1e+30
    %v1810 = vsel %vm1746, 0.0, -1e+30
    %v1811 = vsel %vm1747, 0.0, -1e+30
    %v1812 = vsel %vm1748, 0.0, -1e+30
    %v1813 = vsel %vm1749, 0.0, -1e+30
    %v1814 = vsel %vm1750, 0.0, -1e+30
    %v1815 = vsel %vm1751, 0.0, -1e+30
    %v1816 = vsel %vm1752, 0.0, -1e+30
    %v1817 = vsel %vm1753, 0.0, -1e+30
    %v1818 = vsel %vm1754, 0.0, -1e+30
    %v1819 = vsel %vm1755, 0.0, -1e+30
    %v1820 = vsel %vm1756, 0.0, -1e+30
    %v1821 = vsel %vm1757, 0.0, -1e+30
    %v1822 = vsel %vm1758, 0.0, -1e+30
    %v1823 = vsel %vm1759, 0.0, -1e+30
    %v1824 = vsel %vm1760, 0.0, -1e+30
    %v1825 = vsel %vm1761, 0.0, -1e+30
    %v1826 = vsel %vm1762, 0.0, -1e+30
    %v1827 = vsel %vm1763, 0.0, -1e+30
    %v1828 = vsel %vm1764, 0.0, -1e+30
    %v1829 = vsel %vm1765, 0.0, -1e+30
    %v1830 = vsel %vm1766, 0.0, -1e+30
    %v1831 = vsel %vm1767, 0.0, -1e+30
    %v1832 = vsel %vm1768, 0.0, -1e+30
    %v1833 = vsel %vm1769, 0.0, -1e+30
    %v1834 = vsel %vm1770, 0.0, -1e+30
    %v1835 = vsel %vm1771, 0.0, -1e+30
    %v1836 = vsel %vm1772, 0.0, -1e+30
    %v1837 = vsel %vm1773, 0.0, -1e+30
    %v1838 = vsel %vm1774, 0.0, -1e+30
    %v1839 = vsel %vm1775, 0.0, -1e+30
    %v1840 = vsel %vm1776, 0.0, -1e+30
    %v1841 = vsel %vm1777, 0.0, -1e+30
    %v1842 = vsel %vm1778, 0.0, -1e+30
    %v1843 = vsel %vm1779, 0.0, -1e+30
    %v1844 = vsel %vm1780, 0.0, -1e+30
    %v1845 = vsel %vm1781, 0.0, -1e+30
    %v1846 = vsel %vm1782, 0.0, -1e+30
    %v1847 = vsel %vm1783, 0.0, -1e+30
    %v1848 = vsel %vm1784, 0.0, -1e+30
    %v1849 = vsel %vm1785, 0.0, -1e+30
    %v1850 = vsel %vm1786, 0.0, -1e+30
    %v1851 = vsel %vm1787, 0.0, -1e+30
    %v1852 = vsel %vm1788, 0.0, -1e+30
    %v1853 = vsel %vm1789, 0.0, -1e+30
    %v1854 = vsel %vm1790, 0.0, -1e+30
    %v1855 = vsel %vm1791, 0.0, -1e+30
    %v1856 = vsel %vm1792, 0.0, -1e+30
    %v1857 = vsel %vm1793, 0.0, -1e+30
    %v1858 = vsel %vm1794, 0.0, -1e+30
    %v1859 = vsel %vm1795, 0.0, -1e+30
    %v1860 = vsel %vm1796, 0.0, -1e+30
    %vm1861 = vcmask 64512
    %v1863 = vsel %vm1861, %v1513, 0
    %v1866 = vsel %vm1861, %v1514, 0
    %v1869 = vsel %vm1861, %v1515, 0
    %v1872 = vsel %vm1861, %v1516, 0
    %v1875 = vsel %vm1861, %v1517, 0
    %v1878 = vsel %vm1861, %v1518, 0
    %v1881 = vsel %vm1861, %v1519, 0
    %v1884 = vsel %vm1861, %v1520, 0
    %v1887 = vsel %vm1861, %v1521, 0
    %v1890 = vsel %vm1861, %v1522, 0
    %v1893 = vsel %vm1861, %v1523, 0
    %v1896 = vsel %vm1861, %v1524, 0
    %v1899 = vsel %vm1861, %v1525, 0
    %v1902 = vsel %vm1861, %v1526, 0
    %v1905 = vsel %vm1861, %v1527, 0
    %v1908 = vsel %vm1861, %v1528, 0
    %v1911 = vsel %vm1861, %v1529, 0
    %v1914 = vsel %vm1861, %v1530, 0
    %v1917 = vsel %vm1861, %v1531, 0
    %v1920 = vsel %vm1861, %v1532, 0
    %v1923 = vsel %vm1861, %v1533, 0
    %v1926 = vsel %vm1861, %v1534, 0
    %v1929 = vsel %vm1861, %v1535, 0
    %v1932 = vsel %vm1861, %v1536, 0
    %v1935 = vsel %vm1861, %v1537, 0
    %v1938 = vsel %vm1861, %v1538, 0
    %v1941 = vsel %vm1861, %v1539, 0
    %v1944 = vsel %vm1861, %v1540, 0
    %v1947 = vsel %vm1861, %v1541, 0
    %v1950 = vsel %vm1861, %v1542, 0
    %v1953 = vsel %vm1861, %v1543, 0
    %v1956 = vsel %vm1861, %v1544, 0
    %1958 = vmatprep.subr.bf16.mxu0 0
    %1959 = vmatpush1.bf16.xpose.msra.mxu0 %v1911
    %1960 = vmatprep.subr.bf16.mxu0 0
    %1961 = vmatpush1.bf16.xpose.msra.mxu0 %v1914
    %1962 = vmatprep.subr.bf16.mxu0 0
    %1963 = vmatpush1.bf16.xpose.msra.mxu0 %v1917
    %1964 = vmatprep.subr.bf16.mxu0 0
    %1965 = vmatpush1.bf16.xpose.msra.mxu0 %v1920
    %1966 = vmatprep.subr.bf16.mxu0 0
    %1967 = vmatpush1.bf16.xpose.msra.mxu0 %v1923
    %1968 = vmatprep.subr.bf16.mxu0 0
    %1969 = vmatpush1.bf16.xpose.msra.mxu0 %v1926
    %1970 = vmatprep.subr.bf16.mxu0 0
    %1971 = vmatpush1.bf16.xpose.msra.mxu0 %v1929
    %1972 = vmatprep.subr.bf16.mxu0 0
    %1973 = vmatpush1.bf16.xpose.msra.mxu0 %v1932
    %1974 = vmatprep.subr.bf16.mxu0 0
    %1975 = vmatpush1.bf16.xpose.msra.mxu0 %v1935
    %1976 = vmatprep.subr.bf16.mxu0 0
    %1977 = vmatpush1.bf16.xpose.msra.mxu0 %v1938
    %1978 = vmatprep.subr.bf16.mxu0 0
    %1979 = vmatpush1.bf16.xpose.msra.mxu0 %v1941
    %1980 = vmatprep.subr.bf16.mxu0 0
    %1981 = vmatpush1.bf16.xpose.msra.mxu0 %v1944
    %1982 = vmatprep.subr.bf16.mxu0 0
    %1983 = vmatpush1.bf16.xpose.msra.mxu0 %v1947
    %1984 = vmatprep.subr.bf16.mxu0 0
    %1985 = vmatpush1.bf16.xpose.msra.mxu0 %v1950
    %1986 = vmatprep.subr.bf16.mxu0 0
    %1987 = vmatpush1.bf16.xpose.msra.mxu0 %v1953
    %1988 = vmatprep.subr.bf16.mxu0 0
    %1989 = vmatpush1.bf16.xpose.msra.mxu0 %v1956
    %1990 = vmatprep.mubr.bf16.mxu0 0
    %1991 = vmatmul.mubr.bf16.gmra.mrb[0].mxu0 %v1863
    %v1992 = vpop.f32.mrb[0].mxu0
    %v1993 = vadd.f32 %v1797, %v1992
    %v1994 = vpop.f32.mrb[0].mxu0
    %v1995 = vadd.f32 %v1798, %v1994
    %v1996 = vpop.f32.mrb[0].mxu0
    %v1997 = vadd.f32 %v1799, %v1996
    %v1998 = vpop.f32.mrb[0].mxu0
    %v1999 = vadd.f32 %v1800, %v1998
    %2000 = vmatprep.mubr.bf16.mxu0 0
    %2001 = vmatmul.mubr.bf16.gmra.mrb[0].mxu0 %v1866
    %v2002 = vpop.f32.mrb[0].mxu0
    %v2003 = vadd.f32 %v1801, %v2002
    %v2004 = vpop.f32.mrb[0].mxu0
    %v2005 = vadd.f32 %v1802, %v2004
    %v2006 = vpop.f32.mrb[0].mxu0
    %v2007 = vadd.f32 %v1803, %v2006
    %v2008 = vpop.f32.mrb[0].mxu0
    %v2009 = vadd.f32 %v1804, %v2008
    %2010 = vmatprep.mubr.bf16.mxu0 0
    %2011 = vmatmul.mubr.bf16.gmra.mrb[0].mxu0 %v1869
    %v2012 = vpop.f32.mrb[0].mxu0
    %v2013 = vadd.f32 %v1805, %v2012
    %v2014 = vpop.f32.mrb[0].mxu0
    %v2015 = vadd.f32 %v1806, %v2014
    %v2016 = vpop.f32.mrb[0].mxu0
    %v2017 = vadd.f32 %v1807, %v2016
    %v2018 = vpop.f32.mrb[0].mxu0
    %v2019 = vadd.f32 %v1808, %v2018
    %2020 = vmatprep.mubr.bf16.mxu0 0
    %2021 = vmatmul.mubr.bf16.gmra.mrb[0].mxu0 %v1872
    %v2022 = vpop.f32.mrb[0].mxu0
    %v2023 = vadd.f32 %v1809, %v2022
    %v2024 = vpop.f32.mrb[0].mxu0
    %v2025 = vadd.f32 %v1810, %v2024
    %v2026 = vpop.f32.mrb[0].mxu0
    %v2027 = vadd.f32 %v1811, %v2026
    %v2028 = vpop.f32.mrb[0].mxu0
    %v2029 = vadd.f32 %v1812, %v2028
    %2030 = vmatprep.mubr.bf16.mxu0 0
    %2031 = vmatmul.mubr.bf16.gmra.mrb[0].mxu0 %v1875
    %v2032 = vpop.f32.mrb[0].mxu0
    %v2033 = vadd.f32 %v1813, %v2032
    %v2034 = vpop.f32.mrb[0].mxu0
    %v2035 = vadd.f32 %v1814, %v2034
    %v2036 = vpop.f32.mrb[0].mxu0
    %v2037 = vadd.f32 %v1815, %v2036
    %v2038 = vpop.f32.mrb[0].mxu0
    %v2039 = vadd.f32 %v1816, %v2038
    %2040 = vmatprep.mubr.bf16.mxu0 0
    %2041 = vmatmul.mubr.bf16.gmra.mrb[0].mxu0 %v1878
    %v2042 = vpop.f32.mrb[0].mxu0
    %v2043 = vadd.f32 %v1817, %v2042
    %v2044 = vpop.f32.mrb[0].mxu0
    %v2045 = vadd.f32 %v1818, %v2044
    %v2046 = vpop.f32.mrb[0].mxu0
    %v2047 = vadd.f32 %v1819, %v2046
    %v2048 = vpop.f32.mrb[0].mxu0
    %v2049 = vadd.f32 %v1820, %v2048
    %2050 = vmatprep.mubr.bf16.mxu0 0
    %2051 = vmatmul.mubr.bf16.gmra.mrb[0].mxu0 %v1881
    %v2052 = vpop.f32.mrb[0].mxu0
    %v2053 = vadd.f32 %v1821, %v2052
    %v2054 = vpop.f32.mrb[0].mxu0
    %v2055 = vadd.f32 %v1822, %v2054
    %v2056 = vpop.f32.mrb[0].mxu0
    %v2057 = vadd.f32 %v1823, %v2056
    %v2058 = vpop.f32.mrb[0].mxu0
    %v2059 = vadd.f32 %v1824, %v2058
    %2060 = vmatprep.mubr.bf16.mxu0 0
    %2061 = vmatmul.mubr.bf16.gmra.mrb[0].mxu0 %v1884
    %v2062 = vpop.f32.mrb[0].mxu0
    %v2063 = vadd.f32 %v1825, %v2062
    %v2064 = vpop.f32.mrb[0].mxu0
    %v2065 = vadd.f32 %v1826, %v2064
    %v2066 = vpop.f32.mrb[0].mxu0
    %v2067 = vadd.f32 %v1827, %v2066
    %v2068 = vpop.f32.mrb[0].mxu0
    %v2069 = vadd.f32 %v1828, %v2068
    %2070 = vmatprep.mubr.bf16.mxu0 0
    %2071 = vmatmul.mubr.bf16.gmra.mrb[0].mxu0 %v1887
    %v2072 = vpop.f32.mrb[0].mxu0
    %v2073 = vadd.f32 %v1829, %v2072
    %v2074 = vpop.f32.mrb[0].mxu0
    %v2075 = vadd.f32 %v1830, %v2074
    %v2076 = vpop.f32.mrb[0].mxu0
    %v2077 = vadd.f32 %v1831, %v2076
    %v2078 = vpop.f32.mrb[0].mxu0
    %v2079 = vadd.f32 %v1832, %v2078
    %2080 = vmatprep.mubr.bf16.mxu0 0
    %2081 = vmatmul.mubr.bf16.gmra.mrb[0].mxu0 %v1890
    %v2082 = vpop.f32.mrb[0].mxu0
    %v2083 = vadd.f32 %v1833, %v2082
    %v2084 = vpop.f32.mrb[0].mxu0
    %v2085 = vadd.f32 %v1834, %v2084
    %v2086 = vpop.f32.mrb[0].mxu0
    %v2087 = vadd.f32 %v1835, %v2086
    %v2088 = vpop.f32.mrb[0].mxu0
    %v2089 = vadd.f32 %v1836, %v2088
    %2090 = vmatprep.mubr.bf16.mxu0 0
    %2091 = vmatmul.mubr.bf16.gmra.mrb[0].mxu0 %v1893
    %v2092 = vpop.f32.mrb[0].mxu0
    %v2093 = vadd.f32 %v1837, %v2092
    %v2094 = vpop.f32.mrb[0].mxu0
    %v2095 = vadd.f32 %v1838, %v2094
    %v2096 = vpop.f32.mrb[0].mxu0
    %v2097 = vadd.f32 %v1839, %v2096
    %v2098 = vpop.f32.mrb[0].mxu0
    %v2099 = vadd.f32 %v1840, %v2098
    %2100 = vmatprep.mubr.bf16.mxu0 0
    %2101 = vmatmul.mubr.bf16.gmra.mrb[0].mxu0 %v1896
    %v2102 = vpop.f32.mrb[0].mxu0
    %v2103 = vadd.f32 %v1841, %v2102
    %v2104 = vpop.f32.mrb[0].mxu0
    %v2105 = vadd.f32 %v1842, %v2104
    %v2106 = vpop.f32.mrb[0].mxu0
    %v2107 = vadd.f32 %v1843, %v2106
    %v2108 = vpop.f32.mrb[0].mxu0
    %v2109 = vadd.f32 %v1844, %v2108
    %2110 = vmatprep.mubr.bf16.mxu0 0
    %2111 = vmatmul.mubr.bf16.gmra.mrb[0].mxu0 %v1899
    %v2112 = vpop.f32.mrb[0].mxu0
    %v2113 = vadd.f32 %v1845, %v2112
    %v2114 = vpop.f32.mrb[0].mxu0
    %v2115 = vadd.f32 %v1846, %v2114
    %v2116 = vpop.f32.mrb[0].mxu0
    %v2117 = vadd.f32 %v1847, %v2116
    %v2118 = vpop.f32.mrb[0].mxu0
    %v2119 = vadd.f32 %v1848, %v2118
    %2120 = vmatprep.mubr.bf16.mxu0 0
    %2121 = vmatmul.mubr.bf16.gmra.mrb[0].mxu0 %v1902
    %v2122 = vpop.f32.mrb[0].mxu0
    %v2123 = vadd.f32 %v1849, %v2122
    %v2124 = vpop.f32.mrb[0].mxu0
    %v2125 = vadd.f32 %v1850, %v2124
    %v2126 = vpop.f32.mrb[0].mxu0
    %v2127 = vadd.f32 %v1851, %v2126
    %v2128 = vpop.f32.mrb[0].mxu0
    %v2129 = vadd.f32 %v1852, %v2128
    %2130 = vmatprep.mubr.bf16.mxu0 0
    %2131 = vmatmul.mubr.bf16.gmra.mrb[0].mxu0 %v1905
    %v2132 = vpop.f32.mrb[0].mxu0
    %v2133 = vadd.f32 %v1853, %v2132
    %v2134 = vpop.f32.mrb[0].mxu0
    %v2135 = vadd.f32 %v1854, %v2134
    %v2136 = vpop.f32.mrb[0].mxu0
    %v2137 = vadd.f32 %v1855, %v2136
    %v2138 = vpop.f32.mrb[0].mxu0
    %v2139 = vadd.f32 %v1856, %v2138
    %2140 = vmatprep.mubr.bf16.mxu0 0
    %2141 = vmatmul.mubr.bf16.gmra.mrb[0].mxu0 %v1908
    %v2142 = vpop.f32.mrb[0].mxu0
    %v2143 = vadd.f32 %v1857, %v2142
    %v2144 = vpop.f32.mrb[0].mxu0
    %v2145 = vadd.f32 %v1858, %v2144
    %v2146 = vpop.f32.mrb[0].mxu0
    %v2147 = vadd.f32 %v1859, %v2146
    %v2148 = vpop.f32.mrb[0].mxu0
    %v2149 = vadd.f32 %v1860, %v2148
    %2150 = vdwg.mxu0
    %v2151 = vmax.f32 %v1993, %v1995
    %2152 = vmax.xlane.f32.xlu0 %v2151
    %v2153 = vpop.xlane.xlu0 %2152
    %v2154 = vmax.f32 %v1997, %v1999
    %2155 = vmax.xlane.f32.xlu0 %v2154
    %v2156 = vpop.xlane.xlu0 %2155
    %v2157 = vmax.f32 %v2003, %v2005
    %2158 = vmax.xlane.f32.xlu0 %v2157
    %v2159 = vpop.xlane.xlu0 %2158
    %v2160 = vmax.f32 %v2007, %v2009
    %2161 = vmax.xlane.f32.xlu0 %v2160
    %v2162 = vpop.xlane.xlu0 %2161
    %v2163 = vmax.f32 %v2013, %v2015
    %2164 = vmax.xlane.f32.xlu0 %v2163
    %v2165 = vpop.xlane.xlu0 %2164
    %v2166 = vmax.f32 %v2017, %v2019
    %2167 = vmax.xlane.f32.xlu0 %v2166
    %v2168 = vpop.xlane.xlu0 %2167
    %v2169 = vmax.f32 %v2023, %v2025
    %2170 = vmax.xlane.f32.xlu0 %v2169
    %v2171 = vpop.xlane.xlu0 %2170
    %v2172 = vmax.f32 %v2027, %v2029
    %2173 = vmax.xlane.f32.xlu0 %v2172
    %v2174 = vpop.xlane.xlu0 %2173
    %v2175 = vmax.f32 %v2033, %v2035
    %2176 = vmax.xlane.f32.xlu0 %v2175
    %v2177 = vpop.xlane.xlu0 %2176
    %v2178 = vmax.f32 %v2037, %v2039
    %2179 = vmax.xlane.f32.xlu0 %v2178
    %v2180 = vpop.xlane.xlu0 %2179
    %v2181 = vmax.f32 %v2043, %v2045
    %2182 = vmax.xlane.f32.xlu0 %v2181
    %v2183 = vpop.xlane.xlu0 %2182
    %v2184 = vmax.f32 %v2047, %v2049
    %2185 = vmax.xlane.f32.xlu0 %v2184
    %v2186 = vpop.xlane.xlu0 %2185
    %v2187 = vmax.f32 %v2053, %v2055
    %2188 = vmax.xlane.f32.xlu0 %v2187
    %v2189 = vpop.xlane.xlu0 %2188
    %v2190 = vmax.f32 %v2057, %v2059
    %2191 = vmax.xlane.f32.xlu0 %v2190
    %v2192 = vpop.xlane.xlu0 %2191
    %v2193 = vmax.f32 %v2063, %v2065
    %2194 = vmax.xlane.f32.xlu0 %v2193
    %v2195 = vpop.xlane.xlu0 %2194
    %v2196 = vmax.f32 %v2067, %v2069
    %2197 = vmax.xlane.f32.xlu0 %v2196
    %v2198 = vpop.xlane.xlu0 %2197
    %v2199 = vmax.f32 %v2073, %v2075
    %2200 = vmax.xlane.f32.xlu0 %v2199
    %v2201 = vpop.xlane.xlu0 %2200
    %v2202 = vmax.f32 %v2077, %v2079
    %2203 = vmax.xlane.f32.xlu0 %v2202
    %v2204 = vpop.xlane.xlu0 %2203
    %v2205 = vmax.f32 %v2083, %v2085
    %2206 = vmax.xlane.f32.xlu0 %v2205
    %v2207 = vpop.xlane.xlu0 %2206
    %v2208 = vmax.f32 %v2087, %v2089
    %2209 = vmax.xlane.f32.xlu0 %v2208
    %v2210 = vpop.xlane.xlu0 %2209
    %v2211 = vmax.f32 %v2093, %v2095
    %2212 = vmax.xlane.f32.xlu0 %v2211
    %v2213 = vpop.xlane.xlu0 %2212
    %v2214 = vmax.f32 %v2097, %v2099
    %2215 = vmax.xlane.f32.xlu0 %v2214
    %v2216 = vpop.xlane.xlu0 %2215
    %v2217 = vmax.f32 %v2103, %v2105
    %2218 = vmax.xlane.f32.xlu0 %v2217
    %v2219 = vpop.xlane.xlu0 %2218
    %v2220 = vmax.f32 %v2107, %v2109
    %2221 = vmax.xlane.f32.xlu0 %v2220
    %v2222 = vpop.xlane.xlu0 %2221
    %v2223 = vmax.f32 %v2113, %v2115
    %2224 = vmax.xlane.f32.xlu0 %v2223
    %v2225 = vpop.xlane.xlu0 %2224
    %v2226 = vmax.f32 %v2117, %v2119
    %2227 = vmax.xlane.f32.xlu0 %v2226
    %v2228 = vpop.xlane.xlu0 %2227
    %v2229 = vmax.f32 %v2123, %v2125
    %2230 = vmax.xlane.f32.xlu0 %v2229
    %v2231 = vpop.xlane.xlu0 %2230
    %v2232 = vmax.f32 %v2127, %v2129
    %2233 = vmax.xlane.f32.xlu0 %v2232
    %v2234 = vpop.xlane.xlu0 %2233
    %v2235 = vmax.f32 %v2133, %v2135
    %2236 = vmax.xlane.f32.xlu0 %v2235
    %v2237 = vpop.xlane.xlu0 %2236
    %v2238 = vmax.f32 %v2137, %v2139
    %2239 = vmax.xlane.f32.xlu0 %v2238
    %v2240 = vpop.xlane.xlu0 %2239
    %v2241 = vmax.f32 %v2143, %v2145
    %2242 = vmax.xlane.f32.xlu0 %v2241
    %v2243 = vpop.xlane.xlu0 %2242
    %v2244 = vmax.f32 %v2147, %v2149
    %2245 = vmax.xlane.f32.xlu0 %v2244
    %v2246 = vpop.xlane.xlu0 %2245
    %v2247 = vsub.f32 %v1993, %v2153
    %v2248 = vsub.f32 %v1995, %v2153
    %v2249 = vsub.f32 %v1997, %v2156
    %v2250 = vsub.f32 %v1999, %v2156
    %v2251 = vsub.f32 %v2003, %v2159
    %v2252 = vsub.f32 %v2005, %v2159
    %v2253 = vsub.f32 %v2007, %v2162
    %v2254 = vsub.f32 %v2009, %v2162
    %v2255 = vsub.f32 %v2013, %v2165
    %v2256 = vsub.f32 %v2015, %v2165
    %v2257 = vsub.f32 %v2017, %v2168
    %v2258 = vsub.f32 %v2019, %v2168
    %v2259 = vsub.f32 %v2023, %v2171
    %v2260 = vsub.f32 %v2025, %v2171
    %v2261 = vsub.f32 %v2027, %v2174
    %v2262 = vsub.f32 %v2029, %v2174
    %v2263 = vsub.f32 %v2033, %v2177
    %v2264 = vsub.f32 %v2035, %v2177
    %v2265 = vsub.f32 %v2037, %v2180
    %v2266 = vsub.f32 %v2039, %v2180
    %v2267 = vsub.f32 %v2043, %v2183
    %v2268 = vsub.f32 %v2045, %v2183
    %v2269 = vsub.f32 %v2047, %v2186
    %v2270 = vsub.f32 %v2049, %v2186
    %v2271 = vsub.f32 %v2053, %v2189
    %v2272 = vsub.f32 %v2055, %v2189
    %v2273 = vsub.f32 %v2057, %v2192
    %v2274 = vsub.f32 %v2059, %v2192
    %v2275 = vsub.f32 %v2063, %v2195
    %v2276 = vsub.f32 %v2065, %v2195
    %v2277 = vsub.f32 %v2067, %v2198
    %v2278 = vsub.f32 %v2069, %v2198
    %v2279 = vsub.f32 %v2073, %v2201
    %v2280 = vsub.f32 %v2075, %v2201
    %v2281 = vsub.f32 %v2077, %v2204
    %v2282 = vsub.f32 %v2079, %v2204
    %v2283 = vsub.f32 %v2083, %v2207
    %v2284 = vsub.f32 %v2085, %v2207
    %v2285 = vsub.f32 %v2087, %v2210
    %v2286 = vsub.f32 %v2089, %v2210
    %v2287 = vsub.f32 %v2093, %v2213
    %v2288 = vsub.f32 %v2095, %v2213
    %v2289 = vsub.f32 %v2097, %v2216
    %v2290 = vsub.f32 %v2099, %v2216
    %v2291 = vsub.f32 %v2103, %v2219
    %v2292 = vsub.f32 %v2105, %v2219
    %v2293 = vsub.f32 %v2107, %v2222
    %v2294 = vsub.f32 %v2109, %v2222
    %v2295 = vsub.f32 %v2113, %v2225
    %v2296 = vsub.f32 %v2115, %v2225
    %v2297 = vsub.f32 %v2117, %v2228
    %v2298 = vsub.f32 %v2119, %v2228
    %v2299 = vsub.f32 %v2123, %v2231
    %v2300 = vsub.f32 %v2125, %v2231
    %v2301 = vsub.f32 %v2127, %v2234
    %v2302 = vsub.f32 %v2129, %v2234
    %v2303 = vsub.f32 %v2133, %v2237
    %v2304 = vsub.f32 %v2135, %v2237
    %v2305 = vsub.f32 %v2137, %v2240
    %v2306 = vsub.f32 %v2139, %v2240
    %v2307 = vsub.f32 %v2143, %v2243
    %v2308 = vsub.f32 %v2145, %v2243
    %v2309 = vsub.f32 %v2147, %v2246
    %v2310 = vsub.f32 %v2149, %v2246
    %v2311 = vmul.f32 %v2247, 1.442695
    %v2312 = vpow.pop %v2311
    %v2313 = vmul.f32 %v2248, 1.442695
    %v2314 = vpow.pop %v2313
    %v2315 = vmul.f32 %v2249, 1.442695
    %v2316 = vpow.pop %v2315
    %v2317 = vmul.f32 %v2250, 1.442695
    %v2318 = vpow.pop %v2317
    %v2319 = vmul.f32 %v2251, 1.442695
    %v2320 = vpow.pop %v2319
    %v2321 = vmul.f32 %v2252, 1.442695
    %v2322 = vpow.pop %v2321
    %v2323 = vmul.f32 %v2253, 1.442695
    %v2324 = vpow.pop %v2323
    %v2325 = vmul.f32 %v2254, 1.442695
    %v2326 = vpow.pop %v2325
    %v2327 = vmul.f32 %v2255, 1.442695
    %v2328 = vpow.pop %v2327
    %v2329 = vmul.f32 %v2256, 1.442695
    %v2330 = vpow.pop %v2329
    %v2331 = vmul.f32 %v2257, 1.442695
    %v2332 = vpow.pop %v2331
    %v2333 = vmul.f32 %v2258, 1.442695
    %v2334 = vpow.pop %v2333
    %v2335 = vmul.f32 %v2259, 1.442695
    %v2336 = vpow.pop %v2335
    %v2337 = vmul.f32 %v2260, 1.442695
    %v2338 = vpow.pop %v2337
    %v2339 = vmul.f32 %v2261, 1.442695
    %v2340 = vpow.pop %v2339
    %v2341 = vmul.f32 %v2262, 1.442695
    %v2342 = vpow.pop %v2341
    %v2343 = vmul.f32 %v2263, 1.442695
    %v2344 = vpow.pop %v2343
    %v2345 = vmul.f32 %v2264, 1.442695
    %v2346 = vpow.pop %v2345
    %v2347 = vmul.f32 %v2265, 1.442695
    %v2348 = vpow.pop %v2347
    %v2349 = vmul.f32 %v2266, 1.442695
    %v2350 = vpow.pop %v2349
    %v2351 = vmul.f32 %v2267, 1.442695
    %v2352 = vpow.pop %v2351
    %v2353 = vmul.f32 %v2268, 1.442695
    %v2354 = vpow.pop %v2353
    %v2355 = vmul.f32 %v2269, 1.442695
    %v2356 = vpow.pop %v2355
    %v2357 = vmul.f32 %v2270, 1.442695
    %v2358 = vpow.pop %v2357
    %v2359 = vmul.f32 %v2271, 1.442695
    %v2360 = vpow.pop %v2359
    %v2361 = vmul.f32 %v2272, 1.442695
    %v2362 = vpow.pop %v2361
    %v2363 = vmul.f32 %v2273, 1.442695
    %v2364 = vpow.pop %v2363
    %v2365 = vmul.f32 %v2274, 1.442695
    %v2366 = vpow.pop %v2365
    %v2367 = vmul.f32 %v2275, 1.442695
    %v2368 = vpow.pop %v2367
    %v2369 = vmul.f32 %v2276, 1.442695
    %v2370 = vpow.pop %v2369
    %v2371 = vmul.f32 %v2277, 1.442695
    %v2372 = vpow.pop %v2371
    %v2373 = vmul.f32 %v2278, 1.442695
    %v2374 = vpow.pop %v2373
    %v2375 = vmul.f32 %v2279, 1.442695
    %v2376 = vpow.pop %v2375
    %v2377 = vmul.f32 %v2280, 1.442695
    %v2378 = vpow.pop %v2377
    %v2379 = vmul.f32 %v2281, 1.442695
    %v2380 = vpow.pop %v2379
    %v2381 = vmul.f32 %v2282, 1.442695
    %v2382 = vpow.pop %v2381
    %v2383 = vmul.f32 %v2283, 1.442695
    %v2384 = vpow.pop %v2383
    %v2385 = vmul.f32 %v2284, 1.442695
    %v2386 = vpow.pop %v2385
    %v2387 = vmul.f32 %v2285, 1.442695
    %v2388 = vpow.pop %v2387
    %v2389 = vmul.f32 %v2286, 1.442695
    %v2390 = vpow.pop %v2389
    %v2391 = vmul.f32 %v2287, 1.442695
    %v2392 = vpow.pop %v2391
    %v2393 = vmul.f32 %v2288, 1.442695
    %v2394 = vpow.pop %v2393
    %v2395 = vmul.f32 %v2289, 1.442695
    %v2396 = vpow.pop %v2395
    %v2397 = vmul.f32 %v2290, 1.442695
    %v2398 = vpow.pop %v2397
    %v2399 = vmul.f32 %v2291, 1.442695
    %v2400 = vpow.pop %v2399
    %v2401 = vmul.f32 %v2292, 1.442695
    %v2402 = vpow.pop %v2401
    %v2403 = vmul.f32 %v2293, 1.442695
    %v2404 = vpow.pop %v2403
    %v2405 = vmul.f32 %v2294, 1.442695
    %v2406 = vpow.pop %v2405
    %v2407 = vmul.f32 %v2295, 1.442695
    %v2408 = vpow.pop %v2407
    %v2409 = vmul.f32 %v2296, 1.442695
    %v2410 = vpow.pop %v2409
    %v2411 = vmul.f32 %v2297, 1.442695
    %v2412 = vpow.pop %v2411
    %v2413 = vmul.f32 %v2298, 1.442695
    %v2414 = vpow.pop %v2413
    %v2415 = vmul.f32 %v2299, 1.442695
    %v2416 = vpow.pop %v2415
    %v2417 = vmul.f32 %v2300, 1.442695
    %v2418 = vpow.pop %v2417
    %v2419 = vmul.f32 %v2301, 1.442695
    %v2420 = vpow.pop %v2419
    %v2421 = vmul.f32 %v2302, 1.442695
    %v2422 = vpow.pop %v2421
    %v2423 = vmul.f32 %v2303, 1.442695
    %v2424 = vpow.pop %v2423
    %v2425 = vmul.f32 %v2304, 1.442695
    %v2426 = vpow.pop %v2425
    %v2427 = vmul.f32 %v2305, 1.442695
    %v2428 = vpow.pop %v2427
    %v2429 = vmul.f32 %v2306, 1.442695
    %v2430 = vpow.pop %v2429
    %v2431 = vmul.f32 %v2307, 1.442695
    %v2432 = vpow.pop %v2431
    %v2433 = vmul.f32 %v2308, 1.442695
    %v2434 = vpow.pop %v2433
    %v2435 = vmul.f32 %v2309, 1.442695
    %v2436 = vpow.pop %v2435
    %v2437 = vmul.f32 %v2310, 1.442695
    %v2438 = vpow.pop %v2437
    %v2439 = vadd.f32 %v2312, %v2314
    %2440 = vadd.xlane.f32.xlu0 %v2439
    %v2441 = vpop.xlane.xlu0 %2440
    %v2442 = vadd.f32 %v2316, %v2318
    %2443 = vadd.xlane.f32.xlu0 %v2442
    %v2444 = vpop.xlane.xlu0 %2443
    %v2445 = vadd.f32 %v2320, %v2322
    %2446 = vadd.xlane.f32.xlu0 %v2445
    %v2447 = vpop.xlane.xlu0 %2446
    %v2448 = vadd.f32 %v2324, %v2326
    %2449 = vadd.xlane.f32.xlu0 %v2448
    %v2450 = vpop.xlane.xlu0 %2449
    %v2451 = vadd.f32 %v2328, %v2330
    %2452 = vadd.xlane.f32.xlu0 %v2451
    %v2453 = vpop.xlane.xlu0 %2452
    %v2454 = vadd.f32 %v2332, %v2334
    %2455 = vadd.xlane.f32.xlu0 %v2454
    %v2456 = vpop.xlane.xlu0 %2455
    %v2457 = vadd.f32 %v2336, %v2338
    %2458 = vadd.xlane.f32.xlu0 %v2457
    %v2459 = vpop.xlane.xlu0 %2458
    %v2460 = vadd.f32 %v2340, %v2342
    %2461 = vadd.xlane.f32.xlu0 %v2460
    %v2462 = vpop.xlane.xlu0 %2461
    %v2463 = vadd.f32 %v2344, %v2346
    %2464 = vadd.xlane.f32.xlu0 %v2463
    %v2465 = vpop.xlane.xlu0 %2464
    %v2466 = vadd.f32 %v2348, %v2350
    %2467 = vadd.xlane.f32.xlu0 %v2466
    %v2468 = vpop.xlane.xlu0 %2467
    %v2469 = vadd.f32 %v2352, %v2354
    %2470 = vadd.xlane.f32.xlu0 %v2469
    %v2471 = vpop.xlane.xlu0 %2470
    %v2472 = vadd.f32 %v2356, %v2358
    %2473 = vadd.xlane.f32.xlu0 %v2472
    %v2474 = vpop.xlane.xlu0 %2473
    %v2475 = vadd.f32 %v2360, %v2362
    %2476 = vadd.xlane.f32.xlu0 %v2475
    %v2477 = vpop.xlane.xlu0 %2476
    %v2478 = vadd.f32 %v2364, %v2366
    %2479 = vadd.xlane.f32.xlu0 %v2478
    %v2480 = vpop.xlane.xlu0 %2479
    %v2481 = vadd.f32 %v2368, %v2370
    %2482 = vadd.xlane.f32.xlu0 %v2481
    %v2483 = vpop.xlane.xlu0 %2482
    %v2484 = vadd.f32 %v2372, %v2374
    %2485 = vadd.xlane.f32.xlu0 %v2484
    %v2486 = vpop.xlane.xlu0 %2485
    %v2487 = vadd.f32 %v2376, %v2378
    %2488 = vadd.xlane.f32.xlu0 %v2487
    %v2489 = vpop.xlane.xlu0 %2488
    %v2490 = vadd.f32 %v2380, %v2382
    %2491 = vadd.xlane.f32.xlu0 %v2490
    %v2492 = vpop.xlane.xlu0 %2491
    %v2493 = vadd.f32 %v2384, %v2386
    %2494 = vadd.xlane.f32.xlu0 %v2493
    %v2495 = vpop.xlane.xlu0 %2494
    %v2496 = vadd.f32 %v2388, %v2390
    %2497 = vadd.xlane.f32.xlu0 %v2496
    %v2498 = vpop.xlane.xlu0 %2497
    %v2499 = vadd.f32 %v2392, %v2394
    %2500 = vadd.xlane.f32.xlu0 %v2499
    %v2501 = vpop.xlane.xlu0 %2500
    %v2502 = vadd.f32 %v2396, %v2398
    %2503 = vadd.xlane.f32.xlu0 %v2502
    %v2504 = vpop.xlane.xlu0 %2503
    %v2505 = vadd.f32 %v2400, %v2402
    %2506 = vadd.xlane.f32.xlu0 %v2505
    %v2507 = vpop.xlane.xlu0 %2506
    %v2508 = vadd.f32 %v2404, %v2406
    %2509 = vadd.xlane.f32.xlu0 %v2508
    %v2510 = vpop.xlane.xlu0 %2509
    %v2511 = vadd.f32 %v2408, %v2410
    %2512 = vadd.xlane.f32.xlu0 %v2511
    %v2513 = vpop.xlane.xlu0 %2512
    %v2514 = vadd.f32 %v2412, %v2414
    %2515 = vadd.xlane.f32.xlu0 %v2514
    %v2516 = vpop.xlane.xlu0 %2515
    %v2517 = vadd.f32 %v2416, %v2418
    %2518 = vadd.xlane.f32.xlu0 %v2517
    %v2519 = vpop.xlane.xlu0 %2518
    %v2520 = vadd.f32 %v2420, %v2422
    %2521 = vadd.xlane.f32.xlu0 %v2520
    %v2522 = vpop.xlane.xlu0 %2521
    %v2523 = vadd.f32 %v2424, %v2426
    %2524 = vadd.xlane.f32.xlu0 %v2523
    %v2525 = vpop.xlane.xlu0 %2524
    %v2526 = vadd.f32 %v2428, %v2430
    %2527 = vadd.xlane.f32.xlu0 %v2526
    %v2528 = vpop.xlane.xlu0 %2527
    %v2529 = vadd.f32 %v2432, %v2434
    %2530 = vadd.xlane.f32.xlu0 %v2529
    %v2531 = vpop.xlane.xlu0 %2530
    %v2532 = vadd.f32 %v2436, %v2438
    %2533 = vadd.xlane.f32.xlu0 %v2532
    %v2534 = vpop.xlane.xlu0 %2533
    %v2535 = vrcp.pop %v2441
    %v2536 = vrcp.pop %v2444
    %v2537 = vrcp.pop %v2447
    %v2538 = vrcp.pop %v2450
    %v2539 = vrcp.pop %v2453
    %v2540 = vrcp.pop %v2456
    %v2541 = vrcp.pop %v2459
    %v2542 = vrcp.pop %v2462
    %v2543 = vrcp.pop %v2465
    %v2544 = vrcp.pop %v2468
    %v2545 = vrcp.pop %v2471
    %v2546 = vrcp.pop %v2474
    %v2547 = vrcp.pop %v2477
    %v2548 = vrcp.pop %v2480
    %v2549 = vrcp.pop %v2483
    %v2550 = vrcp.pop %v2486
    %v2551 = vrcp.pop %v2489
    %v2552 = vrcp.pop %v2492
    %v2553 = vrcp.pop %v2495
    %v2554 = vrcp.pop %v2498
    %v2555 = vrcp.pop %v2501
    %v2556 = vrcp.pop %v2504
    %v2557 = vrcp.pop %v2507
    %v2558 = vrcp.pop %v2510
    %v2559 = vrcp.pop %v2513
    %v2560 = vrcp.pop %v2516
    %v2561 = vrcp.pop %v2519
    %v2562 = vrcp.pop %v2522
    %v2563 = vrcp.pop %v2525
    %v2564 = vrcp.pop %v2528
    %v2565 = vrcp.pop %v2531
    %v2566 = vrcp.pop %v2534
    %v2567 = vmul.f32 %v2312, %v2535
    %v2568 = vmul.f32 %v2314, %v2535
    %v2569 = vmul.f32 %v2316, %v2536
    %v2570 = vmul.f32 %v2318, %v2536
    %v2571 = vmul.f32 %v2320, %v2537
    %v2572 = vmul.f32 %v2322, %v2537
    %v2573 = vmul.f32 %v2324, %v2538
    %v2574 = vmul.f32 %v2326, %v2538
    %v2575 = vmul.f32 %v2328, %v2539
    %v2576 = vmul.f32 %v2330, %v2539
    %v2577 = vmul.f32 %v2332, %v2540
    %v2578 = vmul.f32 %v2334, %v2540
    %v2579 = vmul.f32 %v2336, %v2541
    %v2580 = vmul.f32 %v2338, %v2541
    %v2581 = vmul.f32 %v2340, %v2542
    %v2582 = vmul.f32 %v2342, %v2542
    %v2583 = vmul.f32 %v2344, %v2543
    %v2584 = vmul.f32 %v2346, %v2543
    %v2585 = vmul.f32 %v2348, %v2544
    %v2586 = vmul.f32 %v2350, %v2544
    %v2587 = vmul.f32 %v2352, %v2545
    %v2588 = vmul.f32 %v2354, %v2545
    %v2589 = vmul.f32 %v2356, %v2546
    %v2590 = vmul.f32 %v2358, %v2546
    %v2591 = vmul.f32 %v2360, %v2547
    %v2592 = vmul.f32 %v2362, %v2547
    %v2593 = vmul.f32 %v2364, %v2548
    %v2594 = vmul.f32 %v2366, %v2548
    %v2595 = vmul.f32 %v2368, %v2549
    %v2596 = vmul.f32 %v2370, %v2549
    %v2597 = vmul.f32 %v2372, %v2550
    %v2598 = vmul.f32 %v2374, %v2550
    %v2599 = vmul.f32 %v2376, %v2551
    %v2600 = vmul.f32 %v2378, %v2551
    %v2601 = vmul.f32 %v2380, %v2552
    %v2602 = vmul.f32 %v2382, %v2552
    %v2603 = vmul.f32 %v2384, %v2553
    %v2604 = vmul.f32 %v2386, %v2553
    %v2605 = vmul.f32 %v2388, %v2554
    %v2606 = vmul.f32 %v2390, %v2554
    %v2607 = vmul.f32 %v2392, %v2555
    %v2608 = vmul.f32 %v2394, %v2555
    %v2609 = vmul.f32 %v2396, %v2556
    %v2610 = vmul.f32 %v2398, %v2556
    %v2611 = vmul.f32 %v2400, %v2557
    %v2612 = vmul.f32 %v2402, %v2557
    %v2613 = vmul.f32 %v2404, %v2558
    %v2614 = vmul.f32 %v2406, %v2558
    %v2615 = vmul.f32 %v2408, %v2559
    %v2616 = vmul.f32 %v2410, %v2559
    %v2617 = vmul.f32 %v2412, %v2560
    %v2618 = vmul.f32 %v2414, %v2560
    %v2619 = vmul.f32 %v2416, %v2561
    %v2620 = vmul.f32 %v2418, %v2561
    %v2621 = vmul.f32 %v2420, %v2562
    %v2622 = vmul.f32 %v2422, %v2562
    %v2623 = vmul.f32 %v2424, %v2563
    %v2624 = vmul.f32 %v2426, %v2563
    %v2625 = vmul.f32 %v2428, %v2564
    %v2626 = vmul.f32 %v2430, %v2564
    %v2627 = vmul.f32 %v2432, %v2565
    %v2628 = vmul.f32 %v2434, %v2565
    %v2629 = vmul.f32 %v2436, %v2566
    %v2630 = vmul.f32 %v2438, %v2566
    %v2631 = vpack.c.bf16 %v2569, %v2567
    %v2632 = vpack.c.bf16 %v2570, %v2568
    %v2633 = vpack.c.bf16 %v2573, %v2571
    %v2634 = vpack.c.bf16 %v2574, %v2572
    %v2635 = vpack.c.bf16 %v2577, %v2575
    %v2636 = vpack.c.bf16 %v2578, %v2576
    %v2637 = vpack.c.bf16 %v2581, %v2579
    %v2638 = vpack.c.bf16 %v2582, %v2580
    %v2639 = vpack.c.bf16 %v2585, %v2583
    %v2640 = vpack.c.bf16 %v2586, %v2584
    %v2641 = vpack.c.bf16 %v2589, %v2587
    %v2642 = vpack.c.bf16 %v2590, %v2588
    %v2643 = vpack.c.bf16 %v2593, %v2591
    %v2644 = vpack.c.bf16 %v2594, %v2592
    %v2645 = vpack.c.bf16 %v2597, %v2595
    %v2646 = vpack.c.bf16 %v2598, %v2596
    %v2647 = vpack.c.bf16 %v2601, %v2599
    %v2648 = vpack.c.bf16 %v2602, %v2600
    %v2649 = vpack.c.bf16 %v2605, %v2603
    %v2650 = vpack.c.bf16 %v2606, %v2604
    %v2651 = vpack.c.bf16 %v2609, %v2607
    %v2652 = vpack.c.bf16 %v2610, %v2608
    %v2653 = vpack.c.bf16 %v2613, %v2611
    %v2654 = vpack.c.bf16 %v2614, %v2612
    %v2655 = vpack.c.bf16 %v2617, %v2615
    %v2656 = vpack.c.bf16 %v2618, %v2616
    %v2657 = vpack.c.bf16 %v2621, %v2619
    %v2658 = vpack.c.bf16 %v2622, %v2620
    %v2659 = vpack.c.bf16 %v2625, %v2623
    %v2660 = vpack.c.bf16 %v2626, %v2624
    %v2661 = vpack.c.bf16 %v2629, %v2627
    %v2662 = vpack.c.bf16 %v2630, %v2628
    %2663 = vmatprep.subr.bf16.mxu0 0
    %2664 = vmatpush1.bf16.msra.mxu0 %v1545
    %2665 = vmatprep.subr.bf16.mxu0 0
    %2666 = vmatpush1.bf16.msra.mxu0 %v1546
    %2667 = vmatprep.subr.bf16.mxu0 0
    %2668 = vmatpush1.bf16.msra.mxu0 %v1547
    %2669 = vmatprep.subr.bf16.mxu0 0
    %2670 = vmatpush1.bf16.msra.mxu0 %v1548
    %2671 = vmatprep.subr.bf16.mxu0 0
    %2672 = vmatpush1.bf16.msra.mxu0 %v1549
    %2673 = vmatprep.subr.bf16.mxu0 0
    %2674 = vmatpush1.bf16.msra.mxu0 %v1550
    %2675 = vmatprep.subr.bf16.mxu0 0
    %2676 = vmatpush1.bf16.msra.mxu0 %v1551
    %2677 = vmatprep.subr.bf16.mxu0 0
    %2678 = vmatpush1.bf16.msra.mxu0 %v1552
    %2679 = vmatprep.subr.bf16.mxu0 0
    %2680 = vmatpush1.bf16.msra.mxu0 %v1553
    %2681 = vmatprep.subr.bf16.mxu0 0
    %2682 = vmatpush1.bf16.msra.mxu0 %v1554
    %2683 = vmatprep.subr.bf16.mxu0 0
    %2684 = vmatpush1.bf16.msra.mxu0 %v1555
    %2685 = vmatprep.subr.bf16.mxu0 0
    %2686 = vmatpush1.bf16.msra.mxu0 %v1556
    %2687 = vmatprep.subr.bf16.mxu0 0
    %2688 = vmatpush1.bf16.msra.mxu0 %v1557
    %2689 = vmatprep.subr.bf16.mxu0 0
    %2690 = vmatpush1.bf16.msra.mxu0 %v1558
    %2691 = vmatprep.subr.bf16.mxu0 0
    %2692 = vmatpush1.bf16.msra.mxu0 %v1559
    %2693 = vmatprep.subr.bf16.mxu0 0
    %2694 = vmatpush1.bf16.msra.mxu0 %v1560
    %2695 = vmatprep.mubr.bf16.mxu0 %v2632
    %2696 = vmatmul.mubr.bf16.gmra.mrb[0].mxu0 %v2631
    %v2697 = vpop.f32.mrb[0].mxu0
    %v2698 = vadd.f32 0.0, %v2697
    %v2699 = vpop.f32.mrb[0].mxu0
    %v2700 = vpop.f32.mrb[0].mxu0
    %v2701 = vadd.f32 0.0, %v2700
    %v2702 = vpop.f32.mrb[0].mxu0
    %2703 = vmatprep.mubr.bf16.mxu0 %v2634
    %2704 = vmatmul.mubr.bf16.gmra.mrb[0].mxu0 %v2633
    %v2705 = vpop.f32.mrb[0].mxu0
    %v2706 = vadd.f32 0.0, %v2705
    %v2707 = vpop.f32.mrb[0].mxu0
    %v2708 = vpop.f32.mrb[0].mxu0
    %v2709 = vadd.f32 0.0, %v2708
    %v2710 = vpop.f32.mrb[0].mxu0
    %2711 = vmatprep.mubr.bf16.mxu0 %v2636
    %2712 = vmatmul.mubr.bf16.gmra.mrb[0].mxu0 %v2635
    %v2713 = vpop.f32.mrb[0].mxu0
    %v2714 = vadd.f32 0.0, %v2713
    %v2715 = vpop.f32.mrb[0].mxu0
    %v2716 = vpop.f32.mrb[0].mxu0
    %v2717 = vadd.f32 0.0, %v2716
    %v2718 = vpop.f32.mrb[0].mxu0
    %2719 = vmatprep.mubr.bf16.mxu0 %v2638
    %2720 = vmatmul.mubr.bf16.gmra.mrb[0].mxu0 %v2637
    %v2721 = vpop.f32.mrb[0].mxu0
    %v2722 = vadd.f32 0.0, %v2721
    %v2723 = vpop.f32.mrb[0].mxu0
    %v2724 = vpop.f32.mrb[0].mxu0
    %v2725 = vadd.f32 0.0, %v2724
    %v2726 = vpop.f32.mrb[0].mxu0
    %2727 = vmatprep.mubr.bf16.mxu0 %v2640
    %2728 = vmatmul.mubr.bf16.gmra.mrb[0].mxu0 %v2639
    %v2729 = vpop.f32.mrb[0].mxu0
    %v2730 = vadd.f32 0.0, %v2729
    %v2731 = vpop.f32.mrb[0].mxu0
    %v2732 = vpop.f32.mrb[0].mxu0
    %v2733 = vadd.f32 0.0, %v2732
    %v2734 = vpop.f32.mrb[0].mxu0
    %2735 = vmatprep.mubr.bf16.mxu0 %v2642
    %2736 = vmatmul.mubr.bf16.gmra.mrb[0].mxu0 %v2641
    %v2737 = vpop.f32.mrb[0].mxu0
    %v2738 = vadd.f32 0.0, %v2737
    %v2739 = vpop.f32.mrb[0].mxu0
    %v2740 = vpop.f32.mrb[0].mxu0
    %v2741 = vadd.f32 0.0, %v2740
    %v2742 = vpop.f32.mrb[0].mxu0
    %2743 = vmatprep.mubr.bf16.mxu0 %v2644
    %2744 = vmatmul.mubr.bf16.gmra.mrb[0].mxu0 %v2643
    %v2745 = vpop.f32.mrb[0].mxu0
    %v2746 = vadd.f32 0.0, %v2745
    %v2747 = vpop.f32.mrb[0].mxu0
    %v2748 = vpop.f32.mrb[0].mxu0
    %v2749 = vadd.f32 0.0, %v2748
    %v2750 = vpop.f32.mrb[0].mxu0
    %2751 = vmatprep.mubr.bf16.mxu0 %v2646
    %2752 = vmatmul.mubr.bf16.gmra.mrb[0].mxu0 %v2645
    %v2753 = vpop.f32.mrb[0].mxu0
    %v2754 = vadd.f32 0.0, %v2753
    %v2755 = vpop.f32.mrb[0].mxu0
    %v2756 = vpop.f32.mrb[0].mxu0
    %v2757 = vadd.f32 0.0, %v2756
    %v2758 = vpop.f32.mrb[0].mxu0
    %2759 = vmatprep.mubr.bf16.mxu0 %v2648
    %2760 = vmatmul.mubr.bf16.gmra.mrb[0].mxu0 %v2647
    %v2761 = vpop.f32.mrb[0].mxu0
    %v2762 = vadd.f32 0.0, %v2761
    %v2763 = vpop.f32.mrb[0].mxu0
    %v2764 = vpop.f32.mrb[0].mxu0
    %v2765 = vadd.f32 0.0, %v2764
    %v2766 = vpop.f32.mrb[0].mxu0
    %2767 = vmatprep.mubr.bf16.mxu0 %v2650
    %2768 = vmatmul.mubr.bf16.gmra.mrb[0].mxu0 %v2649
    %v2769 = vpop.f32.mrb[0].mxu0
    %v2770 = vadd.f32 0.0, %v2769
    %v2771 = vpop.f32.mrb[0].mxu0
    %v2772 = vpop.f32.mrb[0].mxu0
    %v2773 = vadd.f32 0.0, %v2772
    %v2774 = vpop.f32.mrb[0].mxu0
    %2775 = vmatprep.mubr.bf16.mxu0 %v2652
    %2776 = vmatmul.mubr.bf16.gmra.mrb[0].mxu0 %v2651
    %v2777 = vpop.f32.mrb[0].mxu0
    %v2778 = vadd.f32 0.0, %v2777
    %v2779 = vpop.f32.mrb[0].mxu0
    %v2780 = vpop.f32.mrb[0].mxu0
    %v2781 = vadd.f32 0.0, %v2780
    %v2782 = vpop.f32.mrb[0].mxu0
    %2783 = vmatprep.mubr.bf16.mxu0 %v2654
    %2784 = vmatmul.mubr.bf16.gmra.mrb[0].mxu0 %v2653
    %v2785 = vpop.f32.mrb[0].mxu0
    %v2786 = vadd.f32 0.0, %v2785
    %v2787 = vpop.f32.mrb[0].mxu0
    %v2788 = vpop.f32.mrb[0].mxu0
    %v2789 = vadd.f32 0.0, %v2788
    %v2790 = vpop.f32.mrb[0].mxu0
    %2791 = vmatprep.mubr.bf16.mxu0 %v2656
    %2792 = vmatmul.mubr.bf16.gmra.mrb[0].mxu0 %v2655
    %v2793 = vpop.f32.mrb[0].mxu0
    %v2794 = vadd.f32 0.0, %v2793
    %v2795 = vpop.f32.mrb[0].mxu0
    %v2796 = vpop.f32.mrb[0].mxu0
    %v2797 = vadd.f32 0.0, %v2796
    %v2798 = vpop.f32.mrb[0].mxu0
    %2799 = vmatprep.mubr.bf16.mxu0 %v2658
    %2800 = vmatmul.mubr.bf16.gmra.mrb[0].mxu0 %v2657
    %v2801 = vpop.f32.mrb[0].mxu0
    %v2802 = vadd.f32 0.0, %v2801
    %v2803 = vpop.f32.mrb[0].mxu0
    %v2804 = vpop.f32.mrb[0].mxu0
    %v2805 = vadd.f32 0.0, %v2804
    %v2806 = vpop.f32.mrb[0].mxu0
    %2807 = vmatprep.mubr.bf16.mxu0 %v2660
    %2808 = vmatmul.mubr.bf16.gmra.mrb[0].mxu0 %v2659
    %v2809 = vpop.f32.mrb[0].mxu0
    %v2810 = vadd.f32 0.0, %v2809
    %v2811 = vpop.f32.mrb[0].mxu0
    %v2812 = vpop.f32.mrb[0].mxu0
    %v2813 = vadd.f32 0.0, %v2812
    %v2814 = vpop.f32.mrb[0].mxu0
    %2815 = vmatprep.mubr.bf16.mxu0 %v2662
    %2816 = vmatmul.mubr.bf16.gmra.mrb[0].mxu0 %v2661
    %v2817 = vpop.f32.mrb[0].mxu0
    %v2818 = vadd.f32 0.0, %v2817
    %v2819 = vpop.f32.mrb[0].mxu0
    %v2820 = vpop.f32.mrb[0].mxu0
    %v2821 = vadd.f32 0.0, %v2820
    %v2822 = vpop.f32.mrb[0].mxu0
    %2823 = vdwg.mxu0
    %2840 = vrot.lane.b32.xlu0 %v1513, 120
    %v2841 = vpop.permute.xlu0 %2840
    %2842 = vrot.lane.b32.xlu0 %v1514, 120
    %v2843 = vpop.permute.xlu0 %2842
    %2844 = vrot.lane.b32.xlu0 %v1515, 120
    %v2845 = vpop.permute.xlu0 %2844
    %2846 = vrot.lane.b32.xlu0 %v1516, 120
    %v2847 = vpop.permute.xlu0 %2846
    %2848 = vrot.lane.b32.xlu0 %v1517, 120
    %v2849 = vpop.permute.xlu0 %2848
    %2850 = vrot.lane.b32.xlu0 %v1518, 120
    %v2851 = vpop.permute.xlu0 %2850
    %2852 = vrot.lane.b32.xlu0 %v1519, 120
    %v2853 = vpop.permute.xlu0 %2852
    %2854 = vrot.lane.b32.xlu0 %v1520, 120
    %v2855 = vpop.permute.xlu0 %2854
    %2856 = vrot.lane.b32.xlu0 %v1521, 120
    %v2857 = vpop.permute.xlu0 %2856
    %2858 = vrot.lane.b32.xlu0 %v1522, 120
    %v2859 = vpop.permute.xlu0 %2858
    %2860 = vrot.lane.b32.xlu0 %v1523, 120
    %v2861 = vpop.permute.xlu0 %2860
    %2862 = vrot.lane.b32.xlu0 %v1524, 120
    %v2863 = vpop.permute.xlu0 %2862
    %2864 = vrot.lane.b32.xlu0 %v1525, 120
    %v2865 = vpop.permute.xlu0 %2864
    %2866 = vrot.lane.b32.xlu0 %v1526, 120
    %v2867 = vpop.permute.xlu0 %2866
    %2868 = vrot.lane.b32.xlu0 %v1527, 120
    %v2869 = vpop.permute.xlu0 %2868
    %2870 = vrot.lane.b32.xlu0 %v1528, 120
    %v2871 = vpop.permute.xlu0 %2870
    %2888 = vrot.lane.b32.xlu0 %v1529, 120
    %v2889 = vpop.permute.xlu0 %2888
    %2890 = vrot.lane.b32.xlu0 %v1530, 120
    %v2891 = vpop.permute.xlu0 %2890
    %2892 = vrot.lane.b32.xlu0 %v1531, 120
    %v2893 = vpop.permute.xlu0 %2892
    %2894 = vrot.lane.b32.xlu0 %v1532, 120
    %v2895 = vpop.permute.xlu0 %2894
    %2896 = vrot.lane.b32.xlu0 %v1533, 120
    %v2897 = vpop.permute.xlu0 %2896
    %2898 = vrot.lane.b32.xlu0 %v1534, 120
    %v2899 = vpop.permute.xlu0 %2898
    %2900 = vrot.lane.b32.xlu0 %v1535, 120
    %v2901 = vpop.permute.xlu0 %2900
    %2902 = vrot.lane.b32.xlu0 %v1536, 120
    %v2903 = vpop.permute.xlu0 %2902
    %2904 = vrot.lane.b32.xlu0 %v1537, 120
    %v2905 = vpop.permute.xlu0 %2904
    %2906 = vrot.lane.b32.xlu0 %v1538, 120
    %v2907 = vpop.permute.xlu0 %2906
    %2908 = vrot.lane.b32.xlu0 %v1539, 120
    %v2909 = vpop.permute.xlu0 %2908
    %2910 = vrot.lane.b32.xlu0 %v1540, 120
    %v2911 = vpop.permute.xlu0 %2910
    %2912 = vrot.lane.b32.xlu0 %v1541, 120
    %v2913 = vpop.permute.xlu0 %2912
    %2914 = vrot.lane.b32.xlu0 %v1542, 120
    %v2915 = vpop.permute.xlu0 %2914
    %2916 = vrot.lane.b32.xlu0 %v1543, 120
    %v2917 = vpop.permute.xlu0 %2916
    %2918 = vrot.lane.b32.xlu0 %v1544, 120
    %v2919 = vpop.permute.xlu0 %2918
    %v2921 = vsel %vm1861, %v2841, 0
    %v2924 = vsel %vm1861, %v2843, 0
    %v2927 = vsel %vm1861, %v2845, 0
    %v2930 = vsel %vm1861, %v2847, 0
    %v2933 = vsel %vm1861, %v2849, 0
    %v2936 = vsel %vm1861, %v2851, 0
    %v2939 = vsel %vm1861, %v2853, 0
    %v2942 = vsel %vm1861, %v2855, 0
    %v2945 = vsel %vm1861, %v2857, 0
    %v2948 = vsel %vm1861, %v2859, 0
    %v2951 = vsel %vm1861, %v2861, 0
    %v2954 = vsel %vm1861, %v2863, 0
    %v2957 = vsel %vm1861, %v2865, 0
    %v2960 = vsel %vm1861, %v2867, 0
    %v2963 = vsel %vm1861, %v2869, 0
    %v2966 = vsel %vm1861, %v2871, 0
    %v2969 = vsel %vm1861, %v2889, 0
    %v2972 = vsel %vm1861, %v2891, 0
    %v2975 = vsel %vm1861, %v2893, 0
    %v2978 = vsel %vm1861, %v2895, 0
    %v2981 = vsel %vm1861, %v2897, 0
    %v2984 = vsel %vm1861, %v2899, 0
    %v2987 = vsel %vm1861, %v2901, 0
    %v2990 = vsel %vm1861, %v2903, 0
    %v2993 = vsel %vm1861, %v2905, 0
    %v2996 = vsel %vm1861, %v2907, 0
    %v2999 = vsel %vm1861, %v2909, 0
    %v3002 = vsel %vm1861, %v2911, 0
    %v3005 = vsel %vm1861, %v2913, 0
    %v3008 = vsel %vm1861, %v2915, 0
    %v3011 = vsel %vm1861, %v2917, 0
    %v3014 = vsel %vm1861, %v2919, 0
    %3016 = vmatprep.subr.bf16.mxu0 0
    %3017 = vmatpush1.bf16.xpose.msra.mxu0 %v2969
    %3018 = vmatprep.subr.bf16.mxu0 0
    %3019 = vmatpush1.bf16.xpose.msra.mxu0 %v2972
    %3020 = vmatprep.subr.bf16.mxu0 0
    %3021 = vmatpush1.bf16.xpose.msra.mxu0 %v2975
    %3022 = vmatprep.subr.bf16.mxu0 0
    %3023 = vmatpush1.bf16.xpose.msra.mxu0 %v2978
    %3024 = vmatprep.subr.bf16.mxu0 0
    %3025 = vmatpush1.bf16.xpose.msra.mxu0 %v2981
    %3026 = vmatprep.subr.bf16.mxu0 0
    %3027 = vmatpush1.bf16.xpose.msra.mxu0 %v2984
    %3028 = vmatprep.subr.bf16.mxu0 0
    %3029 = vmatpush1.bf16.xpose.msra.mxu0 %v2987
    %3030 = vmatprep.subr.bf16.mxu0 0
    %3031 = vmatpush1.bf16.xpose.msra.mxu0 %v2990
    %3032 = vmatprep.subr.bf16.mxu0 0
    %3033 = vmatpush1.bf16.xpose.msra.mxu0 %v2993
    %3034 = vmatprep.subr.bf16.mxu0 0
    %3035 = vmatpush1.bf16.xpose.msra.mxu0 %v2996
    %3036 = vmatprep.subr.bf16.mxu0 0
    %3037 = vmatpush1.bf16.xpose.msra.mxu0 %v2999
    %3038 = vmatprep.subr.bf16.mxu0 0
    %3039 = vmatpush1.bf16.xpose.msra.mxu0 %v3002
    %3040 = vmatprep.subr.bf16.mxu0 0
    %3041 = vmatpush1.bf16.xpose.msra.mxu0 %v3005
    %3042 = vmatprep.subr.bf16.mxu0 0
    %3043 = vmatpush1.bf16.xpose.msra.mxu0 %v3008
    %3044 = vmatprep.subr.bf16.mxu0 0
    %3045 = vmatpush1.bf16.xpose.msra.mxu0 %v3011
    %3046 = vmatprep.subr.bf16.mxu0 0
    %3047 = vmatpush1.bf16.xpose.msra.mxu0 %v3014
    %3048 = vmatprep.mubr.bf16.mxu0 0
    %3049 = vmatmul.mubr.bf16.gmra.mrb[0].mxu0 %v2921
    %v3050 = vpop.f32.mrb[0].mxu0
    %v3051 = vadd.f32 %v1797, %v3050
    %v3052 = vpop.f32.mrb[0].mxu0
    %v3053 = vadd.f32 %v1798, %v3052
    %v3054 = vpop.f32.mrb[0].mxu0
    %v3055 = vadd.f32 %v1799, %v3054
    %v3056 = vpop.f32.mrb[0].mxu0
    %v3057 = vadd.f32 %v1800, %v3056
    %3058 = vmatprep.mubr.bf16.mxu0 0
    %3059 = vmatmul.mubr.bf16.gmra.mrb[0].mxu0 %v2924
    %v3060 = vpop.f32.mrb[0].mxu0
    %v3061 = vadd.f32 %v1801, %v3060
    %v3062 = vpop.f32.mrb[0].mxu0
    %v3063 = vadd.f32 %v1802, %v3062
    %v3064 = vpop.f32.mrb[0].mxu0
    %v3065 = vadd.f32 %v1803, %v3064
    %v3066 = vpop.f32.mrb[0].mxu0
    %v3067 = vadd.f32 %v1804, %v3066
    %3068 = vmatprep.mubr.bf16.mxu0 0
    %3069 = vmatmul.mubr.bf16.gmra.mrb[0].mxu0 %v2927
    %v3070 = vpop.f32.mrb[0].mxu0
    %v3071 = vadd.f32 %v1805, %v3070
    %v3072 = vpop.f32.mrb[0].mxu0
    %v3073 = vadd.f32 %v1806, %v3072
    %v3074 = vpop.f32.mrb[0].mxu0
    %v3075 = vadd.f32 %v1807, %v3074
    %v3076 = vpop.f32.mrb[0].mxu0
    %v3077 = vadd.f32 %v1808, %v3076
    %3078 = vmatprep.mubr.bf16.mxu0 0
    %3079 = vmatmul.mubr.bf16.gmra.mrb[0].mxu0 %v2930
    %v3080 = vpop.f32.mrb[0].mxu0
    %v3081 = vadd.f32 %v1809, %v3080
    %v3082 = vpop.f32.mrb[0].mxu0
    %v3083 = vadd.f32 %v1810, %v3082
    %v3084 = vpop.f32.mrb[0].mxu0
    %v3085 = vadd.f32 %v1811, %v3084
    %v3086 = vpop.f32.mrb[0].mxu0
    %v3087 = vadd.f32 %v1812, %v3086
    %3088 = vmatprep.mubr.bf16.mxu0 0
    %3089 = vmatmul.mubr.bf16.gmra.mrb[0].mxu0 %v2933
    %v3090 = vpop.f32.mrb[0].mxu0
    %v3091 = vadd.f32 %v1813, %v3090
    %v3092 = vpop.f32.mrb[0].mxu0
    %v3093 = vadd.f32 %v1814, %v3092
    %v3094 = vpop.f32.mrb[0].mxu0
    %v3095 = vadd.f32 %v1815, %v3094
    %v3096 = vpop.f32.mrb[0].mxu0
    %v3097 = vadd.f32 %v1816, %v3096
    %3098 = vmatprep.mubr.bf16.mxu0 0
    %3099 = vmatmul.mubr.bf16.gmra.mrb[0].mxu0 %v2936
    %v3100 = vpop.f32.mrb[0].mxu0
    %v3101 = vadd.f32 %v1817, %v3100
    %v3102 = vpop.f32.mrb[0].mxu0
    %v3103 = vadd.f32 %v1818, %v3102
    %v3104 = vpop.f32.mrb[0].mxu0
    %v3105 = vadd.f32 %v1819, %v3104
    %v3106 = vpop.f32.mrb[0].mxu0
    %v3107 = vadd.f32 %v1820, %v3106
    %3108 = vmatprep.mubr.bf16.mxu0 0
    %3109 = vmatmul.mubr.bf16.gmra.mrb[0].mxu0 %v2939
    %v3110 = vpop.f32.mrb[0].mxu0
    %v3111 = vadd.f32 %v1821, %v3110
    %v3112 = vpop.f32.mrb[0].mxu0
    %v3113 = vadd.f32 %v1822, %v3112
    %v3114 = vpop.f32.mrb[0].mxu0
    %v3115 = vadd.f32 %v1823, %v3114
    %v3116 = vpop.f32.mrb[0].mxu0
    %v3117 = vadd.f32 %v1824, %v3116
    %3118 = vmatprep.mubr.bf16.mxu0 0
    %3119 = vmatmul.mubr.bf16.gmra.mrb[0].mxu0 %v2942
    %v3120 = vpop.f32.mrb[0].mxu0
    %v3121 = vadd.f32 %v1825, %v3120
    %v3122 = vpop.f32.mrb[0].mxu0
    %v3123 = vadd.f32 %v1826, %v3122
    %v3124 = vpop.f32.mrb[0].mxu0
    %v3125 = vadd.f32 %v1827, %v3124
    %v3126 = vpop.f32.mrb[0].mxu0
    %v3127 = vadd.f32 %v1828, %v3126
    %3128 = vmatprep.mubr.bf16.mxu0 0
    %3129 = vmatmul.mubr.bf16.gmra.mrb[0].mxu0 %v2945
    %v3130 = vpop.f32.mrb[0].mxu0
    %v3131 = vadd.f32 %v1829, %v3130
    %v3132 = vpop.f32.mrb[0].mxu0
    %v3133 = vadd.f32 %v1830, %v3132
    %v3134 = vpop.f32.mrb[0].mxu0
    %v3135 = vadd.f32 %v1831, %v3134
    %v3136 = vpop.f32.mrb[0].mxu0
    %v3137 = vadd.f32 %v1832, %v3136
    %3138 = vmatprep.mubr.bf16.mxu0 0
    %3139 = vmatmul.mubr.bf16.gmra.mrb[0].mxu0 %v2948
    %v3140 = vpop.f32.mrb[0].mxu0
    %v3141 = vadd.f32 %v1833, %v3140
    %v3142 = vpop.f32.mrb[0].mxu0
    %v3143 = vadd.f32 %v1834, %v3142
    %v3144 = vpop.f32.mrb[0].mxu0
    %v3145 = vadd.f32 %v1835, %v3144
    %v3146 = vpop.f32.mrb[0].mxu0
    %v3147 = vadd.f32 %v1836, %v3146
    %3148 = vmatprep.mubr.bf16.mxu0 0
    %3149 = vmatmul.mubr.bf16.gmra.mrb[0].mxu0 %v2951
    %v3150 = vpop.f32.mrb[0].mxu0
    %v3151 = vadd.f32 %v1837, %v3150
    %v3152 = vpop.f32.mrb[0].mxu0
    %v3153 = vadd.f32 %v1838, %v3152
    %v3154 = vpop.f32.mrb[0].mxu0
    %v3155 = vadd.f32 %v1839, %v3154
    %v3156 = vpop.f32.mrb[0].mxu0
    %v3157 = vadd.f32 %v1840, %v3156
    %3158 = vmatprep.mubr.bf16.mxu0 0
    %3159 = vmatmul.mubr.bf16.gmra.mrb[0].mxu0 %v2954
    %v3160 = vpop.f32.mrb[0].mxu0
    %v3161 = vadd.f32 %v1841, %v3160
    %v3162 = vpop.f32.mrb[0].mxu0
    %v3163 = vadd.f32 %v1842, %v3162
    %v3164 = vpop.f32.mrb[0].mxu0
    %v3165 = vadd.f32 %v1843, %v3164
    %v3166 = vpop.f32.mrb[0].mxu0
    %v3167 = vadd.f32 %v1844, %v3166
    %3168 = vmatprep.mubr.bf16.mxu0 0
    %3169 = vmatmul.mubr.bf16.gmra.mrb[0].mxu0 %v2957
    %v3170 = vpop.f32.mrb[0].mxu0
    %v3171 = vadd.f32 %v1845, %v3170
    %v3172 = vpop.f32.mrb[0].mxu0
    %v3173 = vadd.f32 %v1846, %v3172
    %v3174 = vpop.f32.mrb[0].mxu0
    %v3175 = vadd.f32 %v1847, %v3174
    %v3176 = vpop.f32.mrb[0].mxu0
    %v3177 = vadd.f32 %v1848, %v3176
    %3178 = vmatprep.mubr.bf16.mxu0 0
    %3179 = vmatmul.mubr.bf16.gmra.mrb[0].mxu0 %v2960
    %v3180 = vpop.f32.mrb[0].mxu0
    %v3181 = vadd.f32 %v1849, %v3180
    %v3182 = vpop.f32.mrb[0].mxu0
    %v3183 = vadd.f32 %v1850, %v3182
    %v3184 = vpop.f32.mrb[0].mxu0
    %v3185 = vadd.f32 %v1851, %v3184
    %v3186 = vpop.f32.mrb[0].mxu0
    %v3187 = vadd.f32 %v1852, %v3186
    %3188 = vmatprep.mubr.bf16.mxu0 0
    %3189 = vmatmul.mubr.bf16.gmra.mrb[0].mxu0 %v2963
    %v3190 = vpop.f32.mrb[0].mxu0
    %v3191 = vadd.f32 %v1853, %v3190
    %v3192 = vpop.f32.mrb[0].mxu0
    %v3193 = vadd.f32 %v1854, %v3192
    %v3194 = vpop.f32.mrb[0].mxu0
    %v3195 = vadd.f32 %v1855, %v3194
    %v3196 = vpop.f32.mrb[0].mxu0
    %v3197 = vadd.f32 %v1856, %v3196
    %3198 = vmatprep.mubr.bf16.mxu0 0
    %3199 = vmatmul.mubr.bf16.gmra.mrb[0].mxu0 %v2966
    %v3200 = vpop.f32.mrb[0].mxu0
    %v3201 = vadd.f32 %v1857, %v3200
    %v3202 = vpop.f32.mrb[0].mxu0
    %v3203 = vadd.f32 %v1858, %v3202
    %v3204 = vpop.f32.mrb[0].mxu0
    %v3205 = vadd.f32 %v1859, %v3204
    %v3206 = vpop.f32.mrb[0].mxu0
    %v3207 = vadd.f32 %v1860, %v3206
    %3208 = vdwg.mxu0
    %v3209 = vmax.f32 %v3051, %v3053
    %3210 = vmax.xlane.f32.xlu0 %v3209
    %v3211 = vpop.xlane.xlu0 %3210
    %v3212 = vmax.f32 %v3055, %v3057
    %3213 = vmax.xlane.f32.xlu0 %v3212
    %v3214 = vpop.xlane.xlu0 %3213
    %v3215 = vmax.f32 %v3061, %v3063
    %3216 = vmax.xlane.f32.xlu0 %v3215
    %v3217 = vpop.xlane.xlu0 %3216
    %v3218 = vmax.f32 %v3065, %v3067
    %3219 = vmax.xlane.f32.xlu0 %v3218
    %v3220 = vpop.xlane.xlu0 %3219
    %v3221 = vmax.f32 %v3071, %v3073
    %3222 = vmax.xlane.f32.xlu0 %v3221
    %v3223 = vpop.xlane.xlu0 %3222
    %v3224 = vmax.f32 %v3075, %v3077
    %3225 = vmax.xlane.f32.xlu0 %v3224
    %v3226 = vpop.xlane.xlu0 %3225
    %v3227 = vmax.f32 %v3081, %v3083
    %3228 = vmax.xlane.f32.xlu0 %v3227
    %v3229 = vpop.xlane.xlu0 %3228
    %v3230 = vmax.f32 %v3085, %v3087
    %3231 = vmax.xlane.f32.xlu0 %v3230
    %v3232 = vpop.xlane.xlu0 %3231
    %v3233 = vmax.f32 %v3091, %v3093
    %3234 = vmax.xlane.f32.xlu0 %v3233
    %v3235 = vpop.xlane.xlu0 %3234
    %v3236 = vmax.f32 %v3095, %v3097
    %3237 = vmax.xlane.f32.xlu0 %v3236
    %v3238 = vpop.xlane.xlu0 %3237
    %v3239 = vmax.f32 %v3101, %v3103
    %3240 = vmax.xlane.f32.xlu0 %v3239
    %v3241 = vpop.xlane.xlu0 %3240
    %v3242 = vmax.f32 %v3105, %v3107
    %3243 = vmax.xlane.f32.xlu0 %v3242
    %v3244 = vpop.xlane.xlu0 %3243
    %v3245 = vmax.f32 %v3111, %v3113
    %3246 = vmax.xlane.f32.xlu0 %v3245
    %v3247 = vpop.xlane.xlu0 %3246
    %v3248 = vmax.f32 %v3115, %v3117
    %3249 = vmax.xlane.f32.xlu0 %v3248
    %v3250 = vpop.xlane.xlu0 %3249
    %v3251 = vmax.f32 %v3121, %v3123
    %3252 = vmax.xlane.f32.xlu0 %v3251
    %v3253 = vpop.xlane.xlu0 %3252
    %v3254 = vmax.f32 %v3125, %v3127
    %3255 = vmax.xlane.f32.xlu0 %v3254
    %v3256 = vpop.xlane.xlu0 %3255
    %v3257 = vmax.f32 %v3131, %v3133
    %3258 = vmax.xlane.f32.xlu0 %v3257
    %v3259 = vpop.xlane.xlu0 %3258
    %v3260 = vmax.f32 %v3135, %v3137
    %3261 = vmax.xlane.f32.xlu0 %v3260
    %v3262 = vpop.xlane.xlu0 %3261
    %v3263 = vmax.f32 %v3141, %v3143
    %3264 = vmax.xlane.f32.xlu0 %v3263
    %v3265 = vpop.xlane.xlu0 %3264
    %v3266 = vmax.f32 %v3145, %v3147
    %3267 = vmax.xlane.f32.xlu0 %v3266
    %v3268 = vpop.xlane.xlu0 %3267
    %v3269 = vmax.f32 %v3151, %v3153
    %3270 = vmax.xlane.f32.xlu0 %v3269
    %v3271 = vpop.xlane.xlu0 %3270
    %v3272 = vmax.f32 %v3155, %v3157
    %3273 = vmax.xlane.f32.xlu0 %v3272
    %v3274 = vpop.xlane.xlu0 %3273
    %v3275 = vmax.f32 %v3161, %v3163
    %3276 = vmax.xlane.f32.xlu0 %v3275
    %v3277 = vpop.xlane.xlu0 %3276
    %v3278 = vmax.f32 %v3165, %v3167
    %3279 = vmax.xlane.f32.xlu0 %v3278
    %v3280 = vpop.xlane.xlu0 %3279
    %v3281 = vmax.f32 %v3171, %v3173
    %3282 = vmax.xlane.f32.xlu0 %v3281
    %v3283 = vpop.xlane.xlu0 %3282
    %v3284 = vmax.f32 %v3175, %v3177
    %3285 = vmax.xlane.f32.xlu0 %v3284
    %v3286 = vpop.xlane.xlu0 %3285
    %v3287 = vmax.f32 %v3181, %v3183
    %3288 = vmax.xlane.f32.xlu0 %v3287
    %v3289 = vpop.xlane.xlu0 %3288
    %v3290 = vmax.f32 %v3185, %v3187
    %3291 = vmax.xlane.f32.xlu0 %v3290
    %v3292 = vpop.xlane.xlu0 %3291
    %v3293 = vmax.f32 %v3191, %v3193
    %3294 = vmax.xlane.f32.xlu0 %v3293
    %v3295 = vpop.xlane.xlu0 %3294
    %v3296 = vmax.f32 %v3195, %v3197
    %3297 = vmax.xlane.f32.xlu0 %v3296
    %v3298 = vpop.xlane.xlu0 %3297
    %v3299 = vmax.f32 %v3201, %v3203
    %3300 = vmax.xlane.f32.xlu0 %v3299
    %v3301 = vpop.xlane.xlu0 %3300
    %v3302 = vmax.f32 %v3205, %v3207
    %3303 = vmax.xlane.f32.xlu0 %v3302
    %v3304 = vpop.xlane.xlu0 %3303
    %v3305 = vsub.f32 %v3051, %v3211
    %v3306 = vsub.f32 %v3053, %v3211
    %v3307 = vsub.f32 %v3055, %v3214
    %v3308 = vsub.f32 %v3057, %v3214
    %v3309 = vsub.f32 %v3061, %v3217
    %v3310 = vsub.f32 %v3063, %v3217
    %v3311 = vsub.f32 %v3065, %v3220
    %v3312 = vsub.f32 %v3067, %v3220
    %v3313 = vsub.f32 %v3071, %v3223
    %v3314 = vsub.f32 %v3073, %v3223
    %v3315 = vsub.f32 %v3075, %v3226
    %v3316 = vsub.f32 %v3077, %v3226
    %v3317 = vsub.f32 %v3081, %v3229
    %v3318 = vsub.f32 %v3083, %v3229
    %v3319 = vsub.f32 %v3085, %v3232
    %v3320 = vsub.f32 %v3087, %v3232
    %v3321 = vsub.f32 %v3091, %v3235
    %v3322 = vsub.f32 %v3093, %v3235
    %v3323 = vsub.f32 %v3095, %v3238
    %v3324 = vsub.f32 %v3097, %v3238
    %v3325 = vsub.f32 %v3101, %v3241
    %v3326 = vsub.f32 %v3103, %v3241
    %v3327 = vsub.f32 %v3105, %v3244
    %v3328 = vsub.f32 %v3107, %v3244
    %v3329 = vsub.f32 %v3111, %v3247
    %v3330 = vsub.f32 %v3113, %v3247
    %v3331 = vsub.f32 %v3115, %v3250
    %v3332 = vsub.f32 %v3117, %v3250
    %v3333 = vsub.f32 %v3121, %v3253
    %v3334 = vsub.f32 %v3123, %v3253
    %v3335 = vsub.f32 %v3125, %v3256
    %v3336 = vsub.f32 %v3127, %v3256
    %v3337 = vsub.f32 %v3131, %v3259
    %v3338 = vsub.f32 %v3133, %v3259
    %v3339 = vsub.f32 %v3135, %v3262
    %v3340 = vsub.f32 %v3137, %v3262
    %v3341 = vsub.f32 %v3141, %v3265
    %v3342 = vsub.f32 %v3143, %v3265
    %v3343 = vsub.f32 %v3145, %v3268
    %v3344 = vsub.f32 %v3147, %v3268
    %v3345 = vsub.f32 %v3151, %v3271
    %v3346 = vsub.f32 %v3153, %v3271
    %v3347 = vsub.f32 %v3155, %v3274
    %v3348 = vsub.f32 %v3157, %v3274
    %v3349 = vsub.f32 %v3161, %v3277
    %v3350 = vsub.f32 %v3163, %v3277
    %v3351 = vsub.f32 %v3165, %v3280
    %v3352 = vsub.f32 %v3167, %v3280
    %v3353 = vsub.f32 %v3171, %v3283
    %v3354 = vsub.f32 %v3173, %v3283
    %v3355 = vsub.f32 %v3175, %v3286
    %v3356 = vsub.f32 %v3177, %v3286
    %v3357 = vsub.f32 %v3181, %v3289
    %v3358 = vsub.f32 %v3183, %v3289
    %v3359 = vsub.f32 %v3185, %v3292
    %v3360 = vsub.f32 %v3187, %v3292
    %v3361 = vsub.f32 %v3191, %v3295
    %v3362 = vsub.f32 %v3193, %v3295
    %v3363 = vsub.f32 %v3195, %v3298
    %v3364 = vsub.f32 %v3197, %v3298
    %v3365 = vsub.f32 %v3201, %v3301
    %v3366 = vsub.f32 %v3203, %v3301
    %v3367 = vsub.f32 %v3205, %v3304
    %v3368 = vsub.f32 %v3207, %v3304
    %v3369 = vmul.f32 %v3305, 1.442695
    %v3370 = vpow.pop %v3369
    %v3371 = vmul.f32 %v3306, 1.442695
    %v3372 = vpow.pop %v3371
    %v3373 = vmul.f32 %v3307, 1.442695
    %v3374 = vpow.pop %v3373
    %v3375 = vmul.f32 %v3308, 1.442695
    %v3376 = vpow.pop %v3375
    %v3377 = vmul.f32 %v3309, 1.442695
    %v3378 = vpow.pop %v3377
    %v3379 = vmul.f32 %v3310, 1.442695
    %v3380 = vpow.pop %v3379
    %v3381 = vmul.f32 %v3311, 1.442695
    %v3382 = vpow.pop %v3381
    %v3383 = vmul.f32 %v3312, 1.442695
    %v3384 = vpow.pop %v3383
    %v3385 = vmul.f32 %v3313, 1.442695
    %v3386 = vpow.pop %v3385
    %v3387 = vmul.f32 %v3314, 1.442695
    %v3388 = vpow.pop %v3387
    %v3389 = vmul.f32 %v3315, 1.442695
    %v3390 = vpow.pop %v3389
    %v3391 = vmul.f32 %v3316, 1.442695
    %v3392 = vpow.pop %v3391
    %v3393 = vmul.f32 %v3317, 1.442695
    %v3394 = vpow.pop %v3393
    %v3395 = vmul.f32 %v3318, 1.442695
    %v3396 = vpow.pop %v3395
    %v3397 = vmul.f32 %v3319, 1.442695
    %v3398 = vpow.pop %v3397
    %v3399 = vmul.f32 %v3320, 1.442695
    %v3400 = vpow.pop %v3399
    %v3401 = vmul.f32 %v3321, 1.442695
    %v3402 = vpow.pop %v3401
    %v3403 = vmul.f32 %v3322, 1.442695
    %v3404 = vpow.pop %v3403
    %v3405 = vmul.f32 %v3323, 1.442695
    %v3406 = vpow.pop %v3405
    %v3407 = vmul.f32 %v3324, 1.442695
    %v3408 = vpow.pop %v3407
    %v3409 = vmul.f32 %v3325, 1.442695
    %v3410 = vpow.pop %v3409
    %v3411 = vmul.f32 %v3326, 1.442695
    %v3412 = vpow.pop %v3411
    %v3413 = vmul.f32 %v3327, 1.442695
    %v3414 = vpow.pop %v3413
    %v3415 = vmul.f32 %v3328, 1.442695
    %v3416 = vpow.pop %v3415
    %v3417 = vmul.f32 %v3329, 1.442695
    %v3418 = vpow.pop %v3417
    %v3419 = vmul.f32 %v3330, 1.442695
    %v3420 = vpow.pop %v3419
    %v3421 = vmul.f32 %v3331, 1.442695
    %v3422 = vpow.pop %v3421
    %v3423 = vmul.f32 %v3332, 1.442695
    %v3424 = vpow.pop %v3423
    %v3425 = vmul.f32 %v3333, 1.442695
    %v3426 = vpow.pop %v3425
    %v3427 = vmul.f32 %v3334, 1.442695
    %v3428 = vpow.pop %v3427
    %v3429 = vmul.f32 %v3335, 1.442695
    %v3430 = vpow.pop %v3429
    %v3431 = vmul.f32 %v3336, 1.442695
    %v3432 = vpow.pop %v3431
    %v3433 = vmul.f32 %v3337, 1.442695
    %v3434 = vpow.pop %v3433
    %v3435 = vmul.f32 %v3338, 1.442695
    %v3436 = vpow.pop %v3435
    %v3437 = vmul.f32 %v3339, 1.442695
    %v3438 = vpow.pop %v3437
    %v3439 = vmul.f32 %v3340, 1.442695
    %v3440 = vpow.pop %v3439
    %v3441 = vmul.f32 %v3341, 1.442695
    %v3442 = vpow.pop %v3441
    %v3443 = vmul.f32 %v3342, 1.442695
    %v3444 = vpow.pop %v3443
    %v3445 = vmul.f32 %v3343, 1.442695
    %v3446 = vpow.pop %v3445
    %v3447 = vmul.f32 %v3344, 1.442695
    %v3448 = vpow.pop %v3447
    %v3449 = vmul.f32 %v3345, 1.442695
    %v3450 = vpow.pop %v3449
    %v3451 = vmul.f32 %v3346, 1.442695
    %v3452 = vpow.pop %v3451
    %v3453 = vmul.f32 %v3347, 1.442695
    %v3454 = vpow.pop %v3453
    %v3455 = vmul.f32 %v3348, 1.442695
    %v3456 = vpow.pop %v3455
    %v3457 = vmul.f32 %v3349, 1.442695
    %v3458 = vpow.pop %v3457
    %v3459 = vmul.f32 %v3350, 1.442695
    %v3460 = vpow.pop %v3459
    %v3461 = vmul.f32 %v3351, 1.442695
    %v3462 = vpow.pop %v3461
    %v3463 = vmul.f32 %v3352, 1.442695
    %v3464 = vpow.pop %v3463
    %v3465 = vmul.f32 %v3353, 1.442695
    %v3466 = vpow.pop %v3465
    %v3467 = vmul.f32 %v3354, 1.442695
    %v3468 = vpow.pop %v3467
    %v3469 = vmul.f32 %v3355, 1.442695
    %v3470 = vpow.pop %v3469
    %v3471 = vmul.f32 %v3356, 1.442695
    %v3472 = vpow.pop %v3471
    %v3473 = vmul.f32 %v3357, 1.442695
    %v3474 = vpow.pop %v3473
    %v3475 = vmul.f32 %v3358, 1.442695
    %v3476 = vpow.pop %v3475
    %v3477 = vmul.f32 %v3359, 1.442695
    %v3478 = vpow.pop %v3477
    %v3479 = vmul.f32 %v3360, 1.442695
    %v3480 = vpow.pop %v3479
    %v3481 = vmul.f32 %v3361, 1.442695
    %v3482 = vpow.pop %v3481
    %v3483 = vmul.f32 %v3362, 1.442695
    %v3484 = vpow.pop %v3483
    %v3485 = vmul.f32 %v3363, 1.442695
    %v3486 = vpow.pop %v3485
    %v3487 = vmul.f32 %v3364, 1.442695
    %v3488 = vpow.pop %v3487
    %v3489 = vmul.f32 %v3365, 1.442695
    %v3490 = vpow.pop %v3489
    %v3491 = vmul.f32 %v3366, 1.442695
    %v3492 = vpow.pop %v3491
    %v3493 = vmul.f32 %v3367, 1.442695
    %v3494 = vpow.pop %v3493
    %v3495 = vmul.f32 %v3368, 1.442695
    %v3496 = vpow.pop %v3495
    %v3497 = vadd.f32 %v3370, %v3372
    %3498 = vadd.xlane.f32.xlu0 %v3497
    %v3499 = vpop.xlane.xlu0 %3498
    %v3500 = vadd.f32 %v3374, %v3376
    %3501 = vadd.xlane.f32.xlu0 %v3500
    %v3502 = vpop.xlane.xlu0 %3501
    %v3503 = vadd.f32 %v3378, %v3380
    %3504 = vadd.xlane.f32.xlu0 %v3503
    %v3505 = vpop.xlane.xlu0 %3504
    %v3506 = vadd.f32 %v3382, %v3384
    %3507 = vadd.xlane.f32.xlu0 %v3506
    %v3508 = vpop.xlane.xlu0 %3507
    %v3509 = vadd.f32 %v3386, %v3388
    %3510 = vadd.xlane.f32.xlu0 %v3509
    %v3511 = vpop.xlane.xlu0 %3510
    %v3512 = vadd.f32 %v3390, %v3392
    %3513 = vadd.xlane.f32.xlu0 %v3512
    %v3514 = vpop.xlane.xlu0 %3513
    %v3515 = vadd.f32 %v3394, %v3396
    %3516 = vadd.xlane.f32.xlu0 %v3515
    %v3517 = vpop.xlane.xlu0 %3516
    %v3518 = vadd.f32 %v3398, %v3400
    %3519 = vadd.xlane.f32.xlu0 %v3518
    %v3520 = vpop.xlane.xlu0 %3519
    %v3521 = vadd.f32 %v3402, %v3404
    %3522 = vadd.xlane.f32.xlu0 %v3521
    %v3523 = vpop.xlane.xlu0 %3522
    %v3524 = vadd.f32 %v3406, %v3408
    %3525 = vadd.xlane.f32.xlu0 %v3524
    %v3526 = vpop.xlane.xlu0 %3525
    %v3527 = vadd.f32 %v3410, %v3412
    %3528 = vadd.xlane.f32.xlu0 %v3527
    %v3529 = vpop.xlane.xlu0 %3528
    %v3530 = vadd.f32 %v3414, %v3416
    %3531 = vadd.xlane.f32.xlu0 %v3530
    %v3532 = vpop.xlane.xlu0 %3531
    %v3533 = vadd.f32 %v3418, %v3420
    %3534 = vadd.xlane.f32.xlu0 %v3533
    %v3535 = vpop.xlane.xlu0 %3534
    %v3536 = vadd.f32 %v3422, %v3424
    %3537 = vadd.xlane.f32.xlu0 %v3536
    %v3538 = vpop.xlane.xlu0 %3537
    %v3539 = vadd.f32 %v3426, %v3428
    %3540 = vadd.xlane.f32.xlu0 %v3539
    %v3541 = vpop.xlane.xlu0 %3540
    %v3542 = vadd.f32 %v3430, %v3432
    %3543 = vadd.xlane.f32.xlu0 %v3542
    %v3544 = vpop.xlane.xlu0 %3543
    %v3545 = vadd.f32 %v3434, %v3436
    %3546 = vadd.xlane.f32.xlu0 %v3545
    %v3547 = vpop.xlane.xlu0 %3546
    %v3548 = vadd.f32 %v3438, %v3440
    %3549 = vadd.xlane.f32.xlu0 %v3548
    %v3550 = vpop.xlane.xlu0 %3549
    %v3551 = vadd.f32 %v3442, %v3444
    %3552 = vadd.xlane.f32.xlu0 %v3551
    %v3553 = vpop.xlane.xlu0 %3552
    %v3554 = vadd.f32 %v3446, %v3448
    %3555 = vadd.xlane.f32.xlu0 %v3554
    %v3556 = vpop.xlane.xlu0 %3555
    %v3557 = vadd.f32 %v3450, %v3452
    %3558 = vadd.xlane.f32.xlu0 %v3557
    %v3559 = vpop.xlane.xlu0 %3558
    %v3560 = vadd.f32 %v3454, %v3456
    %3561 = vadd.xlane.f32.xlu0 %v3560
    %v3562 = vpop.xlane.xlu0 %3561
    %v3563 = vadd.f32 %v3458, %v3460
    %3564 = vadd.xlane.f32.xlu0 %v3563
    %v3565 = vpop.xlane.xlu0 %3564
    %v3566 = vadd.f32 %v3462, %v3464
    %3567 = vadd.xlane.f32.xlu0 %v3566
    %v3568 = vpop.xlane.xlu0 %3567
    %v3569 = vadd.f32 %v3466, %v3468
    %3570 = vadd.xlane.f32.xlu0 %v3569
    %v3571 = vpop.xlane.xlu0 %3570
    %v3572 = vadd.f32 %v3470, %v3472
    %3573 = vadd.xlane.f32.xlu0 %v3572
    %v3574 = vpop.xlane.xlu0 %3573
    %v3575 = vadd.f32 %v3474, %v3476
    %3576 = vadd.xlane.f32.xlu0 %v3575
    %v3577 = vpop.xlane.xlu0 %3576
    %v3578 = vadd.f32 %v3478, %v3480
    %3579 = vadd.xlane.f32.xlu0 %v3578
    %v3580 = vpop.xlane.xlu0 %3579
    %v3581 = vadd.f32 %v3482, %v3484
    %3582 = vadd.xlane.f32.xlu0 %v3581
    %v3583 = vpop.xlane.xlu0 %3582
    %v3584 = vadd.f32 %v3486, %v3488
    %3585 = vadd.xlane.f32.xlu0 %v3584
    %v3586 = vpop.xlane.xlu0 %3585
    %v3587 = vadd.f32 %v3490, %v3492
    %3588 = vadd.xlane.f32.xlu0 %v3587
    %v3589 = vpop.xlane.xlu0 %3588
    %v3590 = vadd.f32 %v3494, %v3496
    %3591 = vadd.xlane.f32.xlu0 %v3590
    %v3592 = vpop.xlane.xlu0 %3591
    %v3593 = vrcp.pop %v3499
    %v3594 = vrcp.pop %v3502
    %v3595 = vrcp.pop %v3505
    %v3596 = vrcp.pop %v3508
    %v3597 = vrcp.pop %v3511
    %v3598 = vrcp.pop %v3514
    %v3599 = vrcp.pop %v3517
    %v3600 = vrcp.pop %v3520
    %v3601 = vrcp.pop %v3523
    %v3602 = vrcp.pop %v3526
    %v3603 = vrcp.pop %v3529
    %v3604 = vrcp.pop %v3532
    %v3605 = vrcp.pop %v3535
    %v3606 = vrcp.pop %v3538
    %v3607 = vrcp.pop %v3541
    %v3608 = vrcp.pop %v3544
    %v3609 = vrcp.pop %v3547
    %v3610 = vrcp.pop %v3550
    %v3611 = vrcp.pop %v3553
    %v3612 = vrcp.pop %v3556
    %v3613 = vrcp.pop %v3559
    %v3614 = vrcp.pop %v3562
    %v3615 = vrcp.pop %v3565
    %v3616 = vrcp.pop %v3568
    %v3617 = vrcp.pop %v3571
    %v3618 = vrcp.pop %v3574
    %v3619 = vrcp.pop %v3577
    %v3620 = vrcp.pop %v3580
    %v3621 = vrcp.pop %v3583
    %v3622 = vrcp.pop %v3586
    %v3623 = vrcp.pop %v3589
    %v3624 = vrcp.pop %v3592
    %v3625 = vmul.f32 %v3370, %v3593
    %v3626 = vmul.f32 %v3372, %v3593
    %v3627 = vmul.f32 %v3374, %v3594
    %v3628 = vmul.f32 %v3376, %v3594
    %v3629 = vmul.f32 %v3378, %v3595
    %v3630 = vmul.f32 %v3380, %v3595
    %v3631 = vmul.f32 %v3382, %v3596
    %v3632 = vmul.f32 %v3384, %v3596
    %v3633 = vmul.f32 %v3386, %v3597
    %v3634 = vmul.f32 %v3388, %v3597
    %v3635 = vmul.f32 %v3390, %v3598
    %v3636 = vmul.f32 %v3392, %v3598
    %v3637 = vmul.f32 %v3394, %v3599
    %v3638 = vmul.f32 %v3396, %v3599
    %v3639 = vmul.f32 %v3398, %v3600
    %v3640 = vmul.f32 %v3400, %v3600
    %v3641 = vmul.f32 %v3402, %v3601
    %v3642 = vmul.f32 %v3404, %v3601
    %v3643 = vmul.f32 %v3406, %v3602
    %v3644 = vmul.f32 %v3408, %v3602
    %v3645 = vmul.f32 %v3410, %v3603
    %v3646 = vmul.f32 %v3412, %v3603
    %v3647 = vmul.f32 %v3414, %v3604
    %v3648 = vmul.f32 %v3416, %v3604
    %v3649 = vmul.f32 %v3418, %v3605
    %v3650 = vmul.f32 %v3420, %v3605
    %v3651 = vmul.f32 %v3422, %v3606
    %v3652 = vmul.f32 %v3424, %v3606
    %v3653 = vmul.f32 %v3426, %v3607
    %v3654 = vmul.f32 %v3428, %v3607
    %v3655 = vmul.f32 %v3430, %v3608
    %v3656 = vmul.f32 %v3432, %v3608
    %v3657 = vmul.f32 %v3434, %v3609
    %v3658 = vmul.f32 %v3436, %v3609
    %v3659 = vmul.f32 %v3438, %v3610
    %v3660 = vmul.f32 %v3440, %v3610
    %v3661 = vmul.f32 %v3442, %v3611
    %v3662 = vmul.f32 %v3444, %v3611
    %v3663 = vmul.f32 %v3446, %v3612
    %v3664 = vmul.f32 %v3448, %v3612
    %v3665 = vmul.f32 %v3450, %v3613
    %v3666 = vmul.f32 %v3452, %v3613
    %v3667 = vmul.f32 %v3454, %v3614
    %v3668 = vmul.f32 %v3456, %v3614
    %v3669 = vmul.f32 %v3458, %v3615
    %v3670 = vmul.f32 %v3460, %v3615
    %v3671 = vmul.f32 %v3462, %v3616
    %v3672 = vmul.f32 %v3464, %v3616
    %v3673 = vmul.f32 %v3466, %v3617
    %v3674 = vmul.f32 %v3468, %v3617
    %v3675 = vmul.f32 %v3470, %v3618
    %v3676 = vmul.f32 %v3472, %v3618
    %v3677 = vmul.f32 %v3474, %v3619
    %v3678 = vmul.f32 %v3476, %v3619
    %v3679 = vmul.f32 %v3478, %v3620
    %v3680 = vmul.f32 %v3480, %v3620
    %v3681 = vmul.f32 %v3482, %v3621
    %v3682 = vmul.f32 %v3484, %v3621
    %v3683 = vmul.f32 %v3486, %v3622
    %v3684 = vmul.f32 %v3488, %v3622
    %v3685 = vmul.f32 %v3490, %v3623
    %v3686 = vmul.f32 %v3492, %v3623
    %v3687 = vmul.f32 %v3494, %v3624
    %v3688 = vmul.f32 %v3496, %v3624
    %v3689 = vpack.c.bf16 %v3627, %v3625
    %v3690 = vpack.c.bf16 %v3628, %v3626
    %v3691 = vpack.c.bf16 %v3631, %v3629
    %v3692 = vpack.c.bf16 %v3632, %v3630
    %v3693 = vpack.c.bf16 %v3635, %v3633
    %v3694 = vpack.c.bf16 %v3636, %v3634
    %v3695 = vpack.c.bf16 %v3639, %v3637
    %v3696 = vpack.c.bf16 %v3640, %v3638
    %v3697 = vpack.c.bf16 %v3643, %v3641
    %v3698 = vpack.c.bf16 %v3644, %v3642
    %v3699 = vpack.c.bf16 %v3647, %v3645
    %v3700 = vpack.c.bf16 %v3648, %v3646
    %v3701 = vpack.c.bf16 %v3651, %v3649
    %v3702 = vpack.c.bf16 %v3652, %v3650
    %v3703 = vpack.c.bf16 %v3655, %v3653
    %v3704 = vpack.c.bf16 %v3656, %v3654
    %v3705 = vpack.c.bf16 %v3659, %v3657
    %v3706 = vpack.c.bf16 %v3660, %v3658
    %v3707 = vpack.c.bf16 %v3663, %v3661
    %v3708 = vpack.c.bf16 %v3664, %v3662
    %v3709 = vpack.c.bf16 %v3667, %v3665
    %v3710 = vpack.c.bf16 %v3668, %v3666
    %v3711 = vpack.c.bf16 %v3671, %v3669
    %v3712 = vpack.c.bf16 %v3672, %v3670
    %v3713 = vpack.c.bf16 %v3675, %v3673
    %v3714 = vpack.c.bf16 %v3676, %v3674
    %v3715 = vpack.c.bf16 %v3679, %v3677
    %v3716 = vpack.c.bf16 %v3680, %v3678
    %v3717 = vpack.c.bf16 %v3683, %v3681
    %v3718 = vpack.c.bf16 %v3684, %v3682
    %v3719 = vpack.c.bf16 %v3687, %v3685
    %v3720 = vpack.c.bf16 %v3688, %v3686
    %3737 = vrot.lane.b32.xlu0 %v1545, 120
    %v3738 = vpop.permute.xlu0 %3737
    %3739 = vrot.lane.b32.xlu0 %v1546, 120
    %v3740 = vpop.permute.xlu0 %3739
    %3741 = vrot.lane.b32.xlu0 %v1547, 120
    %v3742 = vpop.permute.xlu0 %3741
    %3743 = vrot.lane.b32.xlu0 %v1548, 120
    %v3744 = vpop.permute.xlu0 %3743
    %3745 = vrot.lane.b32.xlu0 %v1549, 120
    %v3746 = vpop.permute.xlu0 %3745
    %3747 = vrot.lane.b32.xlu0 %v1550, 120
    %v3748 = vpop.permute.xlu0 %3747
    %3749 = vrot.lane.b32.xlu0 %v1551, 120
    %v3750 = vpop.permute.xlu0 %3749
    %3751 = vrot.lane.b32.xlu0 %v1552, 120
    %v3752 = vpop.permute.xlu0 %3751
    %3753 = vrot.lane.b32.xlu0 %v1553, 120
    %v3754 = vpop.permute.xlu0 %3753
    %3755 = vrot.lane.b32.xlu0 %v1554, 120
    %v3756 = vpop.permute.xlu0 %3755
    %3757 = vrot.lane.b32.xlu0 %v1555, 120
    %v3758 = vpop.permute.xlu0 %3757
    %3759 = vrot.lane.b32.xlu0 %v1556, 120
    %v3760 = vpop.permute.xlu0 %3759
    %3761 = vrot.lane.b32.xlu0 %v1557, 120
    %v3762 = vpop.permute.xlu0 %3761
    %3763 = vrot.lane.b32.xlu0 %v1558, 120
    %v3764 = vpop.permute.xlu0 %3763
    %3765 = vrot.lane.b32.xlu0 %v1559, 120
    %v3766 = vpop.permute.xlu0 %3765
    %3767 = vrot.lane.b32.xlu0 %v1560, 120
    %v3768 = vpop.permute.xlu0 %3767
    %3785 = vmatprep.subr.bf16.mxu0 0
    %3786 = vmatpush1.bf16.msra.mxu0 %v3738
    %3787 = vmatprep.subr.bf16.mxu0 0
    %3788 = vmatpush1.bf16.msra.mxu0 %v3740
    %3789 = vmatprep.subr.bf16.mxu0 0
    %3790 = vmatpush1.bf16.msra.mxu0 %v3742
    %3791 = vmatprep.subr.bf16.mxu0 0
    %3792 = vmatpush1.bf16.msra.mxu0 %v3744
    %3793 = vmatprep.subr.bf16.mxu0 0
    %3794 = vmatpush1.bf16.msra.mxu0 %v3746
    %3795 = vmatprep.subr.bf16.mxu0 0
    %3796 = vmatpush1.bf16.msra.mxu0 %v3748
    %3797 = vmatprep.subr.bf16.mxu0 0
    %3798 = vmatpush1.bf16.msra.mxu0 %v3750
    %3799 = vmatprep.subr.bf16.mxu0 0
    %3800 = vmatpush1.bf16.msra.mxu0 %v3752
    %3801 = vmatprep.subr.bf16.mxu0 0
    %3802 = vmatpush1.bf16.msra.mxu0 %v3754
    %3803 = vmatprep.subr.bf16.mxu0 0
    %3804 = vmatpush1.bf16.msra.mxu0 %v3756
    %3805 = vmatprep.subr.bf16.mxu0 0
    %3806 = vmatpush1.bf16.msra.mxu0 %v3758
    %3807 = vmatprep.subr.bf16.mxu0 0
    %3808 = vmatpush1.bf16.msra.mxu0 %v3760
    %3809 = vmatprep.subr.bf16.mxu0 0
    %3810 = vmatpush1.bf16.msra.mxu0 %v3762
    %3811 = vmatprep.subr.bf16.mxu0 0
    %3812 = vmatpush1.bf16.msra.mxu0 %v3764
    %3813 = vmatprep.subr.bf16.mxu0 0
    %3814 = vmatpush1.bf16.msra.mxu0 %v3766
    %3815 = vmatprep.subr.bf16.mxu0 0
    %3816 = vmatpush1.bf16.msra.mxu0 %v3768
    %3817 = vmatprep.mubr.bf16.mxu0 %v3690
    %3818 = vmatmul.mubr.bf16.gmra.mrb[0].mxu0 %v3689
    %v3819 = vpop.f32.mrb[0].mxu0
    %v3820 = vadd.f32 0.0, %v3819
    %v3821 = vpop.f32.mrb[0].mxu0
    %v3822 = vpop.f32.mrb[0].mxu0
    %v3823 = vadd.f32 0.0, %v3822
    %v3824 = vpop.f32.mrb[0].mxu0
    %3825 = vmatprep.mubr.bf16.mxu0 %v3692
    %3826 = vmatmul.mubr.bf16.gmra.mrb[0].mxu0 %v3691
    %v3827 = vpop.f32.mrb[0].mxu0
    %v3828 = vadd.f32 0.0, %v3827
    %v3829 = vpop.f32.mrb[0].mxu0
    %v3830 = vpop.f32.mrb[0].mxu0
    %v3831 = vadd.f32 0.0, %v3830
    %v3832 = vpop.f32.mrb[0].mxu0
    %3833 = vmatprep.mubr.bf16.mxu0 %v3694
    %3834 = vmatmul.mubr.bf16.gmra.mrb[0].mxu0 %v3693
    %v3835 = vpop.f32.mrb[0].mxu0
    %v3836 = vadd.f32 0.0, %v3835
    %v3837 = vpop.f32.mrb[0].mxu0
    %v3838 = vpop.f32.mrb[0].mxu0
    %v3839 = vadd.f32 0.0, %v3838
    %v3840 = vpop.f32.mrb[0].mxu0
    %3841 = vmatprep.mubr.bf16.mxu0 %v3696
    %3842 = vmatmul.mubr.bf16.gmra.mrb[0].mxu0 %v3695
    %v3843 = vpop.f32.mrb[0].mxu0
    %v3844 = vadd.f32 0.0, %v3843
    %v3845 = vpop.f32.mrb[0].mxu0
    %v3846 = vpop.f32.mrb[0].mxu0
    %v3847 = vadd.f32 0.0, %v3846
    %v3848 = vpop.f32.mrb[0].mxu0
    %3849 = vmatprep.mubr.bf16.mxu0 %v3698
    %3850 = vmatmul.mubr.bf16.gmra.mrb[0].mxu0 %v3697
    %v3851 = vpop.f32.mrb[0].mxu0
    %v3852 = vadd.f32 0.0, %v3851
    %v3853 = vpop.f32.mrb[0].mxu0
    %v3854 = vpop.f32.mrb[0].mxu0
    %v3855 = vadd.f32 0.0, %v3854
    %v3856 = vpop.f32.mrb[0].mxu0
    %3857 = vmatprep.mubr.bf16.mxu0 %v3700
    %3858 = vmatmul.mubr.bf16.gmra.mrb[0].mxu0 %v3699
    %v3859 = vpop.f32.mrb[0].mxu0
    %v3860 = vadd.f32 0.0, %v3859
    %v3861 = vpop.f32.mrb[0].mxu0
    %v3862 = vpop.f32.mrb[0].mxu0
    %v3863 = vadd.f32 0.0, %v3862
    %v3864 = vpop.f32.mrb[0].mxu0
    %3865 = vmatprep.mubr.bf16.mxu0 %v3702
    %3866 = vmatmul.mubr.bf16.gmra.mrb[0].mxu0 %v3701
    %v3867 = vpop.f32.mrb[0].mxu0
    %v3868 = vadd.f32 0.0, %v3867
    %v3869 = vpop.f32.mrb[0].mxu0
    %v3870 = vpop.f32.mrb[0].mxu0
    %v3871 = vadd.f32 0.0, %v3870
    %v3872 = vpop.f32.mrb[0].mxu0
    %3873 = vmatprep.mubr.bf16.mxu0 %v3704
    %3874 = vmatmul.mubr.bf16.gmra.mrb[0].mxu0 %v3703
    %v3875 = vpop.f32.mrb[0].mxu0
    %v3876 = vadd.f32 0.0, %v3875
    %v3877 = vpop.f32.mrb[0].mxu0
    %v3878 = vpop.f32.mrb[0].mxu0
    %v3879 = vadd.f32 0.0, %v3878
    %v3880 = vpop.f32.mrb[0].mxu0
    %3881 = vmatprep.mubr.bf16.mxu0 %v3706
    %3882 = vmatmul.mubr.bf16.gmra.mrb[0].mxu0 %v3705
    %v3883 = vpop.f32.mrb[0].mxu0
    %v3884 = vadd.f32 0.0, %v3883
    %v3885 = vpop.f32.mrb[0].mxu0
    %v3886 = vpop.f32.mrb[0].mxu0
    %v3887 = vadd.f32 0.0, %v3886
    %v3888 = vpop.f32.mrb[0].mxu0
    %3889 = vmatprep.mubr.bf16.mxu0 %v3708
    %3890 = vmatmul.mubr.bf16.gmra.mrb[0].mxu0 %v3707
    %v3891 = vpop.f32.mrb[0].mxu0
    %v3892 = vadd.f32 0.0, %v3891
    %v3893 = vpop.f32.mrb[0].mxu0
    %v3894 = vpop.f32.mrb[0].mxu0
    %v3895 = vadd.f32 0.0, %v3894
    %v3896 = vpop.f32.mrb[0].mxu0
    %3897 = vmatprep.mubr.bf16.mxu0 %v3710
    %3898 = vmatmul.mubr.bf16.gmra.mrb[0].mxu0 %v3709
    %v3899 = vpop.f32.mrb[0].mxu0
    %v3900 = vadd.f32 0.0, %v3899
    %v3901 = vpop.f32.mrb[0].mxu0
    %v3902 = vpop.f32.mrb[0].mxu0
    %v3903 = vadd.f32 0.0, %v3902
    %v3904 = vpop.f32.mrb[0].mxu0
    %3905 = vmatprep.mubr.bf16.mxu0 %v3712
    %3906 = vmatmul.mubr.bf16.gmra.mrb[0].mxu0 %v3711
    %v3907 = vpop.f32.mrb[0].mxu0
    %v3908 = vadd.f32 0.0, %v3907
    %v3909 = vpop.f32.mrb[0].mxu0
    %v3910 = vpop.f32.mrb[0].mxu0
    %v3911 = vadd.f32 0.0, %v3910
    %v3912 = vpop.f32.mrb[0].mxu0
    %3913 = vmatprep.mubr.bf16.mxu0 %v3714
    %3914 = vmatmul.mubr.bf16.gmra.mrb[0].mxu0 %v3713
    %v3915 = vpop.f32.mrb[0].mxu0
    %v3916 = vadd.f32 0.0, %v3915
    %v3917 = vpop.f32.mrb[0].mxu0
    %v3918 = vpop.f32.mrb[0].mxu0
    %v3919 = vadd.f32 0.0, %v3918
    %v3920 = vpop.f32.mrb[0].mxu0
    %3921 = vmatprep.mubr.bf16.mxu0 %v3716
    %3922 = vmatmul.mubr.bf16.gmra.mrb[0].mxu0 %v3715
    %v3923 = vpop.f32.mrb[0].mxu0
    %v3924 = vadd.f32 0.0, %v3923
    %v3925 = vpop.f32.mrb[0].mxu0
    %v3926 = vpop.f32.mrb[0].mxu0
    %v3927 = vadd.f32 0.0, %v3926
    %v3928 = vpop.f32.mrb[0].mxu0
    %3929 = vmatprep.mubr.bf16.mxu0 %v3718
    %3930 = vmatmul.mubr.bf16.gmra.mrb[0].mxu0 %v3717
    %v3931 = vpop.f32.mrb[0].mxu0
    %v3932 = vadd.f32 0.0, %v3931
    %v3933 = vpop.f32.mrb[0].mxu0
    %v3934 = vpop.f32.mrb[0].mxu0
    %v3935 = vadd.f32 0.0, %v3934
    %v3936 = vpop.f32.mrb[0].mxu0
    %3937 = vmatprep.mubr.bf16.mxu0 %v3720
    %3938 = vmatmul.mubr.bf16.gmra.mrb[0].mxu0 %v3719
    %v3939 = vpop.f32.mrb[0].mxu0
    %v3940 = vadd.f32 0.0, %v3939
    %v3941 = vpop.f32.mrb[0].mxu0
    %v3942 = vpop.f32.mrb[0].mxu0
    %v3943 = vadd.f32 0.0, %v3942
    %v3944 = vpop.f32.mrb[0].mxu0
    %3945 = vdwg.mxu0
    %3946 = vrot.lane.b32.xlu0 %v1513, 112
    %v3947 = vpop.permute.xlu0 %3946
    %3948 = vrot.lane.b32.xlu0 %v1514, 112
    %v3949 = vpop.permute.xlu0 %3948
    %3950 = vrot.lane.b32.xlu0 %v1515, 112
    %v3951 = vpop.permute.xlu0 %3950
    %3952 = vrot.lane.b32.xlu0 %v1516, 112
    %v3953 = vpop.permute.xlu0 %3952
    %3954 = vrot.lane.b32.xlu0 %v1517, 112
    %v3955 = vpop.permute.xlu0 %3954
    %3956 = vrot.lane.b32.xlu0 %v1518, 112
    %v3957 = vpop.permute.xlu0 %3956
    %3958 = vrot.lane.b32.xlu0 %v1519, 112
    %v3959 = vpop.permute.xlu0 %3958
    %3960 = vrot.lane.b32.xlu0 %v1520, 112
    %v3961 = vpop.permute.xlu0 %3960
    %3962 = vrot.lane.b32.xlu0 %v1521, 112
    %v3963 = vpop.permute.xlu0 %3962
    %3964 = vrot.lane.b32.xlu0 %v1522, 112
    %v3965 = vpop.permute.xlu0 %3964
    %3966 = vrot.lane.b32.xlu0 %v1523, 112
    %v3967 = vpop.permute.xlu0 %3966
    %3968 = vrot.lane.b32.xlu0 %v1524, 112
    %v3969 = vpop.permute.xlu0 %3968
    %3970 = vrot.lane.b32.xlu0 %v1525, 112
    %v3971 = vpop.permute.xlu0 %3970
    %3972 = vrot.lane.b32.xlu0 %v1526, 112
    %v3973 = vpop.permute.xlu0 %3972
    %3974 = vrot.lane.b32.xlu0 %v1527, 112
    %v3975 = vpop.permute.xlu0 %3974
    %3976 = vrot.lane.b32.xlu0 %v1528, 112
    %v3977 = vpop.permute.xlu0 %3976
    %3978 = vrot.lane.b32.xlu0 %v1529, 112
    %v3979 = vpop.permute.xlu0 %3978
    %3980 = vrot.lane.b32.xlu0 %v1530, 112
    %v3981 = vpop.permute.xlu0 %3980
    %3982 = vrot.lane.b32.xlu0 %v1531, 112
    %v3983 = vpop.permute.xlu0 %3982
    %3984 = vrot.lane.b32.xlu0 %v1532, 112
    %v3985 = vpop.permute.xlu0 %3984
    %3986 = vrot.lane.b32.xlu0 %v1533, 112
    %v3987 = vpop.permute.xlu0 %3986
    %3988 = vrot.lane.b32.xlu0 %v1534, 112
    %v3989 = vpop.permute.xlu0 %3988
    %3990 = vrot.lane.b32.xlu0 %v1535, 112
    %v3991 = vpop.permute.xlu0 %3990
    %3992 = vrot.lane.b32.xlu0 %v1536, 112
    %v3993 = vpop.permute.xlu0 %3992
    %3994 = vrot.lane.b32.xlu0 %v1537, 112
    %v3995 = vpop.permute.xlu0 %3994
    %3996 = vrot.lane.b32.xlu0 %v1538, 112
    %v3997 = vpop.permute.xlu0 %3996
    %3998 = vrot.lane.b32.xlu0 %v1539, 112
    %v3999 = vpop.permute.xlu0 %3998
    %4000 = vrot.lane.b32.xlu0 %v1540, 112
    %v4001 = vpop.permute.xlu0 %4000
    %4002 = vrot.lane.b32.xlu0 %v1541, 112
    %v4003 = vpop.permute.xlu0 %4002
    %4004 = vrot.lane.b32.xlu0 %v1542, 112
    %v4005 = vpop.permute.xlu0 %4004
    %4006 = vrot.lane.b32.xlu0 %v1543, 112
    %v4007 = vpop.permute.xlu0 %4006
    %4008 = vrot.lane.b32.xlu0 %v1544, 112
    %v4009 = vpop.permute.xlu0 %4008
    %v4011 = vsel %vm1861, %v3947, 0
    %v4014 = vsel %vm1861, %v3949, 0
    %v4017 = vsel %vm1861, %v3951, 0
    %v4020 = vsel %vm1861, %v3953, 0
    %v4023 = vsel %vm1861, %v3955, 0
    %v4026 = vsel %vm1861, %v3957, 0
    %v4029 = vsel %vm1861, %v3959, 0
    %v4032 = vsel %vm1861, %v3961, 0
    %v4035 = vsel %vm1861, %v3963, 0
    %v4038 = vsel %vm1861, %v3965, 0
    %v4041 = vsel %vm1861, %v3967, 0
    %v4044 = vsel %vm1861, %v3969, 0
    %v4047 = vsel %vm1861, %v3971, 0
    %v4050 = vsel %vm1861, %v3973, 0
    %v4053 = vsel %vm1861, %v3975, 0
    %v4056 = vsel %vm1861, %v3977, 0
    %v4059 = vsel %vm1861, %v3979, 0
    %v4062 = vsel %vm1861, %v3981, 0
    %v4065 = vsel %vm1861, %v3983, 0
    %v4068 = vsel %vm1861, %v3985, 0
    %v4071 = vsel %vm1861, %v3987, 0
    %v4074 = vsel %vm1861, %v3989, 0
    %v4077 = vsel %vm1861, %v3991, 0
    %v4080 = vsel %vm1861, %v3993, 0
    %v4083 = vsel %vm1861, %v3995, 0
    %v4086 = vsel %vm1861, %v3997, 0
    %v4089 = vsel %vm1861, %v3999, 0
    %v4092 = vsel %vm1861, %v4001, 0
    %v4095 = vsel %vm1861, %v4003, 0
    %v4098 = vsel %vm1861, %v4005, 0
    %v4101 = vsel %vm1861, %v4007, 0
    %v4104 = vsel %vm1861, %v4009, 0
    %4106 = vmatprep.subr.bf16.mxu0 0
    %4107 = vmatpush1.bf16.xpose.msra.mxu0 %v4059
    %4108 = vmatprep.subr.bf16.mxu0 0
    %4109 = vmatpush1.bf16.xpose.msra.mxu0 %v4062
    %4110 = vmatprep.subr.bf16.mxu0 0
    %4111 = vmatpush1.bf16.xpose.msra.mxu0 %v4065
    %4112 = vmatprep.subr.bf16.mxu0 0
    %4113 = vmatpush1.bf16.xpose.msra.mxu0 %v4068
    %4114 = vmatprep.subr.bf16.mxu0 0
    %4115 = vmatpush1.bf16.xpose.msra.mxu0 %v4071
    %4116 = vmatprep.subr.bf16.mxu0 0
    %4117 = vmatpush1.bf16.xpose.msra.mxu0 %v4074
    %4118 = vmatprep.subr.bf16.mxu0 0
    %4119 = vmatpush1.bf16.xpose.msra.mxu0 %v4077
    %4120 = vmatprep.subr.bf16.mxu0 0
    %4121 = vmatpush1.bf16.xpose.msra.mxu0 %v4080
    %4122 = vmatprep.subr.bf16.mxu0 0
    %4123 = vmatpush1.bf16.xpose.msra.mxu0 %v4083
    %4124 = vmatprep.subr.bf16.mxu0 0
    %4125 = vmatpush1.bf16.xpose.msra.mxu0 %v4086
    %4126 = vmatprep.subr.bf16.mxu0 0
    %4127 = vmatpush1.bf16.xpose.msra.mxu0 %v4089
    %4128 = vmatprep.subr.bf16.mxu0 0
    %4129 = vmatpush1.bf16.xpose.msra.mxu0 %v4092
    %4130 = vmatprep.subr.bf16.mxu0 0
    %4131 = vmatpush1.bf16.xpose.msra.mxu0 %v4095
    %4132 = vmatprep.subr.bf16.mxu0 0
    %4133 = vmatpush1.bf16.xpose.msra.mxu0 %v4098
    %4134 = vmatprep.subr.bf16.mxu0 0
    %4135 = vmatpush1.bf16.xpose.msra.mxu0 %v4101
    %4136 = vmatprep.subr.bf16.mxu0 0
    %4137 = vmatpush1.bf16.xpose.msra.mxu0 %v4104
    %4138 = vmatprep.mubr.bf16.mxu0 0
    %4139 = vmatmul.mubr.bf16.gmra.mrb[0].mxu0 %v4011
    %v4140 = vpop.f32.mrb[0].mxu0
    %v4141 = vadd.f32 %v1797, %v4140
    %v4142 = vpop.f32.mrb[0].mxu0
    %v4143 = vadd.f32 %v1798, %v4142
    %v4144 = vpop.f32.mrb[0].mxu0
    %v4145 = vadd.f32 %v1799, %v4144
    %v4146 = vpop.f32.mrb[0].mxu0
    %v4147 = vadd.f32 %v1800, %v4146
    %4148 = vmatprep.mubr.bf16.mxu0 0
    %4149 = vmatmul.mubr.bf16.gmra.mrb[0].mxu0 %v4014
    %v4150 = vpop.f32.mrb[0].mxu0
    %v4151 = vadd.f32 %v1801, %v4150
    %v4152 = vpop.f32.mrb[0].mxu0
    %v4153 = vadd.f32 %v1802, %v4152
    %v4154 = vpop.f32.mrb[0].mxu0
    %v4155 = vadd.f32 %v1803, %v4154
    %v4156 = vpop.f32.mrb[0].mxu0
    %v4157 = vadd.f32 %v1804, %v4156
    %4158 = vmatprep.mubr.bf16.mxu0 0
    %4159 = vmatmul.mubr.bf16.gmra.mrb[0].mxu0 %v4017
    %v4160 = vpop.f32.mrb[0].mxu0
    %v4161 = vadd.f32 %v1805, %v4160
    %v4162 = vpop.f32.mrb[0].mxu0
    %v4163 = vadd.f32 %v1806, %v4162
    %v4164 = vpop.f32.mrb[0].mxu0
    %v4165 = vadd.f32 %v1807, %v4164
    %v4166 = vpop.f32.mrb[0].mxu0
    %v4167 = vadd.f32 %v1808, %v4166
    %4168 = vmatprep.mubr.bf16.mxu0 0
    %4169 = vmatmul.mubr.bf16.gmra.mrb[0].mxu0 %v4020
    %v4170 = vpop.f32.mrb[0].mxu0
    %v4171 = vadd.f32 %v1809, %v4170
    %v4172 = vpop.f32.mrb[0].mxu0
    %v4173 = vadd.f32 %v1810, %v4172
    %v4174 = vpop.f32.mrb[0].mxu0
    %v4175 = vadd.f32 %v1811, %v4174
    %v4176 = vpop.f32.mrb[0].mxu0
    %v4177 = vadd.f32 %v1812, %v4176
    %4178 = vmatprep.mubr.bf16.mxu0 0
    %4179 = vmatmul.mubr.bf16.gmra.mrb[0].mxu0 %v4023
    %v4180 = vpop.f32.mrb[0].mxu0
    %v4181 = vadd.f32 %v1813, %v4180
    %v4182 = vpop.f32.mrb[0].mxu0
    %v4183 = vadd.f32 %v1814, %v4182
    %v4184 = vpop.f32.mrb[0].mxu0
    %v4185 = vadd.f32 %v1815, %v4184
    %v4186 = vpop.f32.mrb[0].mxu0
    %v4187 = vadd.f32 %v1816, %v4186
    %4188 = vmatprep.mubr.bf16.mxu0 0
    %4189 = vmatmul.mubr.bf16.gmra.mrb[0].mxu0 %v4026
    %v4190 = vpop.f32.mrb[0].mxu0
    %v4191 = vadd.f32 %v1817, %v4190
    %v4192 = vpop.f32.mrb[0].mxu0
    %v4193 = vadd.f32 %v1818, %v4192
    %v4194 = vpop.f32.mrb[0].mxu0
    %v4195 = vadd.f32 %v1819, %v4194
    %v4196 = vpop.f32.mrb[0].mxu0
    %v4197 = vadd.f32 %v1820, %v4196
    %4198 = vmatprep.mubr.bf16.mxu0 0
    %4199 = vmatmul.mubr.bf16.gmra.mrb[0].mxu0 %v4029
    %v4200 = vpop.f32.mrb[0].mxu0
    %v4201 = vadd.f32 %v1821, %v4200
    %v4202 = vpop.f32.mrb[0].mxu0
    %v4203 = vadd.f32 %v1822, %v4202
    %v4204 = vpop.f32.mrb[0].mxu0
    %v4205 = vadd.f32 %v1823, %v4204
    %v4206 = vpop.f32.mrb[0].mxu0
    %v4207 = vadd.f32 %v1824, %v4206
    %4208 = vmatprep.mubr.bf16.mxu0 0
    %4209 = vmatmul.mubr.bf16.gmra.mrb[0].mxu0 %v4032
    %v4210 = vpop.f32.mrb[0].mxu0
    %v4211 = vadd.f32 %v1825, %v4210
    %v4212 = vpop.f32.mrb[0].mxu0
    %v4213 = vadd.f32 %v1826, %v4212
    %v4214 = vpop.f32.mrb[0].mxu0
    %v4215 = vadd.f32 %v1827, %v4214
    %v4216 = vpop.f32.mrb[0].mxu0
    %v4217 = vadd.f32 %v1828, %v4216
    %4218 = vmatprep.mubr.bf16.mxu0 0
    %4219 = vmatmul.mubr.bf16.gmra.mrb[0].mxu0 %v4035
    %v4220 = vpop.f32.mrb[0].mxu0
    %v4221 = vadd.f32 %v1829, %v4220
    %v4222 = vpop.f32.mrb[0].mxu0
    %v4223 = vadd.f32 %v1830, %v4222
    %v4224 = vpop.f32.mrb[0].mxu0
    %v4225 = vadd.f32 %v1831, %v4224
    %v4226 = vpop.f32.mrb[0].mxu0
    %v4227 = vadd.f32 %v1832, %v4226
    %4228 = vmatprep.mubr.bf16.mxu0 0
    %4229 = vmatmul.mubr.bf16.gmra.mrb[0].mxu0 %v4038
    %v4230 = vpop.f32.mrb[0].mxu0
    %v4231 = vadd.f32 %v1833, %v4230
    %v4232 = vpop.f32.mrb[0].mxu0
    %v4233 = vadd.f32 %v1834, %v4232
    %v4234 = vpop.f32.mrb[0].mxu0
    %v4235 = vadd.f32 %v1835, %v4234
    %v4236 = vpop.f32.mrb[0].mxu0
    %v4237 = vadd.f32 %v1836, %v4236
    %4238 = vmatprep.mubr.bf16.mxu0 0
    %4239 = vmatmul.mubr.bf16.gmra.mrb[0].mxu0 %v4041
    %v4240 = vpop.f32.mrb[0].mxu0
    %v4241 = vadd.f32 %v1837, %v4240
    %v4242 = vpop.f32.mrb[0].mxu0
    %v4243 = vadd.f32 %v1838, %v4242
    %v4244 = vpop.f32.mrb[0].mxu0
    %v4245 = vadd.f32 %v1839, %v4244
    %v4246 = vpop.f32.mrb[0].mxu0
    %v4247 = vadd.f32 %v1840, %v4246
    %4248 = vmatprep.mubr.bf16.mxu0 0
    %4249 = vmatmul.mubr.bf16.gmra.mrb[0].mxu0 %v4044
    %v4250 = vpop.f32.mrb[0].mxu0
    %v4251 = vadd.f32 %v1841, %v4250
    %v4252 = vpop.f32.mrb[0].mxu0
    %v4253 = vadd.f32 %v1842, %v4252
    %v4254 = vpop.f32.mrb[0].mxu0
    %v4255 = vadd.f32 %v1843, %v4254
    %v4256 = vpop.f32.mrb[0].mxu0
    %v4257 = vadd.f32 %v1844, %v4256
    %4258 = vmatprep.mubr.bf16.mxu0 0
    %4259 = vmatmul.mubr.bf16.gmra.mrb[0].mxu0 %v4047
    %v4260 = vpop.f32.mrb[0].mxu0
    %v4261 = vadd.f32 %v1845, %v4260
    %v4262 = vpop.f32.mrb[0].mxu0
    %v4263 = vadd.f32 %v1846, %v4262
    %v4264 = vpop.f32.mrb[0].mxu0
    %v4265 = vadd.f32 %v1847, %v4264
    %v4266 = vpop.f32.mrb[0].mxu0
    %v4267 = vadd.f32 %v1848, %v4266
    %4268 = vmatprep.mubr.bf16.mxu0 0
    %4269 = vmatmul.mubr.bf16.gmra.mrb[0].mxu0 %v4050
    %v4270 = vpop.f32.mrb[0].mxu0
    %v4271 = vadd.f32 %v1849, %v4270
    %v4272 = vpop.f32.mrb[0].mxu0
    %v4273 = vadd.f32 %v1850, %v4272
    %v4274 = vpop.f32.mrb[0].mxu0
    %v4275 = vadd.f32 %v1851, %v4274
    %v4276 = vpop.f32.mrb[0].mxu0
    %v4277 = vadd.f32 %v1852, %v4276
    %4278 = vmatprep.mubr.bf16.mxu0 0
    %4279 = vmatmul.mubr.bf16.gmra.mrb[0].mxu0 %v4053
    %v4280 = vpop.f32.mrb[0].mxu0
    %v4281 = vadd.f32 %v1853, %v4280
    %v4282 = vpop.f32.mrb[0].mxu0
    %v4283 = vadd.f32 %v1854, %v4282
    %v4284 = vpop.f32.mrb[0].mxu0
    %v4285 = vadd.f32 %v1855, %v4284
    %v4286 = vpop.f32.mrb[0].mxu0
    %v4287 = vadd.f32 %v1856, %v4286
    %4288 = vmatprep.mubr.bf16.mxu0 0
    %4289 = vmatmul.mubr.bf16.gmra.mrb[0].mxu0 %v4056
    %v4290 = vpop.f32.mrb[0].mxu0
    %v4291 = vadd.f32 %v1857, %v4290
    %v4292 = vpop.f32.mrb[0].mxu0
    %v4293 = vadd.f32 %v1858, %v4292
    %v4294 = vpop.f32.mrb[0].mxu0
    %v4295 = vadd.f32 %v1859, %v4294
    %v4296 = vpop.f32.mrb[0].mxu0
    %v4297 = vadd.f32 %v1860, %v4296
    %4298 = vdwg.mxu0
    %v4299 = vmax.f32 %v4141, %v4143
    %4300 = vmax.xlane.f32.xlu0 %v4299
    %v4301 = vpop.xlane.xlu0 %4300
    %v4302 = vmax.f32 %v4145, %v4147
    %4303 = vmax.xlane.f32.xlu0 %v4302
    %v4304 = vpop.xlane.xlu0 %4303
    %v4305 = vmax.f32 %v4151, %v4153
    %4306 = vmax.xlane.f32.xlu0 %v4305
    %v4307 = vpop.xlane.xlu0 %4306
    %v4308 = vmax.f32 %v4155, %v4157
    %4309 = vmax.xlane.f32.xlu0 %v4308
    %v4310 = vpop.xlane.xlu0 %4309
    %v4311 = vmax.f32 %v4161, %v4163
    %4312 = vmax.xlane.f32.xlu0 %v4311
    %v4313 = vpop.xlane.xlu0 %4312
    %v4314 = vmax.f32 %v4165, %v4167
    %4315 = vmax.xlane.f32.xlu0 %v4314
    %v4316 = vpop.xlane.xlu0 %4315
    %v4317 = vmax.f32 %v4171, %v4173
    %4318 = vmax.xlane.f32.xlu0 %v4317
    %v4319 = vpop.xlane.xlu0 %4318
    %v4320 = vmax.f32 %v4175, %v4177
    %4321 = vmax.xlane.f32.xlu0 %v4320
    %v4322 = vpop.xlane.xlu0 %4321
    %v4323 = vmax.f32 %v4181, %v4183
    %4324 = vmax.xlane.f32.xlu0 %v4323
    %v4325 = vpop.xlane.xlu0 %4324
    %v4326 = vmax.f32 %v4185, %v4187
    %4327 = vmax.xlane.f32.xlu0 %v4326
    %v4328 = vpop.xlane.xlu0 %4327
    %v4329 = vmax.f32 %v4191, %v4193
    %4330 = vmax.xlane.f32.xlu0 %v4329
    %v4331 = vpop.xlane.xlu0 %4330
    %v4332 = vmax.f32 %v4195, %v4197
    %4333 = vmax.xlane.f32.xlu0 %v4332
    %v4334 = vpop.xlane.xlu0 %4333
    %v4335 = vmax.f32 %v4201, %v4203
    %4336 = vmax.xlane.f32.xlu0 %v4335
    %v4337 = vpop.xlane.xlu0 %4336
    %v4338 = vmax.f32 %v4205, %v4207
    %4339 = vmax.xlane.f32.xlu0 %v4338
    %v4340 = vpop.xlane.xlu0 %4339
    %v4341 = vmax.f32 %v4211, %v4213
    %4342 = vmax.xlane.f32.xlu0 %v4341
    %v4343 = vpop.xlane.xlu0 %4342
    %v4344 = vmax.f32 %v4215, %v4217
    %4345 = vmax.xlane.f32.xlu0 %v4344
    %v4346 = vpop.xlane.xlu0 %4345
    %v4347 = vmax.f32 %v4221, %v4223
    %4348 = vmax.xlane.f32.xlu0 %v4347
    %v4349 = vpop.xlane.xlu0 %4348
    %v4350 = vmax.f32 %v4225, %v4227
    %4351 = vmax.xlane.f32.xlu0 %v4350
    %v4352 = vpop.xlane.xlu0 %4351
    %v4353 = vmax.f32 %v4231, %v4233
    %4354 = vmax.xlane.f32.xlu0 %v4353
    %v4355 = vpop.xlane.xlu0 %4354
    %v4356 = vmax.f32 %v4235, %v4237
    %4357 = vmax.xlane.f32.xlu0 %v4356
    %v4358 = vpop.xlane.xlu0 %4357
    %v4359 = vmax.f32 %v4241, %v4243
    %4360 = vmax.xlane.f32.xlu0 %v4359
    %v4361 = vpop.xlane.xlu0 %4360
    %v4362 = vmax.f32 %v4245, %v4247
    %4363 = vmax.xlane.f32.xlu0 %v4362
    %v4364 = vpop.xlane.xlu0 %4363
    %v4365 = vmax.f32 %v4251, %v4253
    %4366 = vmax.xlane.f32.xlu0 %v4365
    %v4367 = vpop.xlane.xlu0 %4366
    %v4368 = vmax.f32 %v4255, %v4257
    %4369 = vmax.xlane.f32.xlu0 %v4368
    %v4370 = vpop.xlane.xlu0 %4369
    %v4371 = vmax.f32 %v4261, %v4263
    %4372 = vmax.xlane.f32.xlu0 %v4371
    %v4373 = vpop.xlane.xlu0 %4372
    %v4374 = vmax.f32 %v4265, %v4267
    %4375 = vmax.xlane.f32.xlu0 %v4374
    %v4376 = vpop.xlane.xlu0 %4375
    %v4377 = vmax.f32 %v4271, %v4273
    %4378 = vmax.xlane.f32.xlu0 %v4377
    %v4379 = vpop.xlane.xlu0 %4378
    %v4380 = vmax.f32 %v4275, %v4277
    %4381 = vmax.xlane.f32.xlu0 %v4380
    %v4382 = vpop.xlane.xlu0 %4381
    %v4383 = vmax.f32 %v4281, %v4283
    %4384 = vmax.xlane.f32.xlu0 %v4383
    %v4385 = vpop.xlane.xlu0 %4384
    %v4386 = vmax.f32 %v4285, %v4287
    %4387 = vmax.xlane.f32.xlu0 %v4386
    %v4388 = vpop.xlane.xlu0 %4387
    %v4389 = vmax.f32 %v4291, %v4293
    %4390 = vmax.xlane.f32.xlu0 %v4389
    %v4391 = vpop.xlane.xlu0 %4390
    %v4392 = vmax.f32 %v4295, %v4297
    %4393 = vmax.xlane.f32.xlu0 %v4392
    %v4394 = vpop.xlane.xlu0 %4393
    %v4395 = vsub.f32 %v4141, %v4301
    %v4396 = vsub.f32 %v4143, %v4301
    %v4397 = vsub.f32 %v4145, %v4304
    %v4398 = vsub.f32 %v4147, %v4304
    %v4399 = vsub.f32 %v4151, %v4307
    %v4400 = vsub.f32 %v4153, %v4307
    %v4401 = vsub.f32 %v4155, %v4310
    %v4402 = vsub.f32 %v4157, %v4310
    %v4403 = vsub.f32 %v4161, %v4313
    %v4404 = vsub.f32 %v4163, %v4313
    %v4405 = vsub.f32 %v4165, %v4316
    %v4406 = vsub.f32 %v4167, %v4316
    %v4407 = vsub.f32 %v4171, %v4319
    %v4408 = vsub.f32 %v4173, %v4319
    %v4409 = vsub.f32 %v4175, %v4322
    %v4410 = vsub.f32 %v4177, %v4322
    %v4411 = vsub.f32 %v4181, %v4325
    %v4412 = vsub.f32 %v4183, %v4325
    %v4413 = vsub.f32 %v4185, %v4328
    %v4414 = vsub.f32 %v4187, %v4328
    %v4415 = vsub.f32 %v4191, %v4331
    %v4416 = vsub.f32 %v4193, %v4331
    %v4417 = vsub.f32 %v4195, %v4334
    %v4418 = vsub.f32 %v4197, %v4334
    %v4419 = vsub.f32 %v4201, %v4337
    %v4420 = vsub.f32 %v4203, %v4337
    %v4421 = vsub.f32 %v4205, %v4340
    %v4422 = vsub.f32 %v4207, %v4340
    %v4423 = vsub.f32 %v4211, %v4343
    %v4424 = vsub.f32 %v4213, %v4343
    %v4425 = vsub.f32 %v4215, %v4346
    %v4426 = vsub.f32 %v4217, %v4346
    %v4427 = vsub.f32 %v4221, %v4349
    %v4428 = vsub.f32 %v4223, %v4349
    %v4429 = vsub.f32 %v4225, %v4352
    %v4430 = vsub.f32 %v4227, %v4352
    %v4431 = vsub.f32 %v4231, %v4355
    %v4432 = vsub.f32 %v4233, %v4355
    %v4433 = vsub.f32 %v4235, %v4358
    %v4434 = vsub.f32 %v4237, %v4358
    %v4435 = vsub.f32 %v4241, %v4361
    %v4436 = vsub.f32 %v4243, %v4361
    %v4437 = vsub.f32 %v4245, %v4364
    %v4438 = vsub.f32 %v4247, %v4364
    %v4439 = vsub.f32 %v4251, %v4367
    %v4440 = vsub.f32 %v4253, %v4367
    %v4441 = vsub.f32 %v4255, %v4370
    %v4442 = vsub.f32 %v4257, %v4370
    %v4443 = vsub.f32 %v4261, %v4373
    %v4444 = vsub.f32 %v4263, %v4373
    %v4445 = vsub.f32 %v4265, %v4376
    %v4446 = vsub.f32 %v4267, %v4376
    %v4447 = vsub.f32 %v4271, %v4379
    %v4448 = vsub.f32 %v4273, %v4379
    %v4449 = vsub.f32 %v4275, %v4382
    %v4450 = vsub.f32 %v4277, %v4382
    %v4451 = vsub.f32 %v4281, %v4385
    %v4452 = vsub.f32 %v4283, %v4385
    %v4453 = vsub.f32 %v4285, %v4388
    %v4454 = vsub.f32 %v4287, %v4388
    %v4455 = vsub.f32 %v4291, %v4391
    %v4456 = vsub.f32 %v4293, %v4391
    %v4457 = vsub.f32 %v4295, %v4394
    %v4458 = vsub.f32 %v4297, %v4394
    %v4459 = vmul.f32 %v4395, 1.442695
    %v4460 = vpow.pop %v4459
    %v4461 = vmul.f32 %v4396, 1.442695
    %v4462 = vpow.pop %v4461
    %v4463 = vmul.f32 %v4397, 1.442695
    %v4464 = vpow.pop %v4463
    %v4465 = vmul.f32 %v4398, 1.442695
    %v4466 = vpow.pop %v4465
    %v4467 = vmul.f32 %v4399, 1.442695
    %v4468 = vpow.pop %v4467
    %v4469 = vmul.f32 %v4400, 1.442695
    %v4470 = vpow.pop %v4469
    %v4471 = vmul.f32 %v4401, 1.442695
    %v4472 = vpow.pop %v4471
    %v4473 = vmul.f32 %v4402, 1.442695
    %v4474 = vpow.pop %v4473
    %v4475 = vmul.f32 %v4403, 1.442695
    %v4476 = vpow.pop %v4475
    %v4477 = vmul.f32 %v4404, 1.442695
    %v4478 = vpow.pop %v4477
    %v4479 = vmul.f32 %v4405, 1.442695
    %v4480 = vpow.pop %v4479
    %v4481 = vmul.f32 %v4406, 1.442695
    %v4482 = vpow.pop %v4481
    %v4483 = vmul.f32 %v4407, 1.442695
    %v4484 = vpow.pop %v4483
    %v4485 = vmul.f32 %v4408, 1.442695
    %v4486 = vpow.pop %v4485
    %v4487 = vmul.f32 %v4409, 1.442695
    %v4488 = vpow.pop %v4487
    %v4489 = vmul.f32 %v4410, 1.442695
    %v4490 = vpow.pop %v4489
    %v4491 = vmul.f32 %v4411, 1.442695
    %v4492 = vpow.pop %v4491
    %v4493 = vmul.f32 %v4412, 1.442695
    %v4494 = vpow.pop %v4493
    %v4495 = vmul.f32 %v4413, 1.442695
    %v4496 = vpow.pop %v4495
    %v4497 = vmul.f32 %v4414, 1.442695
    %v4498 = vpow.pop %v4497
    %v4499 = vmul.f32 %v4415, 1.442695
    %v4500 = vpow.pop %v4499
    %v4501 = vmul.f32 %v4416, 1.442695
    %v4502 = vpow.pop %v4501
    %v4503 = vmul.f32 %v4417, 1.442695
    %v4504 = vpow.pop %v4503
    %v4505 = vmul.f32 %v4418, 1.442695
    %v4506 = vpow.pop %v4505
    %v4507 = vmul.f32 %v4419, 1.442695
    %v4508 = vpow.pop %v4507
    %v4509 = vmul.f32 %v4420, 1.442695
    %v4510 = vpow.pop %v4509
    %v4511 = vmul.f32 %v4421, 1.442695
    %v4512 = vpow.pop %v4511
    %v4513 = vmul.f32 %v4422, 1.442695
    %v4514 = vpow.pop %v4513
    %v4515 = vmul.f32 %v4423, 1.442695
    %v4516 = vpow.pop %v4515
    %v4517 = vmul.f32 %v4424, 1.442695
    %v4518 = vpow.pop %v4517
    %v4519 = vmul.f32 %v4425, 1.442695
    %v4520 = vpow.pop %v4519
    %v4521 = vmul.f32 %v4426, 1.442695
    %v4522 = vpow.pop %v4521
    %v4523 = vmul.f32 %v4427, 1.442695
    %v4524 = vpow.pop %v4523
    %v4525 = vmul.f32 %v4428, 1.442695
    %v4526 = vpow.pop %v4525
    %v4527 = vmul.f32 %v4429, 1.442695
    %v4528 = vpow.pop %v4527
    %v4529 = vmul.f32 %v4430, 1.442695
    %v4530 = vpow.pop %v4529
    %v4531 = vmul.f32 %v4431, 1.442695
    %v4532 = vpow.pop %v4531
    %v4533 = vmul.f32 %v4432, 1.442695
    %v4534 = vpow.pop %v4533
    %v4535 = vmul.f32 %v4433, 1.442695
    %v4536 = vpow.pop %v4535
    %v4537 = vmul.f32 %v4434, 1.442695
    %v4538 = vpow.pop %v4537
    %v4539 = vmul.f32 %v4435, 1.442695
    %v4540 = vpow.pop %v4539
    %v4541 = vmul.f32 %v4436, 1.442695
    %v4542 = vpow.pop %v4541
    %v4543 = vmul.f32 %v4437, 1.442695
    %v4544 = vpow.pop %v4543
    %v4545 = vmul.f32 %v4438, 1.442695
    %v4546 = vpow.pop %v4545
    %v4547 = vmul.f32 %v4439, 1.442695
    %v4548 = vpow.pop %v4547
    %v4549 = vmul.f32 %v4440, 1.442695
    %v4550 = vpow.pop %v4549
    %v4551 = vmul.f32 %v4441, 1.442695
    %v4552 = vpow.pop %v4551
    %v4553 = vmul.f32 %v4442, 1.442695
    %v4554 = vpow.pop %v4553
    %v4555 = vmul.f32 %v4443, 1.442695
    %v4556 = vpow.pop %v4555
    %v4557 = vmul.f32 %v4444, 1.442695
    %v4558 = vpow.pop %v4557
    %v4559 = vmul.f32 %v4445, 1.442695
    %v4560 = vpow.pop %v4559
    %v4561 = vmul.f32 %v4446, 1.442695
    %v4562 = vpow.pop %v4561
    %v4563 = vmul.f32 %v4447, 1.442695
    %v4564 = vpow.pop %v4563
    %v4565 = vmul.f32 %v4448, 1.442695
    %v4566 = vpow.pop %v4565
    %v4567 = vmul.f32 %v4449, 1.442695
    %v4568 = vpow.pop %v4567
    %v4569 = vmul.f32 %v4450, 1.442695
    %v4570 = vpow.pop %v4569
    %v4571 = vmul.f32 %v4451, 1.442695
    %v4572 = vpow.pop %v4571
    %v4573 = vmul.f32 %v4452, 1.442695
    %v4574 = vpow.pop %v4573
    %v4575 = vmul.f32 %v4453, 1.442695
    %v4576 = vpow.pop %v4575
    %v4577 = vmul.f32 %v4454, 1.442695
    %v4578 = vpow.pop %v4577
    %v4579 = vmul.f32 %v4455, 1.442695
    %v4580 = vpow.pop %v4579
    %v4581 = vmul.f32 %v4456, 1.442695
    %v4582 = vpow.pop %v4581
    %v4583 = vmul.f32 %v4457, 1.442695
    %v4584 = vpow.pop %v4583
    %v4585 = vmul.f32 %v4458, 1.442695
    %v4586 = vpow.pop %v4585
    %v4587 = vadd.f32 %v4460, %v4462
    %4588 = vadd.xlane.f32.xlu0 %v4587
    %v4589 = vpop.xlane.xlu0 %4588
    %v4590 = vadd.f32 %v4464, %v4466
    %4591 = vadd.xlane.f32.xlu0 %v4590
    %v4592 = vpop.xlane.xlu0 %4591
    %v4593 = vadd.f32 %v4468, %v4470
    %4594 = vadd.xlane.f32.xlu0 %v4593
    %v4595 = vpop.xlane.xlu0 %4594
    %v4596 = vadd.f32 %v4472, %v4474
    %4597 = vadd.xlane.f32.xlu0 %v4596
    %v4598 = vpop.xlane.xlu0 %4597
    %v4599 = vadd.f32 %v4476, %v4478
    %4600 = vadd.xlane.f32.xlu0 %v4599
    %v4601 = vpop.xlane.xlu0 %4600
    %v4602 = vadd.f32 %v4480, %v4482
    %4603 = vadd.xlane.f32.xlu0 %v4602
    %v4604 = vpop.xlane.xlu0 %4603
    %v4605 = vadd.f32 %v4484, %v4486
    %4606 = vadd.xlane.f32.xlu0 %v4605
    %v4607 = vpop.xlane.xlu0 %4606
    %v4608 = vadd.f32 %v4488, %v4490
    %4609 = vadd.xlane.f32.xlu0 %v4608
    %v4610 = vpop.xlane.xlu0 %4609
    %v4611 = vadd.f32 %v4492, %v4494
    %4612 = vadd.xlane.f32.xlu0 %v4611
    %v4613 = vpop.xlane.xlu0 %4612
    %v4614 = vadd.f32 %v4496, %v4498
    %4615 = vadd.xlane.f32.xlu0 %v4614
    %v4616 = vpop.xlane.xlu0 %4615
    %v4617 = vadd.f32 %v4500, %v4502
    %4618 = vadd.xlane.f32.xlu0 %v4617
    %v4619 = vpop.xlane.xlu0 %4618
    %v4620 = vadd.f32 %v4504, %v4506
    %4621 = vadd.xlane.f32.xlu0 %v4620
    %v4622 = vpop.xlane.xlu0 %4621
    %v4623 = vadd.f32 %v4508, %v4510
    %4624 = vadd.xlane.f32.xlu0 %v4623
    %v4625 = vpop.xlane.xlu0 %4624
    %v4626 = vadd.f32 %v4512, %v4514
    %4627 = vadd.xlane.f32.xlu0 %v4626
    %v4628 = vpop.xlane.xlu0 %4627
    %v4629 = vadd.f32 %v4516, %v4518
    %4630 = vadd.xlane.f32.xlu0 %v4629
    %v4631 = vpop.xlane.xlu0 %4630
    %v4632 = vadd.f32 %v4520, %v4522
    %4633 = vadd.xlane.f32.xlu0 %v4632
    %v4634 = vpop.xlane.xlu0 %4633
    %v4635 = vadd.f32 %v4524, %v4526
    %4636 = vadd.xlane.f32.xlu0 %v4635
    %v4637 = vpop.xlane.xlu0 %4636
    %v4638 = vadd.f32 %v4528, %v4530
    %4639 = vadd.xlane.f32.xlu0 %v4638
    %v4640 = vpop.xlane.xlu0 %4639
    %v4641 = vadd.f32 %v4532, %v4534
    %4642 = vadd.xlane.f32.xlu0 %v4641
    %v4643 = vpop.xlane.xlu0 %4642
    %v4644 = vadd.f32 %v4536, %v4538
    %4645 = vadd.xlane.f32.xlu0 %v4644
    %v4646 = vpop.xlane.xlu0 %4645
    %v4647 = vadd.f32 %v4540, %v4542
    %4648 = vadd.xlane.f32.xlu0 %v4647
    %v4649 = vpop.xlane.xlu0 %4648
    %v4650 = vadd.f32 %v4544, %v4546
    %4651 = vadd.xlane.f32.xlu0 %v4650
    %v4652 = vpop.xlane.xlu0 %4651
    %v4653 = vadd.f32 %v4548, %v4550
    %4654 = vadd.xlane.f32.xlu0 %v4653
    %v4655 = vpop.xlane.xlu0 %4654
    %v4656 = vadd.f32 %v4552, %v4554
    %4657 = vadd.xlane.f32.xlu0 %v4656
    %v4658 = vpop.xlane.xlu0 %4657
    %v4659 = vadd.f32 %v4556, %v4558
    %4660 = vadd.xlane.f32.xlu0 %v4659
    %v4661 = vpop.xlane.xlu0 %4660
    %v4662 = vadd.f32 %v4560, %v4562
    %4663 = vadd.xlane.f32.xlu0 %v4662
    %v4664 = vpop.xlane.xlu0 %4663
    %v4665 = vadd.f32 %v4564, %v4566
    %4666 = vadd.xlane.f32.xlu0 %v4665
    %v4667 = vpop.xlane.xlu0 %4666
    %v4668 = vadd.f32 %v4568, %v4570
    %4669 = vadd.xlane.f32.xlu0 %v4668
    %v4670 = vpop.xlane.xlu0 %4669
    %v4671 = vadd.f32 %v4572, %v4574
    %4672 = vadd.xlane.f32.xlu0 %v4671
    %v4673 = vpop.xlane.xlu0 %4672
    %v4674 = vadd.f32 %v4576, %v4578
    %4675 = vadd.xlane.f32.xlu0 %v4674
    %v4676 = vpop.xlane.xlu0 %4675
    %v4677 = vadd.f32 %v4580, %v4582
    %4678 = vadd.xlane.f32.xlu0 %v4677
    %v4679 = vpop.xlane.xlu0 %4678
    %v4680 = vadd.f32 %v4584, %v4586
    %4681 = vadd.xlane.f32.xlu0 %v4680
    %v4682 = vpop.xlane.xlu0 %4681
    %v4683 = vrcp.pop %v4589
    %v4684 = vrcp.pop %v4592
    %v4685 = vrcp.pop %v4595
    %v4686 = vrcp.pop %v4598
    %v4687 = vrcp.pop %v4601
    %v4688 = vrcp.pop %v4604
    %v4689 = vrcp.pop %v4607
    %v4690 = vrcp.pop %v4610
    %v4691 = vrcp.pop %v4613
    %v4692 = vrcp.pop %v4616
    %v4693 = vrcp.pop %v4619
    %v4694 = vrcp.pop %v4622
    %v4695 = vrcp.pop %v4625
    %v4696 = vrcp.pop %v4628
    %v4697 = vrcp.pop %v4631
    %v4698 = vrcp.pop %v4634
    %v4699 = vrcp.pop %v4637
    %v4700 = vrcp.pop %v4640
    %v4701 = vrcp.pop %v4643
    %v4702 = vrcp.pop %v4646
    %v4703 = vrcp.pop %v4649
    %v4704 = vrcp.pop %v4652
    %v4705 = vrcp.pop %v4655
    %v4706 = vrcp.pop %v4658
    %v4707 = vrcp.pop %v4661
    %v4708 = vrcp.pop %v4664
    %v4709 = vrcp.pop %v4667
    %v4710 = vrcp.pop %v4670
    %v4711 = vrcp.pop %v4673
    %v4712 = vrcp.pop %v4676
    %v4713 = vrcp.pop %v4679
    %v4714 = vrcp.pop %v4682
    %v4715 = vmul.f32 %v4460, %v4683
    %v4716 = vmul.f32 %v4462, %v4683
    %v4717 = vmul.f32 %v4464, %v4684
    %v4718 = vmul.f32 %v4466, %v4684
    %v4719 = vmul.f32 %v4468, %v4685
    %v4720 = vmul.f32 %v4470, %v4685
    %v4721 = vmul.f32 %v4472, %v4686
    %v4722 = vmul.f32 %v4474, %v4686
    %v4723 = vmul.f32 %v4476, %v4687
    %v4724 = vmul.f32 %v4478, %v4687
    %v4725 = vmul.f32 %v4480, %v4688
    %v4726 = vmul.f32 %v4482, %v4688
    %v4727 = vmul.f32 %v4484, %v4689
    %v4728 = vmul.f32 %v4486, %v4689
    %v4729 = vmul.f32 %v4488, %v4690
    %v4730 = vmul.f32 %v4490, %v4690
    %v4731 = vmul.f32 %v4492, %v4691
    %v4732 = vmul.f32 %v4494, %v4691
    %v4733 = vmul.f32 %v4496, %v4692
    %v4734 = vmul.f32 %v4498, %v4692
    %v4735 = vmul.f32 %v4500, %v4693
    %v4736 = vmul.f32 %v4502, %v4693
    %v4737 = vmul.f32 %v4504, %v4694
    %v4738 = vmul.f32 %v4506, %v4694
    %v4739 = vmul.f32 %v4508, %v4695
    %v4740 = vmul.f32 %v4510, %v4695
    %v4741 = vmul.f32 %v4512, %v4696
    %v4742 = vmul.f32 %v4514, %v4696
    %v4743 = vmul.f32 %v4516, %v4697
    %v4744 = vmul.f32 %v4518, %v4697
    %v4745 = vmul.f32 %v4520, %v4698
    %v4746 = vmul.f32 %v4522, %v4698
    %v4747 = vmul.f32 %v4524, %v4699
    %v4748 = vmul.f32 %v4526, %v4699
    %v4749 = vmul.f32 %v4528, %v4700
    %v4750 = vmul.f32 %v4530, %v4700
    %v4751 = vmul.f32 %v4532, %v4701
    %v4752 = vmul.f32 %v4534, %v4701
    %v4753 = vmul.f32 %v4536, %v4702
    %v4754 = vmul.f32 %v4538, %v4702
    %v4755 = vmul.f32 %v4540, %v4703
    %v4756 = vmul.f32 %v4542, %v4703
    %v4757 = vmul.f32 %v4544, %v4704
    %v4758 = vmul.f32 %v4546, %v4704
    %v4759 = vmul.f32 %v4548, %v4705
    %v4760 = vmul.f32 %v4550, %v4705
    %v4761 = vmul.f32 %v4552, %v4706
    %v4762 = vmul.f32 %v4554, %v4706
    %v4763 = vmul.f32 %v4556, %v4707
    %v4764 = vmul.f32 %v4558, %v4707
    %v4765 = vmul.f32 %v4560, %v4708
    %v4766 = vmul.f32 %v4562, %v4708
    %v4767 = vmul.f32 %v4564, %v4709
    %v4768 = vmul.f32 %v4566, %v4709
    %v4769 = vmul.f32 %v4568, %v4710
    %v4770 = vmul.f32 %v4570, %v4710
    %v4771 = vmul.f32 %v4572, %v4711
    %v4772 = vmul.f32 %v4574, %v4711
    %v4773 = vmul.f32 %v4576, %v4712
    %v4774 = vmul.f32 %v4578, %v4712
    %v4775 = vmul.f32 %v4580, %v4713
    %v4776 = vmul.f32 %v4582, %v4713
    %v4777 = vmul.f32 %v4584, %v4714
    %v4778 = vmul.f32 %v4586, %v4714
    %v4779 = vpack.c.bf16 %v4717, %v4715
    %v4780 = vpack.c.bf16 %v4718, %v4716
    %v4781 = vpack.c.bf16 %v4721, %v4719
    %v4782 = vpack.c.bf16 %v4722, %v4720
    %v4783 = vpack.c.bf16 %v4725, %v4723
    %v4784 = vpack.c.bf16 %v4726, %v4724
    %v4785 = vpack.c.bf16 %v4729, %v4727
    %v4786 = vpack.c.bf16 %v4730, %v4728
    %v4787 = vpack.c.bf16 %v4733, %v4731
    %v4788 = vpack.c.bf16 %v4734, %v4732
    %v4789 = vpack.c.bf16 %v4737, %v4735
    %v4790 = vpack.c.bf16 %v4738, %v4736
    %v4791 = vpack.c.bf16 %v4741, %v4739
    %v4792 = vpack.c.bf16 %v4742, %v4740
    %v4793 = vpack.c.bf16 %v4745, %v4743
    %v4794 = vpack.c.bf16 %v4746, %v4744
    %v4795 = vpack.c.bf16 %v4749, %v4747
    %v4796 = vpack.c.bf16 %v4750, %v4748
    %v4797 = vpack.c.bf16 %v4753, %v4751
    %v4798 = vpack.c.bf16 %v4754, %v4752
    %v4799 = vpack.c.bf16 %v4757, %v4755
    %v4800 = vpack.c.bf16 %v4758, %v4756
    %v4801 = vpack.c.bf16 %v4761, %v4759
    %v4802 = vpack.c.bf16 %v4762, %v4760
    %v4803 = vpack.c.bf16 %v4765, %v4763
    %v4804 = vpack.c.bf16 %v4766, %v4764
    %v4805 = vpack.c.bf16 %v4769, %v4767
    %v4806 = vpack.c.bf16 %v4770, %v4768
    %v4807 = vpack.c.bf16 %v4773, %v4771
    %v4808 = vpack.c.bf16 %v4774, %v4772
    %v4809 = vpack.c.bf16 %v4777, %v4775
    %v4810 = vpack.c.bf16 %v4778, %v4776
    %4811 = vrot.lane.b32.xlu0 %v1545, 112
    %v4812 = vpop.permute.xlu0 %4811
    %4813 = vrot.lane.b32.xlu0 %v1546, 112
    %v4814 = vpop.permute.xlu0 %4813
    %4815 = vrot.lane.b32.xlu0 %v1547, 112
    %v4816 = vpop.permute.xlu0 %4815
    %4817 = vrot.lane.b32.xlu0 %v1548, 112
    %v4818 = vpop.permute.xlu0 %4817
    %4819 = vrot.lane.b32.xlu0 %v1549, 112
    %v4820 = vpop.permute.xlu0 %4819
    %4821 = vrot.lane.b32.xlu0 %v1550, 112
    %v4822 = vpop.permute.xlu0 %4821
    %4823 = vrot.lane.b32.xlu0 %v1551, 112
    %v4824 = vpop.permute.xlu0 %4823
    %4825 = vrot.lane.b32.xlu0 %v1552, 112
    %v4826 = vpop.permute.xlu0 %4825
    %4827 = vrot.lane.b32.xlu0 %v1553, 112
    %v4828 = vpop.permute.xlu0 %4827
    %4829 = vrot.lane.b32.xlu0 %v1554, 112
    %v4830 = vpop.permute.xlu0 %4829
    %4831 = vrot.lane.b32.xlu0 %v1555, 112
    %v4832 = vpop.permute.xlu0 %4831
    %4833 = vrot.lane.b32.xlu0 %v1556, 112
    %v4834 = vpop.permute.xlu0 %4833
    %4835 = vrot.lane.b32.xlu0 %v1557, 112
    %v4836 = vpop.permute.xlu0 %4835
    %4837 = vrot.lane.b32.xlu0 %v1558, 112
    %v4838 = vpop.permute.xlu0 %4837
    %4839 = vrot.lane.b32.xlu0 %v1559, 112
    %v4840 = vpop.permute.xlu0 %4839
    %4841 = vrot.lane.b32.xlu0 %v1560, 112
    %v4842 = vpop.permute.xlu0 %4841
    %4859 = vmatprep.subr.bf16.mxu0 0
    %4860 = vmatpush1.bf16.msra.mxu0 %v4812
    %4861 = vmatprep.subr.bf16.mxu0 0
    %4862 = vmatpush1.bf16.msra.mxu0 %v4814
    %4863 = vmatprep.subr.bf16.mxu0 0
    %4864 = vmatpush1.bf16.msra.mxu0 %v4816
    %4865 = vmatprep.subr.bf16.mxu0 0
    %4866 = vmatpush1.bf16.msra.mxu0 %v4818
    %4867 = vmatprep.subr.bf16.mxu0 0
    %4868 = vmatpush1.bf16.msra.mxu0 %v4820
    %4869 = vmatprep.subr.bf16.mxu0 0
    %4870 = vmatpush1.bf16.msra.mxu0 %v4822
    %4871 = vmatprep.subr.bf16.mxu0 0
    %4872 = vmatpush1.bf16.msra.mxu0 %v4824
    %4873 = vmatprep.subr.bf16.mxu0 0
    %4874 = vmatpush1.bf16.msra.mxu0 %v4826
    %4875 = vmatprep.subr.bf16.mxu0 0
    %4876 = vmatpush1.bf16.msra.mxu0 %v4828
    %4877 = vmatprep.subr.bf16.mxu0 0
    %4878 = vmatpush1.bf16.msra.mxu0 %v4830
    %4879 = vmatprep.subr.bf16.mxu0 0
    %4880 = vmatpush1.bf16.msra.mxu0 %v4832
    %4881 = vmatprep.subr.bf16.mxu0 0
    %4882 = vmatpush1.bf16.msra.mxu0 %v4834
    %4883 = vmatprep.subr.bf16.mxu0 0
    %4884 = vmatpush1.bf16.msra.mxu0 %v4836
    %4885 = vmatprep.subr.bf16.mxu0 0
    %4886 = vmatpush1.bf16.msra.mxu0 %v4838
    %4887 = vmatprep.subr.bf16.mxu0 0
    %4888 = vmatpush1.bf16.msra.mxu0 %v4840
    %4889 = vmatprep.subr.bf16.mxu0 0
    %4890 = vmatpush1.bf16.msra.mxu0 %v4842
    %4891 = vmatprep.mubr.bf16.mxu0 %v4780
    %4892 = vmatmul.mubr.bf16.gmra.mrb[0].mxu0 %v4779
    %v4893 = vpop.f32.mrb[0].mxu0
    %v4894 = vadd.f32 0.0, %v4893
    %v4895 = vpop.f32.mrb[0].mxu0
    %v4896 = vpop.f32.mrb[0].mxu0
    %v4897 = vadd.f32 0.0, %v4896
    %v4898 = vpop.f32.mrb[0].mxu0
    %4899 = vmatprep.mubr.bf16.mxu0 %v4782
    %4900 = vmatmul.mubr.bf16.gmra.mrb[0].mxu0 %v4781
    %v4901 = vpop.f32.mrb[0].mxu0
    %v4902 = vadd.f32 0.0, %v4901
    %v4903 = vpop.f32.mrb[0].mxu0
    %v4904 = vpop.f32.mrb[0].mxu0
    %v4905 = vadd.f32 0.0, %v4904
    %v4906 = vpop.f32.mrb[0].mxu0
    %4907 = vmatprep.mubr.bf16.mxu0 %v4784
    %4908 = vmatmul.mubr.bf16.gmra.mrb[0].mxu0 %v4783
    %v4909 = vpop.f32.mrb[0].mxu0
    %v4910 = vadd.f32 0.0, %v4909
    %v4911 = vpop.f32.mrb[0].mxu0
    %v4912 = vpop.f32.mrb[0].mxu0
    %v4913 = vadd.f32 0.0, %v4912
    %v4914 = vpop.f32.mrb[0].mxu0
    %4915 = vmatprep.mubr.bf16.mxu0 %v4786
    %4916 = vmatmul.mubr.bf16.gmra.mrb[0].mxu0 %v4785
    %v4917 = vpop.f32.mrb[0].mxu0
    %v4918 = vadd.f32 0.0, %v4917
    %v4919 = vpop.f32.mrb[0].mxu0
    %v4920 = vpop.f32.mrb[0].mxu0
    %v4921 = vadd.f32 0.0, %v4920
    %v4922 = vpop.f32.mrb[0].mxu0
    %4923 = vmatprep.mubr.bf16.mxu0 %v4788
    %4924 = vmatmul.mubr.bf16.gmra.mrb[0].mxu0 %v4787
    %v4925 = vpop.f32.mrb[0].mxu0
    %v4926 = vadd.f32 0.0, %v4925
    %v4927 = vpop.f32.mrb[0].mxu0
    %v4928 = vpop.f32.mrb[0].mxu0
    %v4929 = vadd.f32 0.0, %v4928
    %v4930 = vpop.f32.mrb[0].mxu0
    %4931 = vmatprep.mubr.bf16.mxu0 %v4790
    %4932 = vmatmul.mubr.bf16.gmra.mrb[0].mxu0 %v4789
    %v4933 = vpop.f32.mrb[0].mxu0
    %v4934 = vadd.f32 0.0, %v4933
    %v4935 = vpop.f32.mrb[0].mxu0
    %v4936 = vpop.f32.mrb[0].mxu0
    %v4937 = vadd.f32 0.0, %v4936
    %v4938 = vpop.f32.mrb[0].mxu0
    %4939 = vmatprep.mubr.bf16.mxu0 %v4792
    %4940 = vmatmul.mubr.bf16.gmra.mrb[0].mxu0 %v4791
    %v4941 = vpop.f32.mrb[0].mxu0
    %v4942 = vadd.f32 0.0, %v4941
    %v4943 = vpop.f32.mrb[0].mxu0
    %v4944 = vpop.f32.mrb[0].mxu0
    %v4945 = vadd.f32 0.0, %v4944
    %v4946 = vpop.f32.mrb[0].mxu0
    %4947 = vmatprep.mubr.bf16.mxu0 %v4794
    %4948 = vmatmul.mubr.bf16.gmra.mrb[0].mxu0 %v4793
    %v4949 = vpop.f32.mrb[0].mxu0
    %v4950 = vadd.f32 0.0, %v4949
    %v4951 = vpop.f32.mrb[0].mxu0
    %v4952 = vpop.f32.mrb[0].mxu0
    %v4953 = vadd.f32 0.0, %v4952
    %v4954 = vpop.f32.mrb[0].mxu0
    %4955 = vmatprep.mubr.bf16.mxu0 %v4796
    %4956 = vmatmul.mubr.bf16.gmra.mrb[0].mxu0 %v4795
    %v4957 = vpop.f32.mrb[0].mxu0
    %v4958 = vadd.f32 0.0, %v4957
    %v4959 = vpop.f32.mrb[0].mxu0
    %v4960 = vpop.f32.mrb[0].mxu0
    %v4961 = vadd.f32 0.0, %v4960
    %v4962 = vpop.f32.mrb[0].mxu0
    %4963 = vmatprep.mubr.bf16.mxu0 %v4798
    %4964 = vmatmul.mubr.bf16.gmra.mrb[0].mxu0 %v4797
    %v4965 = vpop.f32.mrb[0].mxu0
    %v4966 = vadd.f32 0.0, %v4965
    %v4967 = vpop.f32.mrb[0].mxu0
    %v4968 = vpop.f32.mrb[0].mxu0
    %v4969 = vadd.f32 0.0, %v4968
    %v4970 = vpop.f32.mrb[0].mxu0
    %4971 = vmatprep.mubr.bf16.mxu0 %v4800
    %4972 = vmatmul.mubr.bf16.gmra.mrb[0].mxu0 %v4799
    %v4973 = vpop.f32.mrb[0].mxu0
    %v4974 = vadd.f32 0.0, %v4973
    %v4975 = vpop.f32.mrb[0].mxu0
    %v4976 = vpop.f32.mrb[0].mxu0
    %v4977 = vadd.f32 0.0, %v4976
    %v4978 = vpop.f32.mrb[0].mxu0
    %4979 = vmatprep.mubr.bf16.mxu0 %v4802
    %4980 = vmatmul.mubr.bf16.gmra.mrb[0].mxu0 %v4801
    %v4981 = vpop.f32.mrb[0].mxu0
    %v4982 = vadd.f32 0.0, %v4981
    %v4983 = vpop.f32.mrb[0].mxu0
    %v4984 = vpop.f32.mrb[0].mxu0
    %v4985 = vadd.f32 0.0, %v4984
    %v4986 = vpop.f32.mrb[0].mxu0
    %4987 = vmatprep.mubr.bf16.mxu0 %v4804
    %4988 = vmatmul.mubr.bf16.gmra.mrb[0].mxu0 %v4803
    %v4989 = vpop.f32.mrb[0].mxu0
    %v4990 = vadd.f32 0.0, %v4989
    %v4991 = vpop.f32.mrb[0].mxu0
    %v4992 = vpop.f32.mrb[0].mxu0
    %v4993 = vadd.f32 0.0, %v4992
    %v4994 = vpop.f32.mrb[0].mxu0
    %4995 = vmatprep.mubr.bf16.mxu0 %v4806
    %4996 = vmatmul.mubr.bf16.gmra.mrb[0].mxu0 %v4805
    %v4997 = vpop.f32.mrb[0].mxu0
    %v4998 = vadd.f32 0.0, %v4997
    %v4999 = vpop.f32.mrb[0].mxu0
    %v5000 = vpop.f32.mrb[0].mxu0
    %v5001 = vadd.f32 0.0, %v5000
    %v5002 = vpop.f32.mrb[0].mxu0
    %5003 = vmatprep.mubr.bf16.mxu0 %v4808
    %5004 = vmatmul.mubr.bf16.gmra.mrb[0].mxu0 %v4807
    %v5005 = vpop.f32.mrb[0].mxu0
    %v5006 = vadd.f32 0.0, %v5005
    %v5007 = vpop.f32.mrb[0].mxu0
    %v5008 = vpop.f32.mrb[0].mxu0
    %v5009 = vadd.f32 0.0, %v5008
    %v5010 = vpop.f32.mrb[0].mxu0
    %5011 = vmatprep.mubr.bf16.mxu0 %v4810
    %5012 = vmatmul.mubr.bf16.gmra.mrb[0].mxu0 %v4809
    %v5013 = vpop.f32.mrb[0].mxu0
    %v5014 = vadd.f32 0.0, %v5013
    %v5015 = vpop.f32.mrb[0].mxu0
    %v5016 = vpop.f32.mrb[0].mxu0
    %v5017 = vadd.f32 0.0, %v5016
    %v5018 = vpop.f32.mrb[0].mxu0
    %5019 = vdwg.mxu0
    %5020 = vrot.lane.b32.xlu0 %v1513, 104
    %v5021 = vpop.permute.xlu0 %5020
    %5022 = vrot.lane.b32.xlu0 %v1514, 104
    %v5023 = vpop.permute.xlu0 %5022
    %5024 = vrot.lane.b32.xlu0 %v1515, 104
    %v5025 = vpop.permute.xlu0 %5024
    %5026 = vrot.lane.b32.xlu0 %v1516, 104
    %v5027 = vpop.permute.xlu0 %5026
    %5028 = vrot.lane.b32.xlu0 %v1517, 104
    %v5029 = vpop.permute.xlu0 %5028
    %5030 = vrot.lane.b32.xlu0 %v1518, 104
    %v5031 = vpop.permute.xlu0 %5030
    %5032 = vrot.lane.b32.xlu0 %v1519, 104
    %v5033 = vpop.permute.xlu0 %5032
    %5034 = vrot.lane.b32.xlu0 %v1520, 104
    %v5035 = vpop.permute.xlu0 %5034
    %5036 = vrot.lane.b32.xlu0 %v1521, 104
    %v5037 = vpop.permute.xlu0 %5036
    %5038 = vrot.lane.b32.xlu0 %v1522, 104
    %v5039 = vpop.permute.xlu0 %5038
    %5040 = vrot.lane.b32.xlu0 %v1523, 104
    %v5041 = vpop.permute.xlu0 %5040
    %5042 = vrot.lane.b32.xlu0 %v1524, 104
    %v5043 = vpop.permute.xlu0 %5042
    %5044 = vrot.lane.b32.xlu0 %v1525, 104
    %v5045 = vpop.permute.xlu0 %5044
    %5046 = vrot.lane.b32.xlu0 %v1526, 104
    %v5047 = vpop.permute.xlu0 %5046
    %5048 = vrot.lane.b32.xlu0 %v1527, 104
    %v5049 = vpop.permute.xlu0 %5048
    %5050 = vrot.lane.b32.xlu0 %v1528, 104
    %v5051 = vpop.permute.xlu0 %5050
    %5052 = vrot.lane.b32.xlu0 %v1529, 104
    %v5053 = vpop.permute.xlu0 %5052
    %5054 = vrot.lane.b32.xlu0 %v1530, 104
    %v5055 = vpop.permute.xlu0 %5054
    %5056 = vrot.lane.b32.xlu0 %v1531, 104
    %v5057 = vpop.permute.xlu0 %5056
    %5058 = vrot.lane.b32.xlu0 %v1532, 104
    %v5059 = vpop.permute.xlu0 %5058
    %5060 = vrot.lane.b32.xlu0 %v1533, 104
    %v5061 = vpop.permute.xlu0 %5060
    %5062 = vrot.lane.b32.xlu0 %v1534, 104
    %v5063 = vpop.permute.xlu0 %5062
    %5064 = vrot.lane.b32.xlu0 %v1535, 104
    %v5065 = vpop.permute.xlu0 %5064
    %5066 = vrot.lane.b32.xlu0 %v1536, 104
    %v5067 = vpop.permute.xlu0 %5066
    %5068 = vrot.lane.b32.xlu0 %v1537, 104
    %v5069 = vpop.permute.xlu0 %5068
    %5070 = vrot.lane.b32.xlu0 %v1538, 104
    %v5071 = vpop.permute.xlu0 %5070
    %5072 = vrot.lane.b32.xlu0 %v1539, 104
    %v5073 = vpop.permute.xlu0 %5072
    %5074 = vrot.lane.b32.xlu0 %v1540, 104
    %v5075 = vpop.permute.xlu0 %5074
    %5076 = vrot.lane.b32.xlu0 %v1541, 104
    %v5077 = vpop.permute.xlu0 %5076
    %5078 = vrot.lane.b32.xlu0 %v1542, 104
    %v5079 = vpop.permute.xlu0 %5078
    %5080 = vrot.lane.b32.xlu0 %v1543, 104
    %v5081 = vpop.permute.xlu0 %5080
    %5082 = vrot.lane.b32.xlu0 %v1544, 104
    %v5083 = vpop.permute.xlu0 %5082
    %v5085 = vsel %vm1861, %v5021, 0
    %v5088 = vsel %vm1861, %v5023, 0
    %v5091 = vsel %vm1861, %v5025, 0
    %v5094 = vsel %vm1861, %v5027, 0
    %v5097 = vsel %vm1861, %v5029, 0
    %v5100 = vsel %vm1861, %v5031, 0
    %v5103 = vsel %vm1861, %v5033, 0
    %v5106 = vsel %vm1861, %v5035, 0
    %v5109 = vsel %vm1861, %v5037, 0
    %v5112 = vsel %vm1861, %v5039, 0
    %v5115 = vsel %vm1861, %v5041, 0
    %v5118 = vsel %vm1861, %v5043, 0
    %v5121 = vsel %vm1861, %v5045, 0
    %v5124 = vsel %vm1861, %v5047, 0
    %v5127 = vsel %vm1861, %v5049, 0
    %v5130 = vsel %vm1861, %v5051, 0
    %v5133 = vsel %vm1861, %v5053, 0
    %v5136 = vsel %vm1861, %v5055, 0
    %v5139 = vsel %vm1861, %v5057, 0
    %v5142 = vsel %vm1861, %v5059, 0
    %v5145 = vsel %vm1861, %v5061, 0
    %v5148 = vsel %vm1861, %v5063, 0
    %v5151 = vsel %vm1861, %v5065, 0
    %v5154 = vsel %vm1861, %v5067, 0
    %v5157 = vsel %vm1861, %v5069, 0
    %v5160 = vsel %vm1861, %v5071, 0
    %v5163 = vsel %vm1861, %v5073, 0
    %v5166 = vsel %vm1861, %v5075, 0
    %v5169 = vsel %vm1861, %v5077, 0
    %v5172 = vsel %vm1861, %v5079, 0
    %v5175 = vsel %vm1861, %v5081, 0
    %v5178 = vsel %vm1861, %v5083, 0
    %5180 = vmatprep.subr.bf16.mxu0 0
    %5181 = vmatpush1.bf16.xpose.msra.mxu0 %v5133
    %5182 = vmatprep.subr.bf16.mxu0 0
    %5183 = vmatpush1.bf16.xpose.msra.mxu0 %v5136
    %5184 = vmatprep.subr.bf16.mxu0 0
    %5185 = vmatpush1.bf16.xpose.msra.mxu0 %v5139
    %5186 = vmatprep.subr.bf16.mxu0 0
    %5187 = vmatpush1.bf16.xpose.msra.mxu0 %v5142
    %5188 = vmatprep.subr.bf16.mxu0 0
    %5189 = vmatpush1.bf16.xpose.msra.mxu0 %v5145
    %5190 = vmatprep.subr.bf16.mxu0 0
    %5191 = vmatpush1.bf16.xpose.msra.mxu0 %v5148
    %5192 = vmatprep.subr.bf16.mxu0 0
    %5193 = vmatpush1.bf16.xpose.msra.mxu0 %v5151
    %5194 = vmatprep.subr.bf16.mxu0 0
    %5195 = vmatpush1.bf16.xpose.msra.mxu0 %v5154
    %5196 = vmatprep.subr.bf16.mxu0 0
    %5197 = vmatpush1.bf16.xpose.msra.mxu0 %v5157
    %5198 = vmatprep.subr.bf16.mxu0 0
    %5199 = vmatpush1.bf16.xpose.msra.mxu0 %v5160
    %5200 = vmatprep.subr.bf16.mxu0 0
    %5201 = vmatpush1.bf16.xpose.msra.mxu0 %v5163
    %5202 = vmatprep.subr.bf16.mxu0 0
    %5203 = vmatpush1.bf16.xpose.msra.mxu0 %v5166
    %5204 = vmatprep.subr.bf16.mxu0 0
    %5205 = vmatpush1.bf16.xpose.msra.mxu0 %v5169
    %5206 = vmatprep.subr.bf16.mxu0 0
    %5207 = vmatpush1.bf16.xpose.msra.mxu0 %v5172
    %5208 = vmatprep.subr.bf16.mxu0 0
    %5209 = vmatpush1.bf16.xpose.msra.mxu0 %v5175
    %5210 = vmatprep.subr.bf16.mxu0 0
    %5211 = vmatpush1.bf16.xpose.msra.mxu0 %v5178
    %5212 = vmatprep.mubr.bf16.mxu0 0
    %5213 = vmatmul.mubr.bf16.gmra.mrb[0].mxu0 %v5085
    %v5214 = vpop.f32.mrb[0].mxu0
    %v5215 = vadd.f32 %v1797, %v5214
    %v5216 = vpop.f32.mrb[0].mxu0
    %v5217 = vadd.f32 %v1798, %v5216
    %v5218 = vpop.f32.mrb[0].mxu0
    %v5219 = vadd.f32 %v1799, %v5218
    %v5220 = vpop.f32.mrb[0].mxu0
    %v5221 = vadd.f32 %v1800, %v5220
    %5222 = vmatprep.mubr.bf16.mxu0 0
    %5223 = vmatmul.mubr.bf16.gmra.mrb[0].mxu0 %v5088
    %v5224 = vpop.f32.mrb[0].mxu0
    %v5225 = vadd.f32 %v1801, %v5224
    %v5226 = vpop.f32.mrb[0].mxu0
    %v5227 = vadd.f32 %v1802, %v5226
    %v5228 = vpop.f32.mrb[0].mxu0
    %v5229 = vadd.f32 %v1803, %v5228
    %v5230 = vpop.f32.mrb[0].mxu0
    %v5231 = vadd.f32 %v1804, %v5230
    %5232 = vmatprep.mubr.bf16.mxu0 0
    %5233 = vmatmul.mubr.bf16.gmra.mrb[0].mxu0 %v5091
    %v5234 = vpop.f32.mrb[0].mxu0
    %v5235 = vadd.f32 %v1805, %v5234
    %v5236 = vpop.f32.mrb[0].mxu0
    %v5237 = vadd.f32 %v1806, %v5236
    %v5238 = vpop.f32.mrb[0].mxu0
    %v5239 = vadd.f32 %v1807, %v5238
    %v5240 = vpop.f32.mrb[0].mxu0
    %v5241 = vadd.f32 %v1808, %v5240
    %5242 = vmatprep.mubr.bf16.mxu0 0
    %5243 = vmatmul.mubr.bf16.gmra.mrb[0].mxu0 %v5094
    %v5244 = vpop.f32.mrb[0].mxu0
    %v5245 = vadd.f32 %v1809, %v5244
    %v5246 = vpop.f32.mrb[0].mxu0
    %v5247 = vadd.f32 %v1810, %v5246
    %v5248 = vpop.f32.mrb[0].mxu0
    %v5249 = vadd.f32 %v1811, %v5248
    %v5250 = vpop.f32.mrb[0].mxu0
    %v5251 = vadd.f32 %v1812, %v5250
    %5252 = vmatprep.mubr.bf16.mxu0 0
    %5253 = vmatmul.mubr.bf16.gmra.mrb[0].mxu0 %v5097
    %v5254 = vpop.f32.mrb[0].mxu0
    %v5255 = vadd.f32 %v1813, %v5254
    %v5256 = vpop.f32.mrb[0].mxu0
    %v5257 = vadd.f32 %v1814, %v5256
    %v5258 = vpop.f32.mrb[0].mxu0
    %v5259 = vadd.f32 %v1815, %v5258
    %v5260 = vpop.f32.mrb[0].mxu0
    %v5261 = vadd.f32 %v1816, %v5260
    %5262 = vmatprep.mubr.bf16.mxu0 0
    %5263 = vmatmul.mubr.bf16.gmra.mrb[0].mxu0 %v5100
    %v5264 = vpop.f32.mrb[0].mxu0
    %v5265 = vadd.f32 %v1817, %v5264
    %v5266 = vpop.f32.mrb[0].mxu0
    %v5267 = vadd.f32 %v1818, %v5266
    %v5268 = vpop.f32.mrb[0].mxu0
    %v5269 = vadd.f32 %v1819, %v5268
    %v5270 = vpop.f32.mrb[0].mxu0
    %v5271 = vadd.f32 %v1820, %v5270
    %5272 = vmatprep.mubr.bf16.mxu0 0
    %5273 = vmatmul.mubr.bf16.gmra.mrb[0].mxu0 %v5103
    %v5274 = vpop.f32.mrb[0].mxu0
    %v5275 = vadd.f32 %v1821, %v5274
    %v5276 = vpop.f32.mrb[0].mxu0
    %v5277 = vadd.f32 %v1822, %v5276
    %v5278 = vpop.f32.mrb[0].mxu0
    %v5279 = vadd.f32 %v1823, %v5278
    %v5280 = vpop.f32.mrb[0].mxu0
    %v5281 = vadd.f32 %v1824, %v5280
    %5282 = vmatprep.mubr.bf16.mxu0 0
    %5283 = vmatmul.mubr.bf16.gmra.mrb[0].mxu0 %v5106
    %v5284 = vpop.f32.mrb[0].mxu0
    %v5285 = vadd.f32 %v1825, %v5284
    %v5286 = vpop.f32.mrb[0].mxu0
    %v5287 = vadd.f32 %v1826, %v5286
    %v5288 = vpop.f32.mrb[0].mxu0
    %v5289 = vadd.f32 %v1827, %v5288
    %v5290 = vpop.f32.mrb[0].mxu0
    %v5291 = vadd.f32 %v1828, %v5290
    %5292 = vmatprep.mubr.bf16.mxu0 0
    %5293 = vmatmul.mubr.bf16.gmra.mrb[0].mxu0 %v5109
    %v5294 = vpop.f32.mrb[0].mxu0
    %v5295 = vadd.f32 %v1829, %v5294
    %v5296 = vpop.f32.mrb[0].mxu0
    %v5297 = vadd.f32 %v1830, %v5296
    %v5298 = vpop.f32.mrb[0].mxu0
    %v5299 = vadd.f32 %v1831, %v5298
    %v5300 = vpop.f32.mrb[0].mxu0
    %v5301 = vadd.f32 %v1832, %v5300
    %5302 = vmatprep.mubr.bf16.mxu0 0
    %5303 = vmatmul.mubr.bf16.gmra.mrb[0].mxu0 %v5112
    %v5304 = vpop.f32.mrb[0].mxu0
    %v5305 = vadd.f32 %v1833, %v5304
    %v5306 = vpop.f32.mrb[0].mxu0
    %v5307 = vadd.f32 %v1834, %v5306
    %v5308 = vpop.f32.mrb[0].mxu0
    %v5309 = vadd.f32 %v1835, %v5308
    %v5310 = vpop.f32.mrb[0].mxu0
    %v5311 = vadd.f32 %v1836, %v5310
    %5312 = vmatprep.mubr.bf16.mxu0 0
    %5313 = vmatmul.mubr.bf16.gmra.mrb[0].mxu0 %v5115
    %v5314 = vpop.f32.mrb[0].mxu0
    %v5315 = vadd.f32 %v1837, %v5314
    %v5316 = vpop.f32.mrb[0].mxu0
    %v5317 = vadd.f32 %v1838, %v5316
    %v5318 = vpop.f32.mrb[0].mxu0
    %v5319 = vadd.f32 %v1839, %v5318
    %v5320 = vpop.f32.mrb[0].mxu0
    %v5321 = vadd.f32 %v1840, %v5320
    %5322 = vmatprep.mubr.bf16.mxu0 0
    %5323 = vmatmul.mubr.bf16.gmra.mrb[0].mxu0 %v5118
    %v5324 = vpop.f32.mrb[0].mxu0
    %v5325 = vadd.f32 %v1841, %v5324
    %v5326 = vpop.f32.mrb[0].mxu0
    %v5327 = vadd.f32 %v1842, %v5326
    %v5328 = vpop.f32.mrb[0].mxu0
    %v5329 = vadd.f32 %v1843, %v5328
    %v5330 = vpop.f32.mrb[0].mxu0
    %v5331 = vadd.f32 %v1844, %v5330
    %5332 = vmatprep.mubr.bf16.mxu0 0
    %5333 = vmatmul.mubr.bf16.gmra.mrb[0].mxu0 %v5121
    %v5334 = vpop.f32.mrb[0].mxu0
    %v5335 = vadd.f32 %v1845, %v5334
    %v5336 = vpop.f32.mrb[0].mxu0
    %v5337 = vadd.f32 %v1846, %v5336
    %v5338 = vpop.f32.mrb[0].mxu0
    %v5339 = vadd.f32 %v1847, %v5338
    %v5340 = vpop.f32.mrb[0].mxu0
    %v5341 = vadd.f32 %v1848, %v5340
    %5342 = vmatprep.mubr.bf16.mxu0 0
    %5343 = vmatmul.mubr.bf16.gmra.mrb[0].mxu0 %v5124
    %v5344 = vpop.f32.mrb[0].mxu0
    %v5345 = vadd.f32 %v1849, %v5344
    %v5346 = vpop.f32.mrb[0].mxu0
    %v5347 = vadd.f32 %v1850, %v5346
    %v5348 = vpop.f32.mrb[0].mxu0
    %v5349 = vadd.f32 %v1851, %v5348
    %v5350 = vpop.f32.mrb[0].mxu0
    %v5351 = vadd.f32 %v1852, %v5350
    %5352 = vmatprep.mubr.bf16.mxu0 0
    %5353 = vmatmul.mubr.bf16.gmra.mrb[0].mxu0 %v5127
    %v5354 = vpop.f32.mrb[0].mxu0
    %v5355 = vadd.f32 %v1853, %v5354
    %v5356 = vpop.f32.mrb[0].mxu0
    %v5357 = vadd.f32 %v1854, %v5356
    %v5358 = vpop.f32.mrb[0].mxu0
    %v5359 = vadd.f32 %v1855, %v5358
    %v5360 = vpop.f32.mrb[0].mxu0
    %v5361 = vadd.f32 %v1856, %v5360
    %5362 = vmatprep.mubr.bf16.mxu0 0
    %5363 = vmatmul.mubr.bf16.gmra.mrb[0].mxu0 %v5130
    %v5364 = vpop.f32.mrb[0].mxu0
    %v5365 = vadd.f32 %v1857, %v5364
    %v5366 = vpop.f32.mrb[0].mxu0
    %v5367 = vadd.f32 %v1858, %v5366
    %v5368 = vpop.f32.mrb[0].mxu0
    %v5369 = vadd.f32 %v1859, %v5368
    %v5370 = vpop.f32.mrb[0].mxu0
    %v5371 = vadd.f32 %v1860, %v5370
    %5372 = vdwg.mxu0
    %v5373 = vmax.f32 %v5215, %v5217
    %5374 = vmax.xlane.f32.xlu0 %v5373
    %v5375 = vpop.xlane.xlu0 %5374
    %v5376 = vmax.f32 %v5219, %v5221
    %5377 = vmax.xlane.f32.xlu0 %v5376
    %v5378 = vpop.xlane.xlu0 %5377
    %v5379 = vmax.f32 %v5225, %v5227
    %5380 = vmax.xlane.f32.xlu0 %v5379
    %v5381 = vpop.xlane.xlu0 %5380
    %v5382 = vmax.f32 %v5229, %v5231
    %5383 = vmax.xlane.f32.xlu0 %v5382
    %v5384 = vpop.xlane.xlu0 %5383
    %v5385 = vmax.f32 %v5235, %v5237
    %5386 = vmax.xlane.f32.xlu0 %v5385
    %v5387 = vpop.xlane.xlu0 %5386
    %v5388 = vmax.f32 %v5239, %v5241
    %5389 = vmax.xlane.f32.xlu0 %v5388
    %v5390 = vpop.xlane.xlu0 %5389
    %v5391 = vmax.f32 %v5245, %v5247
    %5392 = vmax.xlane.f32.xlu0 %v5391
    %v5393 = vpop.xlane.xlu0 %5392
    %v5394 = vmax.f32 %v5249, %v5251
    %5395 = vmax.xlane.f32.xlu0 %v5394
    %v5396 = vpop.xlane.xlu0 %5395
    %v5397 = vmax.f32 %v5255, %v5257
    %5398 = vmax.xlane.f32.xlu0 %v5397
    %v5399 = vpop.xlane.xlu0 %5398
    %v5400 = vmax.f32 %v5259, %v5261
    %5401 = vmax.xlane.f32.xlu0 %v5400
    %v5402 = vpop.xlane.xlu0 %5401
    %v5403 = vmax.f32 %v5265, %v5267
    %5404 = vmax.xlane.f32.xlu0 %v5403
    %v5405 = vpop.xlane.xlu0 %5404
    %v5406 = vmax.f32 %v5269, %v5271
    %5407 = vmax.xlane.f32.xlu0 %v5406
    %v5408 = vpop.xlane.xlu0 %5407
    %v5409 = vmax.f32 %v5275, %v5277
    %5410 = vmax.xlane.f32.xlu0 %v5409
    %v5411 = vpop.xlane.xlu0 %5410
    %v5412 = vmax.f32 %v5279, %v5281
    %5413 = vmax.xlane.f32.xlu0 %v5412
    %v5414 = vpop.xlane.xlu0 %5413
    %v5415 = vmax.f32 %v5285, %v5287
    %5416 = vmax.xlane.f32.xlu0 %v5415
    %v5417 = vpop.xlane.xlu0 %5416
    %v5418 = vmax.f32 %v5289, %v5291
    %5419 = vmax.xlane.f32.xlu0 %v5418
    %v5420 = vpop.xlane.xlu0 %5419
    %v5421 = vmax.f32 %v5295, %v5297
    %5422 = vmax.xlane.f32.xlu0 %v5421
    %v5423 = vpop.xlane.xlu0 %5422
    %v5424 = vmax.f32 %v5299, %v5301
    %5425 = vmax.xlane.f32.xlu0 %v5424
    %v5426 = vpop.xlane.xlu0 %5425
    %v5427 = vmax.f32 %v5305, %v5307
    %5428 = vmax.xlane.f32.xlu0 %v5427
    %v5429 = vpop.xlane.xlu0 %5428
    %v5430 = vmax.f32 %v5309, %v5311
    %5431 = vmax.xlane.f32.xlu0 %v5430
    %v5432 = vpop.xlane.xlu0 %5431
    %v5433 = vmax.f32 %v5315, %v5317
    %5434 = vmax.xlane.f32.xlu0 %v5433
    %v5435 = vpop.xlane.xlu0 %5434
    %v5436 = vmax.f32 %v5319, %v5321
    %5437 = vmax.xlane.f32.xlu0 %v5436
    %v5438 = vpop.xlane.xlu0 %5437
    %v5439 = vmax.f32 %v5325, %v5327
    %5440 = vmax.xlane.f32.xlu0 %v5439
    %v5441 = vpop.xlane.xlu0 %5440
    %v5442 = vmax.f32 %v5329, %v5331
    %5443 = vmax.xlane.f32.xlu0 %v5442
    %v5444 = vpop.xlane.xlu0 %5443
    %v5445 = vmax.f32 %v5335, %v5337
    %5446 = vmax.xlane.f32.xlu0 %v5445
    %v5447 = vpop.xlane.xlu0 %5446
    %v5448 = vmax.f32 %v5339, %v5341
    %5449 = vmax.xlane.f32.xlu0 %v5448
    %v5450 = vpop.xlane.xlu0 %5449
    %v5451 = vmax.f32 %v5345, %v5347
    %5452 = vmax.xlane.f32.xlu0 %v5451
    %v5453 = vpop.xlane.xlu0 %5452
    %v5454 = vmax.f32 %v5349, %v5351
    %5455 = vmax.xlane.f32.xlu0 %v5454
    %v5456 = vpop.xlane.xlu0 %5455
    %v5457 = vmax.f32 %v5355, %v5357
    %5458 = vmax.xlane.f32.xlu0 %v5457
    %v5459 = vpop.xlane.xlu0 %5458
    %v5460 = vmax.f32 %v5359, %v5361
    %5461 = vmax.xlane.f32.xlu0 %v5460
    %v5462 = vpop.xlane.xlu0 %5461
    %v5463 = vmax.f32 %v5365, %v5367
    %5464 = vmax.xlane.f32.xlu0 %v5463
    %v5465 = vpop.xlane.xlu0 %5464
    %v5466 = vmax.f32 %v5369, %v5371
    %5467 = vmax.xlane.f32.xlu0 %v5466
    %v5468 = vpop.xlane.xlu0 %5467
    %v5469 = vsub.f32 %v5215, %v5375
    %v5470 = vsub.f32 %v5217, %v5375
    %v5471 = vsub.f32 %v5219, %v5378
    %v5472 = vsub.f32 %v5221, %v5378
    %v5473 = vsub.f32 %v5225, %v5381
    %v5474 = vsub.f32 %v5227, %v5381
    %v5475 = vsub.f32 %v5229, %v5384
    %v5476 = vsub.f32 %v5231, %v5384
    %v5477 = vsub.f32 %v5235, %v5387
    %v5478 = vsub.f32 %v5237, %v5387
    %v5479 = vsub.f32 %v5239, %v5390
    %v5480 = vsub.f32 %v5241, %v5390
    %v5481 = vsub.f32 %v5245, %v5393
    %v5482 = vsub.f32 %v5247, %v5393
    %v5483 = vsub.f32 %v5249, %v5396
    %v5484 = vsub.f32 %v5251, %v5396
    %v5485 = vsub.f32 %v5255, %v5399
    %v5486 = vsub.f32 %v5257, %v5399
    %v5487 = vsub.f32 %v5259, %v5402
    %v5488 = vsub.f32 %v5261, %v5402
    %v5489 = vsub.f32 %v5265, %v5405
    %v5490 = vsub.f32 %v5267, %v5405
    %v5491 = vsub.f32 %v5269, %v5408
    %v5492 = vsub.f32 %v5271, %v5408
    %v5493 = vsub.f32 %v5275, %v5411
    %v5494 = vsub.f32 %v5277, %v5411
    %v5495 = vsub.f32 %v5279, %v5414
    %v5496 = vsub.f32 %v5281, %v5414
    %v5497 = vsub.f32 %v5285, %v5417
    %v5498 = vsub.f32 %v5287, %v5417
    %v5499 = vsub.f32 %v5289, %v5420
    %v5500 = vsub.f32 %v5291, %v5420
    %v5501 = vsub.f32 %v5295, %v5423
    %v5502 = vsub.f32 %v5297, %v5423
    %v5503 = vsub.f32 %v5299, %v5426
    %v5504 = vsub.f32 %v5301, %v5426
    %v5505 = vsub.f32 %v5305, %v5429
    %v5506 = vsub.f32 %v5307, %v5429
    %v5507 = vsub.f32 %v5309, %v5432
    %v5508 = vsub.f32 %v5311, %v5432
    %v5509 = vsub.f32 %v5315, %v5435
    %v5510 = vsub.f32 %v5317, %v5435
    %v5511 = vsub.f32 %v5319, %v5438
    %v5512 = vsub.f32 %v5321, %v5438
    %v5513 = vsub.f32 %v5325, %v5441
    %v5514 = vsub.f32 %v5327, %v5441
    %v5515 = vsub.f32 %v5329, %v5444
    %v5516 = vsub.f32 %v5331, %v5444
    %v5517 = vsub.f32 %v5335, %v5447
    %v5518 = vsub.f32 %v5337, %v5447
    %v5519 = vsub.f32 %v5339, %v5450
    %v5520 = vsub.f32 %v5341, %v5450
    %v5521 = vsub.f32 %v5345, %v5453
    %v5522 = vsub.f32 %v5347, %v5453
    %v5523 = vsub.f32 %v5349, %v5456
    %v5524 = vsub.f32 %v5351, %v5456
    %v5525 = vsub.f32 %v5355, %v5459
    %v5526 = vsub.f32 %v5357, %v5459
    %v5527 = vsub.f32 %v5359, %v5462
    %v5528 = vsub.f32 %v5361, %v5462
    %v5529 = vsub.f32 %v5365, %v5465
    %v5530 = vsub.f32 %v5367, %v5465
    %v5531 = vsub.f32 %v5369, %v5468
    %v5532 = vsub.f32 %v5371, %v5468
    %v5533 = vmul.f32 %v5469, 1.442695
    %v5534 = vpow.pop %v5533
    %v5535 = vmul.f32 %v5470, 1.442695
    %v5536 = vpow.pop %v5535
    %v5537 = vmul.f32 %v5471, 1.442695
    %v5538 = vpow.pop %v5537
    %v5539 = vmul.f32 %v5472, 1.442695
    %v5540 = vpow.pop %v5539
    %v5541 = vmul.f32 %v5473, 1.442695
    %v5542 = vpow.pop %v5541
    %v5543 = vmul.f32 %v5474, 1.442695
    %v5544 = vpow.pop %v5543
    %v5545 = vmul.f32 %v5475, 1.442695
    %v5546 = vpow.pop %v5545
    %v5547 = vmul.f32 %v5476, 1.442695
    %v5548 = vpow.pop %v5547
    %v5549 = vmul.f32 %v5477, 1.442695
    %v5550 = vpow.pop %v5549
    %v5551 = vmul.f32 %v5478, 1.442695
    %v5552 = vpow.pop %v5551
    %v5553 = vmul.f32 %v5479, 1.442695
    %v5554 = vpow.pop %v5553
    %v5555 = vmul.f32 %v5480, 1.442695
    %v5556 = vpow.pop %v5555
    %v5557 = vmul.f32 %v5481, 1.442695
    %v5558 = vpow.pop %v5557
    %v5559 = vmul.f32 %v5482, 1.442695
    %v5560 = vpow.pop %v5559
    %v5561 = vmul.f32 %v5483, 1.442695
    %v5562 = vpow.pop %v5561
    %v5563 = vmul.f32 %v5484, 1.442695
    %v5564 = vpow.pop %v5563
    %v5565 = vmul.f32 %v5485, 1.442695
    %v5566 = vpow.pop %v5565
    %v5567 = vmul.f32 %v5486, 1.442695
    %v5568 = vpow.pop %v5567
    %v5569 = vmul.f32 %v5487, 1.442695
    %v5570 = vpow.pop %v5569
    %v5571 = vmul.f32 %v5488, 1.442695
    %v5572 = vpow.pop %v5571
    %v5573 = vmul.f32 %v5489, 1.442695
    %v5574 = vpow.pop %v5573
    %v5575 = vmul.f32 %v5490, 1.442695
    %v5576 = vpow.pop %v5575
    %v5577 = vmul.f32 %v5491, 1.442695
    %v5578 = vpow.pop %v5577
    %v5579 = vmul.f32 %v5492, 1.442695
    %v5580 = vpow.pop %v5579
    %v5581 = vmul.f32 %v5493, 1.442695
    %v5582 = vpow.pop %v5581
    %v5583 = vmul.f32 %v5494, 1.442695
    %v5584 = vpow.pop %v5583
    %v5585 = vmul.f32 %v5495, 1.442695
    %v5586 = vpow.pop %v5585
    %v5587 = vmul.f32 %v5496, 1.442695
    %v5588 = vpow.pop %v5587
    %v5589 = vmul.f32 %v5497, 1.442695
    %v5590 = vpow.pop %v5589
    %v5591 = vmul.f32 %v5498, 1.442695
    %v5592 = vpow.pop %v5591
    %v5593 = vmul.f32 %v5499, 1.442695
    %v5594 = vpow.pop %v5593
    %v5595 = vmul.f32 %v5500, 1.442695
    %v5596 = vpow.pop %v5595
    %v5597 = vmul.f32 %v5501, 1.442695
    %v5598 = vpow.pop %v5597
    %v5599 = vmul.f32 %v5502, 1.442695
    %v5600 = vpow.pop %v5599
    %v5601 = vmul.f32 %v5503, 1.442695
    %v5602 = vpow.pop %v5601
    %v5603 = vmul.f32 %v5504, 1.442695
    %v5604 = vpow.pop %v5603
    %v5605 = vmul.f32 %v5505, 1.442695
    %v5606 = vpow.pop %v5605
    %v5607 = vmul.f32 %v5506, 1.442695
    %v5608 = vpow.pop %v5607
    %v5609 = vmul.f32 %v5507, 1.442695
    %v5610 = vpow.pop %v5609
    %v5611 = vmul.f32 %v5508, 1.442695
    %v5612 = vpow.pop %v5611
    %v5613 = vmul.f32 %v5509, 1.442695
    %v5614 = vpow.pop %v5613
    %v5615 = vmul.f32 %v5510, 1.442695
    %v5616 = vpow.pop %v5615
    %v5617 = vmul.f32 %v5511, 1.442695
    %v5618 = vpow.pop %v5617
    %v5619 = vmul.f32 %v5512, 1.442695
    %v5620 = vpow.pop %v5619
    %v5621 = vmul.f32 %v5513, 1.442695
    %v5622 = vpow.pop %v5621
    %v5623 = vmul.f32 %v5514, 1.442695
    %v5624 = vpow.pop %v5623
    %v5625 = vmul.f32 %v5515, 1.442695
    %v5626 = vpow.pop %v5625
    %v5627 = vmul.f32 %v5516, 1.442695
    %v5628 = vpow.pop %v5627
    %v5629 = vmul.f32 %v5517, 1.442695
    %v5630 = vpow.pop %v5629
    %v5631 = vmul.f32 %v5518, 1.442695
    %v5632 = vpow.pop %v5631
    %v5633 = vmul.f32 %v5519, 1.442695
    %v5634 = vpow.pop %v5633
    %v5635 = vmul.f32 %v5520, 1.442695
    %v5636 = vpow.pop %v5635
    %v5637 = vmul.f32 %v5521, 1.442695
    %v5638 = vpow.pop %v5637
    %v5639 = vmul.f32 %v5522, 1.442695
    %v5640 = vpow.pop %v5639
    %v5641 = vmul.f32 %v5523, 1.442695
    %v5642 = vpow.pop %v5641
    %v5643 = vmul.f32 %v5524, 1.442695
    %v5644 = vpow.pop %v5643
    %v5645 = vmul.f32 %v5525, 1.442695
    %v5646 = vpow.pop %v5645
    %v5647 = vmul.f32 %v5526, 1.442695
    %v5648 = vpow.pop %v5647
    %v5649 = vmul.f32 %v5527, 1.442695
    %v5650 = vpow.pop %v5649
    %v5651 = vmul.f32 %v5528, 1.442695
    %v5652 = vpow.pop %v5651
    %v5653 = vmul.f32 %v5529, 1.442695
    %v5654 = vpow.pop %v5653
    %v5655 = vmul.f32 %v5530, 1.442695
    %v5656 = vpow.pop %v5655
    %v5657 = vmul.f32 %v5531, 1.442695
    %v5658 = vpow.pop %v5657
    %v5659 = vmul.f32 %v5532, 1.442695
    %v5660 = vpow.pop %v5659
    %v5661 = vadd.f32 %v5534, %v5536
    %5662 = vadd.xlane.f32.xlu0 %v5661
    %v5663 = vpop.xlane.xlu0 %5662
    %v5664 = vadd.f32 %v5538, %v5540
    %5665 = vadd.xlane.f32.xlu0 %v5664
    %v5666 = vpop.xlane.xlu0 %5665
    %v5667 = vadd.f32 %v5542, %v5544
    %5668 = vadd.xlane.f32.xlu0 %v5667
    %v5669 = vpop.xlane.xlu0 %5668
    %v5670 = vadd.f32 %v5546, %v5548
    %5671 = vadd.xlane.f32.xlu0 %v5670
    %v5672 = vpop.xlane.xlu0 %5671
    %v5673 = vadd.f32 %v5550, %v5552
    %5674 = vadd.xlane.f32.xlu0 %v5673
    %v5675 = vpop.xlane.xlu0 %5674
    %v5676 = vadd.f32 %v5554, %v5556
    %5677 = vadd.xlane.f32.xlu0 %v5676
    %v5678 = vpop.xlane.xlu0 %5677
    %v5679 = vadd.f32 %v5558, %v5560
    %5680 = vadd.xlane.f32.xlu0 %v5679
    %v5681 = vpop.xlane.xlu0 %5680
    %v5682 = vadd.f32 %v5562, %v5564
    %5683 = vadd.xlane.f32.xlu0 %v5682
    %v5684 = vpop.xlane.xlu0 %5683
    %v5685 = vadd.f32 %v5566, %v5568
    %5686 = vadd.xlane.f32.xlu0 %v5685
    %v5687 = vpop.xlane.xlu0 %5686
    %v5688 = vadd.f32 %v5570, %v5572
    %5689 = vadd.xlane.f32.xlu0 %v5688
    %v5690 = vpop.xlane.xlu0 %5689
    %v5691 = vadd.f32 %v5574, %v5576
    %5692 = vadd.xlane.f32.xlu0 %v5691
    %v5693 = vpop.xlane.xlu0 %5692
    %v5694 = vadd.f32 %v5578, %v5580
    %5695 = vadd.xlane.f32.xlu0 %v5694
    %v5696 = vpop.xlane.xlu0 %5695
    %v5697 = vadd.f32 %v5582, %v5584
    %5698 = vadd.xlane.f32.xlu0 %v5697
    %v5699 = vpop.xlane.xlu0 %5698
    %v5700 = vadd.f32 %v5586, %v5588
    %5701 = vadd.xlane.f32.xlu0 %v5700
    %v5702 = vpop.xlane.xlu0 %5701
    %v5703 = vadd.f32 %v5590, %v5592
    %5704 = vadd.xlane.f32.xlu0 %v5703
    %v5705 = vpop.xlane.xlu0 %5704
    %v5706 = vadd.f32 %v5594, %v5596
    %5707 = vadd.xlane.f32.xlu0 %v5706
    %v5708 = vpop.xlane.xlu0 %5707
    %v5709 = vadd.f32 %v5598, %v5600
    %5710 = vadd.xlane.f32.xlu0 %v5709
    %v5711 = vpop.xlane.xlu0 %5710
    %v5712 = vadd.f32 %v5602, %v5604
    %5713 = vadd.xlane.f32.xlu0 %v5712
    %v5714 = vpop.xlane.xlu0 %5713
    %v5715 = vadd.f32 %v5606, %v5608
    %5716 = vadd.xlane.f32.xlu0 %v5715
    %v5717 = vpop.xlane.xlu0 %5716
    %v5718 = vadd.f32 %v5610, %v5612
    %5719 = vadd.xlane.f32.xlu0 %v5718
    %v5720 = vpop.xlane.xlu0 %5719
    %v5721 = vadd.f32 %v5614, %v5616
    %5722 = vadd.xlane.f32.xlu0 %v5721
    %v5723 = vpop.xlane.xlu0 %5722
    %v5724 = vadd.f32 %v5618, %v5620
    %5725 = vadd.xlane.f32.xlu0 %v5724
    %v5726 = vpop.xlane.xlu0 %5725
    %v5727 = vadd.f32 %v5622, %v5624
    %5728 = vadd.xlane.f32.xlu0 %v5727
    %v5729 = vpop.xlane.xlu0 %5728
    %v5730 = vadd.f32 %v5626, %v5628
    %5731 = vadd.xlane.f32.xlu0 %v5730
    %v5732 = vpop.xlane.xlu0 %5731
    %v5733 = vadd.f32 %v5630, %v5632
    %5734 = vadd.xlane.f32.xlu0 %v5733
    %v5735 = vpop.xlane.xlu0 %5734
    %v5736 = vadd.f32 %v5634, %v5636
    %5737 = vadd.xlane.f32.xlu0 %v5736
    %v5738 = vpop.xlane.xlu0 %5737
    %v5739 = vadd.f32 %v5638, %v5640
    %5740 = vadd.xlane.f32.xlu0 %v5739
    %v5741 = vpop.xlane.xlu0 %5740
    %v5742 = vadd.f32 %v5642, %v5644
    %5743 = vadd.xlane.f32.xlu0 %v5742
    %v5744 = vpop.xlane.xlu0 %5743
    %v5745 = vadd.f32 %v5646, %v5648
    %5746 = vadd.xlane.f32.xlu0 %v5745
    %v5747 = vpop.xlane.xlu0 %5746
    %v5748 = vadd.f32 %v5650, %v5652
    %5749 = vadd.xlane.f32.xlu0 %v5748
    %v5750 = vpop.xlane.xlu0 %5749
    %v5751 = vadd.f32 %v5654, %v5656
    %5752 = vadd.xlane.f32.xlu0 %v5751
    %v5753 = vpop.xlane.xlu0 %5752
    %v5754 = vadd.f32 %v5658, %v5660
    %5755 = vadd.xlane.f32.xlu0 %v5754
    %v5756 = vpop.xlane.xlu0 %5755
    %v5757 = vrcp.pop %v5663
    %v5758 = vrcp.pop %v5666
    %v5759 = vrcp.pop %v5669
    %v5760 = vrcp.pop %v5672
    %v5761 = vrcp.pop %v5675
    %v5762 = vrcp.pop %v5678
    %v5763 = vrcp.pop %v5681
    %v5764 = vrcp.pop %v5684
    %v5765 = vrcp.pop %v5687
    %v5766 = vrcp.pop %v5690
    %v5767 = vrcp.pop %v5693
    %v5768 = vrcp.pop %v5696
    %v5769 = vrcp.pop %v5699
    %v5770 = vrcp.pop %v5702
    %v5771 = vrcp.pop %v5705
    %v5772 = vrcp.pop %v5708
    %v5773 = vrcp.pop %v5711
    %v5774 = vrcp.pop %v5714
    %v5775 = vrcp.pop %v5717
    %v5776 = vrcp.pop %v5720
    %v5777 = vrcp.pop %v5723
    %v5778 = vrcp.pop %v5726
    %v5779 = vrcp.pop %v5729
    %v5780 = vrcp.pop %v5732
    %v5781 = vrcp.pop %v5735
    %v5782 = vrcp.pop %v5738
    %v5783 = vrcp.pop %v5741
    %v5784 = vrcp.pop %v5744
    %v5785 = vrcp.pop %v5747
    %v5786 = vrcp.pop %v5750
    %v5787 = vrcp.pop %v5753
    %v5788 = vrcp.pop %v5756
    %v5789 = vmul.f32 %v5534, %v5757
    %v5790 = vmul.f32 %v5536, %v5757
    %v5791 = vmul.f32 %v5538, %v5758
    %v5792 = vmul.f32 %v5540, %v5758
    %v5793 = vmul.f32 %v5542, %v5759
    %v5794 = vmul.f32 %v5544, %v5759
    %v5795 = vmul.f32 %v5546, %v5760
    %v5796 = vmul.f32 %v5548, %v5760
    %v5797 = vmul.f32 %v5550, %v5761
    %v5798 = vmul.f32 %v5552, %v5761
    %v5799 = vmul.f32 %v5554, %v5762
    %v5800 = vmul.f32 %v5556, %v5762
    %v5801 = vmul.f32 %v5558, %v5763
    %v5802 = vmul.f32 %v5560, %v5763
    %v5803 = vmul.f32 %v5562, %v5764
    %v5804 = vmul.f32 %v5564, %v5764
    %v5805 = vmul.f32 %v5566, %v5765
    %v5806 = vmul.f32 %v5568, %v5765
    %v5807 = vmul.f32 %v5570, %v5766
    %v5808 = vmul.f32 %v5572, %v5766
    %v5809 = vmul.f32 %v5574, %v5767
    %v5810 = vmul.f32 %v5576, %v5767
    %v5811 = vmul.f32 %v5578, %v5768
    %v5812 = vmul.f32 %v5580, %v5768
    %v5813 = vmul.f32 %v5582, %v5769
    %v5814 = vmul.f32 %v5584, %v5769
    %v5815 = vmul.f32 %v5586, %v5770
    %v5816 = vmul.f32 %v5588, %v5770
    %v5817 = vmul.f32 %v5590, %v5771
    %v5818 = vmul.f32 %v5592, %v5771
    %v5819 = vmul.f32 %v5594, %v5772
    %v5820 = vmul.f32 %v5596, %v5772
    %v5821 = vmul.f32 %v5598, %v5773
    %v5822 = vmul.f32 %v5600, %v5773
    %v5823 = vmul.f32 %v5602, %v5774
    %v5824 = vmul.f32 %v5604, %v5774
    %v5825 = vmul.f32 %v5606, %v5775
    %v5826 = vmul.f32 %v5608, %v5775
    %v5827 = vmul.f32 %v5610, %v5776
    %v5828 = vmul.f32 %v5612, %v5776
    %v5829 = vmul.f32 %v5614, %v5777
    %v5830 = vmul.f32 %v5616, %v5777
    %v5831 = vmul.f32 %v5618, %v5778
    %v5832 = vmul.f32 %v5620, %v5778
    %v5833 = vmul.f32 %v5622, %v5779
    %v5834 = vmul.f32 %v5624, %v5779
    %v5835 = vmul.f32 %v5626, %v5780
    %v5836 = vmul.f32 %v5628, %v5780
    %v5837 = vmul.f32 %v5630, %v5781
    %v5838 = vmul.f32 %v5632, %v5781
    %v5839 = vmul.f32 %v5634, %v5782
    %v5840 = vmul.f32 %v5636, %v5782
    %v5841 = vmul.f32 %v5638, %v5783
    %v5842 = vmul.f32 %v5640, %v5783
    %v5843 = vmul.f32 %v5642, %v5784
    %v5844 = vmul.f32 %v5644, %v5784
    %v5845 = vmul.f32 %v5646, %v5785
    %v5846 = vmul.f32 %v5648, %v5785
    %v5847 = vmul.f32 %v5650, %v5786
    %v5848 = vmul.f32 %v5652, %v5786
    %v5849 = vmul.f32 %v5654, %v5787
    %v5850 = vmul.f32 %v5656, %v5787
    %v5851 = vmul.f32 %v5658, %v5788
    %v5852 = vmul.f32 %v5660, %v5788
    %v5853 = vpack.c.bf16 %v5791, %v5789
    %v5854 = vpack.c.bf16 %v5792, %v5790
    %v5855 = vpack.c.bf16 %v5795, %v5793
    %v5856 = vpack.c.bf16 %v5796, %v5794
    %v5857 = vpack.c.bf16 %v5799, %v5797
    %v5858 = vpack.c.bf16 %v5800, %v5798
    %v5859 = vpack.c.bf16 %v5803, %v5801
    %v5860 = vpack.c.bf16 %v5804, %v5802
    %v5861 = vpack.c.bf16 %v5807, %v5805
    %v5862 = vpack.c.bf16 %v5808, %v5806
    %v5863 = vpack.c.bf16 %v5811, %v5809
    %v5864 = vpack.c.bf16 %v5812, %v5810
    %v5865 = vpack.c.bf16 %v5815, %v5813
    %v5866 = vpack.c.bf16 %v5816, %v5814
    %v5867 = vpack.c.bf16 %v5819, %v5817
    %v5868 = vpack.c.bf16 %v5820, %v5818
    %v5869 = vpack.c.bf16 %v5823, %v5821
    %v5870 = vpack.c.bf16 %v5824, %v5822
    %v5871 = vpack.c.bf16 %v5827, %v5825
    %v5872 = vpack.c.bf16 %v5828, %v5826
    %v5873 = vpack.c.bf16 %v5831, %v5829
    %v5874 = vpack.c.bf16 %v5832, %v5830
    %v5875 = vpack.c.bf16 %v5835, %v5833
    %v5876 = vpack.c.bf16 %v5836, %v5834
    %v5877 = vpack.c.bf16 %v5839, %v5837
    %v5878 = vpack.c.bf16 %v5840, %v5838
    %v5879 = vpack.c.bf16 %v5843, %v5841
    %v5880 = vpack.c.bf16 %v5844, %v5842
    %v5881 = vpack.c.bf16 %v5847, %v5845
    %v5882 = vpack.c.bf16 %v5848, %v5846
    %v5883 = vpack.c.bf16 %v5851, %v5849
    %v5884 = vpack.c.bf16 %v5852, %v5850
    %5885 = vrot.lane.b32.xlu0 %v1545, 104
    %v5886 = vpop.permute.xlu0 %5885
    %5887 = vrot.lane.b32.xlu0 %v1546, 104
    %v5888 = vpop.permute.xlu0 %5887
    %5889 = vrot.lane.b32.xlu0 %v1547, 104
    %v5890 = vpop.permute.xlu0 %5889
    %5891 = vrot.lane.b32.xlu0 %v1548, 104
    %v5892 = vpop.permute.xlu0 %5891
    %5893 = vrot.lane.b32.xlu0 %v1549, 104
    %v5894 = vpop.permute.xlu0 %5893
    %5895 = vrot.lane.b32.xlu0 %v1550, 104
    %v5896 = vpop.permute.xlu0 %5895
    %5897 = vrot.lane.b32.xlu0 %v1551, 104
    %v5898 = vpop.permute.xlu0 %5897
    %5899 = vrot.lane.b32.xlu0 %v1552, 104
    %v5900 = vpop.permute.xlu0 %5899
    %5901 = vrot.lane.b32.xlu0 %v1553, 104
    %v5902 = vpop.permute.xlu0 %5901
    %5903 = vrot.lane.b32.xlu0 %v1554, 104
    %v5904 = vpop.permute.xlu0 %5903
    %5905 = vrot.lane.b32.xlu0 %v1555, 104
    %v5906 = vpop.permute.xlu0 %5905
    %5907 = vrot.lane.b32.xlu0 %v1556, 104
    %v5908 = vpop.permute.xlu0 %5907
    %5909 = vrot.lane.b32.xlu0 %v1557, 104
    %v5910 = vpop.permute.xlu0 %5909
    %5911 = vrot.lane.b32.xlu0 %v1558, 104
    %v5912 = vpop.permute.xlu0 %5911
    %5913 = vrot.lane.b32.xlu0 %v1559, 104
    %v5914 = vpop.permute.xlu0 %5913
    %5915 = vrot.lane.b32.xlu0 %v1560, 104
    %v5916 = vpop.permute.xlu0 %5915
    %5933 = vmatprep.subr.bf16.mxu0 0
    %5934 = vmatpush1.bf16.msra.mxu0 %v5886
    %5935 = vmatprep.subr.bf16.mxu0 0
    %5936 = vmatpush1.bf16.msra.mxu0 %v5888
    %5937 = vmatprep.subr.bf16.mxu0 0
    %5938 = vmatpush1.bf16.msra.mxu0 %v5890
    %5939 = vmatprep.subr.bf16.mxu0 0
    %5940 = vmatpush1.bf16.msra.mxu0 %v5892
    %5941 = vmatprep.subr.bf16.mxu0 0
    %5942 = vmatpush1.bf16.msra.mxu0 %v5894
    %5943 = vmatprep.subr.bf16.mxu0 0
    %5944 = vmatpush1.bf16.msra.mxu0 %v5896
    %5945 = vmatprep.subr.bf16.mxu0 0
    %5946 = vmatpush1.bf16.msra.mxu0 %v5898
    %5947 = vmatprep.subr.bf16.mxu0 0
    %5948 = vmatpush1.bf16.msra.mxu0 %v5900
    %5949 = vmatprep.subr.bf16.mxu0 0
    %5950 = vmatpush1.bf16.msra.mxu0 %v5902
    %5951 = vmatprep.subr.bf16.mxu0 0
    %5952 = vmatpush1.bf16.msra.mxu0 %v5904
    %5953 = vmatprep.subr.bf16.mxu0 0
    %5954 = vmatpush1.bf16.msra.mxu0 %v5906
    %5955 = vmatprep.subr.bf16.mxu0 0
    %5956 = vmatpush1.bf16.msra.mxu0 %v5908
    %5957 = vmatprep.subr.bf16.mxu0 0
    %5958 = vmatpush1.bf16.msra.mxu0 %v5910
    %5959 = vmatprep.subr.bf16.mxu0 0
    %5960 = vmatpush1.bf16.msra.mxu0 %v5912
    %5961 = vmatprep.subr.bf16.mxu0 0
    %5962 = vmatpush1.bf16.msra.mxu0 %v5914
    %5963 = vmatprep.subr.bf16.mxu0 0
    %5964 = vmatpush1.bf16.msra.mxu0 %v5916
    %5965 = vmatprep.mubr.bf16.mxu0 %v5854
    %5966 = vmatmul.mubr.bf16.gmra.mrb[0].mxu0 %v5853
    %v5967 = vpop.f32.mrb[0].mxu0
    %v5968 = vadd.f32 0.0, %v5967
    %v5969 = vpop.f32.mrb[0].mxu0
    %v5970 = vpop.f32.mrb[0].mxu0
    %v5971 = vadd.f32 0.0, %v5970
    %v5972 = vpop.f32.mrb[0].mxu0
    %5973 = vmatprep.mubr.bf16.mxu0 %v5856
    %5974 = vmatmul.mubr.bf16.gmra.mrb[0].mxu0 %v5855
    %v5975 = vpop.f32.mrb[0].mxu0
    %v5976 = vadd.f32 0.0, %v5975
    %v5977 = vpop.f32.mrb[0].mxu0
    %v5978 = vpop.f32.mrb[0].mxu0
    %v5979 = vadd.f32 0.0, %v5978
    %v5980 = vpop.f32.mrb[0].mxu0
    %5981 = vmatprep.mubr.bf16.mxu0 %v5858
    %5982 = vmatmul.mubr.bf16.gmra.mrb[0].mxu0 %v5857
    %v5983 = vpop.f32.mrb[0].mxu0
    %v5984 = vadd.f32 0.0, %v5983
    %v5985 = vpop.f32.mrb[0].mxu0
    %v5986 = vpop.f32.mrb[0].mxu0
    %v5987 = vadd.f32 0.0, %v5986
    %v5988 = vpop.f32.mrb[0].mxu0
    %5989 = vmatprep.mubr.bf16.mxu0 %v5860
    %5990 = vmatmul.mubr.bf16.gmra.mrb[0].mxu0 %v5859
    %v5991 = vpop.f32.mrb[0].mxu0
    %v5992 = vadd.f32 0.0, %v5991
    %v5993 = vpop.f32.mrb[0].mxu0
    %v5994 = vpop.f32.mrb[0].mxu0
    %v5995 = vadd.f32 0.0, %v5994
    %v5996 = vpop.f32.mrb[0].mxu0
    %5997 = vmatprep.mubr.bf16.mxu0 %v5862
    %5998 = vmatmul.mubr.bf16.gmra.mrb[0].mxu0 %v5861
    %v5999 = vpop.f32.mrb[0].mxu0
    %v6000 = vadd.f32 0.0, %v5999
    %v6001 = vpop.f32.mrb[0].mxu0
    %v6002 = vpop.f32.mrb[0].mxu0
    %v6003 = vadd.f32 0.0, %v6002
    %v6004 = vpop.f32.mrb[0].mxu0
    %6005 = vmatprep.mubr.bf16.mxu0 %v5864
    %6006 = vmatmul.mubr.bf16.gmra.mrb[0].mxu0 %v5863
    %v6007 = vpop.f32.mrb[0].mxu0
    %v6008 = vadd.f32 0.0, %v6007
    %v6009 = vpop.f32.mrb[0].mxu0
    %v6010 = vpop.f32.mrb[0].mxu0
    %v6011 = vadd.f32 0.0, %v6010
    %v6012 = vpop.f32.mrb[0].mxu0
    %6013 = vmatprep.mubr.bf16.mxu0 %v5866
    %6014 = vmatmul.mubr.bf16.gmra.mrb[0].mxu0 %v5865
    %v6015 = vpop.f32.mrb[0].mxu0
    %v6016 = vadd.f32 0.0, %v6015
    %v6017 = vpop.f32.mrb[0].mxu0
    %v6018 = vpop.f32.mrb[0].mxu0
    %v6019 = vadd.f32 0.0, %v6018
    %v6020 = vpop.f32.mrb[0].mxu0
    %6021 = vmatprep.mubr.bf16.mxu0 %v5868
    %6022 = vmatmul.mubr.bf16.gmra.mrb[0].mxu0 %v5867
    %v6023 = vpop.f32.mrb[0].mxu0
    %v6024 = vadd.f32 0.0, %v6023
    %v6025 = vpop.f32.mrb[0].mxu0
    %v6026 = vpop.f32.mrb[0].mxu0
    %v6027 = vadd.f32 0.0, %v6026
    %v6028 = vpop.f32.mrb[0].mxu0
    %6029 = vmatprep.mubr.bf16.mxu0 %v5870
    %6030 = vmatmul.mubr.bf16.gmra.mrb[0].mxu0 %v5869
    %v6031 = vpop.f32.mrb[0].mxu0
    %v6032 = vadd.f32 0.0, %v6031
    %v6033 = vpop.f32.mrb[0].mxu0
    %v6034 = vpop.f32.mrb[0].mxu0
    %v6035 = vadd.f32 0.0, %v6034
    %v6036 = vpop.f32.mrb[0].mxu0
    %6037 = vmatprep.mubr.bf16.mxu0 %v5872
    %6038 = vmatmul.mubr.bf16.gmra.mrb[0].mxu0 %v5871
    %v6039 = vpop.f32.mrb[0].mxu0
    %v6040 = vadd.f32 0.0, %v6039
    %v6041 = vpop.f32.mrb[0].mxu0
    %v6042 = vpop.f32.mrb[0].mxu0
    %v6043 = vadd.f32 0.0, %v6042
    %v6044 = vpop.f32.mrb[0].mxu0
    %6045 = vmatprep.mubr.bf16.mxu0 %v5874
    %6046 = vmatmul.mubr.bf16.gmra.mrb[0].mxu0 %v5873
    %v6047 = vpop.f32.mrb[0].mxu0
    %v6048 = vadd.f32 0.0, %v6047
    %v6049 = vpop.f32.mrb[0].mxu0
    %v6050 = vpop.f32.mrb[0].mxu0
    %v6051 = vadd.f32 0.0, %v6050
    %v6052 = vpop.f32.mrb[0].mxu0
    %6053 = vmatprep.mubr.bf16.mxu0 %v5876
    %6054 = vmatmul.mubr.bf16.gmra.mrb[0].mxu0 %v5875
    %v6055 = vpop.f32.mrb[0].mxu0
    %v6056 = vadd.f32 0.0, %v6055
    %v6057 = vpop.f32.mrb[0].mxu0
    %v6058 = vpop.f32.mrb[0].mxu0
    %v6059 = vadd.f32 0.0, %v6058
    %v6060 = vpop.f32.mrb[0].mxu0
    %6061 = vmatprep.mubr.bf16.mxu0 %v5878
    %6062 = vmatmul.mubr.bf16.gmra.mrb[0].mxu0 %v5877
    %v6063 = vpop.f32.mrb[0].mxu0
    %v6064 = vadd.f32 0.0, %v6063
    %v6065 = vpop.f32.mrb[0].mxu0
    %v6066 = vpop.f32.mrb[0].mxu0
    %v6067 = vadd.f32 0.0, %v6066
    %v6068 = vpop.f32.mrb[0].mxu0
    %6069 = vmatprep.mubr.bf16.mxu0 %v5880
    %6070 = vmatmul.mubr.bf16.gmra.mrb[0].mxu0 %v5879
    %v6071 = vpop.f32.mrb[0].mxu0
    %v6072 = vadd.f32 0.0, %v6071
    %v6073 = vpop.f32.mrb[0].mxu0
    %v6074 = vpop.f32.mrb[0].mxu0
    %v6075 = vadd.f32 0.0, %v6074
    %v6076 = vpop.f32.mrb[0].mxu0
    %6077 = vmatprep.mubr.bf16.mxu0 %v5882
    %6078 = vmatmul.mubr.bf16.gmra.mrb[0].mxu0 %v5881
    %v6079 = vpop.f32.mrb[0].mxu0
    %v6080 = vadd.f32 0.0, %v6079
    %v6081 = vpop.f32.mrb[0].mxu0
    %v6082 = vpop.f32.mrb[0].mxu0
    %v6083 = vadd.f32 0.0, %v6082
    %v6084 = vpop.f32.mrb[0].mxu0
    %6085 = vmatprep.mubr.bf16.mxu0 %v5884
    %6086 = vmatmul.mubr.bf16.gmra.mrb[0].mxu0 %v5883
    %v6087 = vpop.f32.mrb[0].mxu0
    %v6088 = vadd.f32 0.0, %v6087
    %v6089 = vpop.f32.mrb[0].mxu0
    %v6090 = vpop.f32.mrb[0].mxu0
    %v6091 = vadd.f32 0.0, %v6090
    %v6092 = vpop.f32.mrb[0].mxu0
    %6093 = vdwg.mxu0
    %6126 = vrot.lane.b32.xlu0 %v3820, 8
    %v6127 = vpop.permute.xlu0 %6126
    %6128 = vrot.lane.b32.xlu0 %v3823, 8
    %v6129 = vpop.permute.xlu0 %6128
    %6130 = vrot.lane.b32.xlu0 %v3828, 8
    %v6131 = vpop.permute.xlu0 %6130
    %6132 = vrot.lane.b32.xlu0 %v3831, 8
    %v6133 = vpop.permute.xlu0 %6132
    %6134 = vrot.lane.b32.xlu0 %v3836, 8
    %v6135 = vpop.permute.xlu0 %6134
    %6136 = vrot.lane.b32.xlu0 %v3839, 8
    %v6137 = vpop.permute.xlu0 %6136
    %6138 = vrot.lane.b32.xlu0 %v3844, 8
    %v6139 = vpop.permute.xlu0 %6138
    %6140 = vrot.lane.b32.xlu0 %v3847, 8
    %v6141 = vpop.permute.xlu0 %6140
    %6142 = vrot.lane.b32.xlu0 %v3852, 8
    %v6143 = vpop.permute.xlu0 %6142
    %6144 = vrot.lane.b32.xlu0 %v3855, 8
    %v6145 = vpop.permute.xlu0 %6144
    %6146 = vrot.lane.b32.xlu0 %v3860, 8
    %v6147 = vpop.permute.xlu0 %6146
    %6148 = vrot.lane.b32.xlu0 %v3863, 8
    %v6149 = vpop.permute.xlu0 %6148
    %6150 = vrot.lane.b32.xlu0 %v3868, 8
    %v6151 = vpop.permute.xlu0 %6150
    %6152 = vrot.lane.b32.xlu0 %v3871, 8
    %v6153 = vpop.permute.xlu0 %6152
    %6154 = vrot.lane.b32.xlu0 %v3876, 8
    %v6155 = vpop.permute.xlu0 %6154
    %6156 = vrot.lane.b32.xlu0 %v3879, 8
    %v6157 = vpop.permute.xlu0 %6156
    %6158 = vrot.lane.b32.xlu0 %v3884, 8
    %v6159 = vpop.permute.xlu0 %6158
    %6160 = vrot.lane.b32.xlu0 %v3887, 8
    %v6161 = vpop.permute.xlu0 %6160
    %6162 = vrot.lane.b32.xlu0 %v3892, 8
    %v6163 = vpop.permute.xlu0 %6162
    %6164 = vrot.lane.b32.xlu0 %v3895, 8
    %v6165 = vpop.permute.xlu0 %6164
    %6166 = vrot.lane.b32.xlu0 %v3900, 8
    %v6167 = vpop.permute.xlu0 %6166
    %6168 = vrot.lane.b32.xlu0 %v3903, 8
    %v6169 = vpop.permute.xlu0 %6168
    %6170 = vrot.lane.b32.xlu0 %v3908, 8
    %v6171 = vpop.permute.xlu0 %6170
    %6172 = vrot.lane.b32.xlu0 %v3911, 8
    %v6173 = vpop.permute.xlu0 %6172
    %6174 = vrot.lane.b32.xlu0 %v3916, 8
    %v6175 = vpop.permute.xlu0 %6174
    %6176 = vrot.lane.b32.xlu0 %v3919, 8
    %v6177 = vpop.permute.xlu0 %6176
    %6178 = vrot.lane.b32.xlu0 %v3924, 8
    %v6179 = vpop.permute.xlu0 %6178
    %6180 = vrot.lane.b32.xlu0 %v3927, 8
    %v6181 = vpop.permute.xlu0 %6180
    %6182 = vrot.lane.b32.xlu0 %v3932, 8
    %v6183 = vpop.permute.xlu0 %6182
    %6184 = vrot.lane.b32.xlu0 %v3935, 8
    %v6185 = vpop.permute.xlu0 %6184
    %6186 = vrot.lane.b32.xlu0 %v3940, 8
    %v6187 = vpop.permute.xlu0 %6186
    %6188 = vrot.lane.b32.xlu0 %v3943, 8
    %v6189 = vpop.permute.xlu0 %6188
    %6254 = vrot.lane.b32.xlu0 %v4894, 16
    %v6255 = vpop.permute.xlu0 %6254
    %6256 = vrot.lane.b32.xlu0 %v4897, 16
    %v6257 = vpop.permute.xlu0 %6256
    %6258 = vrot.lane.b32.xlu0 %v4902, 16
    %v6259 = vpop.permute.xlu0 %6258
    %6260 = vrot.lane.b32.xlu0 %v4905, 16
    %v6261 = vpop.permute.xlu0 %6260
    %6262 = vrot.lane.b32.xlu0 %v4910, 16
    %v6263 = vpop.permute.xlu0 %6262
    %6264 = vrot.lane.b32.xlu0 %v4913, 16
    %v6265 = vpop.permute.xlu0 %6264
    %6266 = vrot.lane.b32.xlu0 %v4918, 16
    %v6267 = vpop.permute.xlu0 %6266
    %6268 = vrot.lane.b32.xlu0 %v4921, 16
    %v6269 = vpop.permute.xlu0 %6268
    %6270 = vrot.lane.b32.xlu0 %v4926, 16
    %v6271 = vpop.permute.xlu0 %6270
    %6272 = vrot.lane.b32.xlu0 %v4929, 16
    %v6273 = vpop.permute.xlu0 %6272
    %6274 = vrot.lane.b32.xlu0 %v4934, 16
    %v6275 = vpop.permute.xlu0 %6274
    %6276 = vrot.lane.b32.xlu0 %v4937, 16
    %v6277 = vpop.permute.xlu0 %6276
    %6278 = vrot.lane.b32.xlu0 %v4942, 16
    %v6279 = vpop.permute.xlu0 %6278
    %6280 = vrot.lane.b32.xlu0 %v4945, 16
    %v6281 = vpop.permute.xlu0 %6280
    %6282 = vrot.lane.b32.xlu0 %v4950, 16
    %v6283 = vpop.permute.xlu0 %6282
    %6284 = vrot.lane.b32.xlu0 %v4953, 16
    %v6285 = vpop.permute.xlu0 %6284
    %6286 = vrot.lane.b32.xlu0 %v4958, 16
    %v6287 = vpop.permute.xlu0 %6286
    %6288 = vrot.lane.b32.xlu0 %v4961, 16
    %v6289 = vpop.permute.xlu0 %6288
    %6290 = vrot.lane.b32.xlu0 %v4966, 16
    %v6291 = vpop.permute.xlu0 %6290
    %6292 = vrot.lane.b32.xlu0 %v4969, 16
    %v6293 = vpop.permute.xlu0 %6292
    %6294 = vrot.lane.b32.xlu0 %v4974, 16
    %v6295 = vpop.permute.xlu0 %6294
    %6296 = vrot.lane.b32.xlu0 %v4977, 16
    %v6297 = vpop.permute.xlu0 %6296
    %6298 = vrot.lane.b32.xlu0 %v4982, 16
    %v6299 = vpop.permute.xlu0 %6298
    %6300 = vrot.lane.b32.xlu0 %v4985, 16
    %v6301 = vpop.permute.xlu0 %6300
    %6302 = vrot.lane.b32.xlu0 %v4990, 16
    %v6303 = vpop.permute.xlu0 %6302
    %6304 = vrot.lane.b32.xlu0 %v4993, 16
    %v6305 = vpop.permute.xlu0 %6304
    %6306 = vrot.lane.b32.xlu0 %v4998, 16
    %v6307 = vpop.permute.xlu0 %6306
    %6308 = vrot.lane.b32.xlu0 %v5001, 16
    %v6309 = vpop.permute.xlu0 %6308
    %6310 = vrot.lane.b32.xlu0 %v5006, 16
    %v6311 = vpop.permute.xlu0 %6310
    %6312 = vrot.lane.b32.xlu0 %v5009, 16
    %v6313 = vpop.permute.xlu0 %6312
    %6314 = vrot.lane.b32.xlu0 %v5014, 16
    %v6315 = vpop.permute.xlu0 %6314
    %6316 = vrot.lane.b32.xlu0 %v5017, 16
    %v6317 = vpop.permute.xlu0 %6316
    %6382 = vrot.lane.b32.xlu0 %v5968, 24
    %v6383 = vpop.permute.xlu0 %6382
    %6384 = vrot.lane.b32.xlu0 %v5971, 24
    %v6385 = vpop.permute.xlu0 %6384
    %6386 = vrot.lane.b32.xlu0 %v5976, 24
    %v6387 = vpop.permute.xlu0 %6386
    %6388 = vrot.lane.b32.xlu0 %v5979, 24
    %v6389 = vpop.permute.xlu0 %6388
    %6390 = vrot.lane.b32.xlu0 %v5984, 24
    %v6391 = vpop.permute.xlu0 %6390
    %6392 = vrot.lane.b32.xlu0 %v5987, 24
    %v6393 = vpop.permute.xlu0 %6392
    %6394 = vrot.lane.b32.xlu0 %v5992, 24
    %v6395 = vpop.permute.xlu0 %6394
    %6396 = vrot.lane.b32.xlu0 %v5995, 24
    %v6397 = vpop.permute.xlu0 %6396
    %6398 = vrot.lane.b32.xlu0 %v6000, 24
    %v6399 = vpop.permute.xlu0 %6398
    %6400 = vrot.lane.b32.xlu0 %v6003, 24
    %v6401 = vpop.permute.xlu0 %6400
    %6402 = vrot.lane.b32.xlu0 %v6008, 24
    %v6403 = vpop.permute.xlu0 %6402
    %6404 = vrot.lane.b32.xlu0 %v6011, 24
    %v6405 = vpop.permute.xlu0 %6404
    %6406 = vrot.lane.b32.xlu0 %v6016, 24
    %v6407 = vpop.permute.xlu0 %6406
    %6408 = vrot.lane.b32.xlu0 %v6019, 24
    %v6409 = vpop.permute.xlu0 %6408
    %6410 = vrot.lane.b32.xlu0 %v6024, 24
    %v6411 = vpop.permute.xlu0 %6410
    %6412 = vrot.lane.b32.xlu0 %v6027, 24
    %v6413 = vpop.permute.xlu0 %6412
    %6414 = vrot.lane.b32.xlu0 %v6032, 24
    %v6415 = vpop.permute.xlu0 %6414
    %6416 = vrot.lane.b32.xlu0 %v6035, 24
    %v6417 = vpop.permute.xlu0 %6416
    %6418 = vrot.lane.b32.xlu0 %v6040, 24
    %v6419 = vpop.permute.xlu0 %6418
    %6420 = vrot.lane.b32.xlu0 %v6043, 24
    %v6421 = vpop.permute.xlu0 %6420
    %6422 = vrot.lane.b32.xlu0 %v6048, 24
    %v6423 = vpop.permute.xlu0 %6422
    %6424 = vrot.lane.b32.xlu0 %v6051, 24
    %v6425 = vpop.permute.xlu0 %6424
    %6426 = vrot.lane.b32.xlu0 %v6056, 24
    %v6427 = vpop.permute.xlu0 %6426
    %6428 = vrot.lane.b32.xlu0 %v6059, 24
    %v6429 = vpop.permute.xlu0 %6428
    %6430 = vrot.lane.b32.xlu0 %v6064, 24
    %v6431 = vpop.permute.xlu0 %6430
    %6432 = vrot.lane.b32.xlu0 %v6067, 24
    %v6433 = vpop.permute.xlu0 %6432
    %6434 = vrot.lane.b32.xlu0 %v6072, 24
    %v6435 = vpop.permute.xlu0 %6434
    %6436 = vrot.lane.b32.xlu0 %v6075, 24
    %v6437 = vpop.permute.xlu0 %6436
    %6438 = vrot.lane.b32.xlu0 %v6080, 24
    %v6439 = vpop.permute.xlu0 %6438
    %6440 = vrot.lane.b32.xlu0 %v6083, 24
    %v6441 = vpop.permute.xlu0 %6440
    %6442 = vrot.lane.b32.xlu0 %v6088, 24
    %v6443 = vpop.permute.xlu0 %6442
    %6444 = vrot.lane.b32.xlu0 %v6091, 24
    %v6445 = vpop.permute.xlu0 %6444
    %v6478 = vsel %vm1861, %v2698, %v6127
    %v6479 = vsel %vm1861, %v2701, %v6129
    %v6480 = vsel %vm1861, %v2706, %v6131
    %v6481 = vsel %vm1861, %v2709, %v6133
    %v6482 = vsel %vm1861, %v2714, %v6135
    %v6483 = vsel %vm1861, %v2717, %v6137
    %v6484 = vsel %vm1861, %v2722, %v6139
    %v6485 = vsel %vm1861, %v2725, %v6141
    %v6486 = vsel %vm1861, %v2730, %v6143
    %v6487 = vsel %vm1861, %v2733, %v6145
    %v6488 = vsel %vm1861, %v2738, %v6147
    %v6489 = vsel %vm1861, %v2741, %v6149
    %v6490 = vsel %vm1861, %v2746, %v6151
    %v6491 = vsel %vm1861, %v2749, %v6153
    %v6492 = vsel %vm1861, %v2754, %v6155
    %v6493 = vsel %vm1861, %v2757, %v6157
    %v6494 = vsel %vm1861, %v2762, %v6159
    %v6495 = vsel %vm1861, %v2765, %v6161
    %v6496 = vsel %vm1861, %v2770, %v6163
    %v6497 = vsel %vm1861, %v2773, %v6165
    %v6498 = vsel %vm1861, %v2778, %v6167
    %v6499 = vsel %vm1861, %v2781, %v6169
    %v6500 = vsel %vm1861, %v2786, %v6171
    %v6501 = vsel %vm1861, %v2789, %v6173
    %v6502 = vsel %vm1861, %v2794, %v6175
    %v6503 = vsel %vm1861, %v2797, %v6177
    %v6504 = vsel %vm1861, %v2802, %v6179
    %v6505 = vsel %vm1861, %v2805, %v6181
    %v6506 = vsel %vm1861, %v2810, %v6183
    %v6507 = vsel %vm1861, %v2813, %v6185
    %v6508 = vsel %vm1861, %v2818, %v6187
    %v6509 = vsel %vm1861, %v2821, %v6189
    %vm6510 = vcmask 130048
    %v6511 = vsel %vm6510, %v6478, %v6255
    %v6512 = vsel %vm6510, %v6479, %v6257
    %v6513 = vsel %vm6510, %v6480, %v6259
    %v6514 = vsel %vm6510, %v6481, %v6261
    %v6515 = vsel %vm6510, %v6482, %v6263
    %v6516 = vsel %vm6510, %v6483, %v6265
    %v6517 = vsel %vm6510, %v6484, %v6267
    %v6518 = vsel %vm6510, %v6485, %v6269
    %v6519 = vsel %vm6510, %v6486, %v6271
    %v6520 = vsel %vm6510, %v6487, %v6273
    %v6521 = vsel %vm6510, %v6488, %v6275
    %v6522 = vsel %vm6510, %v6489, %v6277
    %v6523 = vsel %vm6510, %v6490, %v6279
    %v6524 = vsel %vm6510, %v6491, %v6281
    %v6525 = vsel %vm6510, %v6492, %v6283
    %v6526 = vsel %vm6510, %v6493, %v6285
    %v6527 = vsel %vm6510, %v6494, %v6287
    %v6528 = vsel %vm6510, %v6495, %v6289
    %v6529 = vsel %vm6510, %v6496, %v6291
    %v6530 = vsel %vm6510, %v6497, %v6293
    %v6531 = vsel %vm6510, %v6498, %v6295
    %v6532 = vsel %vm6510, %v6499, %v6297
    %v6533 = vsel %vm6510, %v6500, %v6299
    %v6534 = vsel %vm6510, %v6501, %v6301
    %v6535 = vsel %vm6510, %v6502, %v6303
    %v6536 = vsel %vm6510, %v6503, %v6305
    %v6537 = vsel %vm6510, %v6504, %v6307
    %v6538 = vsel %vm6510, %v6505, %v6309
    %v6539 = vsel %vm6510, %v6506, %v6311
    %v6540 = vsel %vm6510, %v6507, %v6313
    %v6541 = vsel %vm6510, %v6508, %v6315
    %v6542 = vsel %vm6510, %v6509, %v6317
    %vm6543 = vcmask 195584
    %v6544 = vsel %vm6543, %v6511, %v6383
    %v6545 = vsel %vm6543, %v6512, %v6385
    %v6546 = vsel %vm6543, %v6513, %v6387
    %v6547 = vsel %vm6543, %v6514, %v6389
    %v6548 = vsel %vm6543, %v6515, %v6391
    %v6549 = vsel %vm6543, %v6516, %v6393
    %v6550 = vsel %vm6543, %v6517, %v6395
    %v6551 = vsel %vm6543, %v6518, %v6397
    %v6552 = vsel %vm6543, %v6519, %v6399
    %v6553 = vsel %vm6543, %v6520, %v6401
    %v6554 = vsel %vm6543, %v6521, %v6403
    %v6555 = vsel %vm6543, %v6522, %v6405
    %v6556 = vsel %vm6543, %v6523, %v6407
    %v6557 = vsel %vm6543, %v6524, %v6409
    %v6558 = vsel %vm6543, %v6525, %v6411
    %v6559 = vsel %vm6543, %v6526, %v6413
    %v6560 = vsel %vm6543, %v6527, %v6415
    %v6561 = vsel %vm6543, %v6528, %v6417
    %v6562 = vsel %vm6543, %v6529, %v6419
    %v6563 = vsel %vm6543, %v6530, %v6421
    %v6564 = vsel %vm6543, %v6531, %v6423
    %v6565 = vsel %vm6543, %v6532, %v6425
    %v6566 = vsel %vm6543, %v6533, %v6427
    %v6567 = vsel %vm6543, %v6534, %v6429
    %v6568 = vsel %vm6543, %v6535, %v6431
    %v6569 = vsel %vm6543, %v6536, %v6433
    %v6570 = vsel %vm6543, %v6537, %v6435
    %v6571 = vsel %vm6543, %v6538, %v6437
    %v6572 = vsel %vm6543, %v6539, %v6439
    %v6573 = vsel %vm6543, %v6540, %v6441
    %v6574 = vsel %vm6543, %v6541, %v6443
    %v6575 = vsel %vm6543, %v6542, %v6445
    %v6576 = vpack.c.bf16 %v6545, %v6544
    %v6577 = vpack.c.bf16 %v6547, %v6546
    %v6578 = vpack.c.bf16 %v6549, %v6548
    %v6579 = vpack.c.bf16 %v6551, %v6550
    %v6580 = vpack.c.bf16 %v6553, %v6552
    %v6581 = vpack.c.bf16 %v6555, %v6554
    %v6582 = vpack.c.bf16 %v6557, %v6556
    %v6583 = vpack.c.bf16 %v6559, %v6558
    %v6584 = vpack.c.bf16 %v6561, %v6560
    %v6585 = vpack.c.bf16 %v6563, %v6562
    %v6586 = vpack.c.bf16 %v6565, %v6564
    %v6587 = vpack.c.bf16 %v6567, %v6566
    %v6588 = vpack.c.bf16 %v6569, %v6568
    %v6589 = vpack.c.bf16 %v6571, %v6570
    %v6590 = vpack.c.bf16 %v6573, %v6572
    %v6591 = vpack.c.bf16 %v6575, %v6574
    %v6592 = vlaneseq
    %v6593 = vshrl.u32 %v6592, 7
    %v6594 = vsub.s32 0, %v6593
    %v6595 = vrot.slane %v96, %v6594
    %v6600 = vunpack.c.l.b16 %v842
    %v6601 = vunpack.c.l.b16 %v843
    %v6602 = vunpack.c.l.b16 %v844
    %v6603 = vunpack.c.l.b16 %v845
    %v6604 = vpack.c.b16 %v6601, %v6600
    %v6605 = vpack.c.b16 %v6603, %v6602
    %v6609 = vsel %vm129, %v6576, 0
    %v6612 = vsel %vm129, %v6577, 0
    %v6615 = vsel %vm129, %v6578, 0
    %v6618 = vsel %vm129, %v6579, 0
    %v6621 = vsel %vm129, %v6580, 0
    %v6624 = vsel %vm129, %v6581, 0
    %v6627 = vsel %vm129, %v6582, 0
    %v6630 = vsel %vm129, %v6583, 0
    %v6633 = vsel %vm129, %v6584, 0
    %v6636 = vsel %vm129, %v6585, 0
    %v6639 = vsel %vm129, %v6586, 0
    %v6642 = vsel %vm129, %v6587, 0
    %v6645 = vsel %vm129, %v6588, 0
    %v6648 = vsel %vm129, %v6589, 0
    %v6651 = vsel %vm129, %v6590, 0
    %v6654 = vsel %vm129, %v6591, 0
    %6656 = vmatprep.subr.bf16.mxu0 0
    %6657 = vmatpush1.bf16.msra.mxu0 %v6604
    %6658 = vmatprep.subr.bf16.mxu0 0
    %6659 = vmatpush1.bf16.msra.mxu0 %v6605
    %6660 = vmatprep.subr.bf16.mxu0 0
    %6661 = vmatpush1.bf16.msra.mxu0 0
    %6662 = vmatprep.subr.bf16.mxu0 0
    %6663 = vmatpush1.bf16.msra.mxu0 0
    %6664 = vmatprep.subr.bf16.mxu0 0
    %6665 = vmatpush1.bf16.msra.mxu0 0
    %6666 = vmatprep.subr.bf16.mxu0 0
    %6667 = vmatpush1.bf16.msra.mxu0 0
    %6668 = vmatprep.subr.bf16.mxu0 0
    %6669 = vmatpush1.bf16.msra.mxu0 0
    %6670 = vmatprep.subr.bf16.mxu0 0
    %6671 = vmatpush1.bf16.msra.mxu0 0
    %6672 = vmatprep.subr.bf16.mxu0 0
    %6673 = vmatpush1.bf16.msra.mxu0 0
    %6674 = vmatprep.subr.bf16.mxu0 0
    %6675 = vmatpush1.bf16.msra.mxu0 0
    %6676 = vmatprep.subr.bf16.mxu0 0
    %6677 = vmatpush1.bf16.msra.mxu0 0
    %6678 = vmatprep.subr.bf16.mxu0 0
    %6679 = vmatpush1.bf16.msra.mxu0 0
    %6680 = vmatprep.subr.bf16.mxu0 0
    %6681 = vmatpush1.bf16.msra.mxu0 0
    %6682 = vmatprep.subr.bf16.mxu0 0
    %6683 = vmatpush1.bf16.msra.mxu0 0
    %6684 = vmatprep.subr.bf16.mxu0 0
    %6685 = vmatpush1.bf16.msra.mxu0 0
    %6686 = vmatprep.subr.bf16.mxu0 0
    %6687 = vmatpush1.bf16.msra.mxu0 0
    %6688 = vmatprep.mubr.bf16.mxu0 0
    %6689 = vmatmul.mubr.bf16.gmra.mrb[0].mxu0 %v6609
    %v6690 = vpop.f32.mrb[0].mxu0
    %v6691 = vadd.f32 %v6595, %v6690
    %v6692 = vpop.f32.mrb[0].mxu0
    %v6693 = vpop.f32.mrb[0].mxu0
    %v6694 = vadd.f32 %v6595, %v6693
    %v6695 = vpop.f32.mrb[0].mxu0
    %6696 = vmatprep.mubr.bf16.mxu0 0
    %6697 = vmatmul.mubr.bf16.gmra.mrb[0].mxu0 %v6612
    %v6698 = vpop.f32.mrb[0].mxu0
    %v6699 = vadd.f32 %v6595, %v6698
    %v6700 = vpop.f32.mrb[0].mxu0
    %v6701 = vpop.f32.mrb[0].mxu0
    %v6702 = vadd.f32 %v6595, %v6701
    %v6703 = vpop.f32.mrb[0].mxu0
    %6704 = vmatprep.mubr.bf16.mxu0 0
    %6705 = vmatmul.mubr.bf16.gmra.mrb[0].mxu0 %v6615
    %v6706 = vpop.f32.mrb[0].mxu0
    %v6707 = vadd.f32 %v6595, %v6706
    %v6708 = vpop.f32.mrb[0].mxu0
    %v6709 = vpop.f32.mrb[0].mxu0
    %v6710 = vadd.f32 %v6595, %v6709
    %v6711 = vpop.f32.mrb[0].mxu0
    %6712 = vmatprep.mubr.bf16.mxu0 0
    %6713 = vmatmul.mubr.bf16.gmra.mrb[0].mxu0 %v6618
    %v6714 = vpop.f32.mrb[0].mxu0
    %v6715 = vadd.f32 %v6595, %v6714
    %v6716 = vpop.f32.mrb[0].mxu0
    %v6717 = vpop.f32.mrb[0].mxu0
    %v6718 = vadd.f32 %v6595, %v6717
    %v6719 = vpop.f32.mrb[0].mxu0
    %6720 = vmatprep.mubr.bf16.mxu0 0
    %6721 = vmatmul.mubr.bf16.gmra.mrb[0].mxu0 %v6621
    %v6722 = vpop.f32.mrb[0].mxu0
    %v6723 = vadd.f32 %v6595, %v6722
    %v6724 = vpop.f32.mrb[0].mxu0
    %v6725 = vpop.f32.mrb[0].mxu0
    %v6726 = vadd.f32 %v6595, %v6725
    %v6727 = vpop.f32.mrb[0].mxu0
    %6728 = vmatprep.mubr.bf16.mxu0 0
    %6729 = vmatmul.mubr.bf16.gmra.mrb[0].mxu0 %v6624
    %v6730 = vpop.f32.mrb[0].mxu0
    %v6731 = vadd.f32 %v6595, %v6730
    %v6732 = vpop.f32.mrb[0].mxu0
    %v6733 = vpop.f32.mrb[0].mxu0
    %v6734 = vadd.f32 %v6595, %v6733
    %v6735 = vpop.f32.mrb[0].mxu0
    %6736 = vmatprep.mubr.bf16.mxu0 0
    %6737 = vmatmul.mubr.bf16.gmra.mrb[0].mxu0 %v6627
    %v6738 = vpop.f32.mrb[0].mxu0
    %v6739 = vadd.f32 %v6595, %v6738
    %v6740 = vpop.f32.mrb[0].mxu0
    %v6741 = vpop.f32.mrb[0].mxu0
    %v6742 = vadd.f32 %v6595, %v6741
    %v6743 = vpop.f32.mrb[0].mxu0
    %6744 = vmatprep.mubr.bf16.mxu0 0
    %6745 = vmatmul.mubr.bf16.gmra.mrb[0].mxu0 %v6630
    %v6746 = vpop.f32.mrb[0].mxu0
    %v6747 = vadd.f32 %v6595, %v6746
    %v6748 = vpop.f32.mrb[0].mxu0
    %v6749 = vpop.f32.mrb[0].mxu0
    %v6750 = vadd.f32 %v6595, %v6749
    %v6751 = vpop.f32.mrb[0].mxu0
    %6752 = vmatprep.mubr.bf16.mxu0 0
    %6753 = vmatmul.mubr.bf16.gmra.mrb[0].mxu0 %v6633
    %v6754 = vpop.f32.mrb[0].mxu0
    %v6755 = vadd.f32 %v6595, %v6754
    %v6756 = vpop.f32.mrb[0].mxu0
    %v6757 = vpop.f32.mrb[0].mxu0
    %v6758 = vadd.f32 %v6595, %v6757
    %v6759 = vpop.f32.mrb[0].mxu0
    %6760 = vmatprep.mubr.bf16.mxu0 0
    %6761 = vmatmul.mubr.bf16.gmra.mrb[0].mxu0 %v6636
    %v6762 = vpop.f32.mrb[0].mxu0
    %v6763 = vadd.f32 %v6595, %v6762
    %v6764 = vpop.f32.mrb[0].mxu0
    %v6765 = vpop.f32.mrb[0].mxu0
    %v6766 = vadd.f32 %v6595, %v6765
    %v6767 = vpop.f32.mrb[0].mxu0
    %6768 = vmatprep.mubr.bf16.mxu0 0
    %6769 = vmatmul.mubr.bf16.gmra.mrb[0].mxu0 %v6639
    %v6770 = vpop.f32.mrb[0].mxu0
    %v6771 = vadd.f32 %v6595, %v6770
    %v6772 = vpop.f32.mrb[0].mxu0
    %v6773 = vpop.f32.mrb[0].mxu0
    %v6774 = vadd.f32 %v6595, %v6773
    %v6775 = vpop.f32.mrb[0].mxu0
    %6776 = vmatprep.mubr.bf16.mxu0 0
    %6777 = vmatmul.mubr.bf16.gmra.mrb[0].mxu0 %v6642
    %v6778 = vpop.f32.mrb[0].mxu0
    %v6779 = vadd.f32 %v6595, %v6778
    %v6780 = vpop.f32.mrb[0].mxu0
    %v6781 = vpop.f32.mrb[0].mxu0
    %v6782 = vadd.f32 %v6595, %v6781
    %v6783 = vpop.f32.mrb[0].mxu0
    %6784 = vmatprep.mubr.bf16.mxu0 0
    %6785 = vmatmul.mubr.bf16.gmra.mrb[0].mxu0 %v6645
    %v6786 = vpop.f32.mrb[0].mxu0
    %v6787 = vadd.f32 %v6595, %v6786
    %v6788 = vpop.f32.mrb[0].mxu0
    %v6789 = vpop.f32.mrb[0].mxu0
    %v6790 = vadd.f32 %v6595, %v6789
    %v6791 = vpop.f32.mrb[0].mxu0
    %6792 = vmatprep.mubr.bf16.mxu0 0
    %6793 = vmatmul.mubr.bf16.gmra.mrb[0].mxu0 %v6648
    %v6794 = vpop.f32.mrb[0].mxu0
    %v6795 = vadd.f32 %v6595, %v6794
    %v6796 = vpop.f32.mrb[0].mxu0
    %v6797 = vpop.f32.mrb[0].mxu0
    %v6798 = vadd.f32 %v6595, %v6797
    %v6799 = vpop.f32.mrb[0].mxu0
    %6800 = vmatprep.mubr.bf16.mxu0 0
    %6801 = vmatmul.mubr.bf16.gmra.mrb[0].mxu0 %v6651
    %v6802 = vpop.f32.mrb[0].mxu0
    %v6803 = vadd.f32 %v6595, %v6802
    %v6804 = vpop.f32.mrb[0].mxu0
    %v6805 = vpop.f32.mrb[0].mxu0
    %v6806 = vadd.f32 %v6595, %v6805
    %v6807 = vpop.f32.mrb[0].mxu0
    %6808 = vmatprep.mubr.bf16.mxu0 0
    %6809 = vmatmul.mubr.bf16.gmra.mrb[0].mxu0 %v6654
    %v6810 = vpop.f32.mrb[0].mxu0
    %v6811 = vadd.f32 %v6595, %v6810
    %v6812 = vpop.f32.mrb[0].mxu0
    %v6813 = vpop.f32.mrb[0].mxu0
    %v6814 = vadd.f32 %v6595, %v6813
    %v6815 = vpop.f32.mrb[0].mxu0
    %6816 = vdwg.mxu0
    %v6817 = vadd.f32 %v587, %v6691
    %v6818 = vadd.f32 %v588, %v6694
    %v6819 = vadd.f32 %v589, %v6699
    %v6820 = vadd.f32 %v590, %v6702
    %v6821 = vadd.f32 %v591, %v6707
    %v6822 = vadd.f32 %v592, %v6710
    %v6823 = vadd.f32 %v593, %v6715
    %v6824 = vadd.f32 %v594, %v6718
    %v6825 = vadd.f32 %v595, %v6723
    %v6826 = vadd.f32 %v596, %v6726
    %v6827 = vadd.f32 %v597, %v6731
    %v6828 = vadd.f32 %v598, %v6734
    %v6829 = vadd.f32 %v599, %v6739
    %v6830 = vadd.f32 %v600, %v6742
    %v6831 = vadd.f32 %v601, %v6747
    %v6832 = vadd.f32 %v602, %v6750
    %v6833 = vadd.f32 %v603, %v6755
    %v6834 = vadd.f32 %v604, %v6758
    %v6835 = vadd.f32 %v605, %v6763
    %v6836 = vadd.f32 %v606, %v6766
    %v6837 = vadd.f32 %v607, %v6771
    %v6838 = vadd.f32 %v608, %v6774
    %v6839 = vadd.f32 %v609, %v6779
    %v6840 = vadd.f32 %v610, %v6782
    %v6841 = vadd.f32 %v611, %v6787
    %v6842 = vadd.f32 %v612, %v6790
    %v6843 = vadd.f32 %v613, %v6795
    %v6844 = vadd.f32 %v614, %v6798
    %v6845 = vadd.f32 %v615, %v6803
    %v6846 = vadd.f32 %v616, %v6806
    %v6847 = vadd.f32 %v617, %v6811
    %v6848 = vadd.f32 %v618, %v6814
    %6849 = vst.msk [vmem:[#allocation11] sm:$0xff] %vm129, %v6817
    %6850 = vst.msk [vmem:[#allocation11 + $0x8] sm:$0xff] %vm129, %v6818
    %6851 = vst.msk [vmem:[#allocation11 + $0x10] sm:$0xff] %vm129, %v6819
    %6852 = vst.msk [vmem:[#allocation11 + $0x18] sm:$0xff] %vm129, %v6820
    %6853 = vst.msk [vmem:[#allocation11 + $0x20] sm:$0xff] %vm129, %v6821
    %6854 = vst.msk [vmem:[#allocation11 + $0x28] sm:$0xff] %vm129, %v6822
    %6855 = vst.msk [vmem:[#allocation11 + $0x30] sm:$0xff] %vm129, %v6823
    %6856 = vst.msk [vmem:[#allocation11 + $0x38] sm:$0xff] %vm129, %v6824
    %6857 = vst.msk [vmem:[#allocation11 + $0x40] sm:$0xff] %vm129, %v6825
    %6858 = vst.msk [vmem:[#allocation11 + $0x48] sm:$0xff] %vm129, %v6826
    %6859 = vst.msk [vmem:[#allocation11 + $0x50] sm:$0xff] %vm129, %v6827
    %6860 = vst.msk [vmem:[#allocation11 + $0x58] sm:$0xff] %vm129, %v6828
    %6861 = vst.msk [vmem:[#allocation11 + $0x60] sm:$0xff] %vm129, %v6829
    %6862 = vst.msk [vmem:[#allocation11 + $0x68] sm:$0xff] %vm129, %v6830
    %6863 = vst.msk [vmem:[#allocation11 + $0x70] sm:$0xff] %vm129, %v6831
    %6864 = vst.msk [vmem:[#allocation11 + $0x78] sm:$0xff] %vm129, %v6832
    %6865 = vst.msk [vmem:[#allocation11 + $0x80] sm:$0xff] %vm129, %v6833
    %6866 = vst.msk [vmem:[#allocation11 + $0x88] sm:$0xff] %vm129, %v6834
    %6867 = vst.msk [vmem:[#allocation11 + $0x90] sm:$0xff] %vm129, %v6835
    %6868 = vst.msk [vmem:[#allocation11 + $0x98] sm:$0xff] %vm129, %v6836
    %6869 = vst.msk [vmem:[#allocation11 + $0xa0] sm:$0xff] %vm129, %v6837
    %6870 = vst.msk [vmem:[#allocation11 + $0xa8] sm:$0xff] %vm129, %v6838
    %6871 = vst.msk [vmem:[#allocation11 + $0xb0] sm:$0xff] %vm129, %v6839
    %6872 = vst.msk [vmem:[#allocation11 + $0xb8] sm:$0xff] %vm129, %v6840
    %6873 = vst.msk [vmem:[#allocation11 + $0xc0] sm:$0xff] %vm129, %v6841
    %6874 = vst.msk [vmem:[#allocation11 + $0xc8] sm:$0xff] %vm129, %v6842
    %6875 = vst.msk [vmem:[#allocation11 + $0xd0] sm:$0xff] %vm129, %v6843
    %6876 = vst.msk [vmem:[#allocation11 + $0xd8] sm:$0xff] %vm129, %v6844
    %6877 = vst.msk [vmem:[#allocation11 + $0xe0] sm:$0xff] %vm129, %v6845
    %6878 = vst.msk [vmem:[#allocation11 + $0xe8] sm:$0xff] %vm129, %v6846
    %6879 = vst.msk [vmem:[#allocation11 + $0xf0] sm:$0xff] %vm129, %v6847
    %6880 = vst.msk [vmem:[#allocation11 + $0xf8] sm:$0xff] %vm129, %v6848
    // Predicated region
    $region46: #{tpu_custom_call.1} parent=1 // pred_check
      _
    $region47: #{tpu_custom_call.1} parent=1 // pred_check_branch
      %6882 = sbr.rel (0) target = $region49
    $region48: #{tpu_custom_call.1} parent=1 // pred_region
      %s6884 = ssub.s32 4096, 4096
      %6885 = vsyncadd [#allocation4], %s6884
      %s6886 = sshll.u32 [#allocation11], 4
      %s6887 = int_to_ptr.vmem [resolvable:$true] %s6886
      %6892 = dma.vmem_to_hbm [thread:$0]  %s6887, 4096, %s6, [#allocation4], 128, 128, 8
    $region49: #{tpu_custom_call.1} parent=1 // pred_fallthru
      _
    // Predicated region
    $region50: #{tpu_custom_call.1} parent=1 // pred_check
      _
    $region51: #{tpu_custom_call.1} parent=1 // pred_check_branch
      %6894 = sbr.rel (0) target = $region53
    $region52: #{tpu_custom_call.1} parent=1 // pred_region
      %6895 = dma.done [#allocation4], 4096
    $region53: #{tpu_custom_call.1} parent=1 // pred_fallthru
      _
    %6896 = vsyncpa [#allocation3], 1
    %6897 = vsyncpa [#allocation6], 1
    %6898 = vsyncpa [#allocation9], 1
    %6899 = vsyncpa [#allocation4], 1

</llo_original>
